<compile_context>
chip_gen: v7x
topology: tpu7x:2x2x1
jax: 0.10.0
libtpu: 0.0.40
codegen_flags: <defaults>
</compile_context>

<pallas_src>
import math
import numpy as np
import jax
import jax.numpy as jnp
from jax.experimental import pallas as pl
from jax.experimental.pallas import tpu as pltpu


def fourier_kernel(x_ref, wh_ref, ww_ref, ph_ref, o_ref):
    # x_ref  : [2, tile_hw]   row 0 = angle_h pixels, row 1 = angle_w pixels
    # wh/ww/ph : [2F, 1]      weights duplicated, phase2 = [phase, phase + pi/2]
    # o_ref  : [2F, tile_hw]  channels [0,F) == sin, [F,2F) == cos (via shifted sin)
    x_h = x_ref[0:1, :]                       # [1, tile_hw]
    x_w = x_ref[1:2, :]                       # [1, tile_hw]
    coords = wh_ref[...] * x_h + ww_ref[...] * x_w + ph_ref[...]   # [2F, tile_hw] f32 (VPU)
    o_ref[...] = jnp.sin(coords).astype(o_ref.dtype)               # single lane-dense store


def _pick_tile(hw, want):
    """Largest multiple of 128 <= want that divides hw; fall back to full hw."""
    want = min(want, hw)
    t = (want // 128) * 128
    while t >= 128:
        if hw % t == 0:
            return t
        t -= 128
    return hw   # block dim == full array dim is always allowed


def fourier_feature_pallas(angles_nchw, freqs, phase, *, tile_hw=512,
                           out_dtype=jnp.float32):
    """angles_nchw: [N, 2, H, W] float32
       freqs:       [F, 2]       float32 (freq_h, freq_w per basis)
       phase:       [F]          float32
       returns:     [N, 2F, H, W] out_dtype (cat([sin, cos], channel dim))
    """
    N, C, H, W = angles_nchw.shape
    assert C == 2, "FourierFeature expects 2 input angle channels"
    F = freqs.shape[0]
    HW = H * W
    tile = _pick_tile(HW, tile_hw)
    grid = (N, HW // tile)

    # NCHW-native: only a free reshape, no transposes on either side.
    x = angles_nchw.reshape(N, 2, HW).astype(jnp.float32)

    # Fuse sin/cos into one sine over 2F channels:
    #   channel f in [0, F)  -> sin(w_f . x + phi_f)
    #   channel f in [F, 2F) -> cos(w_{f-F} . x + phi_{f-F}) == sin(... + pi/2)
    w_h = freqs[:, 0].astype(jnp.float32)
    w_w = freqs[:, 1].astype(jnp.float32)
    wh2 = jnp.concatenate([w_h, w_h]).reshape(2 * F, 1)
    ww2 = jnp.concatenate([w_w, w_w]).reshape(2 * F, 1)
    ph2 = jnp.concatenate([phase, phase + (math.pi / 2)]).astype(jnp.float32).reshape(2 * F, 1)

    out_flat = pl.pallas_call(
        fourier_kernel,
        out_shape=jax.ShapeDtypeStruct((N, 2 * F, HW), out_dtype),
        grid_spec=pltpu.PrefetchScalarGridSpec(
            num_scalar_prefetch=0,
            grid=grid,
            in_specs=[
                pl.BlockSpec((None, 2, tile), lambda n, p: (n, 0, p)),
                pl.BlockSpec((2 * F, 1), lambda n, p: (0, 0)),
                pl.BlockSpec((2 * F, 1), lambda n, p: (0, 0)),
                pl.BlockSpec((2 * F, 1), lambda n, p: (0, 0)),
            ],
            out_specs=pl.BlockSpec((None, 2 * F, tile), lambda n, p: (n, 0, p)),
        ),
        compiler_params=pltpu.CompilerParams(
            dimension_semantics=("parallel", "parallel")),
    )(x, wh2, ww2, ph2)

    return out_flat.reshape(N, 2 * F, H, W)   # free reshape, no transpose


def build_params(resolution, num_freqs, L_offset=(3, -1), key=None):
    """Deterministic synthetic init mirroring __init__(basis_scale='random')."""
    L_h = int(np.ceil(np.log2(resolution[0]))) + L_offset[0]
    L_w = int(np.ceil(np.log2(resolution[1]))) + L_offset[1]
    band_h = 2 ** (L_h - 1)

    k1, k2, k3 = jax.random.split(key, 3)
    F = num_freqs // 2
    freqs_h = jax.random.uniform(k1, (F, 1), minval=-band_h, maxval=band_h,
                                 dtype=jnp.float32)
    choices = np.concatenate([-(2.0 ** np.arange(L_w)), [0.0], 2.0 ** np.arange(L_w)])
    idx = jax.random.randint(k2, (F, 1), 0, len(choices))
    freqs_w = jnp.asarray(choices, jnp.float32)[idx]
    phase = jax.random.uniform(k3, (F,), dtype=jnp.float32) * 2.0 * math.pi
    freqs = jnp.concatenate([freqs_h, freqs_w], axis=-1)   # [F, 2]
    return freqs, phase


if __name__ == "__main__":
    key = jax.random.PRNGKey(0)
    k_in, k_par = jax.random.split(key)

    resolution = (16, 16)
    num_freqs = 256            # -> F = 128 basis frequencies, 256 output channels
    N, H, W = 2, resolution[0], resolution[1]

    freqs, phase = build_params(resolution, num_freqs, key=k_par)
    angles = jax.random.normal(k_in, (N, 2, H, W), dtype=jnp.float32)

    out = fourier_feature_pallas(angles, freqs, phase)
    out = jax.block_until_ready(out)

    # pure-JAX reference: the 1x1 conv expanded over the two input channels + sin/cos cat.
    coords_ref = (angles[:, 0:1] * freqs[:, 0][None, :, None, None]
                  + angles[:, 1:2] * freqs[:, 1][None, :, None, None]
                  + phase[None, :, None, None])
    ref = jnp.concatenate([jnp.sin(coords_ref), jnp.cos(coords_ref)], axis=1)
    # Tolerance note: the kernel computes cos(c) as sin(c + pi/2); with |c| up to
    # ~band_h*|angle| (~2e2) the f32 rounding of the +pi/2 shift perturbs the argument
    # by O(|c| * eps) ~ 2e-5, so allow a slightly looser atol than pure eps.
    np.testing.assert_allclose(np.asarray(out), np.asarray(ref),
                               rtol=1e-5, atol=5e-5)

    assert out.shape == (N, num_freqs, H, W)
    print("KERNEL_OK")
</pallas_src>

<mosaic_0001>
module attributes {stable_mosaic.version = 11 : i64} {
  func.func @fourier_kernel(%arg0: i32, %arg1: i32, %arg2: memref<1x2x256xf32, #tpu.memory_space<vmem>>, %arg3: memref<256x1xf32, #tpu.memory_space<vmem>>, %arg4: memref<256x1xf32, #tpu.memory_space<vmem>>, %arg5: memref<256x1xf32, #tpu.memory_space<vmem>>, %arg6: memref<1x256x256xf32, #tpu.memory_space<vmem>>) attributes {dimension_semantics = [#tpu.dimension_semantics<parallel>, #tpu.dimension_semantics<parallel>], iteration_bounds = array<i64: 2, 1>, scalar_prefetch = 0 : i64, scratch_operands = 0 : i64, tpu.core_type = #tpu.core_type<tc>, window_params = [{transform_indices = @transform_0, window_bounds = array<i64: 1, 2, 256>}, {pipeline_mode = #tpu.pipeline_mode<synchronous>, transform_indices = @transform_1, window_bounds = array<i64: 256, 1>}, {pipeline_mode = #tpu.pipeline_mode<synchronous>, transform_indices = @transform_2, window_bounds = array<i64: 256, 1>}, {pipeline_mode = #tpu.pipeline_mode<synchronous>, transform_indices = @transform_3, window_bounds = array<i64: 256, 1>}, {transform_indices = @transform_4, window_bounds = array<i64: 1, 256, 256>}]} {
    %c0 = arith.constant 0 : index
    %c0_0 = arith.constant 0 : index
    %c0_1 = arith.constant 0 : index
    %0 = vector.load %arg2[%c0, %c0_0, %c0_1] : memref<1x2x256xf32, #tpu.memory_space<vmem>>, vector<1x1x256xf32>
    %1 = vector.shape_cast %0 : vector<1x1x256xf32> to vector<1x256xf32>
    %c0_2 = arith.constant 0 : index
    %c1 = arith.constant 1 : index
    %c0_3 = arith.constant 0 : index
    %2 = vector.load %arg2[%c0_2, %c1, %c0_3] : memref<1x2x256xf32, #tpu.memory_space<vmem>>, vector<1x1x256xf32>
    %3 = vector.shape_cast %2 : vector<1x1x256xf32> to vector<1x256xf32>
    %c0_4 = arith.constant 0 : index
    %c0_5 = arith.constant 0 : index
    %4 = vector.load %arg3[%c0_4, %c0_5] : memref<256x1xf32, #tpu.memory_space<vmem>>, vector<256x1xf32>
    %5 = vector.broadcast %4 : vector<256x1xf32> to vector<256x256xf32>
    %6 = vector.broadcast %1 : vector<1x256xf32> to vector<256x256xf32>
    %7 = arith.mulf %5, %6 : vector<256x256xf32>
    %c0_6 = arith.constant 0 : index
    %c0_7 = arith.constant 0 : index
    %8 = vector.load %arg4[%c0_6, %c0_7] : memref<256x1xf32, #tpu.memory_space<vmem>>, vector<256x1xf32>
    %9 = vector.broadcast %8 : vector<256x1xf32> to vector<256x256xf32>
    %10 = vector.broadcast %3 : vector<1x256xf32> to vector<256x256xf32>
    %11 = arith.mulf %9, %10 : vector<256x256xf32>
    %12 = arith.addf %7, %11 : vector<256x256xf32>
    %c0_8 = arith.constant 0 : index
    %c0_9 = arith.constant 0 : index
    %13 = vector.load %arg5[%c0_8, %c0_9] : memref<256x1xf32, #tpu.memory_space<vmem>>, vector<256x1xf32>
    %14 = vector.broadcast %13 : vector<256x1xf32> to vector<256x256xf32>
    %15 = arith.addf %12, %14 : vector<256x256xf32>
    %16 = math.sin %15 : vector<256x256xf32>
    %c0_10 = arith.constant 0 : index
    %c0_11 = arith.constant 0 : index
    %c0_12 = arith.constant 0 : index
    %17 = vector.load %arg6[%c0_10, %c0_11, %c0_12] : memref<1x256x256xf32, #tpu.memory_space<vmem>>, vector<1x256x256xf32>
    %18 = vector.shape_cast %17 : vector<1x256x256xf32> to vector<256x256xf32>
    %19 = vector.shape_cast %16 : vector<256x256xf32> to vector<1x256x256xf32>
    tpu.vector_store %arg6[%c0_10, %c0_11, %c0_12], %19 {strides = array<i32>} : memref<1x256x256xf32, #tpu.memory_space<vmem>>, vector<1x256x256xf32>,
    return
  }
  func.func @transform_0(%arg0: i32, %arg1: i32) -> (i32, i32, i32) {
    %c0_i32 = arith.constant 0 : i32
    %c0_i32_0 = arith.constant 0 : i32
    return %arg0, %c0_i32, %arg1 : i32, i32, i32
  }
  func.func @transform_1(%arg0: i32, %arg1: i32) -> (i32, i32) {
    %c0_i32 = arith.constant 0 : i32
    %c0_i32_0 = arith.constant 0 : i32
    %c0_i32_1 = arith.constant 0 : i32
    return %c0_i32, %c0_i32_0 : i32, i32
  }
  func.func @transform_2(%arg0: i32, %arg1: i32) -> (i32, i32) {
    %c0_i32 = arith.constant 0 : i32
    %c0_i32_0 = arith.constant 0 : i32
    %c0_i32_1 = arith.constant 0 : i32
    return %c0_i32, %c0_i32_0 : i32, i32
  }
  func.func @transform_3(%arg0: i32, %arg1: i32) -> (i32, i32) {
    %c0_i32 = arith.constant 0 : i32
    %c0_i32_0 = arith.constant 0 : i32
    %c0_i32_1 = arith.constant 0 : i32
    return %c0_i32, %c0_i32_0 : i32, i32
  }
  func.func @transform_4(%arg0: i32, %arg1: i32) -> (i32, i32, i32) {
    %c0_i32 = arith.constant 0 : i32
    %c0_i32_0 = arith.constant 0 : i32
    return %arg0, %c0_i32, %arg1 : i32, i32, i32
  }
}

</mosaic_0001>

<llo_original>
// kernel: tpu_custom_call.1
$region0: #{tpu_custom_call.1}
  #allocation0 [shape = 'u32[]', space=smem, size = 0x4, offset = 0x4, fixed_abs, tag = 'smem constant byte address 0x4 - core index']
  #allocation1 [shape = 'u32[144,128]{1,0:T(1,128)}', space=vmem, size = 0x12000, scoped, tag = 'internal scratch']
  %s0 = inlined_call_operand.vmem [shape: f32[2,2,256], index: 0, kind: input, shape index: {}]
  %s1 = inlined_call_operand.vmem [shape: f32[256,1], index: 1, kind: input, shape index: {}]
  %s2 = inlined_call_operand.vmem [shape: f32[256,1], index: 2, kind: input, shape index: {}]
  %s3 = inlined_call_operand.vmem [shape: f32[256,1], index: 3, kind: input, shape index: {}]
  %s4 = inlined_call_operand.hbm [shape: f32[2,256,256], index: 4, kind: output, shape index: {}]
  %s5 = sld [smem:[#allocation0]]
  $region49: #{tpu_custom_call.1} parent=0
    _
  %s7 = ssub.s32 1, %s5
  %s8 = scalar_select 0, %s7, %s5
  $region1: #{tpu_custom_call.1} parent=0
    #allocation2 [shape = 'u8[524288]{0}', space=vmem, size = 0x80000, scoped, tag = 'output window, operand 0']
    #allocation3 [shape = 's32[2]{0}', space=sflag, size = 0x8, scoped, tag = 'scoped memory for tpu_custom_call.1']
    %9 = vsyncpa [#allocation3], 0
    %s10 = scalar_lea.sflag [#allocation3], 1
    %11 = vsyncpa %s10, 0
    loop: start=0, step=1, limit=4
    $region2: #{tpu_custom_call.1} parent=1 // loop_pre_header
      _
    $region3: #{tpu_custom_call.1} parent=1 // loop_header
      %s13 = sphi 0, %s17
      %p14 = scmp.ge.s32.totalorder %s13, 4
      %s20 = sphi 0, %s32
      %s21 = sphi 0, %s28
      %s22 = sphi 0, %s20
      %s23 = sphi 0, %s21
      %s24 = sphi 0, %s22
      %s25 = sphi 0, %s23
      %s37 = sphi 0, %s39
      %s40 = sphi 0, %s37
      %s41 = sphi 0, %s40
      %s57 = sphi 0, %s41
      %s61 = sphi 0, %s61
      %s63 = sphi 0, %s61
      %s64 = sphi 0, %s63
      %s78 = sphi 0, %s64
      %s82 = sphi 0, %s82
      %s84 = sphi 0, %s82
      %s85 = sphi 0, %s84
      %s99 = sphi 0, %s85
      %s103 = sphi 0, %s103
      %s105 = sphi 0, %s103
      %s106 = sphi 0, %s105
      %s120 = sphi 0, %s106
      %s128 = sphi 0, %s130
      %s131 = sphi 0, %s128
      %s132 = sphi 0, %s131
      %s148 = sphi 0, %s132
    $region4: #{tpu_custom_call.1} parent=1 // loop_header_branch
      %16 = sbr.rel (%p14) target = $region8
    $region5: #{tpu_custom_call.1} parent=1 // loop_body
      %s18 = ssub.s32 %s13, 1
      %s19 = ssub.s32 %s13, 2
      %s26 = sadd.s32 1, %s21
      %p27 = scmp.ge.s32.totalorder %s26, 1
      %s28 = scalar_select %p27, 0, %s26
      %s29 = sadd.s32 1, %s20
      %s30 = scalar_select %p27, %s29, %s20
      %p31 = scmp.ge.s32.totalorder %s30, 2
      %s32 = scalar_select %p31, 0, %s30
      %s33 = ssub.s32 %s20, %s32
      %s34 = ssub.s32 %s21, %s28
      %s35 = sor.u32 %s33, %s34
      %p36 = scmp.eq.s32.totalorder %s35, 0
      %s38 = sadd.s32 %s37, 1
      %s39 = scalar_select %p36, %s37, %s38
      %p42 = pneg %p36
      %p43 = scmp.eq.s32.totalorder %s13, 1
      %p44 = por %p42, %p43
      %p45 = scmp.ne.s32.totalorder %s37, %s40
      %p46 = scmp.eq.s32.totalorder %s13, 0
      %p47 = por %p45, %p46
      %p48 = scmp.ne.s32.totalorder %s37, %s40
      %p49 = scmp.eq.s32.totalorder %s18, 1
      %p50 = por %p48, %p49
      %p51 = scmp.ne.s32.totalorder %s40, %s41
      %p52 = scmp.eq.s32.totalorder %s18, 0
      %p53 = por %p51, %p52
      %p54 = scmp.ne.s32.totalorder %s40, %s41
      %p55 = scmp.eq.s32.totalorder %s19, 1
      %p56 = por %p54, %p55
      %p58 = scmp.ne.s32.totalorder %s41, %s57
      %p59 = scmp.eq.s32.totalorder %s19, 0
      %p60 = por %p58, %p59
      %s62 = sadd.s32 %s61, 1
      %p65 = scmp.eq.s32.totalorder %s13, 1
      %p66 = scmp.ne.s32.totalorder %s61, %s63
      %p67 = scmp.eq.s32.totalorder %s13, 0
      %p68 = por %p66, %p67
      %p69 = scmp.ne.s32.totalorder %s61, %s63
      %p70 = scmp.eq.s32.totalorder %s18, 1
      %p71 = por %p69, %p70
      %p72 = scmp.ne.s32.totalorder %s63, %s64
      %p73 = scmp.eq.s32.totalorder %s18, 0
      %p74 = por %p72, %p73
      %p75 = scmp.ne.s32.totalorder %s63, %s64
      %p76 = scmp.eq.s32.totalorder %s19, 1
      %p77 = por %p75, %p76
      %p79 = scmp.ne.s32.totalorder %s64, %s78
      %p80 = scmp.eq.s32.totalorder %s19, 0
      %p81 = por %p79, %p80
      %s83 = sadd.s32 %s82, 1
      %p86 = scmp.eq.s32.totalorder %s13, 1
      %p87 = scmp.ne.s32.totalorder %s82, %s84
      %p88 = scmp.eq.s32.totalorder %s13, 0
      %p89 = por %p87, %p88
      %p90 = scmp.ne.s32.totalorder %s82, %s84
      %p91 = scmp.eq.s32.totalorder %s18, 1
      %p92 = por %p90, %p91
      %p93 = scmp.ne.s32.totalorder %s84, %s85
      %p94 = scmp.eq.s32.totalorder %s18, 0
      %p95 = por %p93, %p94
      %p96 = scmp.ne.s32.totalorder %s84, %s85
      %p97 = scmp.eq.s32.totalorder %s19, 1
      %p98 = por %p96, %p97
      %p100 = scmp.ne.s32.totalorder %s85, %s99
      %p101 = scmp.eq.s32.totalorder %s19, 0
      %p102 = por %p100, %p101
      %s104 = sadd.s32 %s103, 1
      %p107 = scmp.eq.s32.totalorder %s13, 1
      %p108 = scmp.ne.s32.totalorder %s103, %s105
      %p109 = scmp.eq.s32.totalorder %s13, 0
      %p110 = por %p108, %p109
      %p111 = scmp.ne.s32.totalorder %s103, %s105
      %p112 = scmp.eq.s32.totalorder %s18, 1
      %p113 = por %p111, %p112
      %p114 = scmp.ne.s32.totalorder %s105, %s106
      %p115 = scmp.eq.s32.totalorder %s18, 0
      %p116 = por %p114, %p115
      %p117 = scmp.ne.s32.totalorder %s105, %s106
      %p118 = scmp.eq.s32.totalorder %s19, 1
      %p119 = por %p117, %p118
      %p121 = scmp.ne.s32.totalorder %s106, %s120
      %p122 = scmp.eq.s32.totalorder %s19, 0
      %p123 = por %p121, %p122
      %s124 = ssub.s32 %s20, %s32
      %s125 = ssub.s32 %s21, %s28
      %s126 = sor.u32 %s124, %s125
      %p127 = scmp.eq.s32.totalorder %s126, 0
      %s129 = sadd.s32 %s128, 1
      %s130 = scalar_select %p127, %s128, %s129
      %p133 = pneg %p127
      %p134 = scmp.eq.s32.totalorder %s13, 1
      %p135 = por %p133, %p134
      %p136 = scmp.ne.s32.totalorder %s128, %s131
      %p137 = scmp.eq.s32.totalorder %s13, 0
      %p138 = por %p136, %p137
      %p139 = scmp.ne.s32.totalorder %s128, %s131
      %p140 = scmp.eq.s32.totalorder %s18, 1
      %p141 = por %p139, %p140
      %p142 = scmp.ne.s32.totalorder %s131, %s132
      %p143 = scmp.eq.s32.totalorder %s18, 0
      %p144 = por %p142, %p143
      %p145 = scmp.ne.s32.totalorder %s131, %s132
      %p146 = scmp.eq.s32.totalorder %s19, 1
      %p147 = por %p145, %p146
      %p149 = scmp.ne.s32.totalorder %s132, %s148
      %p150 = scmp.eq.s32.totalorder %s19, 0
      %p151 = por %p149, %p150
      %p152 = scmp.le.s32.totalorder 1, %s13
      %p153 = scmp.lt.s32.totalorder %s13, 3
      %p154 = pnand %p152, %p153
      %p155 = pneg %p154
      // Predicated region
      $region9: #{tpu_custom_call.1} parent=5 // pred_check
        _
      $region10: #{tpu_custom_call.1} parent=5 // pred_check_branch
        %157 = sbr.rel (%p154) target = $region12
      $region11: #{tpu_custom_call.1} parent=5 // pred_region
        %s158 = ssub.s32 %s13, 1
        // Predicated region
        $region13: #{tpu_custom_call.1} parent=11 // pred_check
          %p159 = pneg %p74
        $region14: #{tpu_custom_call.1} parent=11 // pred_check_branch
          %161 = sbr.rel (%p159) target = $region16
        $region15: #{tpu_custom_call.1} parent=11 // pred_region
          _
        $region16: #{tpu_custom_call.1} parent=11 // pred_fallthru
          _
        // Predicated region
        $region17: #{tpu_custom_call.1} parent=11 // pred_check
          %p162 = pneg %p95
        $region18: #{tpu_custom_call.1} parent=11 // pred_check_branch
          %164 = sbr.rel (%p162) target = $region20
        $region19: #{tpu_custom_call.1} parent=11 // pred_region
          _
        $region20: #{tpu_custom_call.1} parent=11 // pred_fallthru
          _
        // Predicated region
        $region21: #{tpu_custom_call.1} parent=11 // pred_check
          %p165 = pneg %p116
        $region22: #{tpu_custom_call.1} parent=11 // pred_check_branch
          %167 = sbr.rel (%p165) target = $region24
        $region23: #{tpu_custom_call.1} parent=11 // pred_region
          _
        $region24: #{tpu_custom_call.1} parent=11 // pred_fallthru
          _
      $region12: #{tpu_custom_call.1} parent=5 // pred_fallthru
        _
      %p168 = scmp.lt.s32.totalorder %s13, 2
      // Predicated region
      $region25: #{tpu_custom_call.1} parent=5 // pred_check
        %p169 = pneg %p168
      $region26: #{tpu_custom_call.1} parent=5 // pred_check_branch
        %171 = sbr.rel (%p169) target = $region28
      $region27: #{tpu_custom_call.1} parent=5 // pred_region
        // Predicated region
        $region29: #{tpu_custom_call.1} parent=27 // pred_check
          %p172 = pneg %p47
        $region30: #{tpu_custom_call.1} parent=27 // pred_check_branch
          %174 = sbr.rel (%p172) target = $region32
        $region31: #{tpu_custom_call.1} parent=27 // pred_region
          %s175 = smul.u32 2, %s21
          %p176 = scmp.lt.s32.totalorder %s20, 1
          %s177 = scalar_select %p176, %s20, 1
          %p178 = scmp.lt.s32.totalorder %s175, 1
          %s179 = scalar_select %p178, %s175, 1
          %s180 = smul.addr %s177, 2
          %s181 = sadd.s32 %s179, %s180
          %s182 = smul.addr %s181, 2
          %s183 = scalar_lea.vmem %s0, %s182
          %s184 = smul.u32 2, %s21
        $region32: #{tpu_custom_call.1} parent=27 // pred_fallthru
          _
      $region28: #{tpu_custom_call.1} parent=5 // pred_fallthru
        _
      %p185 = scmp.le.s32.totalorder 1, %s13
      %p186 = scmp.lt.s32.totalorder %s13, 3
      %p187 = pnand %p185, %p186
      %p188 = pneg %p187
      // Predicated region
      $region33: #{tpu_custom_call.1} parent=5 // pred_check
        _
      $region34: #{tpu_custom_call.1} parent=5 // pred_check_branch
        %190 = sbr.rel (%p187) target = $region36
      $region35: #{tpu_custom_call.1} parent=5 // pred_region
        %s191 = ssub.s32 %s13, 1
        %s192 = smul.u32 2, %s23
        %p193 = scmp.lt.s32.totalorder %s22, 1
        %s194 = scalar_select %p193, %s22, 1
        %p195 = scmp.lt.s32.totalorder %s192, 1
        %s196 = scalar_select %p195, %s192, 1
        %s197 = smul.addr %s194, 2
        %s198 = sadd.s32 %s196, %s197
        %s199 = smul.addr %s198, 2
        %s200 = scalar_lea.vmem %s0, %s199
        %p201 = pneg %p53
        %p202 = pneg %p50
        %p203 = pneg %p74
        %p204 = pneg %p71
        %p205 = pneg %p95
        %p206 = pneg %p92
        %p207 = pneg %p116
        %p208 = pneg %p113
        %p209 = pneg %p144
        %p210 = pneg %p141
        %s211 = sand.u32 %s131, 1
        %s212 = scalar_lea.sflag [#allocation3], %s211
        %s213 = sand.u32 %s131, 1
        %s214 = smul.addr %s213, 512
        %s215 = scalar_lea.vmem [#allocation2], %s214
        %s216 = smul.u32 2, %s23
        %p217 = scmp.lt.s32.totalorder %s22, 1
        %s218 = scalar_select %p217, %s22, 1
        %p219 = scmp.lt.s32.totalorder %s216, 1
        %s220 = scalar_select %p219, %s216, 1
        %s221 = smul.addr %s218, 2
        %s222 = sadd.s32 %s220, %s221
        %s223 = smul.addr %s222, 2
        %s224 = scalar_lea.vmem %s0, %s223
        %s225 = smul.u32 2, %s23
        %s226 = smul.u32 2, %s23
        %v227 = vld [vmem:[%s224] ss:$2 sm:$0x3]
        %s228 = scalar_lea.vmem %s224, 1
        %v229 = vld [vmem:[%s228] ss:$2 sm:$0x3]
        %v230 = vld [vmem:[%s1] sm:$0xff]
        %v231 = vld [vmem:[%s1 + $0x8] sm:$0xff]
        %v232 = vld [vmem:[%s1 + $0x10] sm:$0xff]
        %v233 = vld [vmem:[%s1 + $0x18] sm:$0xff]
        %v234 = vld [vmem:[%s1 + $0x20] sm:$0xff]
        %v235 = vld [vmem:[%s1 + $0x28] sm:$0xff]
        %v236 = vld [vmem:[%s1 + $0x30] sm:$0xff]
        %v237 = vld [vmem:[%s1 + $0x38] sm:$0xff]
        %v238 = vld [vmem:[%s1 + $0x40] sm:$0xff]
        %v239 = vld [vmem:[%s1 + $0x48] sm:$0xff]
        %v240 = vld [vmem:[%s1 + $0x50] sm:$0xff]
        %v241 = vld [vmem:[%s1 + $0x58] sm:$0xff]
        %v242 = vld [vmem:[%s1 + $0x60] sm:$0xff]
        %v243 = vld [vmem:[%s1 + $0x68] sm:$0xff]
        %v244 = vld [vmem:[%s1 + $0x70] sm:$0xff]
        %v245 = vld [vmem:[%s1 + $0x78] sm:$0xff]
        %v246 = vld [vmem:[%s1 + $0x80] sm:$0xff]
        %v247 = vld [vmem:[%s1 + $0x88] sm:$0xff]
        %v248 = vld [vmem:[%s1 + $0x90] sm:$0xff]
        %v249 = vld [vmem:[%s1 + $0x98] sm:$0xff]
        %v250 = vld [vmem:[%s1 + $0xa0] sm:$0xff]
        %v251 = vld [vmem:[%s1 + $0xa8] sm:$0xff]
        %v252 = vld [vmem:[%s1 + $0xb0] sm:$0xff]
        %v253 = vld [vmem:[%s1 + $0xb8] sm:$0xff]
        %v254 = vld [vmem:[%s1 + $0xc0] sm:$0xff]
        %v255 = vld [vmem:[%s1 + $0xc8] sm:$0xff]
        %v256 = vld [vmem:[%s1 + $0xd0] sm:$0xff]
        %v257 = vld [vmem:[%s1 + $0xd8] sm:$0xff]
        %v258 = vld [vmem:[%s1 + $0xe0] sm:$0xff]
        %v259 = vld [vmem:[%s1 + $0xe8] sm:$0xff]
        %v260 = vld [vmem:[%s1 + $0xf0] sm:$0xff]
        %v261 = vld [vmem:[%s1 + $0xf8] sm:$0xff]
        %263 = vset.pattern.permute.xlu0 0
        %264 = vperm.xlu0 %263, %v230
        %v265 = vpop.permute.xlu0 %264
        %268 = vset.pattern.permute.xlu0 0
        %269 = vperm.xlu0 %268, %v231
        %v270 = vpop.permute.xlu0 %269
        %273 = vset.pattern.permute.xlu0 0
        %274 = vperm.xlu0 %273, %v232
        %v275 = vpop.permute.xlu0 %274
        %278 = vset.pattern.permute.xlu0 0
        %279 = vperm.xlu0 %278, %v233
        %v280 = vpop.permute.xlu0 %279
        %283 = vset.pattern.permute.xlu0 0
        %284 = vperm.xlu0 %283, %v234
        %v285 = vpop.permute.xlu0 %284
        %288 = vset.pattern.permute.xlu0 0
        %289 = vperm.xlu0 %288, %v235
        %v290 = vpop.permute.xlu0 %289
        %293 = vset.pattern.permute.xlu0 0
        %294 = vperm.xlu0 %293, %v236
        %v295 = vpop.permute.xlu0 %294
        %298 = vset.pattern.permute.xlu0 0
        %299 = vperm.xlu0 %298, %v237
        %v300 = vpop.permute.xlu0 %299
        %303 = vset.pattern.permute.xlu0 0
        %304 = vperm.xlu0 %303, %v238
        %v305 = vpop.permute.xlu0 %304
        %308 = vset.pattern.permute.xlu0 0
        %309 = vperm.xlu0 %308, %v239
        %v310 = vpop.permute.xlu0 %309
        %313 = vset.pattern.permute.xlu0 0
        %314 = vperm.xlu0 %313, %v240
        %v315 = vpop.permute.xlu0 %314
        %318 = vset.pattern.permute.xlu0 0
        %319 = vperm.xlu0 %318, %v241
        %v320 = vpop.permute.xlu0 %319
        %323 = vset.pattern.permute.xlu0 0
        %324 = vperm.xlu0 %323, %v242
        %v325 = vpop.permute.xlu0 %324
        %328 = vset.pattern.permute.xlu0 0
        %329 = vperm.xlu0 %328, %v243
        %v330 = vpop.permute.xlu0 %329
        %333 = vset.pattern.permute.xlu0 0
        %334 = vperm.xlu0 %333, %v244
        %v335 = vpop.permute.xlu0 %334
        %338 = vset.pattern.permute.xlu0 0
        %339 = vperm.xlu0 %338, %v245
        %v340 = vpop.permute.xlu0 %339
        %343 = vset.pattern.permute.xlu0 0
        %344 = vperm.xlu0 %343, %v246
        %v345 = vpop.permute.xlu0 %344
        %348 = vset.pattern.permute.xlu0 0
        %349 = vperm.xlu0 %348, %v247
        %v350 = vpop.permute.xlu0 %349
        %353 = vset.pattern.permute.xlu0 0
        %354 = vperm.xlu0 %353, %v248
        %v355 = vpop.permute.xlu0 %354
        %358 = vset.pattern.permute.xlu0 0
        %359 = vperm.xlu0 %358, %v249
        %v360 = vpop.permute.xlu0 %359
        %363 = vset.pattern.permute.xlu0 0
        %364 = vperm.xlu0 %363, %v250
        %v365 = vpop.permute.xlu0 %364
        %368 = vset.pattern.permute.xlu0 0
        %369 = vperm.xlu0 %368, %v251
        %v370 = vpop.permute.xlu0 %369
        %373 = vset.pattern.permute.xlu0 0
        %374 = vperm.xlu0 %373, %v252
        %v375 = vpop.permute.xlu0 %374
        %378 = vset.pattern.permute.xlu0 0
        %379 = vperm.xlu0 %378, %v253
        %v380 = vpop.permute.xlu0 %379
        %383 = vset.pattern.permute.xlu0 0
        %384 = vperm.xlu0 %383, %v254
        %v385 = vpop.permute.xlu0 %384
        %388 = vset.pattern.permute.xlu0 0
        %389 = vperm.xlu0 %388, %v255
        %v390 = vpop.permute.xlu0 %389
        %393 = vset.pattern.permute.xlu0 0
        %394 = vperm.xlu0 %393, %v256
        %v395 = vpop.permute.xlu0 %394
        %398 = vset.pattern.permute.xlu0 0
        %399 = vperm.xlu0 %398, %v257
        %v400 = vpop.permute.xlu0 %399
        %403 = vset.pattern.permute.xlu0 0
        %404 = vperm.xlu0 %403, %v258
        %v405 = vpop.permute.xlu0 %404
        %408 = vset.pattern.permute.xlu0 0
        %409 = vperm.xlu0 %408, %v259
        %v410 = vpop.permute.xlu0 %409
        %413 = vset.pattern.permute.xlu0 0
        %414 = vperm.xlu0 %413, %v260
        %v415 = vpop.permute.xlu0 %414
        %418 = vset.pattern.permute.xlu0 0
        %419 = vperm.xlu0 %418, %v261
        %v420 = vpop.permute.xlu0 %419
        %v423 = vlaneseq
        %v424 = vshrl.u32 %v423, 7
        %v425 = vsub.s32 0, %v424
        %v426 = vrot.slane %v227, %v425
        %v427 = vlaneseq
        %v428 = vshrl.u32 %v427, 7
        %v429 = vsub.s32 1, %v428
        %v430 = vrot.slane %v227, %v429
        %v433 = vmul.f32 %v265, %v426
        %v434 = vmul.f32 %v265, %v430
        %v435 = vmul.f32 %v270, %v426
        %v436 = vmul.f32 %v270, %v430
        %v437 = vmul.f32 %v275, %v426
        %v438 = vmul.f32 %v275, %v430
        %v439 = vmul.f32 %v280, %v426
        %v440 = vmul.f32 %v280, %v430
        %v441 = vmul.f32 %v285, %v426
        %v442 = vmul.f32 %v285, %v430
        %v443 = vmul.f32 %v290, %v426
        %v444 = vmul.f32 %v290, %v430
        %v445 = vmul.f32 %v295, %v426
        %v446 = vmul.f32 %v295, %v430
        %v447 = vmul.f32 %v300, %v426
        %v448 = vmul.f32 %v300, %v430
        %v449 = vmul.f32 %v305, %v426
        %v450 = vmul.f32 %v305, %v430
        %v451 = vmul.f32 %v310, %v426
        %v452 = vmul.f32 %v310, %v430
        %v453 = vmul.f32 %v315, %v426
        %v454 = vmul.f32 %v315, %v430
        %v455 = vmul.f32 %v320, %v426
        %v456 = vmul.f32 %v320, %v430
        %v457 = vmul.f32 %v325, %v426
        %v458 = vmul.f32 %v325, %v430
        %v459 = vmul.f32 %v330, %v426
        %v460 = vmul.f32 %v330, %v430
        %v461 = vmul.f32 %v335, %v426
        %v462 = vmul.f32 %v335, %v430
        %v463 = vmul.f32 %v340, %v426
        %v464 = vmul.f32 %v340, %v430
        %v465 = vmul.f32 %v345, %v426
        %v466 = vmul.f32 %v345, %v430
        %v467 = vmul.f32 %v350, %v426
        %v468 = vmul.f32 %v350, %v430
        %v469 = vmul.f32 %v355, %v426
        %v470 = vmul.f32 %v355, %v430
        %v471 = vmul.f32 %v360, %v426
        %v472 = vmul.f32 %v360, %v430
        %v473 = vmul.f32 %v365, %v426
        %v474 = vmul.f32 %v365, %v430
        %v475 = vmul.f32 %v370, %v426
        %v476 = vmul.f32 %v370, %v430
        %v477 = vmul.f32 %v375, %v426
        %v478 = vmul.f32 %v375, %v430
        %v479 = vmul.f32 %v380, %v426
        %v480 = vmul.f32 %v380, %v430
        %v481 = vmul.f32 %v385, %v426
        %v482 = vmul.f32 %v385, %v430
        %v483 = vmul.f32 %v390, %v426
        %v484 = vmul.f32 %v390, %v430
        %v485 = vmul.f32 %v395, %v426
        %v486 = vmul.f32 %v395, %v430
        %v487 = vmul.f32 %v400, %v426
        %v488 = vmul.f32 %v400, %v430
        %v489 = vmul.f32 %v405, %v426
        %v490 = vmul.f32 %v405, %v430
        %v491 = vmul.f32 %v410, %v426
        %v492 = vmul.f32 %v410, %v430
        %v493 = vmul.f32 %v415, %v426
        %v494 = vmul.f32 %v415, %v430
        %v495 = vmul.f32 %v420, %v426
        %v496 = vmul.f32 %v420, %v430
        %v497 = vld [vmem:[%s2] sm:$0xff]
        %v498 = vld [vmem:[%s2 + $0x8] sm:$0xff]
        %v499 = vld [vmem:[%s2 + $0x10] sm:$0xff]
        %v500 = vld [vmem:[%s2 + $0x18] sm:$0xff]
        %v501 = vld [vmem:[%s2 + $0x20] sm:$0xff]
        %v502 = vld [vmem:[%s2 + $0x28] sm:$0xff]
        %v503 = vld [vmem:[%s2 + $0x30] sm:$0xff]
        %v504 = vld [vmem:[%s2 + $0x38] sm:$0xff]
        %v505 = vld [vmem:[%s2 + $0x40] sm:$0xff]
        %v506 = vld [vmem:[%s2 + $0x48] sm:$0xff]
        %v507 = vld [vmem:[%s2 + $0x50] sm:$0xff]
        %v508 = vld [vmem:[%s2 + $0x58] sm:$0xff]
        %v509 = vld [vmem:[%s2 + $0x60] sm:$0xff]
        %v510 = vld [vmem:[%s2 + $0x68] sm:$0xff]
        %v511 = vld [vmem:[%s2 + $0x70] sm:$0xff]
        %v512 = vld [vmem:[%s2 + $0x78] sm:$0xff]
        %v513 = vld [vmem:[%s2 + $0x80] sm:$0xff]
        %v514 = vld [vmem:[%s2 + $0x88] sm:$0xff]
        %v515 = vld [vmem:[%s2 + $0x90] sm:$0xff]
        %v516 = vld [vmem:[%s2 + $0x98] sm:$0xff]
        %v517 = vld [vmem:[%s2 + $0xa0] sm:$0xff]
        %v518 = vld [vmem:[%s2 + $0xa8] sm:$0xff]
        %v519 = vld [vmem:[%s2 + $0xb0] sm:$0xff]
        %v520 = vld [vmem:[%s2 + $0xb8] sm:$0xff]
        %v521 = vld [vmem:[%s2 + $0xc0] sm:$0xff]
        %v522 = vld [vmem:[%s2 + $0xc8] sm:$0xff]
        %v523 = vld [vmem:[%s2 + $0xd0] sm:$0xff]
        %v524 = vld [vmem:[%s2 + $0xd8] sm:$0xff]
        %v525 = vld [vmem:[%s2 + $0xe0] sm:$0xff]
        %v526 = vld [vmem:[%s2 + $0xe8] sm:$0xff]
        %v527 = vld [vmem:[%s2 + $0xf0] sm:$0xff]
        %v528 = vld [vmem:[%s2 + $0xf8] sm:$0xff]
        %530 = vset.pattern.permute.xlu0 0
        %531 = vperm.xlu0 %530, %v497
        %v532 = vpop.permute.xlu0 %531
        %535 = vset.pattern.permute.xlu0 0
        %536 = vperm.xlu0 %535, %v498
        %v537 = vpop.permute.xlu0 %536
        %540 = vset.pattern.permute.xlu0 0
        %541 = vperm.xlu0 %540, %v499
        %v542 = vpop.permute.xlu0 %541
        %545 = vset.pattern.permute.xlu0 0
        %546 = vperm.xlu0 %545, %v500
        %v547 = vpop.permute.xlu0 %546
        %550 = vset.pattern.permute.xlu0 0
        %551 = vperm.xlu0 %550, %v501
        %v552 = vpop.permute.xlu0 %551
        %555 = vset.pattern.permute.xlu0 0
        %556 = vperm.xlu0 %555, %v502
        %v557 = vpop.permute.xlu0 %556
        %560 = vset.pattern.permute.xlu0 0
        %561 = vperm.xlu0 %560, %v503
        %v562 = vpop.permute.xlu0 %561
        %565 = vset.pattern.permute.xlu0 0
        %566 = vperm.xlu0 %565, %v504
        %v567 = vpop.permute.xlu0 %566
        %570 = vset.pattern.permute.xlu0 0
        %571 = vperm.xlu0 %570, %v505
        %v572 = vpop.permute.xlu0 %571
        %575 = vset.pattern.permute.xlu0 0
        %576 = vperm.xlu0 %575, %v506
        %v577 = vpop.permute.xlu0 %576
        %580 = vset.pattern.permute.xlu0 0
        %581 = vperm.xlu0 %580, %v507
        %v582 = vpop.permute.xlu0 %581
        %585 = vset.pattern.permute.xlu0 0
        %586 = vperm.xlu0 %585, %v508
        %v587 = vpop.permute.xlu0 %586
        %590 = vset.pattern.permute.xlu0 0
        %591 = vperm.xlu0 %590, %v509
        %v592 = vpop.permute.xlu0 %591
        %595 = vset.pattern.permute.xlu0 0
        %596 = vperm.xlu0 %595, %v510
        %v597 = vpop.permute.xlu0 %596
        %600 = vset.pattern.permute.xlu0 0
        %601 = vperm.xlu0 %600, %v511
        %v602 = vpop.permute.xlu0 %601
        %605 = vset.pattern.permute.xlu0 0
        %606 = vperm.xlu0 %605, %v512
        %v607 = vpop.permute.xlu0 %606
        %610 = vset.pattern.permute.xlu0 0
        %611 = vperm.xlu0 %610, %v513
        %v612 = vpop.permute.xlu0 %611
        %615 = vset.pattern.permute.xlu0 0
        %616 = vperm.xlu0 %615, %v514
        %v617 = vpop.permute.xlu0 %616
        %620 = vset.pattern.permute.xlu0 0
        %621 = vperm.xlu0 %620, %v515
        %v622 = vpop.permute.xlu0 %621
        %625 = vset.pattern.permute.xlu0 0
        %626 = vperm.xlu0 %625, %v516
        %v627 = vpop.permute.xlu0 %626
        %630 = vset.pattern.permute.xlu0 0
        %631 = vperm.xlu0 %630, %v517
        %v632 = vpop.permute.xlu0 %631
        %635 = vset.pattern.permute.xlu0 0
        %636 = vperm.xlu0 %635, %v518
        %v637 = vpop.permute.xlu0 %636
        %640 = vset.pattern.permute.xlu0 0
        %641 = vperm.xlu0 %640, %v519
        %v642 = vpop.permute.xlu0 %641
        %645 = vset.pattern.permute.xlu0 0
        %646 = vperm.xlu0 %645, %v520
        %v647 = vpop.permute.xlu0 %646
        %650 = vset.pattern.permute.xlu0 0
        %651 = vperm.xlu0 %650, %v521
        %v652 = vpop.permute.xlu0 %651
        %655 = vset.pattern.permute.xlu0 0
        %656 = vperm.xlu0 %655, %v522
        %v657 = vpop.permute.xlu0 %656
        %660 = vset.pattern.permute.xlu0 0
        %661 = vperm.xlu0 %660, %v523
        %v662 = vpop.permute.xlu0 %661
        %665 = vset.pattern.permute.xlu0 0
        %666 = vperm.xlu0 %665, %v524
        %v667 = vpop.permute.xlu0 %666
        %670 = vset.pattern.permute.xlu0 0
        %671 = vperm.xlu0 %670, %v525
        %v672 = vpop.permute.xlu0 %671
        %675 = vset.pattern.permute.xlu0 0
        %676 = vperm.xlu0 %675, %v526
        %v677 = vpop.permute.xlu0 %676
        %680 = vset.pattern.permute.xlu0 0
        %681 = vperm.xlu0 %680, %v527
        %v682 = vpop.permute.xlu0 %681
        %685 = vset.pattern.permute.xlu0 0
        %686 = vperm.xlu0 %685, %v528
        %v687 = vpop.permute.xlu0 %686
        %v690 = vlaneseq
        %v691 = vshrl.u32 %v690, 7
        %v692 = vsub.s32 0, %v691
        %v693 = vrot.slane %v229, %v692
        %v694 = vlaneseq
        %v695 = vshrl.u32 %v694, 7
        %v696 = vsub.s32 1, %v695
        %v697 = vrot.slane %v229, %v696
        %v700 = vmul.f32 %v532, %v693
        %v701 = vmul.f32 %v532, %v697
        %v702 = vmul.f32 %v537, %v693
        %v703 = vmul.f32 %v537, %v697
        %v704 = vmul.f32 %v542, %v693
        %v705 = vmul.f32 %v542, %v697
        %v706 = vmul.f32 %v547, %v693
        %v707 = vmul.f32 %v547, %v697
        %v708 = vmul.f32 %v552, %v693
        %v709 = vmul.f32 %v552, %v697
        %v710 = vmul.f32 %v557, %v693
        %v711 = vmul.f32 %v557, %v697
        %v712 = vmul.f32 %v562, %v693
        %v713 = vmul.f32 %v562, %v697
        %v714 = vmul.f32 %v567, %v693
        %v715 = vmul.f32 %v567, %v697
        %v716 = vmul.f32 %v572, %v693
        %v717 = vmul.f32 %v572, %v697
        %v718 = vmul.f32 %v577, %v693
        %v719 = vmul.f32 %v577, %v697
        %v720 = vmul.f32 %v582, %v693
        %v721 = vmul.f32 %v582, %v697
        %v722 = vmul.f32 %v587, %v693
        %v723 = vmul.f32 %v587, %v697
        %v724 = vmul.f32 %v592, %v693
        %v725 = vmul.f32 %v592, %v697
        %v726 = vmul.f32 %v597, %v693
        %v727 = vmul.f32 %v597, %v697
        %v728 = vmul.f32 %v602, %v693
        %v729 = vmul.f32 %v602, %v697
        %v730 = vmul.f32 %v607, %v693
        %v731 = vmul.f32 %v607, %v697
        %v732 = vmul.f32 %v612, %v693
        %v733 = vmul.f32 %v612, %v697
        %v734 = vmul.f32 %v617, %v693
        %v735 = vmul.f32 %v617, %v697
        %v736 = vmul.f32 %v622, %v693
        %v737 = vmul.f32 %v622, %v697
        %v738 = vmul.f32 %v627, %v693
        %v739 = vmul.f32 %v627, %v697
        %v740 = vmul.f32 %v632, %v693
        %v741 = vmul.f32 %v632, %v697
        %v742 = vmul.f32 %v637, %v693
        %v743 = vmul.f32 %v637, %v697
        %v744 = vmul.f32 %v642, %v693
        %v745 = vmul.f32 %v642, %v697
        %v746 = vmul.f32 %v647, %v693
        %v747 = vmul.f32 %v647, %v697
        %v748 = vmul.f32 %v652, %v693
        %v749 = vmul.f32 %v652, %v697
        %v750 = vmul.f32 %v657, %v693
        %v751 = vmul.f32 %v657, %v697
        %v752 = vmul.f32 %v662, %v693
        %v753 = vmul.f32 %v662, %v697
        %v754 = vmul.f32 %v667, %v693
        %v755 = vmul.f32 %v667, %v697
        %v756 = vmul.f32 %v672, %v693
        %v757 = vmul.f32 %v672, %v697
        %v758 = vmul.f32 %v677, %v693
        %v759 = vmul.f32 %v677, %v697
        %v760 = vmul.f32 %v682, %v693
        %v761 = vmul.f32 %v682, %v697
        %v762 = vmul.f32 %v687, %v693
        %v763 = vmul.f32 %v687, %v697
        %v764 = vadd.f32 %v433, %v700
        %v765 = vadd.f32 %v434, %v701
        %v766 = vadd.f32 %v435, %v702
        %v767 = vadd.f32 %v436, %v703
        %v768 = vadd.f32 %v437, %v704
        %v769 = vadd.f32 %v438, %v705
        %v770 = vadd.f32 %v439, %v706
        %v771 = vadd.f32 %v440, %v707
        %v772 = vadd.f32 %v441, %v708
        %v773 = vadd.f32 %v442, %v709
        %v774 = vadd.f32 %v443, %v710
        %v775 = vadd.f32 %v444, %v711
        %v776 = vadd.f32 %v445, %v712
        %v777 = vadd.f32 %v446, %v713
        %v778 = vadd.f32 %v447, %v714
        %v779 = vadd.f32 %v448, %v715
        %v780 = vadd.f32 %v449, %v716
        %v781 = vadd.f32 %v450, %v717
        %v782 = vadd.f32 %v451, %v718
        %v783 = vadd.f32 %v452, %v719
        %v784 = vadd.f32 %v453, %v720
        %v785 = vadd.f32 %v454, %v721
        %v786 = vadd.f32 %v455, %v722
        %v787 = vadd.f32 %v456, %v723
        %v788 = vadd.f32 %v457, %v724
        %v789 = vadd.f32 %v458, %v725
        %v790 = vadd.f32 %v459, %v726
        %v791 = vadd.f32 %v460, %v727
        %v792 = vadd.f32 %v461, %v728
        %v793 = vadd.f32 %v462, %v729
        %v794 = vadd.f32 %v463, %v730
        %v795 = vadd.f32 %v464, %v731
        %v796 = vadd.f32 %v465, %v732
        %v797 = vadd.f32 %v466, %v733
        %v798 = vadd.f32 %v467, %v734
        %v799 = vadd.f32 %v468, %v735
        %v800 = vadd.f32 %v469, %v736
        %v801 = vadd.f32 %v470, %v737
        %v802 = vadd.f32 %v471, %v738
        %v803 = vadd.f32 %v472, %v739
        %v804 = vadd.f32 %v473, %v740
        %v805 = vadd.f32 %v474, %v741
        %v806 = vadd.f32 %v475, %v742
        %v807 = vadd.f32 %v476, %v743
        %v808 = vadd.f32 %v477, %v744
        %v809 = vadd.f32 %v478, %v745
        %v810 = vadd.f32 %v479, %v746
        %v811 = vadd.f32 %v480, %v747
        %v812 = vadd.f32 %v481, %v748
        %v813 = vadd.f32 %v482, %v749
        %v814 = vadd.f32 %v483, %v750
        %v815 = vadd.f32 %v484, %v751
        %v816 = vadd.f32 %v485, %v752
        %v817 = vadd.f32 %v486, %v753
        %v818 = vadd.f32 %v487, %v754
        %v819 = vadd.f32 %v488, %v755
        %v820 = vadd.f32 %v489, %v756
        %v821 = vadd.f32 %v490, %v757
        %v822 = vadd.f32 %v491, %v758
        %v823 = vadd.f32 %v492, %v759
        %v824 = vadd.f32 %v493, %v760
        %v825 = vadd.f32 %v494, %v761
        %v826 = vadd.f32 %v495, %v762
        %v827 = vadd.f32 %v496, %v763
        %v828 = vld [vmem:[%s3] sm:$0xff]
        %v829 = vld [vmem:[%s3 + $0x8] sm:$0xff]
        %v830 = vld [vmem:[%s3 + $0x10] sm:$0xff]
        %v831 = vld [vmem:[%s3 + $0x18] sm:$0xff]
        %v832 = vld [vmem:[%s3 + $0x20] sm:$0xff]
        %v833 = vld [vmem:[%s3 + $0x28] sm:$0xff]
        %v834 = vld [vmem:[%s3 + $0x30] sm:$0xff]
        %v835 = vld [vmem:[%s3 + $0x38] sm:$0xff]
        %v836 = vld [vmem:[%s3 + $0x40] sm:$0xff]
        %v837 = vld [vmem:[%s3 + $0x48] sm:$0xff]
        %v838 = vld [vmem:[%s3 + $0x50] sm:$0xff]
        %v839 = vld [vmem:[%s3 + $0x58] sm:$0xff]
        %v840 = vld [vmem:[%s3 + $0x60] sm:$0xff]
        %v841 = vld [vmem:[%s3 + $0x68] sm:$0xff]
        %v842 = vld [vmem:[%s3 + $0x70] sm:$0xff]
        %v843 = vld [vmem:[%s3 + $0x78] sm:$0xff]
        %v844 = vld [vmem:[%s3 + $0x80] sm:$0xff]
        %v845 = vld [vmem:[%s3 + $0x88] sm:$0xff]
        %v846 = vld [vmem:[%s3 + $0x90] sm:$0xff]
        %v847 = vld [vmem:[%s3 + $0x98] sm:$0xff]
        %v848 = vld [vmem:[%s3 + $0xa0] sm:$0xff]
        %v849 = vld [vmem:[%s3 + $0xa8] sm:$0xff]
        %v850 = vld [vmem:[%s3 + $0xb0] sm:$0xff]
        %v851 = vld [vmem:[%s3 + $0xb8] sm:$0xff]
        %v852 = vld [vmem:[%s3 + $0xc0] sm:$0xff]
        %v853 = vld [vmem:[%s3 + $0xc8] sm:$0xff]
        %v854 = vld [vmem:[%s3 + $0xd0] sm:$0xff]
        %v855 = vld [vmem:[%s3 + $0xd8] sm:$0xff]
        %v856 = vld [vmem:[%s3 + $0xe0] sm:$0xff]
        %v857 = vld [vmem:[%s3 + $0xe8] sm:$0xff]
        %v858 = vld [vmem:[%s3 + $0xf0] sm:$0xff]
        %v859 = vld [vmem:[%s3 + $0xf8] sm:$0xff]
        %861 = vset.pattern.permute.xlu0 0
        %862 = vperm.xlu0 %861, %v828
        %v863 = vpop.permute.xlu0 %862
        %866 = vset.pattern.permute.xlu0 0
        %867 = vperm.xlu0 %866, %v829
        %v868 = vpop.permute.xlu0 %867
        %871 = vset.pattern.permute.xlu0 0
        %872 = vperm.xlu0 %871, %v830
        %v873 = vpop.permute.xlu0 %872
        %876 = vset.pattern.permute.xlu0 0
        %877 = vperm.xlu0 %876, %v831
        %v878 = vpop.permute.xlu0 %877
        %881 = vset.pattern.permute.xlu0 0
        %882 = vperm.xlu0 %881, %v832
        %v883 = vpop.permute.xlu0 %882
        %886 = vset.pattern.permute.xlu0 0
        %887 = vperm.xlu0 %886, %v833
        %v888 = vpop.permute.xlu0 %887
        %891 = vset.pattern.permute.xlu0 0
        %892 = vperm.xlu0 %891, %v834
        %v893 = vpop.permute.xlu0 %892
        %896 = vset.pattern.permute.xlu0 0
        %897 = vperm.xlu0 %896, %v835
        %v898 = vpop.permute.xlu0 %897
        %901 = vset.pattern.permute.xlu0 0
        %902 = vperm.xlu0 %901, %v836
        %v903 = vpop.permute.xlu0 %902
        %906 = vset.pattern.permute.xlu0 0
        %907 = vperm.xlu0 %906, %v837
        %v908 = vpop.permute.xlu0 %907
        %911 = vset.pattern.permute.xlu0 0
        %912 = vperm.xlu0 %911, %v838
        %v913 = vpop.permute.xlu0 %912
        %916 = vset.pattern.permute.xlu0 0
        %917 = vperm.xlu0 %916, %v839
        %v918 = vpop.permute.xlu0 %917
        %921 = vset.pattern.permute.xlu0 0
        %922 = vperm.xlu0 %921, %v840
        %v923 = vpop.permute.xlu0 %922
        %926 = vset.pattern.permute.xlu0 0
        %927 = vperm.xlu0 %926, %v841
        %v928 = vpop.permute.xlu0 %927
        %931 = vset.pattern.permute.xlu0 0
        %932 = vperm.xlu0 %931, %v842
        %v933 = vpop.permute.xlu0 %932
        %936 = vset.pattern.permute.xlu0 0
        %937 = vperm.xlu0 %936, %v843
        %v938 = vpop.permute.xlu0 %937
        %941 = vset.pattern.permute.xlu0 0
        %942 = vperm.xlu0 %941, %v844
        %v943 = vpop.permute.xlu0 %942
        %946 = vset.pattern.permute.xlu0 0
        %947 = vperm.xlu0 %946, %v845
        %v948 = vpop.permute.xlu0 %947
        %951 = vset.pattern.permute.xlu0 0
        %952 = vperm.xlu0 %951, %v846
        %v953 = vpop.permute.xlu0 %952
        %956 = vset.pattern.permute.xlu0 0
        %957 = vperm.xlu0 %956, %v847
        %v958 = vpop.permute.xlu0 %957
        %961 = vset.pattern.permute.xlu0 0
        %962 = vperm.xlu0 %961, %v848
        %v963 = vpop.permute.xlu0 %962
        %966 = vset.pattern.permute.xlu0 0
        %967 = vperm.xlu0 %966, %v849
        %v968 = vpop.permute.xlu0 %967
        %971 = vset.pattern.permute.xlu0 0
        %972 = vperm.xlu0 %971, %v850
        %v973 = vpop.permute.xlu0 %972
        %976 = vset.pattern.permute.xlu0 0
        %977 = vperm.xlu0 %976, %v851
        %v978 = vpop.permute.xlu0 %977
        %981 = vset.pattern.permute.xlu0 0
        %982 = vperm.xlu0 %981, %v852
        %v983 = vpop.permute.xlu0 %982
        %986 = vset.pattern.permute.xlu0 0
        %987 = vperm.xlu0 %986, %v853
        %v988 = vpop.permute.xlu0 %987
        %991 = vset.pattern.permute.xlu0 0
        %992 = vperm.xlu0 %991, %v854
        %v993 = vpop.permute.xlu0 %992
        %996 = vset.pattern.permute.xlu0 0
        %997 = vperm.xlu0 %996, %v855
        %v998 = vpop.permute.xlu0 %997
        %1001 = vset.pattern.permute.xlu0 0
        %1002 = vperm.xlu0 %1001, %v856
        %v1003 = vpop.permute.xlu0 %1002
        %1006 = vset.pattern.permute.xlu0 0
        %1007 = vperm.xlu0 %1006, %v857
        %v1008 = vpop.permute.xlu0 %1007
        %1011 = vset.pattern.permute.xlu0 0
        %1012 = vperm.xlu0 %1011, %v858
        %v1013 = vpop.permute.xlu0 %1012
        %1016 = vset.pattern.permute.xlu0 0
        %1017 = vperm.xlu0 %1016, %v859
        %v1018 = vpop.permute.xlu0 %1017
        %v1020 = vadd.f32 %v764, %v863
        %v1021 = vadd.f32 %v765, %v863
        %v1022 = vadd.f32 %v766, %v868
        %v1023 = vadd.f32 %v767, %v868
        %v1024 = vadd.f32 %v768, %v873
        %v1025 = vadd.f32 %v769, %v873
        %v1026 = vadd.f32 %v770, %v878
        %v1027 = vadd.f32 %v771, %v878
        %v1028 = vadd.f32 %v772, %v883
        %v1029 = vadd.f32 %v773, %v883
        %v1030 = vadd.f32 %v774, %v888
        %v1031 = vadd.f32 %v775, %v888
        %v1032 = vadd.f32 %v776, %v893
        %v1033 = vadd.f32 %v777, %v893
        %v1034 = vadd.f32 %v778, %v898
        %v1035 = vadd.f32 %v779, %v898
        %v1036 = vadd.f32 %v780, %v903
        %v1037 = vadd.f32 %v781, %v903
        %v1038 = vadd.f32 %v782, %v908
        %v1039 = vadd.f32 %v783, %v908
        %v1040 = vadd.f32 %v784, %v913
        %v1041 = vadd.f32 %v785, %v913
        %v1042 = vadd.f32 %v786, %v918
        %v1043 = vadd.f32 %v787, %v918
        %v1044 = vadd.f32 %v788, %v923
        %v1045 = vadd.f32 %v789, %v923
        %v1046 = vadd.f32 %v790, %v928
        %v1047 = vadd.f32 %v791, %v928
        %v1048 = vadd.f32 %v792, %v933
        %v1049 = vadd.f32 %v793, %v933
        %v1050 = vadd.f32 %v794, %v938
        %v1051 = vadd.f32 %v795, %v938
        %v1052 = vadd.f32 %v796, %v943
        %v1053 = vadd.f32 %v797, %v943
        %v1054 = vadd.f32 %v798, %v948
        %v1055 = vadd.f32 %v799, %v948
        %v1056 = vadd.f32 %v800, %v953
        %v1057 = vadd.f32 %v801, %v953
        %v1058 = vadd.f32 %v802, %v958
        %v1059 = vadd.f32 %v803, %v958
        %v1060 = vadd.f32 %v804, %v963
        %v1061 = vadd.f32 %v805, %v963
        %v1062 = vadd.f32 %v806, %v968
        %v1063 = vadd.f32 %v807, %v968
        %v1064 = vadd.f32 %v808, %v973
        %v1065 = vadd.f32 %v809, %v973
        %v1066 = vadd.f32 %v810, %v978
        %v1067 = vadd.f32 %v811, %v978
        %v1068 = vadd.f32 %v812, %v983
        %v1069 = vadd.f32 %v813, %v983
        %v1070 = vadd.f32 %v814, %v988
        %v1071 = vadd.f32 %v815, %v988
        %v1072 = vadd.f32 %v816, %v993
        %v1073 = vadd.f32 %v817, %v993
        %v1074 = vadd.f32 %v818, %v998
        %v1075 = vadd.f32 %v819, %v998
        %v1076 = vadd.f32 %v820, %v1003
        %v1077 = vadd.f32 %v821, %v1003
        %v1078 = vadd.f32 %v822, %v1008
        %v1079 = vadd.f32 %v823, %v1008
        %v1080 = vadd.f32 %v824, %v1013
        %v1081 = vadd.f32 %v825, %v1013
        %v1082 = vadd.f32 %v826, %v1018
        %v1083 = vadd.f32 %v827, %v1018
        %v1084 = vand.u32 2147483647, %v1020
        %vm1085 = vcmp.le.f32.partialorder %v1084, 0.7853982
        %vm1086 = vcmp.lt.s32.totalorder %v1020, 0
        %v1087 = vand.u32 %v1020, 2139095040
        %v1088 = vshrl.u32 %v1087, 23
        %v1089 = vsub.s32 %v1088, 127
        %v1090 = vand.u32 2147483647, %v1020
        %v1091 = vand.u32 %v1090, 8388607
        %v1092 = vor.u32 %v1091, 8388608
        %v1093 = vsub.s32 0, %v1092
        %v1094 = vadd.s32 %v1089, 1
        %vm1095 = vcmp.gt.s32.totalorder %v1094, 0
        %v1096 = vsel %vm1095, %v1094, 0
        %v1097 = vshrl.u32 %v1096, 5
        %v1098 = vand.u32 %v1096, 31
        %v1099 = vsub.s32 32, %v1098
        %v1100 = vshrl.u32 683565275, %v1099
        %v1101 = vshll.u32 683565275, %v1098
        %v1102 = vshrl.u32 2475754826, %v1099
        %v1103 = vor.u32 %v1101, %v1102
        %v1104 = vshll.u32 2475754826, %v1098
        %v1105 = vshrl.u32 2131351028, %v1099
        %v1106 = vor.u32 %v1104, %v1105
        %v1107 = vshll.u32 2131351028, %v1098
        %v1108 = vshrl.u32 2102212464, %v1099
        %v1109 = vor.u32 %v1107, %v1108
        %v1110 = vshll.u32 2102212464, %v1098
        %v1111 = vshrl.u32 920167782, %v1099
        %v1112 = vor.u32 %v1110, %v1111
        %v1113 = vshll.u32 920167782, %v1098
        %v1114 = vshrl.u32 1326507024, %v1099
        %v1115 = vor.u32 %v1113, %v1114
        %vm1116 = vcmp.lt.s32.totalorder %v1097, 1
        %vm1117 = vcmp.lt.s32.totalorder %v1097, 2
        %vm1118 = vcmp.lt.s32.totalorder %v1097, 3
        %vm1119 = vcmp.lt.s32.totalorder %v1097, 4
        %v1120 = vsel %vm1116, %v1100, %v1103
        %v1121 = vsel %vm1119, %v1109, 2102212464
        %v1122 = vsel %vm1118, %v1106, %v1121
        %v1123 = vsel %vm1117, %v1120, %v1122
        %v1124 = vsel %vm1116, %v1103, %v1106
        %v1125 = vsel %vm1119, %v1112, 920167782
        %v1126 = vsel %vm1118, %v1109, %v1125
        %v1127 = vsel %vm1117, %v1124, %v1126
        %v1128 = vsel %vm1116, %v1106, %v1109
        %v1129 = vsel %vm1119, %v1115, 1326507024
        %v1130 = vsel %vm1118, %v1112, %v1129
        %v1131 = vsel %vm1117, %v1128, %v1130
        %v1132 = vshll.u32 %v1092, 8
        %v1133 = vmul.u32.u64.compose %v1132, %v1131
        %v1134 = vextract.low.u32 %v1133
        %v1135 = vextract.high.u32 %v1133
        %v1136 = vmul.u32.u64.compose %v1132, %v1127
        %v1137 = vextract.low.u32 %v1136
        %v1138 = vextract.high.u32 %v1136
        %v1139 = vmul.u32 %v1132, %v1123
        %v1140 = vadd.s32 %v1135, %v1137
        %vm1141 = vc.u32 %v1135, %v1137
        %v1142 = vadd.s32 %v1138, 1
        %v1143 = vsel %vm1141, %v1142, %v1138
        %v1144 = vadd.s32 %v1139, %v1143
        %v1145 = vadd.s32 %v1144, 536870912
        %v1146 = vshrl.u32 %v1145, 30
        %v1147 = vshll.u32 %v1146, 30
        %v1148 = vsub.s32 %v1144, %v1147
        %vm1149 = vcmp.lt.s32.totalorder %v1148, 0
        %v1150 = vsub.s32 0, %v1148
        %v1151 = vsel %vm1149, %v1150, %v1148
        %v1152 = vclz %v1151
        %v1153 = vsub.s32 %v1152, 2
        %vm1154 = vcmp.gt.s32.totalorder 0, %v1153
        %v1155 = vsel %vm1154, 0, %v1153
        %v1156 = vsub.s32 32, %v1155
        %v1157 = vshll.u32 %v1148, %v1155
        %v1158 = vshrl.u32 %v1140, %v1156
        %v1159 = vor.u32 %v1157, %v1158
        %v1160 = vsub.s32 4294967266, %v1155
        %v1161 = vadd.s32 %v1160, 127
        %v1162 = vshll.u32 %v1161, 23
        %v1163 = vor.u32 4788187, %v1162
        %v1164 = vand.u32 2147483647, %v1163
        %v1166 = vcvt.s32.f32 %v1159
        %v1167 = vmul.f32 %v1166, %v1164
        %v1168 = vxor.u32 %v1167, 2147483648
        %v1169 = vsel %vm1086, %v1168, %v1167
        %v1170 = vsub.s32 4, %v1146
        %v1171 = vsel %vm1086, %v1170, %v1146
        %v1172 = vsel %vm1085, %v1020, %v1169
        %v1173 = vsel %vm1085, 0, %v1171
        %v1174 = vcosq.f32.pop %v1172
        %v1175 = vsinq.f32.pop %v1172
        %vm1176 = vweird.f32 %v1020
        %v1177 = vadd.s32 %v1173, 3
        %v1178 = vand.u32 %v1177, 3
        %vm1179 = vcmp.lt.s32.totalorder %v1178, 2
        %vm1180 = vcmp.eq.s32.totalorder %v1178, 0
        %v1181 = vxor.u32 %v1175, 2147483648
        %v1182 = vsel %vm1180, %v1174, %v1181
        %vm1183 = vcmp.eq.s32.totalorder %v1178, 2
        %v1184 = vxor.u32 %v1174, 2147483648
        %v1185 = vsel %vm1183, %v1184, %v1175
        %v1186 = vsel %vm1179, %v1182, %v1185
        %v1187 = vsel %vm1176, nan, %v1186
        %v1188 = vand.u32 2147483647, %v1021
        %vm1189 = vcmp.le.f32.partialorder %v1188, 0.7853982
        %vm1190 = vcmp.lt.s32.totalorder %v1021, 0
        %v1191 = vand.u32 %v1021, 2139095040
        %v1192 = vshrl.u32 %v1191, 23
        %v1193 = vsub.s32 %v1192, 127
        %v1194 = vand.u32 2147483647, %v1021
        %v1195 = vand.u32 %v1194, 8388607
        %v1196 = vor.u32 %v1195, 8388608
        %v1197 = vsub.s32 0, %v1196
        %v1198 = vadd.s32 %v1193, 1
        %vm1199 = vcmp.gt.s32.totalorder %v1198, 0
        %v1200 = vsel %vm1199, %v1198, 0
        %v1201 = vshrl.u32 %v1200, 5
        %v1202 = vand.u32 %v1200, 31
        %v1203 = vsub.s32 32, %v1202
        %v1204 = vshrl.u32 683565275, %v1203
        %v1205 = vshll.u32 683565275, %v1202
        %v1206 = vshrl.u32 2475754826, %v1203
        %v1207 = vor.u32 %v1205, %v1206
        %v1208 = vshll.u32 2475754826, %v1202
        %v1209 = vshrl.u32 2131351028, %v1203
        %v1210 = vor.u32 %v1208, %v1209
        %v1211 = vshll.u32 2131351028, %v1202
        %v1212 = vshrl.u32 2102212464, %v1203
        %v1213 = vor.u32 %v1211, %v1212
        %v1214 = vshll.u32 2102212464, %v1202
        %v1215 = vshrl.u32 920167782, %v1203
        %v1216 = vor.u32 %v1214, %v1215
        %v1217 = vshll.u32 920167782, %v1202
        %v1218 = vshrl.u32 1326507024, %v1203
        %v1219 = vor.u32 %v1217, %v1218
        %vm1220 = vcmp.lt.s32.totalorder %v1201, 1
        %vm1221 = vcmp.lt.s32.totalorder %v1201, 2
        %vm1222 = vcmp.lt.s32.totalorder %v1201, 3
        %vm1223 = vcmp.lt.s32.totalorder %v1201, 4
        %v1224 = vsel %vm1220, %v1204, %v1207
        %v1225 = vsel %vm1223, %v1213, 2102212464
        %v1226 = vsel %vm1222, %v1210, %v1225
        %v1227 = vsel %vm1221, %v1224, %v1226
        %v1228 = vsel %vm1220, %v1207, %v1210
        %v1229 = vsel %vm1223, %v1216, 920167782
        %v1230 = vsel %vm1222, %v1213, %v1229
        %v1231 = vsel %vm1221, %v1228, %v1230
        %v1232 = vsel %vm1220, %v1210, %v1213
        %v1233 = vsel %vm1223, %v1219, 1326507024
        %v1234 = vsel %vm1222, %v1216, %v1233
        %v1235 = vsel %vm1221, %v1232, %v1234
        %v1236 = vshll.u32 %v1196, 8
        %v1237 = vmul.u32.u64.compose %v1236, %v1235
        %v1238 = vextract.low.u32 %v1237
        %v1239 = vextract.high.u32 %v1237
        %v1240 = vmul.u32.u64.compose %v1236, %v1231
        %v1241 = vextract.low.u32 %v1240
        %v1242 = vextract.high.u32 %v1240
        %v1243 = vmul.u32 %v1236, %v1227
        %v1244 = vadd.s32 %v1239, %v1241
        %vm1245 = vc.u32 %v1239, %v1241
        %v1246 = vadd.s32 %v1242, 1
        %v1247 = vsel %vm1245, %v1246, %v1242
        %v1248 = vadd.s32 %v1243, %v1247
        %v1249 = vadd.s32 %v1248, 536870912
        %v1250 = vshrl.u32 %v1249, 30
        %v1251 = vshll.u32 %v1250, 30
        %v1252 = vsub.s32 %v1248, %v1251
        %vm1253 = vcmp.lt.s32.totalorder %v1252, 0
        %v1254 = vsub.s32 0, %v1252
        %v1255 = vsel %vm1253, %v1254, %v1252
        %v1256 = vclz %v1255
        %v1257 = vsub.s32 %v1256, 2
        %vm1258 = vcmp.gt.s32.totalorder 0, %v1257
        %v1259 = vsel %vm1258, 0, %v1257
        %v1260 = vsub.s32 32, %v1259
        %v1261 = vshll.u32 %v1252, %v1259
        %v1262 = vshrl.u32 %v1244, %v1260
        %v1263 = vor.u32 %v1261, %v1262
        %v1264 = vsub.s32 4294967266, %v1259
        %v1265 = vadd.s32 %v1264, 127
        %v1266 = vshll.u32 %v1265, 23
        %v1267 = vor.u32 4788187, %v1266
        %v1268 = vand.u32 2147483647, %v1267
        %v1270 = vcvt.s32.f32 %v1263
        %v1271 = vmul.f32 %v1270, %v1268
        %v1272 = vxor.u32 %v1271, 2147483648
        %v1273 = vsel %vm1190, %v1272, %v1271
        %v1274 = vsub.s32 4, %v1250
        %v1275 = vsel %vm1190, %v1274, %v1250
        %v1276 = vsel %vm1189, %v1021, %v1273
        %v1277 = vsel %vm1189, 0, %v1275
        %v1278 = vcosq.f32.pop %v1276
        %v1279 = vsinq.f32.pop %v1276
        %vm1280 = vweird.f32 %v1021
        %v1281 = vadd.s32 %v1277, 3
        %v1282 = vand.u32 %v1281, 3
        %vm1283 = vcmp.lt.s32.totalorder %v1282, 2
        %vm1284 = vcmp.eq.s32.totalorder %v1282, 0
        %v1285 = vxor.u32 %v1279, 2147483648
        %v1286 = vsel %vm1284, %v1278, %v1285
        %vm1287 = vcmp.eq.s32.totalorder %v1282, 2
        %v1288 = vxor.u32 %v1278, 2147483648
        %v1289 = vsel %vm1287, %v1288, %v1279
        %v1290 = vsel %vm1283, %v1286, %v1289
        %v1291 = vsel %vm1280, nan, %v1290
        %v1292 = vand.u32 2147483647, %v1022
        %vm1293 = vcmp.le.f32.partialorder %v1292, 0.7853982
        %vm1294 = vcmp.lt.s32.totalorder %v1022, 0
        %v1295 = vand.u32 %v1022, 2139095040
        %v1296 = vshrl.u32 %v1295, 23
        %v1297 = vsub.s32 %v1296, 127
        %v1298 = vand.u32 2147483647, %v1022
        %v1299 = vand.u32 %v1298, 8388607
        %v1300 = vor.u32 %v1299, 8388608
        %v1301 = vsub.s32 0, %v1300
        %v1302 = vadd.s32 %v1297, 1
        %vm1303 = vcmp.gt.s32.totalorder %v1302, 0
        %v1304 = vsel %vm1303, %v1302, 0
        %v1305 = vshrl.u32 %v1304, 5
        %v1306 = vand.u32 %v1304, 31
        %v1307 = vsub.s32 32, %v1306
        %v1308 = vshrl.u32 683565275, %v1307
        %v1309 = vshll.u32 683565275, %v1306
        %v1310 = vshrl.u32 2475754826, %v1307
        %v1311 = vor.u32 %v1309, %v1310
        %v1312 = vshll.u32 2475754826, %v1306
        %v1313 = vshrl.u32 2131351028, %v1307
        %v1314 = vor.u32 %v1312, %v1313
        %v1315 = vshll.u32 2131351028, %v1306
        %v1316 = vshrl.u32 2102212464, %v1307
        %v1317 = vor.u32 %v1315, %v1316
        %v1318 = vshll.u32 2102212464, %v1306
        %v1319 = vshrl.u32 920167782, %v1307
        %v1320 = vor.u32 %v1318, %v1319
        %v1321 = vshll.u32 920167782, %v1306
        %v1322 = vshrl.u32 1326507024, %v1307
        %v1323 = vor.u32 %v1321, %v1322
        %vm1324 = vcmp.lt.s32.totalorder %v1305, 1
        %vm1325 = vcmp.lt.s32.totalorder %v1305, 2
        %vm1326 = vcmp.lt.s32.totalorder %v1305, 3
        %vm1327 = vcmp.lt.s32.totalorder %v1305, 4
        %v1328 = vsel %vm1324, %v1308, %v1311
        %v1329 = vsel %vm1327, %v1317, 2102212464
        %v1330 = vsel %vm1326, %v1314, %v1329
        %v1331 = vsel %vm1325, %v1328, %v1330
        %v1332 = vsel %vm1324, %v1311, %v1314
        %v1333 = vsel %vm1327, %v1320, 920167782
        %v1334 = vsel %vm1326, %v1317, %v1333
        %v1335 = vsel %vm1325, %v1332, %v1334
        %v1336 = vsel %vm1324, %v1314, %v1317
        %v1337 = vsel %vm1327, %v1323, 1326507024
        %v1338 = vsel %vm1326, %v1320, %v1337
        %v1339 = vsel %vm1325, %v1336, %v1338
        %v1340 = vshll.u32 %v1300, 8
        %v1341 = vmul.u32.u64.compose %v1340, %v1339
        %v1342 = vextract.low.u32 %v1341
        %v1343 = vextract.high.u32 %v1341
        %v1344 = vmul.u32.u64.compose %v1340, %v1335
        %v1345 = vextract.low.u32 %v1344
        %v1346 = vextract.high.u32 %v1344
        %v1347 = vmul.u32 %v1340, %v1331
        %v1348 = vadd.s32 %v1343, %v1345
        %vm1349 = vc.u32 %v1343, %v1345
        %v1350 = vadd.s32 %v1346, 1
        %v1351 = vsel %vm1349, %v1350, %v1346
        %v1352 = vadd.s32 %v1347, %v1351
        %v1353 = vadd.s32 %v1352, 536870912
        %v1354 = vshrl.u32 %v1353, 30
        %v1355 = vshll.u32 %v1354, 30
        %v1356 = vsub.s32 %v1352, %v1355
        %vm1357 = vcmp.lt.s32.totalorder %v1356, 0
        %v1358 = vsub.s32 0, %v1356
        %v1359 = vsel %vm1357, %v1358, %v1356
        %v1360 = vclz %v1359
        %v1361 = vsub.s32 %v1360, 2
        %vm1362 = vcmp.gt.s32.totalorder 0, %v1361
        %v1363 = vsel %vm1362, 0, %v1361
        %v1364 = vsub.s32 32, %v1363
        %v1365 = vshll.u32 %v1356, %v1363
        %v1366 = vshrl.u32 %v1348, %v1364
        %v1367 = vor.u32 %v1365, %v1366
        %v1368 = vsub.s32 4294967266, %v1363
        %v1369 = vadd.s32 %v1368, 127
        %v1370 = vshll.u32 %v1369, 23
        %v1371 = vor.u32 4788187, %v1370
        %v1372 = vand.u32 2147483647, %v1371
        %v1374 = vcvt.s32.f32 %v1367
        %v1375 = vmul.f32 %v1374, %v1372
        %v1376 = vxor.u32 %v1375, 2147483648
        %v1377 = vsel %vm1294, %v1376, %v1375
        %v1378 = vsub.s32 4, %v1354
        %v1379 = vsel %vm1294, %v1378, %v1354
        %v1380 = vsel %vm1293, %v1022, %v1377
        %v1381 = vsel %vm1293, 0, %v1379
        %v1382 = vcosq.f32.pop %v1380
        %v1383 = vsinq.f32.pop %v1380
        %vm1384 = vweird.f32 %v1022
        %v1385 = vadd.s32 %v1381, 3
        %v1386 = vand.u32 %v1385, 3
        %vm1387 = vcmp.lt.s32.totalorder %v1386, 2
        %vm1388 = vcmp.eq.s32.totalorder %v1386, 0
        %v1389 = vxor.u32 %v1383, 2147483648
        %v1390 = vsel %vm1388, %v1382, %v1389
        %vm1391 = vcmp.eq.s32.totalorder %v1386, 2
        %v1392 = vxor.u32 %v1382, 2147483648
        %v1393 = vsel %vm1391, %v1392, %v1383
        %v1394 = vsel %vm1387, %v1390, %v1393
        %v1395 = vsel %vm1384, nan, %v1394
        %v1396 = vand.u32 2147483647, %v1023
        %vm1397 = vcmp.le.f32.partialorder %v1396, 0.7853982
        %vm1398 = vcmp.lt.s32.totalorder %v1023, 0
        %v1399 = vand.u32 %v1023, 2139095040
        %v1400 = vshrl.u32 %v1399, 23
        %v1401 = vsub.s32 %v1400, 127
        %v1402 = vand.u32 2147483647, %v1023
        %v1403 = vand.u32 %v1402, 8388607
        %v1404 = vor.u32 %v1403, 8388608
        %v1405 = vsub.s32 0, %v1404
        %v1406 = vadd.s32 %v1401, 1
        %vm1407 = vcmp.gt.s32.totalorder %v1406, 0
        %v1408 = vsel %vm1407, %v1406, 0
        %v1409 = vshrl.u32 %v1408, 5
        %v1410 = vand.u32 %v1408, 31
        %v1411 = vsub.s32 32, %v1410
        %v1412 = vshrl.u32 683565275, %v1411
        %v1413 = vshll.u32 683565275, %v1410
        %v1414 = vshrl.u32 2475754826, %v1411
        %v1415 = vor.u32 %v1413, %v1414
        %v1416 = vshll.u32 2475754826, %v1410
        %v1417 = vshrl.u32 2131351028, %v1411
        %v1418 = vor.u32 %v1416, %v1417
        %v1419 = vshll.u32 2131351028, %v1410
        %v1420 = vshrl.u32 2102212464, %v1411
        %v1421 = vor.u32 %v1419, %v1420
        %v1422 = vshll.u32 2102212464, %v1410
        %v1423 = vshrl.u32 920167782, %v1411
        %v1424 = vor.u32 %v1422, %v1423
        %v1425 = vshll.u32 920167782, %v1410
        %v1426 = vshrl.u32 1326507024, %v1411
        %v1427 = vor.u32 %v1425, %v1426
        %vm1428 = vcmp.lt.s32.totalorder %v1409, 1
        %vm1429 = vcmp.lt.s32.totalorder %v1409, 2
        %vm1430 = vcmp.lt.s32.totalorder %v1409, 3
        %vm1431 = vcmp.lt.s32.totalorder %v1409, 4
        %v1432 = vsel %vm1428, %v1412, %v1415
        %v1433 = vsel %vm1431, %v1421, 2102212464
        %v1434 = vsel %vm1430, %v1418, %v1433
        %v1435 = vsel %vm1429, %v1432, %v1434
        %v1436 = vsel %vm1428, %v1415, %v1418
        %v1437 = vsel %vm1431, %v1424, 920167782
        %v1438 = vsel %vm1430, %v1421, %v1437
        %v1439 = vsel %vm1429, %v1436, %v1438
        %v1440 = vsel %vm1428, %v1418, %v1421
        %v1441 = vsel %vm1431, %v1427, 1326507024
        %v1442 = vsel %vm1430, %v1424, %v1441
        %v1443 = vsel %vm1429, %v1440, %v1442
        %v1444 = vshll.u32 %v1404, 8
        %v1445 = vmul.u32.u64.compose %v1444, %v1443
        %v1446 = vextract.low.u32 %v1445
        %v1447 = vextract.high.u32 %v1445
        %v1448 = vmul.u32.u64.compose %v1444, %v1439
        %v1449 = vextract.low.u32 %v1448
        %v1450 = vextract.high.u32 %v1448
        %v1451 = vmul.u32 %v1444, %v1435
        %v1452 = vadd.s32 %v1447, %v1449
        %vm1453 = vc.u32 %v1447, %v1449
        %v1454 = vadd.s32 %v1450, 1
        %v1455 = vsel %vm1453, %v1454, %v1450
        %v1456 = vadd.s32 %v1451, %v1455
        %v1457 = vadd.s32 %v1456, 536870912
        %v1458 = vshrl.u32 %v1457, 30
        %v1459 = vshll.u32 %v1458, 30
        %v1460 = vsub.s32 %v1456, %v1459
        %vm1461 = vcmp.lt.s32.totalorder %v1460, 0
        %v1462 = vsub.s32 0, %v1460
        %v1463 = vsel %vm1461, %v1462, %v1460
        %v1464 = vclz %v1463
        %v1465 = vsub.s32 %v1464, 2
        %vm1466 = vcmp.gt.s32.totalorder 0, %v1465
        %v1467 = vsel %vm1466, 0, %v1465
        %v1468 = vsub.s32 32, %v1467
        %v1469 = vshll.u32 %v1460, %v1467
        %v1470 = vshrl.u32 %v1452, %v1468
        %v1471 = vor.u32 %v1469, %v1470
        %v1472 = vsub.s32 4294967266, %v1467
        %v1473 = vadd.s32 %v1472, 127
        %v1474 = vshll.u32 %v1473, 23
        %v1475 = vor.u32 4788187, %v1474
        %v1476 = vand.u32 2147483647, %v1475
        %v1478 = vcvt.s32.f32 %v1471
        %v1479 = vmul.f32 %v1478, %v1476
        %v1480 = vxor.u32 %v1479, 2147483648
        %v1481 = vsel %vm1398, %v1480, %v1479
        %v1482 = vsub.s32 4, %v1458
        %v1483 = vsel %vm1398, %v1482, %v1458
        %v1484 = vsel %vm1397, %v1023, %v1481
        %v1485 = vsel %vm1397, 0, %v1483
        %v1486 = vcosq.f32.pop %v1484
        %v1487 = vsinq.f32.pop %v1484
        %vm1488 = vweird.f32 %v1023
        %v1489 = vadd.s32 %v1485, 3
        %v1490 = vand.u32 %v1489, 3
        %vm1491 = vcmp.lt.s32.totalorder %v1490, 2
        %vm1492 = vcmp.eq.s32.totalorder %v1490, 0
        %v1493 = vxor.u32 %v1487, 2147483648
        %v1494 = vsel %vm1492, %v1486, %v1493
        %vm1495 = vcmp.eq.s32.totalorder %v1490, 2
        %v1496 = vxor.u32 %v1486, 2147483648
        %v1497 = vsel %vm1495, %v1496, %v1487
        %v1498 = vsel %vm1491, %v1494, %v1497
        %v1499 = vsel %vm1488, nan, %v1498
        %v1500 = vand.u32 2147483647, %v1024
        %vm1501 = vcmp.le.f32.partialorder %v1500, 0.7853982
        %vm1502 = vcmp.lt.s32.totalorder %v1024, 0
        %v1503 = vand.u32 %v1024, 2139095040
        %v1504 = vshrl.u32 %v1503, 23
        %v1505 = vsub.s32 %v1504, 127
        %v1506 = vand.u32 2147483647, %v1024
        %v1507 = vand.u32 %v1506, 8388607
        %v1508 = vor.u32 %v1507, 8388608
        %v1509 = vsub.s32 0, %v1508
        %v1510 = vadd.s32 %v1505, 1
        %vm1511 = vcmp.gt.s32.totalorder %v1510, 0
        %v1512 = vsel %vm1511, %v1510, 0
        %v1513 = vshrl.u32 %v1512, 5
        %v1514 = vand.u32 %v1512, 31
        %v1515 = vsub.s32 32, %v1514
        %v1516 = vshrl.u32 683565275, %v1515
        %v1517 = vshll.u32 683565275, %v1514
        %v1518 = vshrl.u32 2475754826, %v1515
        %v1519 = vor.u32 %v1517, %v1518
        %v1520 = vshll.u32 2475754826, %v1514
        %v1521 = vshrl.u32 2131351028, %v1515
        %v1522 = vor.u32 %v1520, %v1521
        %v1523 = vshll.u32 2131351028, %v1514
        %v1524 = vshrl.u32 2102212464, %v1515
        %v1525 = vor.u32 %v1523, %v1524
        %v1526 = vshll.u32 2102212464, %v1514
        %v1527 = vshrl.u32 920167782, %v1515
        %v1528 = vor.u32 %v1526, %v1527
        %v1529 = vshll.u32 920167782, %v1514
        %v1530 = vshrl.u32 1326507024, %v1515
        %v1531 = vor.u32 %v1529, %v1530
        %vm1532 = vcmp.lt.s32.totalorder %v1513, 1
        %vm1533 = vcmp.lt.s32.totalorder %v1513, 2
        %vm1534 = vcmp.lt.s32.totalorder %v1513, 3
        %vm1535 = vcmp.lt.s32.totalorder %v1513, 4
        %v1536 = vsel %vm1532, %v1516, %v1519
        %v1537 = vsel %vm1535, %v1525, 2102212464
        %v1538 = vsel %vm1534, %v1522, %v1537
        %v1539 = vsel %vm1533, %v1536, %v1538
        %v1540 = vsel %vm1532, %v1519, %v1522
        %v1541 = vsel %vm1535, %v1528, 920167782
        %v1542 = vsel %vm1534, %v1525, %v1541
        %v1543 = vsel %vm1533, %v1540, %v1542
        %v1544 = vsel %vm1532, %v1522, %v1525
        %v1545 = vsel %vm1535, %v1531, 1326507024
        %v1546 = vsel %vm1534, %v1528, %v1545
        %v1547 = vsel %vm1533, %v1544, %v1546
        %v1548 = vshll.u32 %v1508, 8
        %v1549 = vmul.u32.u64.compose %v1548, %v1547
        %v1550 = vextract.low.u32 %v1549
        %v1551 = vextract.high.u32 %v1549
        %v1552 = vmul.u32.u64.compose %v1548, %v1543
        %v1553 = vextract.low.u32 %v1552
        %v1554 = vextract.high.u32 %v1552
        %v1555 = vmul.u32 %v1548, %v1539
        %v1556 = vadd.s32 %v1551, %v1553
        %vm1557 = vc.u32 %v1551, %v1553
        %v1558 = vadd.s32 %v1554, 1
        %v1559 = vsel %vm1557, %v1558, %v1554
        %v1560 = vadd.s32 %v1555, %v1559
        %v1561 = vadd.s32 %v1560, 536870912
        %v1562 = vshrl.u32 %v1561, 30
        %v1563 = vshll.u32 %v1562, 30
        %v1564 = vsub.s32 %v1560, %v1563
        %vm1565 = vcmp.lt.s32.totalorder %v1564, 0
        %v1566 = vsub.s32 0, %v1564
        %v1567 = vsel %vm1565, %v1566, %v1564
        %v1568 = vclz %v1567
        %v1569 = vsub.s32 %v1568, 2
        %vm1570 = vcmp.gt.s32.totalorder 0, %v1569
        %v1571 = vsel %vm1570, 0, %v1569
        %v1572 = vsub.s32 32, %v1571
        %v1573 = vshll.u32 %v1564, %v1571
        %v1574 = vshrl.u32 %v1556, %v1572
        %v1575 = vor.u32 %v1573, %v1574
        %v1576 = vsub.s32 4294967266, %v1571
        %v1577 = vadd.s32 %v1576, 127
        %v1578 = vshll.u32 %v1577, 23
        %v1579 = vor.u32 4788187, %v1578
        %v1580 = vand.u32 2147483647, %v1579
        %v1582 = vcvt.s32.f32 %v1575
        %v1583 = vmul.f32 %v1582, %v1580
        %v1584 = vxor.u32 %v1583, 2147483648
        %v1585 = vsel %vm1502, %v1584, %v1583
        %v1586 = vsub.s32 4, %v1562
        %v1587 = vsel %vm1502, %v1586, %v1562
        %v1588 = vsel %vm1501, %v1024, %v1585
        %v1589 = vsel %vm1501, 0, %v1587
        %v1590 = vcosq.f32.pop %v1588
        %v1591 = vsinq.f32.pop %v1588
        %vm1592 = vweird.f32 %v1024
        %v1593 = vadd.s32 %v1589, 3
        %v1594 = vand.u32 %v1593, 3
        %vm1595 = vcmp.lt.s32.totalorder %v1594, 2
        %vm1596 = vcmp.eq.s32.totalorder %v1594, 0
        %v1597 = vxor.u32 %v1591, 2147483648
        %v1598 = vsel %vm1596, %v1590, %v1597
        %vm1599 = vcmp.eq.s32.totalorder %v1594, 2
        %v1600 = vxor.u32 %v1590, 2147483648
        %v1601 = vsel %vm1599, %v1600, %v1591
        %v1602 = vsel %vm1595, %v1598, %v1601
        %v1603 = vsel %vm1592, nan, %v1602
        %v1604 = vand.u32 2147483647, %v1025
        %vm1605 = vcmp.le.f32.partialorder %v1604, 0.7853982
        %vm1606 = vcmp.lt.s32.totalorder %v1025, 0
        %v1607 = vand.u32 %v1025, 2139095040
        %v1608 = vshrl.u32 %v1607, 23
        %v1609 = vsub.s32 %v1608, 127
        %v1610 = vand.u32 2147483647, %v1025
        %v1611 = vand.u32 %v1610, 8388607
        %v1612 = vor.u32 %v1611, 8388608
        %v1613 = vsub.s32 0, %v1612
        %v1614 = vadd.s32 %v1609, 1
        %vm1615 = vcmp.gt.s32.totalorder %v1614, 0
        %v1616 = vsel %vm1615, %v1614, 0
        %v1617 = vshrl.u32 %v1616, 5
        %v1618 = vand.u32 %v1616, 31
        %v1619 = vsub.s32 32, %v1618
        %v1620 = vshrl.u32 683565275, %v1619
        %v1621 = vshll.u32 683565275, %v1618
        %v1622 = vshrl.u32 2475754826, %v1619
        %v1623 = vor.u32 %v1621, %v1622
        %v1624 = vshll.u32 2475754826, %v1618
        %v1625 = vshrl.u32 2131351028, %v1619
        %v1626 = vor.u32 %v1624, %v1625
        %v1627 = vshll.u32 2131351028, %v1618
        %v1628 = vshrl.u32 2102212464, %v1619
        %v1629 = vor.u32 %v1627, %v1628
        %v1630 = vshll.u32 2102212464, %v1618
        %v1631 = vshrl.u32 920167782, %v1619
        %v1632 = vor.u32 %v1630, %v1631
        %v1633 = vshll.u32 920167782, %v1618
        %v1634 = vshrl.u32 1326507024, %v1619
        %v1635 = vor.u32 %v1633, %v1634
        %vm1636 = vcmp.lt.s32.totalorder %v1617, 1
        %vm1637 = vcmp.lt.s32.totalorder %v1617, 2
        %vm1638 = vcmp.lt.s32.totalorder %v1617, 3
        %vm1639 = vcmp.lt.s32.totalorder %v1617, 4
        %v1640 = vsel %vm1636, %v1620, %v1623
        %v1641 = vsel %vm1639, %v1629, 2102212464
        %v1642 = vsel %vm1638, %v1626, %v1641
        %v1643 = vsel %vm1637, %v1640, %v1642
        %v1644 = vsel %vm1636, %v1623, %v1626
        %v1645 = vsel %vm1639, %v1632, 920167782
        %v1646 = vsel %vm1638, %v1629, %v1645
        %v1647 = vsel %vm1637, %v1644, %v1646
        %v1648 = vsel %vm1636, %v1626, %v1629
        %v1649 = vsel %vm1639, %v1635, 1326507024
        %v1650 = vsel %vm1638, %v1632, %v1649
        %v1651 = vsel %vm1637, %v1648, %v1650
        %v1652 = vshll.u32 %v1612, 8
        %v1653 = vmul.u32.u64.compose %v1652, %v1651
        %v1654 = vextract.low.u32 %v1653
        %v1655 = vextract.high.u32 %v1653
        %v1656 = vmul.u32.u64.compose %v1652, %v1647
        %v1657 = vextract.low.u32 %v1656
        %v1658 = vextract.high.u32 %v1656
        %v1659 = vmul.u32 %v1652, %v1643
        %v1660 = vadd.s32 %v1655, %v1657
        %vm1661 = vc.u32 %v1655, %v1657
        %v1662 = vadd.s32 %v1658, 1
        %v1663 = vsel %vm1661, %v1662, %v1658
        %v1664 = vadd.s32 %v1659, %v1663
        %v1665 = vadd.s32 %v1664, 536870912
        %v1666 = vshrl.u32 %v1665, 30
        %v1667 = vshll.u32 %v1666, 30
        %v1668 = vsub.s32 %v1664, %v1667
        %vm1669 = vcmp.lt.s32.totalorder %v1668, 0
        %v1670 = vsub.s32 0, %v1668
        %v1671 = vsel %vm1669, %v1670, %v1668
        %v1672 = vclz %v1671
        %v1673 = vsub.s32 %v1672, 2
        %vm1674 = vcmp.gt.s32.totalorder 0, %v1673
        %v1675 = vsel %vm1674, 0, %v1673
        %v1676 = vsub.s32 32, %v1675
        %v1677 = vshll.u32 %v1668, %v1675
        %v1678 = vshrl.u32 %v1660, %v1676
        %v1679 = vor.u32 %v1677, %v1678
        %v1680 = vsub.s32 4294967266, %v1675
        %v1681 = vadd.s32 %v1680, 127
        %v1682 = vshll.u32 %v1681, 23
        %v1683 = vor.u32 4788187, %v1682
        %v1684 = vand.u32 2147483647, %v1683
        %v1686 = vcvt.s32.f32 %v1679
        %v1687 = vmul.f32 %v1686, %v1684
        %v1688 = vxor.u32 %v1687, 2147483648
        %v1689 = vsel %vm1606, %v1688, %v1687
        %v1690 = vsub.s32 4, %v1666
        %v1691 = vsel %vm1606, %v1690, %v1666
        %v1692 = vsel %vm1605, %v1025, %v1689
        %v1693 = vsel %vm1605, 0, %v1691
        %v1694 = vcosq.f32.pop %v1692
        %v1695 = vsinq.f32.pop %v1692
        %vm1696 = vweird.f32 %v1025
        %v1697 = vadd.s32 %v1693, 3
        %v1698 = vand.u32 %v1697, 3
        %vm1699 = vcmp.lt.s32.totalorder %v1698, 2
        %vm1700 = vcmp.eq.s32.totalorder %v1698, 0
        %v1701 = vxor.u32 %v1695, 2147483648
        %v1702 = vsel %vm1700, %v1694, %v1701
        %vm1703 = vcmp.eq.s32.totalorder %v1698, 2
        %v1704 = vxor.u32 %v1694, 2147483648
        %v1705 = vsel %vm1703, %v1704, %v1695
        %v1706 = vsel %vm1699, %v1702, %v1705
        %v1707 = vsel %vm1696, nan, %v1706
        %v1708 = vand.u32 2147483647, %v1026
        %vm1709 = vcmp.le.f32.partialorder %v1708, 0.7853982
        %vm1710 = vcmp.lt.s32.totalorder %v1026, 0
        %v1711 = vand.u32 %v1026, 2139095040
        %v1712 = vshrl.u32 %v1711, 23
        %v1713 = vsub.s32 %v1712, 127
        %v1714 = vand.u32 2147483647, %v1026
        %v1715 = vand.u32 %v1714, 8388607
        %v1716 = vor.u32 %v1715, 8388608
        %v1717 = vsub.s32 0, %v1716
        %v1718 = vadd.s32 %v1713, 1
        %vm1719 = vcmp.gt.s32.totalorder %v1718, 0
        %v1720 = vsel %vm1719, %v1718, 0
        %v1721 = vshrl.u32 %v1720, 5
        %v1722 = vand.u32 %v1720, 31
        %v1723 = vsub.s32 32, %v1722
        %v1724 = vshrl.u32 683565275, %v1723
        %v1725 = vshll.u32 683565275, %v1722
        %v1726 = vshrl.u32 2475754826, %v1723
        %v1727 = vor.u32 %v1725, %v1726
        %v1728 = vshll.u32 2475754826, %v1722
        %v1729 = vshrl.u32 2131351028, %v1723
        %v1730 = vor.u32 %v1728, %v1729
        %v1731 = vshll.u32 2131351028, %v1722
        %v1732 = vshrl.u32 2102212464, %v1723
        %v1733 = vor.u32 %v1731, %v1732
        %v1734 = vshll.u32 2102212464, %v1722
        %v1735 = vshrl.u32 920167782, %v1723
        %v1736 = vor.u32 %v1734, %v1735
        %v1737 = vshll.u32 920167782, %v1722
        %v1738 = vshrl.u32 1326507024, %v1723
        %v1739 = vor.u32 %v1737, %v1738
        %vm1740 = vcmp.lt.s32.totalorder %v1721, 1
        %vm1741 = vcmp.lt.s32.totalorder %v1721, 2
        %vm1742 = vcmp.lt.s32.totalorder %v1721, 3
        %vm1743 = vcmp.lt.s32.totalorder %v1721, 4
        %v1744 = vsel %vm1740, %v1724, %v1727
        %v1745 = vsel %vm1743, %v1733, 2102212464
        %v1746 = vsel %vm1742, %v1730, %v1745
        %v1747 = vsel %vm1741, %v1744, %v1746
        %v1748 = vsel %vm1740, %v1727, %v1730
        %v1749 = vsel %vm1743, %v1736, 920167782
        %v1750 = vsel %vm1742, %v1733, %v1749
        %v1751 = vsel %vm1741, %v1748, %v1750
        %v1752 = vsel %vm1740, %v1730, %v1733
        %v1753 = vsel %vm1743, %v1739, 1326507024
        %v1754 = vsel %vm1742, %v1736, %v1753
        %v1755 = vsel %vm1741, %v1752, %v1754
        %v1756 = vshll.u32 %v1716, 8
        %v1757 = vmul.u32.u64.compose %v1756, %v1755
        %v1758 = vextract.low.u32 %v1757
        %v1759 = vextract.high.u32 %v1757
        %v1760 = vmul.u32.u64.compose %v1756, %v1751
        %v1761 = vextract.low.u32 %v1760
        %v1762 = vextract.high.u32 %v1760
        %v1763 = vmul.u32 %v1756, %v1747
        %v1764 = vadd.s32 %v1759, %v1761
        %vm1765 = vc.u32 %v1759, %v1761
        %v1766 = vadd.s32 %v1762, 1
        %v1767 = vsel %vm1765, %v1766, %v1762
        %v1768 = vadd.s32 %v1763, %v1767
        %v1769 = vadd.s32 %v1768, 536870912
        %v1770 = vshrl.u32 %v1769, 30
        %v1771 = vshll.u32 %v1770, 30
        %v1772 = vsub.s32 %v1768, %v1771
        %vm1773 = vcmp.lt.s32.totalorder %v1772, 0
        %v1774 = vsub.s32 0, %v1772
        %v1775 = vsel %vm1773, %v1774, %v1772
        %v1776 = vclz %v1775
        %v1777 = vsub.s32 %v1776, 2
        %vm1778 = vcmp.gt.s32.totalorder 0, %v1777
        %v1779 = vsel %vm1778, 0, %v1777
        %v1780 = vsub.s32 32, %v1779
        %v1781 = vshll.u32 %v1772, %v1779
        %v1782 = vshrl.u32 %v1764, %v1780
        %v1783 = vor.u32 %v1781, %v1782
        %v1784 = vsub.s32 4294967266, %v1779
        %v1785 = vadd.s32 %v1784, 127
        %v1786 = vshll.u32 %v1785, 23
        %v1787 = vor.u32 4788187, %v1786
        %v1788 = vand.u32 2147483647, %v1787
        %v1790 = vcvt.s32.f32 %v1783
        %v1791 = vmul.f32 %v1790, %v1788
        %v1792 = vxor.u32 %v1791, 2147483648
        %v1793 = vsel %vm1710, %v1792, %v1791
        %v1794 = vsub.s32 4, %v1770
        %v1795 = vsel %vm1710, %v1794, %v1770
        %v1796 = vsel %vm1709, %v1026, %v1793
        %v1797 = vsel %vm1709, 0, %v1795
        %v1798 = vcosq.f32.pop %v1796
        %v1799 = vsinq.f32.pop %v1796
        %vm1800 = vweird.f32 %v1026
        %v1801 = vadd.s32 %v1797, 3
        %v1802 = vand.u32 %v1801, 3
        %vm1803 = vcmp.lt.s32.totalorder %v1802, 2
        %vm1804 = vcmp.eq.s32.totalorder %v1802, 0
        %v1805 = vxor.u32 %v1799, 2147483648
        %v1806 = vsel %vm1804, %v1798, %v1805
        %vm1807 = vcmp.eq.s32.totalorder %v1802, 2
        %v1808 = vxor.u32 %v1798, 2147483648
        %v1809 = vsel %vm1807, %v1808, %v1799
        %v1810 = vsel %vm1803, %v1806, %v1809
        %v1811 = vsel %vm1800, nan, %v1810
        %v1812 = vand.u32 2147483647, %v1027
        %vm1813 = vcmp.le.f32.partialorder %v1812, 0.7853982
        %vm1814 = vcmp.lt.s32.totalorder %v1027, 0
        %v1815 = vand.u32 %v1027, 2139095040
        %v1816 = vshrl.u32 %v1815, 23
        %v1817 = vsub.s32 %v1816, 127
        %v1818 = vand.u32 2147483647, %v1027
        %v1819 = vand.u32 %v1818, 8388607
        %v1820 = vor.u32 %v1819, 8388608
        %v1821 = vsub.s32 0, %v1820
        %v1822 = vadd.s32 %v1817, 1
        %vm1823 = vcmp.gt.s32.totalorder %v1822, 0
        %v1824 = vsel %vm1823, %v1822, 0
        %v1825 = vshrl.u32 %v1824, 5
        %v1826 = vand.u32 %v1824, 31
        %v1827 = vsub.s32 32, %v1826
        %v1828 = vshrl.u32 683565275, %v1827
        %v1829 = vshll.u32 683565275, %v1826
        %v1830 = vshrl.u32 2475754826, %v1827
        %v1831 = vor.u32 %v1829, %v1830
        %v1832 = vshll.u32 2475754826, %v1826
        %v1833 = vshrl.u32 2131351028, %v1827
        %v1834 = vor.u32 %v1832, %v1833
        %v1835 = vshll.u32 2131351028, %v1826
        %v1836 = vshrl.u32 2102212464, %v1827
        %v1837 = vor.u32 %v1835, %v1836
        %v1838 = vshll.u32 2102212464, %v1826
        %v1839 = vshrl.u32 920167782, %v1827
        %v1840 = vor.u32 %v1838, %v1839
        %v1841 = vshll.u32 920167782, %v1826
        %v1842 = vshrl.u32 1326507024, %v1827
        %v1843 = vor.u32 %v1841, %v1842
        %vm1844 = vcmp.lt.s32.totalorder %v1825, 1
        %vm1845 = vcmp.lt.s32.totalorder %v1825, 2
        %vm1846 = vcmp.lt.s32.totalorder %v1825, 3
        %vm1847 = vcmp.lt.s32.totalorder %v1825, 4
        %v1848 = vsel %vm1844, %v1828, %v1831
        %v1849 = vsel %vm1847, %v1837, 2102212464
        %v1850 = vsel %vm1846, %v1834, %v1849
        %v1851 = vsel %vm1845, %v1848, %v1850
        %v1852 = vsel %vm1844, %v1831, %v1834
        %v1853 = vsel %vm1847, %v1840, 920167782
        %v1854 = vsel %vm1846, %v1837, %v1853
        %v1855 = vsel %vm1845, %v1852, %v1854
        %v1856 = vsel %vm1844, %v1834, %v1837
        %v1857 = vsel %vm1847, %v1843, 1326507024
        %v1858 = vsel %vm1846, %v1840, %v1857
        %v1859 = vsel %vm1845, %v1856, %v1858
        %v1860 = vshll.u32 %v1820, 8
        %v1861 = vmul.u32.u64.compose %v1860, %v1859
        %v1862 = vextract.low.u32 %v1861
        %v1863 = vextract.high.u32 %v1861
        %v1864 = vmul.u32.u64.compose %v1860, %v1855
        %v1865 = vextract.low.u32 %v1864
        %v1866 = vextract.high.u32 %v1864
        %v1867 = vmul.u32 %v1860, %v1851
        %v1868 = vadd.s32 %v1863, %v1865
        %vm1869 = vc.u32 %v1863, %v1865
        %v1870 = vadd.s32 %v1866, 1
        %v1871 = vsel %vm1869, %v1870, %v1866
        %v1872 = vadd.s32 %v1867, %v1871
        %v1873 = vadd.s32 %v1872, 536870912
        %v1874 = vshrl.u32 %v1873, 30
        %v1875 = vshll.u32 %v1874, 30
        %v1876 = vsub.s32 %v1872, %v1875
        %vm1877 = vcmp.lt.s32.totalorder %v1876, 0
        %v1878 = vsub.s32 0, %v1876
        %v1879 = vsel %vm1877, %v1878, %v1876
        %v1880 = vclz %v1879
        %v1881 = vsub.s32 %v1880, 2
        %vm1882 = vcmp.gt.s32.totalorder 0, %v1881
        %v1883 = vsel %vm1882, 0, %v1881
        %v1884 = vsub.s32 32, %v1883
        %v1885 = vshll.u32 %v1876, %v1883
        %v1886 = vshrl.u32 %v1868, %v1884
        %v1887 = vor.u32 %v1885, %v1886
        %v1888 = vsub.s32 4294967266, %v1883
        %v1889 = vadd.s32 %v1888, 127
        %v1890 = vshll.u32 %v1889, 23
        %v1891 = vor.u32 4788187, %v1890
        %v1892 = vand.u32 2147483647, %v1891
        %v1894 = vcvt.s32.f32 %v1887
        %v1895 = vmul.f32 %v1894, %v1892
        %v1896 = vxor.u32 %v1895, 2147483648
        %v1897 = vsel %vm1814, %v1896, %v1895
        %v1898 = vsub.s32 4, %v1874
        %v1899 = vsel %vm1814, %v1898, %v1874
        %v1900 = vsel %vm1813, %v1027, %v1897
        %v1901 = vsel %vm1813, 0, %v1899
        %v1902 = vcosq.f32.pop %v1900
        %v1903 = vsinq.f32.pop %v1900
        %vm1904 = vweird.f32 %v1027
        %v1905 = vadd.s32 %v1901, 3
        %v1906 = vand.u32 %v1905, 3
        %vm1907 = vcmp.lt.s32.totalorder %v1906, 2
        %vm1908 = vcmp.eq.s32.totalorder %v1906, 0
        %v1909 = vxor.u32 %v1903, 2147483648
        %v1910 = vsel %vm1908, %v1902, %v1909
        %vm1911 = vcmp.eq.s32.totalorder %v1906, 2
        %v1912 = vxor.u32 %v1902, 2147483648
        %v1913 = vsel %vm1911, %v1912, %v1903
        %v1914 = vsel %vm1907, %v1910, %v1913
        %v1915 = vsel %vm1904, nan, %v1914
        %v1916 = vand.u32 2147483647, %v1028
        %vm1917 = vcmp.le.f32.partialorder %v1916, 0.7853982
        %vm1918 = vcmp.lt.s32.totalorder %v1028, 0
        %v1919 = vand.u32 %v1028, 2139095040
        %v1920 = vshrl.u32 %v1919, 23
        %v1921 = vsub.s32 %v1920, 127
        %v1922 = vand.u32 2147483647, %v1028
        %v1923 = vand.u32 %v1922, 8388607
        %v1924 = vor.u32 %v1923, 8388608
        %v1925 = vsub.s32 0, %v1924
        %v1926 = vadd.s32 %v1921, 1
        %vm1927 = vcmp.gt.s32.totalorder %v1926, 0
        %v1928 = vsel %vm1927, %v1926, 0
        %v1929 = vshrl.u32 %v1928, 5
        %v1930 = vand.u32 %v1928, 31
        %v1931 = vsub.s32 32, %v1930
        %v1932 = vshrl.u32 683565275, %v1931
        %v1933 = vshll.u32 683565275, %v1930
        %v1934 = vshrl.u32 2475754826, %v1931
        %v1935 = vor.u32 %v1933, %v1934
        %v1936 = vshll.u32 2475754826, %v1930
        %v1937 = vshrl.u32 2131351028, %v1931
        %v1938 = vor.u32 %v1936, %v1937
        %v1939 = vshll.u32 2131351028, %v1930
        %v1940 = vshrl.u32 2102212464, %v1931
        %v1941 = vor.u32 %v1939, %v1940
        %v1942 = vshll.u32 2102212464, %v1930
        %v1943 = vshrl.u32 920167782, %v1931
        %v1944 = vor.u32 %v1942, %v1943
        %v1945 = vshll.u32 920167782, %v1930
        %v1946 = vshrl.u32 1326507024, %v1931
        %v1947 = vor.u32 %v1945, %v1946
        %vm1948 = vcmp.lt.s32.totalorder %v1929, 1
        %vm1949 = vcmp.lt.s32.totalorder %v1929, 2
        %vm1950 = vcmp.lt.s32.totalorder %v1929, 3
        %vm1951 = vcmp.lt.s32.totalorder %v1929, 4
        %v1952 = vsel %vm1948, %v1932, %v1935
        %v1953 = vsel %vm1951, %v1941, 2102212464
        %v1954 = vsel %vm1950, %v1938, %v1953
        %v1955 = vsel %vm1949, %v1952, %v1954
        %v1956 = vsel %vm1948, %v1935, %v1938
        %v1957 = vsel %vm1951, %v1944, 920167782
        %v1958 = vsel %vm1950, %v1941, %v1957
        %v1959 = vsel %vm1949, %v1956, %v1958
        %v1960 = vsel %vm1948, %v1938, %v1941
        %v1961 = vsel %vm1951, %v1947, 1326507024
        %v1962 = vsel %vm1950, %v1944, %v1961
        %v1963 = vsel %vm1949, %v1960, %v1962
        %v1964 = vshll.u32 %v1924, 8
        %v1965 = vmul.u32.u64.compose %v1964, %v1963
        %v1966 = vextract.low.u32 %v1965
        %v1967 = vextract.high.u32 %v1965
        %v1968 = vmul.u32.u64.compose %v1964, %v1959
        %v1969 = vextract.low.u32 %v1968
        %v1970 = vextract.high.u32 %v1968
        %v1971 = vmul.u32 %v1964, %v1955
        %v1972 = vadd.s32 %v1967, %v1969
        %vm1973 = vc.u32 %v1967, %v1969
        %v1974 = vadd.s32 %v1970, 1
        %v1975 = vsel %vm1973, %v1974, %v1970
        %v1976 = vadd.s32 %v1971, %v1975
        %v1977 = vadd.s32 %v1976, 536870912
        %v1978 = vshrl.u32 %v1977, 30
        %v1979 = vshll.u32 %v1978, 30
        %v1980 = vsub.s32 %v1976, %v1979
        %vm1981 = vcmp.lt.s32.totalorder %v1980, 0
        %v1982 = vsub.s32 0, %v1980
        %v1983 = vsel %vm1981, %v1982, %v1980
        %v1984 = vclz %v1983
        %v1985 = vsub.s32 %v1984, 2
        %vm1986 = vcmp.gt.s32.totalorder 0, %v1985
        %v1987 = vsel %vm1986, 0, %v1985
        %v1988 = vsub.s32 32, %v1987
        %v1989 = vshll.u32 %v1980, %v1987
        %v1990 = vshrl.u32 %v1972, %v1988
        %v1991 = vor.u32 %v1989, %v1990
        %v1992 = vsub.s32 4294967266, %v1987
        %v1993 = vadd.s32 %v1992, 127
        %v1994 = vshll.u32 %v1993, 23
        %v1995 = vor.u32 4788187, %v1994
        %v1996 = vand.u32 2147483647, %v1995
        %v1998 = vcvt.s32.f32 %v1991
        %v1999 = vmul.f32 %v1998, %v1996
        %v2000 = vxor.u32 %v1999, 2147483648
        %v2001 = vsel %vm1918, %v2000, %v1999
        %v2002 = vsub.s32 4, %v1978
        %v2003 = vsel %vm1918, %v2002, %v1978
        %v2004 = vsel %vm1917, %v1028, %v2001
        %v2005 = vsel %vm1917, 0, %v2003
        %v2006 = vcosq.f32.pop %v2004
        %v2007 = vsinq.f32.pop %v2004
        %vm2008 = vweird.f32 %v1028
        %v2009 = vadd.s32 %v2005, 3
        %v2010 = vand.u32 %v2009, 3
        %vm2011 = vcmp.lt.s32.totalorder %v2010, 2
        %vm2012 = vcmp.eq.s32.totalorder %v2010, 0
        %v2013 = vxor.u32 %v2007, 2147483648
        %v2014 = vsel %vm2012, %v2006, %v2013
        %vm2015 = vcmp.eq.s32.totalorder %v2010, 2
        %v2016 = vxor.u32 %v2006, 2147483648
        %v2017 = vsel %vm2015, %v2016, %v2007
        %v2018 = vsel %vm2011, %v2014, %v2017
        %v2019 = vsel %vm2008, nan, %v2018
        %v2020 = vand.u32 2147483647, %v1029
        %vm2021 = vcmp.le.f32.partialorder %v2020, 0.7853982
        %vm2022 = vcmp.lt.s32.totalorder %v1029, 0
        %v2023 = vand.u32 %v1029, 2139095040
        %v2024 = vshrl.u32 %v2023, 23
        %v2025 = vsub.s32 %v2024, 127
        %v2026 = vand.u32 2147483647, %v1029
        %v2027 = vand.u32 %v2026, 8388607
        %v2028 = vor.u32 %v2027, 8388608
        %v2029 = vsub.s32 0, %v2028
        %v2030 = vadd.s32 %v2025, 1
        %vm2031 = vcmp.gt.s32.totalorder %v2030, 0
        %v2032 = vsel %vm2031, %v2030, 0
        %v2033 = vshrl.u32 %v2032, 5
        %v2034 = vand.u32 %v2032, 31
        %v2035 = vsub.s32 32, %v2034
        %v2036 = vshrl.u32 683565275, %v2035
        %v2037 = vshll.u32 683565275, %v2034
        %v2038 = vshrl.u32 2475754826, %v2035
        %v2039 = vor.u32 %v2037, %v2038
        %v2040 = vshll.u32 2475754826, %v2034
        %v2041 = vshrl.u32 2131351028, %v2035
        %v2042 = vor.u32 %v2040, %v2041
        %v2043 = vshll.u32 2131351028, %v2034
        %v2044 = vshrl.u32 2102212464, %v2035
        %v2045 = vor.u32 %v2043, %v2044
        %v2046 = vshll.u32 2102212464, %v2034
        %v2047 = vshrl.u32 920167782, %v2035
        %v2048 = vor.u32 %v2046, %v2047
        %v2049 = vshll.u32 920167782, %v2034
        %v2050 = vshrl.u32 1326507024, %v2035
        %v2051 = vor.u32 %v2049, %v2050
        %vm2052 = vcmp.lt.s32.totalorder %v2033, 1
        %vm2053 = vcmp.lt.s32.totalorder %v2033, 2
        %vm2054 = vcmp.lt.s32.totalorder %v2033, 3
        %vm2055 = vcmp.lt.s32.totalorder %v2033, 4
        %v2056 = vsel %vm2052, %v2036, %v2039
        %v2057 = vsel %vm2055, %v2045, 2102212464
        %v2058 = vsel %vm2054, %v2042, %v2057
        %v2059 = vsel %vm2053, %v2056, %v2058
        %v2060 = vsel %vm2052, %v2039, %v2042
        %v2061 = vsel %vm2055, %v2048, 920167782
        %v2062 = vsel %vm2054, %v2045, %v2061
        %v2063 = vsel %vm2053, %v2060, %v2062
        %v2064 = vsel %vm2052, %v2042, %v2045
        %v2065 = vsel %vm2055, %v2051, 1326507024
        %v2066 = vsel %vm2054, %v2048, %v2065
        %v2067 = vsel %vm2053, %v2064, %v2066
        %v2068 = vshll.u32 %v2028, 8
        %v2069 = vmul.u32.u64.compose %v2068, %v2067
        %v2070 = vextract.low.u32 %v2069
        %v2071 = vextract.high.u32 %v2069
        %v2072 = vmul.u32.u64.compose %v2068, %v2063
        %v2073 = vextract.low.u32 %v2072
        %v2074 = vextract.high.u32 %v2072
        %v2075 = vmul.u32 %v2068, %v2059
        %v2076 = vadd.s32 %v2071, %v2073
        %vm2077 = vc.u32 %v2071, %v2073
        %v2078 = vadd.s32 %v2074, 1
        %v2079 = vsel %vm2077, %v2078, %v2074
        %v2080 = vadd.s32 %v2075, %v2079
        %v2081 = vadd.s32 %v2080, 536870912
        %v2082 = vshrl.u32 %v2081, 30
        %v2083 = vshll.u32 %v2082, 30
        %v2084 = vsub.s32 %v2080, %v2083
        %vm2085 = vcmp.lt.s32.totalorder %v2084, 0
        %v2086 = vsub.s32 0, %v2084
        %v2087 = vsel %vm2085, %v2086, %v2084
        %v2088 = vclz %v2087
        %v2089 = vsub.s32 %v2088, 2
        %vm2090 = vcmp.gt.s32.totalorder 0, %v2089
        %v2091 = vsel %vm2090, 0, %v2089
        %v2092 = vsub.s32 32, %v2091
        %v2093 = vshll.u32 %v2084, %v2091
        %v2094 = vshrl.u32 %v2076, %v2092
        %v2095 = vor.u32 %v2093, %v2094
        %v2096 = vsub.s32 4294967266, %v2091
        %v2097 = vadd.s32 %v2096, 127
        %v2098 = vshll.u32 %v2097, 23
        %v2099 = vor.u32 4788187, %v2098
        %v2100 = vand.u32 2147483647, %v2099
        %v2102 = vcvt.s32.f32 %v2095
        %v2103 = vmul.f32 %v2102, %v2100
        %v2104 = vxor.u32 %v2103, 2147483648
        %v2105 = vsel %vm2022, %v2104, %v2103
        %v2106 = vsub.s32 4, %v2082
        %v2107 = vsel %vm2022, %v2106, %v2082
        %v2108 = vsel %vm2021, %v1029, %v2105
        %v2109 = vsel %vm2021, 0, %v2107
        %v2110 = vcosq.f32.pop %v2108
        %v2111 = vsinq.f32.pop %v2108
        %vm2112 = vweird.f32 %v1029
        %v2113 = vadd.s32 %v2109, 3
        %v2114 = vand.u32 %v2113, 3
        %vm2115 = vcmp.lt.s32.totalorder %v2114, 2
        %vm2116 = vcmp.eq.s32.totalorder %v2114, 0
        %v2117 = vxor.u32 %v2111, 2147483648
        %v2118 = vsel %vm2116, %v2110, %v2117
        %vm2119 = vcmp.eq.s32.totalorder %v2114, 2
        %v2120 = vxor.u32 %v2110, 2147483648
        %v2121 = vsel %vm2119, %v2120, %v2111
        %v2122 = vsel %vm2115, %v2118, %v2121
        %v2123 = vsel %vm2112, nan, %v2122
        %v2124 = vand.u32 2147483647, %v1030
        %vm2125 = vcmp.le.f32.partialorder %v2124, 0.7853982
        %vm2126 = vcmp.lt.s32.totalorder %v1030, 0
        %v2127 = vand.u32 %v1030, 2139095040
        %v2128 = vshrl.u32 %v2127, 23
        %v2129 = vsub.s32 %v2128, 127
        %v2130 = vand.u32 2147483647, %v1030
        %v2131 = vand.u32 %v2130, 8388607
        %v2132 = vor.u32 %v2131, 8388608
        %v2133 = vsub.s32 0, %v2132
        %v2134 = vadd.s32 %v2129, 1
        %vm2135 = vcmp.gt.s32.totalorder %v2134, 0
        %v2136 = vsel %vm2135, %v2134, 0
        %v2137 = vshrl.u32 %v2136, 5
        %v2138 = vand.u32 %v2136, 31
        %v2139 = vsub.s32 32, %v2138
        %v2140 = vshrl.u32 683565275, %v2139
        %v2141 = vshll.u32 683565275, %v2138
        %v2142 = vshrl.u32 2475754826, %v2139
        %v2143 = vor.u32 %v2141, %v2142
        %v2144 = vshll.u32 2475754826, %v2138
        %v2145 = vshrl.u32 2131351028, %v2139
        %v2146 = vor.u32 %v2144, %v2145
        %v2147 = vshll.u32 2131351028, %v2138
        %v2148 = vshrl.u32 2102212464, %v2139
        %v2149 = vor.u32 %v2147, %v2148
        %v2150 = vshll.u32 2102212464, %v2138
        %v2151 = vshrl.u32 920167782, %v2139
        %v2152 = vor.u32 %v2150, %v2151
        %v2153 = vshll.u32 920167782, %v2138
        %v2154 = vshrl.u32 1326507024, %v2139
        %v2155 = vor.u32 %v2153, %v2154
        %vm2156 = vcmp.lt.s32.totalorder %v2137, 1
        %vm2157 = vcmp.lt.s32.totalorder %v2137, 2
        %vm2158 = vcmp.lt.s32.totalorder %v2137, 3
        %vm2159 = vcmp.lt.s32.totalorder %v2137, 4
        %v2160 = vsel %vm2156, %v2140, %v2143
        %v2161 = vsel %vm2159, %v2149, 2102212464
        %v2162 = vsel %vm2158, %v2146, %v2161
        %v2163 = vsel %vm2157, %v2160, %v2162
        %v2164 = vsel %vm2156, %v2143, %v2146
        %v2165 = vsel %vm2159, %v2152, 920167782
        %v2166 = vsel %vm2158, %v2149, %v2165
        %v2167 = vsel %vm2157, %v2164, %v2166
        %v2168 = vsel %vm2156, %v2146, %v2149
        %v2169 = vsel %vm2159, %v2155, 1326507024
        %v2170 = vsel %vm2158, %v2152, %v2169
        %v2171 = vsel %vm2157, %v2168, %v2170
        %v2172 = vshll.u32 %v2132, 8
        %v2173 = vmul.u32.u64.compose %v2172, %v2171
        %v2174 = vextract.low.u32 %v2173
        %v2175 = vextract.high.u32 %v2173
        %v2176 = vmul.u32.u64.compose %v2172, %v2167
        %v2177 = vextract.low.u32 %v2176
        %v2178 = vextract.high.u32 %v2176
        %v2179 = vmul.u32 %v2172, %v2163
        %v2180 = vadd.s32 %v2175, %v2177
        %vm2181 = vc.u32 %v2175, %v2177
        %v2182 = vadd.s32 %v2178, 1
        %v2183 = vsel %vm2181, %v2182, %v2178
        %v2184 = vadd.s32 %v2179, %v2183
        %v2185 = vadd.s32 %v2184, 536870912
        %v2186 = vshrl.u32 %v2185, 30
        %v2187 = vshll.u32 %v2186, 30
        %v2188 = vsub.s32 %v2184, %v2187
        %vm2189 = vcmp.lt.s32.totalorder %v2188, 0
        %v2190 = vsub.s32 0, %v2188
        %v2191 = vsel %vm2189, %v2190, %v2188
        %v2192 = vclz %v2191
        %v2193 = vsub.s32 %v2192, 2
        %vm2194 = vcmp.gt.s32.totalorder 0, %v2193
        %v2195 = vsel %vm2194, 0, %v2193
        %v2196 = vsub.s32 32, %v2195
        %v2197 = vshll.u32 %v2188, %v2195
        %v2198 = vshrl.u32 %v2180, %v2196
        %v2199 = vor.u32 %v2197, %v2198
        %v2200 = vsub.s32 4294967266, %v2195
        %v2201 = vadd.s32 %v2200, 127
        %v2202 = vshll.u32 %v2201, 23
        %v2203 = vor.u32 4788187, %v2202
        %v2204 = vand.u32 2147483647, %v2203
        %v2206 = vcvt.s32.f32 %v2199
        %v2207 = vmul.f32 %v2206, %v2204
        %v2208 = vxor.u32 %v2207, 2147483648
        %v2209 = vsel %vm2126, %v2208, %v2207
        %v2210 = vsub.s32 4, %v2186
        %v2211 = vsel %vm2126, %v2210, %v2186
        %v2212 = vsel %vm2125, %v1030, %v2209
        %v2213 = vsel %vm2125, 0, %v2211
        %v2214 = vcosq.f32.pop %v2212
        %v2215 = vsinq.f32.pop %v2212
        %vm2216 = vweird.f32 %v1030
        %v2217 = vadd.s32 %v2213, 3
        %v2218 = vand.u32 %v2217, 3
        %vm2219 = vcmp.lt.s32.totalorder %v2218, 2
        %vm2220 = vcmp.eq.s32.totalorder %v2218, 0
        %v2221 = vxor.u32 %v2215, 2147483648
        %v2222 = vsel %vm2220, %v2214, %v2221
        %vm2223 = vcmp.eq.s32.totalorder %v2218, 2
        %v2224 = vxor.u32 %v2214, 2147483648
        %v2225 = vsel %vm2223, %v2224, %v2215
        %v2226 = vsel %vm2219, %v2222, %v2225
        %v2227 = vsel %vm2216, nan, %v2226
        %v2228 = vand.u32 2147483647, %v1031
        %vm2229 = vcmp.le.f32.partialorder %v2228, 0.7853982
        %vm2230 = vcmp.lt.s32.totalorder %v1031, 0
        %v2231 = vand.u32 %v1031, 2139095040
        %v2232 = vshrl.u32 %v2231, 23
        %v2233 = vsub.s32 %v2232, 127
        %v2234 = vand.u32 2147483647, %v1031
        %v2235 = vand.u32 %v2234, 8388607
        %v2236 = vor.u32 %v2235, 8388608
        %v2237 = vsub.s32 0, %v2236
        %v2238 = vadd.s32 %v2233, 1
        %vm2239 = vcmp.gt.s32.totalorder %v2238, 0
        %v2240 = vsel %vm2239, %v2238, 0
        %v2241 = vshrl.u32 %v2240, 5
        %v2242 = vand.u32 %v2240, 31
        %v2243 = vsub.s32 32, %v2242
        %v2244 = vshrl.u32 683565275, %v2243
        %v2245 = vshll.u32 683565275, %v2242
        %v2246 = vshrl.u32 2475754826, %v2243
        %v2247 = vor.u32 %v2245, %v2246
        %v2248 = vshll.u32 2475754826, %v2242
        %v2249 = vshrl.u32 2131351028, %v2243
        %v2250 = vor.u32 %v2248, %v2249
        %v2251 = vshll.u32 2131351028, %v2242
        %v2252 = vshrl.u32 2102212464, %v2243
        %v2253 = vor.u32 %v2251, %v2252
        %v2254 = vshll.u32 2102212464, %v2242
        %v2255 = vshrl.u32 920167782, %v2243
        %v2256 = vor.u32 %v2254, %v2255
        %v2257 = vshll.u32 920167782, %v2242
        %v2258 = vshrl.u32 1326507024, %v2243
        %v2259 = vor.u32 %v2257, %v2258
        %vm2260 = vcmp.lt.s32.totalorder %v2241, 1
        %vm2261 = vcmp.lt.s32.totalorder %v2241, 2
        %vm2262 = vcmp.lt.s32.totalorder %v2241, 3
        %vm2263 = vcmp.lt.s32.totalorder %v2241, 4
        %v2264 = vsel %vm2260, %v2244, %v2247
        %v2265 = vsel %vm2263, %v2253, 2102212464
        %v2266 = vsel %vm2262, %v2250, %v2265
        %v2267 = vsel %vm2261, %v2264, %v2266
        %v2268 = vsel %vm2260, %v2247, %v2250
        %v2269 = vsel %vm2263, %v2256, 920167782
        %v2270 = vsel %vm2262, %v2253, %v2269
        %v2271 = vsel %vm2261, %v2268, %v2270
        %v2272 = vsel %vm2260, %v2250, %v2253
        %v2273 = vsel %vm2263, %v2259, 1326507024
        %v2274 = vsel %vm2262, %v2256, %v2273
        %v2275 = vsel %vm2261, %v2272, %v2274
        %v2276 = vshll.u32 %v2236, 8
        %v2277 = vmul.u32.u64.compose %v2276, %v2275
        %v2278 = vextract.low.u32 %v2277
        %v2279 = vextract.high.u32 %v2277
        %v2280 = vmul.u32.u64.compose %v2276, %v2271
        %v2281 = vextract.low.u32 %v2280
        %v2282 = vextract.high.u32 %v2280
        %v2283 = vmul.u32 %v2276, %v2267
        %v2284 = vadd.s32 %v2279, %v2281
        %vm2285 = vc.u32 %v2279, %v2281
        %v2286 = vadd.s32 %v2282, 1
        %v2287 = vsel %vm2285, %v2286, %v2282
        %v2288 = vadd.s32 %v2283, %v2287
        %v2289 = vadd.s32 %v2288, 536870912
        %v2290 = vshrl.u32 %v2289, 30
        %v2291 = vshll.u32 %v2290, 30
        %v2292 = vsub.s32 %v2288, %v2291
        %vm2293 = vcmp.lt.s32.totalorder %v2292, 0
        %v2294 = vsub.s32 0, %v2292
        %v2295 = vsel %vm2293, %v2294, %v2292
        %v2296 = vclz %v2295
        %v2297 = vsub.s32 %v2296, 2
        %vm2298 = vcmp.gt.s32.totalorder 0, %v2297
        %v2299 = vsel %vm2298, 0, %v2297
        %v2300 = vsub.s32 32, %v2299
        %v2301 = vshll.u32 %v2292, %v2299
        %v2302 = vshrl.u32 %v2284, %v2300
        %v2303 = vor.u32 %v2301, %v2302
        %v2304 = vsub.s32 4294967266, %v2299
        %v2305 = vadd.s32 %v2304, 127
        %v2306 = vshll.u32 %v2305, 23
        %v2307 = vor.u32 4788187, %v2306
        %v2308 = vand.u32 2147483647, %v2307
        %v2310 = vcvt.s32.f32 %v2303
        %v2311 = vmul.f32 %v2310, %v2308
        %v2312 = vxor.u32 %v2311, 2147483648
        %v2313 = vsel %vm2230, %v2312, %v2311
        %v2314 = vsub.s32 4, %v2290
        %v2315 = vsel %vm2230, %v2314, %v2290
        %v2316 = vsel %vm2229, %v1031, %v2313
        %v2317 = vsel %vm2229, 0, %v2315
        %v2318 = vcosq.f32.pop %v2316
        %v2319 = vsinq.f32.pop %v2316
        %vm2320 = vweird.f32 %v1031
        %v2321 = vadd.s32 %v2317, 3
        %v2322 = vand.u32 %v2321, 3
        %vm2323 = vcmp.lt.s32.totalorder %v2322, 2
        %vm2324 = vcmp.eq.s32.totalorder %v2322, 0
        %v2325 = vxor.u32 %v2319, 2147483648
        %v2326 = vsel %vm2324, %v2318, %v2325
        %vm2327 = vcmp.eq.s32.totalorder %v2322, 2
        %v2328 = vxor.u32 %v2318, 2147483648
        %v2329 = vsel %vm2327, %v2328, %v2319
        %v2330 = vsel %vm2323, %v2326, %v2329
        %v2331 = vsel %vm2320, nan, %v2330
        %v2332 = vand.u32 2147483647, %v1032
        %vm2333 = vcmp.le.f32.partialorder %v2332, 0.7853982
        %vm2334 = vcmp.lt.s32.totalorder %v1032, 0
        %v2335 = vand.u32 %v1032, 2139095040
        %v2336 = vshrl.u32 %v2335, 23
        %v2337 = vsub.s32 %v2336, 127
        %v2338 = vand.u32 2147483647, %v1032
        %v2339 = vand.u32 %v2338, 8388607
        %v2340 = vor.u32 %v2339, 8388608
        %v2341 = vsub.s32 0, %v2340
        %v2342 = vadd.s32 %v2337, 1
        %vm2343 = vcmp.gt.s32.totalorder %v2342, 0
        %v2344 = vsel %vm2343, %v2342, 0
        %v2345 = vshrl.u32 %v2344, 5
        %v2346 = vand.u32 %v2344, 31
        %v2347 = vsub.s32 32, %v2346
        %v2348 = vshrl.u32 683565275, %v2347
        %v2349 = vshll.u32 683565275, %v2346
        %v2350 = vshrl.u32 2475754826, %v2347
        %v2351 = vor.u32 %v2349, %v2350
        %v2352 = vshll.u32 2475754826, %v2346
        %v2353 = vshrl.u32 2131351028, %v2347
        %v2354 = vor.u32 %v2352, %v2353
        %v2355 = vshll.u32 2131351028, %v2346
        %v2356 = vshrl.u32 2102212464, %v2347
        %v2357 = vor.u32 %v2355, %v2356
        %v2358 = vshll.u32 2102212464, %v2346
        %v2359 = vshrl.u32 920167782, %v2347
        %v2360 = vor.u32 %v2358, %v2359
        %v2361 = vshll.u32 920167782, %v2346
        %v2362 = vshrl.u32 1326507024, %v2347
        %v2363 = vor.u32 %v2361, %v2362
        %vm2364 = vcmp.lt.s32.totalorder %v2345, 1
        %vm2365 = vcmp.lt.s32.totalorder %v2345, 2
        %vm2366 = vcmp.lt.s32.totalorder %v2345, 3
        %vm2367 = vcmp.lt.s32.totalorder %v2345, 4
        %v2368 = vsel %vm2364, %v2348, %v2351
        %v2369 = vsel %vm2367, %v2357, 2102212464
        %v2370 = vsel %vm2366, %v2354, %v2369
        %v2371 = vsel %vm2365, %v2368, %v2370
        %v2372 = vsel %vm2364, %v2351, %v2354
        %v2373 = vsel %vm2367, %v2360, 920167782
        %v2374 = vsel %vm2366, %v2357, %v2373
        %v2375 = vsel %vm2365, %v2372, %v2374
        %v2376 = vsel %vm2364, %v2354, %v2357
        %v2377 = vsel %vm2367, %v2363, 1326507024
        %v2378 = vsel %vm2366, %v2360, %v2377
        %v2379 = vsel %vm2365, %v2376, %v2378
        %v2380 = vshll.u32 %v2340, 8
        %v2381 = vmul.u32.u64.compose %v2380, %v2379
        %v2382 = vextract.low.u32 %v2381
        %v2383 = vextract.high.u32 %v2381
        %v2384 = vmul.u32.u64.compose %v2380, %v2375
        %v2385 = vextract.low.u32 %v2384
        %v2386 = vextract.high.u32 %v2384
        %v2387 = vmul.u32 %v2380, %v2371
        %v2388 = vadd.s32 %v2383, %v2385
        %vm2389 = vc.u32 %v2383, %v2385
        %v2390 = vadd.s32 %v2386, 1
        %v2391 = vsel %vm2389, %v2390, %v2386
        %v2392 = vadd.s32 %v2387, %v2391
        %v2393 = vadd.s32 %v2392, 536870912
        %v2394 = vshrl.u32 %v2393, 30
        %v2395 = vshll.u32 %v2394, 30
        %v2396 = vsub.s32 %v2392, %v2395
        %vm2397 = vcmp.lt.s32.totalorder %v2396, 0
        %v2398 = vsub.s32 0, %v2396
        %v2399 = vsel %vm2397, %v2398, %v2396
        %v2400 = vclz %v2399
        %v2401 = vsub.s32 %v2400, 2
        %vm2402 = vcmp.gt.s32.totalorder 0, %v2401
        %v2403 = vsel %vm2402, 0, %v2401
        %v2404 = vsub.s32 32, %v2403
        %v2405 = vshll.u32 %v2396, %v2403
        %v2406 = vshrl.u32 %v2388, %v2404
        %v2407 = vor.u32 %v2405, %v2406
        %v2408 = vsub.s32 4294967266, %v2403
        %v2409 = vadd.s32 %v2408, 127
        %v2410 = vshll.u32 %v2409, 23
        %v2411 = vor.u32 4788187, %v2410
        %v2412 = vand.u32 2147483647, %v2411
        %v2414 = vcvt.s32.f32 %v2407
        %v2415 = vmul.f32 %v2414, %v2412
        %v2416 = vxor.u32 %v2415, 2147483648
        %v2417 = vsel %vm2334, %v2416, %v2415
        %v2418 = vsub.s32 4, %v2394
        %v2419 = vsel %vm2334, %v2418, %v2394
        %v2420 = vsel %vm2333, %v1032, %v2417
        %v2421 = vsel %vm2333, 0, %v2419
        %v2422 = vcosq.f32.pop %v2420
        %v2423 = vsinq.f32.pop %v2420
        %vm2424 = vweird.f32 %v1032
        %v2425 = vadd.s32 %v2421, 3
        %v2426 = vand.u32 %v2425, 3
        %vm2427 = vcmp.lt.s32.totalorder %v2426, 2
        %vm2428 = vcmp.eq.s32.totalorder %v2426, 0
        %v2429 = vxor.u32 %v2423, 2147483648
        %v2430 = vsel %vm2428, %v2422, %v2429
        %vm2431 = vcmp.eq.s32.totalorder %v2426, 2
        %v2432 = vxor.u32 %v2422, 2147483648
        %v2433 = vsel %vm2431, %v2432, %v2423
        %v2434 = vsel %vm2427, %v2430, %v2433
        %v2435 = vsel %vm2424, nan, %v2434
        %v2436 = vand.u32 2147483647, %v1033
        %vm2437 = vcmp.le.f32.partialorder %v2436, 0.7853982
        %vm2438 = vcmp.lt.s32.totalorder %v1033, 0
        %v2439 = vand.u32 %v1033, 2139095040
        %v2440 = vshrl.u32 %v2439, 23
        %v2441 = vsub.s32 %v2440, 127
        %v2442 = vand.u32 2147483647, %v1033
        %v2443 = vand.u32 %v2442, 8388607
        %v2444 = vor.u32 %v2443, 8388608
        %v2445 = vsub.s32 0, %v2444
        %v2446 = vadd.s32 %v2441, 1
        %vm2447 = vcmp.gt.s32.totalorder %v2446, 0
        %v2448 = vsel %vm2447, %v2446, 0
        %v2449 = vshrl.u32 %v2448, 5
        %v2450 = vand.u32 %v2448, 31
        %v2451 = vsub.s32 32, %v2450
        %v2452 = vshrl.u32 683565275, %v2451
        %v2453 = vshll.u32 683565275, %v2450
        %v2454 = vshrl.u32 2475754826, %v2451
        %v2455 = vor.u32 %v2453, %v2454
        %v2456 = vshll.u32 2475754826, %v2450
        %v2457 = vshrl.u32 2131351028, %v2451
        %v2458 = vor.u32 %v2456, %v2457
        %v2459 = vshll.u32 2131351028, %v2450
        %v2460 = vshrl.u32 2102212464, %v2451
        %v2461 = vor.u32 %v2459, %v2460
        %v2462 = vshll.u32 2102212464, %v2450
        %v2463 = vshrl.u32 920167782, %v2451
        %v2464 = vor.u32 %v2462, %v2463
        %v2465 = vshll.u32 920167782, %v2450
        %v2466 = vshrl.u32 1326507024, %v2451
        %v2467 = vor.u32 %v2465, %v2466
        %vm2468 = vcmp.lt.s32.totalorder %v2449, 1
        %vm2469 = vcmp.lt.s32.totalorder %v2449, 2
        %vm2470 = vcmp.lt.s32.totalorder %v2449, 3
        %vm2471 = vcmp.lt.s32.totalorder %v2449, 4
        %v2472 = vsel %vm2468, %v2452, %v2455
        %v2473 = vsel %vm2471, %v2461, 2102212464
        %v2474 = vsel %vm2470, %v2458, %v2473
        %v2475 = vsel %vm2469, %v2472, %v2474
        %v2476 = vsel %vm2468, %v2455, %v2458
        %v2477 = vsel %vm2471, %v2464, 920167782
        %v2478 = vsel %vm2470, %v2461, %v2477
        %v2479 = vsel %vm2469, %v2476, %v2478
        %v2480 = vsel %vm2468, %v2458, %v2461
        %v2481 = vsel %vm2471, %v2467, 1326507024
        %v2482 = vsel %vm2470, %v2464, %v2481
        %v2483 = vsel %vm2469, %v2480, %v2482
        %v2484 = vshll.u32 %v2444, 8
        %v2485 = vmul.u32.u64.compose %v2484, %v2483
        %v2486 = vextract.low.u32 %v2485
        %v2487 = vextract.high.u32 %v2485
        %v2488 = vmul.u32.u64.compose %v2484, %v2479
        %v2489 = vextract.low.u32 %v2488
        %v2490 = vextract.high.u32 %v2488
        %v2491 = vmul.u32 %v2484, %v2475
        %v2492 = vadd.s32 %v2487, %v2489
        %vm2493 = vc.u32 %v2487, %v2489
        %v2494 = vadd.s32 %v2490, 1
        %v2495 = vsel %vm2493, %v2494, %v2490
        %v2496 = vadd.s32 %v2491, %v2495
        %v2497 = vadd.s32 %v2496, 536870912
        %v2498 = vshrl.u32 %v2497, 30
        %v2499 = vshll.u32 %v2498, 30
        %v2500 = vsub.s32 %v2496, %v2499
        %vm2501 = vcmp.lt.s32.totalorder %v2500, 0
        %v2502 = vsub.s32 0, %v2500
        %v2503 = vsel %vm2501, %v2502, %v2500
        %v2504 = vclz %v2503
        %v2505 = vsub.s32 %v2504, 2
        %vm2506 = vcmp.gt.s32.totalorder 0, %v2505
        %v2507 = vsel %vm2506, 0, %v2505
        %v2508 = vsub.s32 32, %v2507
        %v2509 = vshll.u32 %v2500, %v2507
        %v2510 = vshrl.u32 %v2492, %v2508
        %v2511 = vor.u32 %v2509, %v2510
        %v2512 = vsub.s32 4294967266, %v2507
        %v2513 = vadd.s32 %v2512, 127
        %v2514 = vshll.u32 %v2513, 23
        %v2515 = vor.u32 4788187, %v2514
        %v2516 = vand.u32 2147483647, %v2515
        %v2518 = vcvt.s32.f32 %v2511
        %v2519 = vmul.f32 %v2518, %v2516
        %v2520 = vxor.u32 %v2519, 2147483648
        %v2521 = vsel %vm2438, %v2520, %v2519
        %v2522 = vsub.s32 4, %v2498
        %v2523 = vsel %vm2438, %v2522, %v2498
        %v2524 = vsel %vm2437, %v1033, %v2521
        %v2525 = vsel %vm2437, 0, %v2523
        %v2526 = vcosq.f32.pop %v2524
        %v2527 = vsinq.f32.pop %v2524
        %vm2528 = vweird.f32 %v1033
        %v2529 = vadd.s32 %v2525, 3
        %v2530 = vand.u32 %v2529, 3
        %vm2531 = vcmp.lt.s32.totalorder %v2530, 2
        %vm2532 = vcmp.eq.s32.totalorder %v2530, 0
        %v2533 = vxor.u32 %v2527, 2147483648
        %v2534 = vsel %vm2532, %v2526, %v2533
        %vm2535 = vcmp.eq.s32.totalorder %v2530, 2
        %v2536 = vxor.u32 %v2526, 2147483648
        %v2537 = vsel %vm2535, %v2536, %v2527
        %v2538 = vsel %vm2531, %v2534, %v2537
        %v2539 = vsel %vm2528, nan, %v2538
        %v2540 = vand.u32 2147483647, %v1034
        %vm2541 = vcmp.le.f32.partialorder %v2540, 0.7853982
        %vm2542 = vcmp.lt.s32.totalorder %v1034, 0
        %v2543 = vand.u32 %v1034, 2139095040
        %v2544 = vshrl.u32 %v2543, 23
        %v2545 = vsub.s32 %v2544, 127
        %v2546 = vand.u32 2147483647, %v1034
        %v2547 = vand.u32 %v2546, 8388607
        %v2548 = vor.u32 %v2547, 8388608
        %v2549 = vsub.s32 0, %v2548
        %v2550 = vadd.s32 %v2545, 1
        %vm2551 = vcmp.gt.s32.totalorder %v2550, 0
        %v2552 = vsel %vm2551, %v2550, 0
        %v2553 = vshrl.u32 %v2552, 5
        %v2554 = vand.u32 %v2552, 31
        %v2555 = vsub.s32 32, %v2554
        %v2556 = vshrl.u32 683565275, %v2555
        %v2557 = vshll.u32 683565275, %v2554
        %v2558 = vshrl.u32 2475754826, %v2555
        %v2559 = vor.u32 %v2557, %v2558
        %v2560 = vshll.u32 2475754826, %v2554
        %v2561 = vshrl.u32 2131351028, %v2555
        %v2562 = vor.u32 %v2560, %v2561
        %v2563 = vshll.u32 2131351028, %v2554
        %v2564 = vshrl.u32 2102212464, %v2555
        %v2565 = vor.u32 %v2563, %v2564
        %v2566 = vshll.u32 2102212464, %v2554
        %v2567 = vshrl.u32 920167782, %v2555
        %v2568 = vor.u32 %v2566, %v2567
        %v2569 = vshll.u32 920167782, %v2554
        %v2570 = vshrl.u32 1326507024, %v2555
        %v2571 = vor.u32 %v2569, %v2570
        %vm2572 = vcmp.lt.s32.totalorder %v2553, 1
        %vm2573 = vcmp.lt.s32.totalorder %v2553, 2
        %vm2574 = vcmp.lt.s32.totalorder %v2553, 3
        %vm2575 = vcmp.lt.s32.totalorder %v2553, 4
        %v2576 = vsel %vm2572, %v2556, %v2559
        %v2577 = vsel %vm2575, %v2565, 2102212464
        %v2578 = vsel %vm2574, %v2562, %v2577
        %v2579 = vsel %vm2573, %v2576, %v2578
        %v2580 = vsel %vm2572, %v2559, %v2562
        %v2581 = vsel %vm2575, %v2568, 920167782
        %v2582 = vsel %vm2574, %v2565, %v2581
        %v2583 = vsel %vm2573, %v2580, %v2582
        %v2584 = vsel %vm2572, %v2562, %v2565
        %v2585 = vsel %vm2575, %v2571, 1326507024
        %v2586 = vsel %vm2574, %v2568, %v2585
        %v2587 = vsel %vm2573, %v2584, %v2586
        %v2588 = vshll.u32 %v2548, 8
        %v2589 = vmul.u32.u64.compose %v2588, %v2587
        %v2590 = vextract.low.u32 %v2589
        %v2591 = vextract.high.u32 %v2589
        %v2592 = vmul.u32.u64.compose %v2588, %v2583
        %v2593 = vextract.low.u32 %v2592
        %v2594 = vextract.high.u32 %v2592
        %v2595 = vmul.u32 %v2588, %v2579
        %v2596 = vadd.s32 %v2591, %v2593
        %vm2597 = vc.u32 %v2591, %v2593
        %v2598 = vadd.s32 %v2594, 1
        %v2599 = vsel %vm2597, %v2598, %v2594
        %v2600 = vadd.s32 %v2595, %v2599
        %v2601 = vadd.s32 %v2600, 536870912
        %v2602 = vshrl.u32 %v2601, 30
        %v2603 = vshll.u32 %v2602, 30
        %v2604 = vsub.s32 %v2600, %v2603
        %vm2605 = vcmp.lt.s32.totalorder %v2604, 0
        %v2606 = vsub.s32 0, %v2604
        %v2607 = vsel %vm2605, %v2606, %v2604
        %v2608 = vclz %v2607
        %v2609 = vsub.s32 %v2608, 2
        %vm2610 = vcmp.gt.s32.totalorder 0, %v2609
        %v2611 = vsel %vm2610, 0, %v2609
        %v2612 = vsub.s32 32, %v2611
        %v2613 = vshll.u32 %v2604, %v2611
        %v2614 = vshrl.u32 %v2596, %v2612
        %v2615 = vor.u32 %v2613, %v2614
        %v2616 = vsub.s32 4294967266, %v2611
        %v2617 = vadd.s32 %v2616, 127
        %v2618 = vshll.u32 %v2617, 23
        %v2619 = vor.u32 4788187, %v2618
        %v2620 = vand.u32 2147483647, %v2619
        %v2622 = vcvt.s32.f32 %v2615
        %v2623 = vmul.f32 %v2622, %v2620
        %v2624 = vxor.u32 %v2623, 2147483648
        %v2625 = vsel %vm2542, %v2624, %v2623
        %v2626 = vsub.s32 4, %v2602
        %v2627 = vsel %vm2542, %v2626, %v2602
        %v2628 = vsel %vm2541, %v1034, %v2625
        %v2629 = vsel %vm2541, 0, %v2627
        %v2630 = vcosq.f32.pop %v2628
        %v2631 = vsinq.f32.pop %v2628
        %vm2632 = vweird.f32 %v1034
        %v2633 = vadd.s32 %v2629, 3
        %v2634 = vand.u32 %v2633, 3
        %vm2635 = vcmp.lt.s32.totalorder %v2634, 2
        %vm2636 = vcmp.eq.s32.totalorder %v2634, 0
        %v2637 = vxor.u32 %v2631, 2147483648
        %v2638 = vsel %vm2636, %v2630, %v2637
        %vm2639 = vcmp.eq.s32.totalorder %v2634, 2
        %v2640 = vxor.u32 %v2630, 2147483648
        %v2641 = vsel %vm2639, %v2640, %v2631
        %v2642 = vsel %vm2635, %v2638, %v2641
        %v2643 = vsel %vm2632, nan, %v2642
        %v2644 = vand.u32 2147483647, %v1035
        %vm2645 = vcmp.le.f32.partialorder %v2644, 0.7853982
        %vm2646 = vcmp.lt.s32.totalorder %v1035, 0
        %v2647 = vand.u32 %v1035, 2139095040
        %v2648 = vshrl.u32 %v2647, 23
        %v2649 = vsub.s32 %v2648, 127
        %v2650 = vand.u32 2147483647, %v1035
        %v2651 = vand.u32 %v2650, 8388607
        %v2652 = vor.u32 %v2651, 8388608
        %v2653 = vsub.s32 0, %v2652
        %v2654 = vadd.s32 %v2649, 1
        %vm2655 = vcmp.gt.s32.totalorder %v2654, 0
        %v2656 = vsel %vm2655, %v2654, 0
        %v2657 = vshrl.u32 %v2656, 5
        %v2658 = vand.u32 %v2656, 31
        %v2659 = vsub.s32 32, %v2658
        %v2660 = vshrl.u32 683565275, %v2659
        %v2661 = vshll.u32 683565275, %v2658
        %v2662 = vshrl.u32 2475754826, %v2659
        %v2663 = vor.u32 %v2661, %v2662
        %v2664 = vshll.u32 2475754826, %v2658
        %v2665 = vshrl.u32 2131351028, %v2659
        %v2666 = vor.u32 %v2664, %v2665
        %v2667 = vshll.u32 2131351028, %v2658
        %v2668 = vshrl.u32 2102212464, %v2659
        %v2669 = vor.u32 %v2667, %v2668
        %v2670 = vshll.u32 2102212464, %v2658
        %v2671 = vshrl.u32 920167782, %v2659
        %v2672 = vor.u32 %v2670, %v2671
        %v2673 = vshll.u32 920167782, %v2658
        %v2674 = vshrl.u32 1326507024, %v2659
        %v2675 = vor.u32 %v2673, %v2674
        %vm2676 = vcmp.lt.s32.totalorder %v2657, 1
        %vm2677 = vcmp.lt.s32.totalorder %v2657, 2
        %vm2678 = vcmp.lt.s32.totalorder %v2657, 3
        %vm2679 = vcmp.lt.s32.totalorder %v2657, 4
        %v2680 = vsel %vm2676, %v2660, %v2663
        %v2681 = vsel %vm2679, %v2669, 2102212464
        %v2682 = vsel %vm2678, %v2666, %v2681
        %v2683 = vsel %vm2677, %v2680, %v2682
        %v2684 = vsel %vm2676, %v2663, %v2666
        %v2685 = vsel %vm2679, %v2672, 920167782
        %v2686 = vsel %vm2678, %v2669, %v2685
        %v2687 = vsel %vm2677, %v2684, %v2686
        %v2688 = vsel %vm2676, %v2666, %v2669
        %v2689 = vsel %vm2679, %v2675, 1326507024
        %v2690 = vsel %vm2678, %v2672, %v2689
        %v2691 = vsel %vm2677, %v2688, %v2690
        %v2692 = vshll.u32 %v2652, 8
        %v2693 = vmul.u32.u64.compose %v2692, %v2691
        %v2694 = vextract.low.u32 %v2693
        %v2695 = vextract.high.u32 %v2693
        %v2696 = vmul.u32.u64.compose %v2692, %v2687
        %v2697 = vextract.low.u32 %v2696
        %v2698 = vextract.high.u32 %v2696
        %v2699 = vmul.u32 %v2692, %v2683
        %v2700 = vadd.s32 %v2695, %v2697
        %vm2701 = vc.u32 %v2695, %v2697
        %v2702 = vadd.s32 %v2698, 1
        %v2703 = vsel %vm2701, %v2702, %v2698
        %v2704 = vadd.s32 %v2699, %v2703
        %v2705 = vadd.s32 %v2704, 536870912
        %v2706 = vshrl.u32 %v2705, 30
        %v2707 = vshll.u32 %v2706, 30
        %v2708 = vsub.s32 %v2704, %v2707
        %vm2709 = vcmp.lt.s32.totalorder %v2708, 0
        %v2710 = vsub.s32 0, %v2708
        %v2711 = vsel %vm2709, %v2710, %v2708
        %v2712 = vclz %v2711
        %v2713 = vsub.s32 %v2712, 2
        %vm2714 = vcmp.gt.s32.totalorder 0, %v2713
        %v2715 = vsel %vm2714, 0, %v2713
        %v2716 = vsub.s32 32, %v2715
        %v2717 = vshll.u32 %v2708, %v2715
        %v2718 = vshrl.u32 %v2700, %v2716
        %v2719 = vor.u32 %v2717, %v2718
        %v2720 = vsub.s32 4294967266, %v2715
        %v2721 = vadd.s32 %v2720, 127
        %v2722 = vshll.u32 %v2721, 23
        %v2723 = vor.u32 4788187, %v2722
        %v2724 = vand.u32 2147483647, %v2723
        %v2726 = vcvt.s32.f32 %v2719
        %v2727 = vmul.f32 %v2726, %v2724
        %v2728 = vxor.u32 %v2727, 2147483648
        %v2729 = vsel %vm2646, %v2728, %v2727
        %v2730 = vsub.s32 4, %v2706
        %v2731 = vsel %vm2646, %v2730, %v2706
        %v2732 = vsel %vm2645, %v1035, %v2729
        %v2733 = vsel %vm2645, 0, %v2731
        %v2734 = vcosq.f32.pop %v2732
        %v2735 = vsinq.f32.pop %v2732
        %vm2736 = vweird.f32 %v1035
        %v2737 = vadd.s32 %v2733, 3
        %v2738 = vand.u32 %v2737, 3
        %vm2739 = vcmp.lt.s32.totalorder %v2738, 2
        %vm2740 = vcmp.eq.s32.totalorder %v2738, 0
        %v2741 = vxor.u32 %v2735, 2147483648
        %v2742 = vsel %vm2740, %v2734, %v2741
        %vm2743 = vcmp.eq.s32.totalorder %v2738, 2
        %v2744 = vxor.u32 %v2734, 2147483648
        %v2745 = vsel %vm2743, %v2744, %v2735
        %v2746 = vsel %vm2739, %v2742, %v2745
        %v2747 = vsel %vm2736, nan, %v2746
        %v2748 = vand.u32 2147483647, %v1036
        %vm2749 = vcmp.le.f32.partialorder %v2748, 0.7853982
        %vm2750 = vcmp.lt.s32.totalorder %v1036, 0
        %v2751 = vand.u32 %v1036, 2139095040
        %v2752 = vshrl.u32 %v2751, 23
        %v2753 = vsub.s32 %v2752, 127
        %v2754 = vand.u32 2147483647, %v1036
        %v2755 = vand.u32 %v2754, 8388607
        %v2756 = vor.u32 %v2755, 8388608
        %v2757 = vsub.s32 0, %v2756
        %v2758 = vadd.s32 %v2753, 1
        %vm2759 = vcmp.gt.s32.totalorder %v2758, 0
        %v2760 = vsel %vm2759, %v2758, 0
        %v2761 = vshrl.u32 %v2760, 5
        %v2762 = vand.u32 %v2760, 31
        %v2763 = vsub.s32 32, %v2762
        %v2764 = vshrl.u32 683565275, %v2763
        %v2765 = vshll.u32 683565275, %v2762
        %v2766 = vshrl.u32 2475754826, %v2763
        %v2767 = vor.u32 %v2765, %v2766
        %v2768 = vshll.u32 2475754826, %v2762
        %v2769 = vshrl.u32 2131351028, %v2763
        %v2770 = vor.u32 %v2768, %v2769
        %v2771 = vshll.u32 2131351028, %v2762
        %v2772 = vshrl.u32 2102212464, %v2763
        %v2773 = vor.u32 %v2771, %v2772
        %v2774 = vshll.u32 2102212464, %v2762
        %v2775 = vshrl.u32 920167782, %v2763
        %v2776 = vor.u32 %v2774, %v2775
        %v2777 = vshll.u32 920167782, %v2762
        %v2778 = vshrl.u32 1326507024, %v2763
        %v2779 = vor.u32 %v2777, %v2778
        %vm2780 = vcmp.lt.s32.totalorder %v2761, 1
        %vm2781 = vcmp.lt.s32.totalorder %v2761, 2
        %vm2782 = vcmp.lt.s32.totalorder %v2761, 3
        %vm2783 = vcmp.lt.s32.totalorder %v2761, 4
        %v2784 = vsel %vm2780, %v2764, %v2767
        %v2785 = vsel %vm2783, %v2773, 2102212464
        %v2786 = vsel %vm2782, %v2770, %v2785
        %v2787 = vsel %vm2781, %v2784, %v2786
        %v2788 = vsel %vm2780, %v2767, %v2770
        %v2789 = vsel %vm2783, %v2776, 920167782
        %v2790 = vsel %vm2782, %v2773, %v2789
        %v2791 = vsel %vm2781, %v2788, %v2790
        %v2792 = vsel %vm2780, %v2770, %v2773
        %v2793 = vsel %vm2783, %v2779, 1326507024
        %v2794 = vsel %vm2782, %v2776, %v2793
        %v2795 = vsel %vm2781, %v2792, %v2794
        %v2796 = vshll.u32 %v2756, 8
        %v2797 = vmul.u32.u64.compose %v2796, %v2795
        %v2798 = vextract.low.u32 %v2797
        %v2799 = vextract.high.u32 %v2797
        %v2800 = vmul.u32.u64.compose %v2796, %v2791
        %v2801 = vextract.low.u32 %v2800
        %v2802 = vextract.high.u32 %v2800
        %v2803 = vmul.u32 %v2796, %v2787
        %v2804 = vadd.s32 %v2799, %v2801
        %vm2805 = vc.u32 %v2799, %v2801
        %v2806 = vadd.s32 %v2802, 1
        %v2807 = vsel %vm2805, %v2806, %v2802
        %v2808 = vadd.s32 %v2803, %v2807
        %v2809 = vadd.s32 %v2808, 536870912
        %v2810 = vshrl.u32 %v2809, 30
        %v2811 = vshll.u32 %v2810, 30
        %v2812 = vsub.s32 %v2808, %v2811
        %vm2813 = vcmp.lt.s32.totalorder %v2812, 0
        %v2814 = vsub.s32 0, %v2812
        %v2815 = vsel %vm2813, %v2814, %v2812
        %v2816 = vclz %v2815
        %v2817 = vsub.s32 %v2816, 2
        %vm2818 = vcmp.gt.s32.totalorder 0, %v2817
        %v2819 = vsel %vm2818, 0, %v2817
        %v2820 = vsub.s32 32, %v2819
        %v2821 = vshll.u32 %v2812, %v2819
        %v2822 = vshrl.u32 %v2804, %v2820
        %v2823 = vor.u32 %v2821, %v2822
        %v2824 = vsub.s32 4294967266, %v2819
        %v2825 = vadd.s32 %v2824, 127
        %v2826 = vshll.u32 %v2825, 23
        %v2827 = vor.u32 4788187, %v2826
        %v2828 = vand.u32 2147483647, %v2827
        %v2830 = vcvt.s32.f32 %v2823
        %v2831 = vmul.f32 %v2830, %v2828
        %v2832 = vxor.u32 %v2831, 2147483648
        %v2833 = vsel %vm2750, %v2832, %v2831
        %v2834 = vsub.s32 4, %v2810
        %v2835 = vsel %vm2750, %v2834, %v2810
        %v2836 = vsel %vm2749, %v1036, %v2833
        %v2837 = vsel %vm2749, 0, %v2835
        %v2838 = vcosq.f32.pop %v2836
        %v2839 = vsinq.f32.pop %v2836
        %vm2840 = vweird.f32 %v1036
        %v2841 = vadd.s32 %v2837, 3
        %v2842 = vand.u32 %v2841, 3
        %vm2843 = vcmp.lt.s32.totalorder %v2842, 2
        %vm2844 = vcmp.eq.s32.totalorder %v2842, 0
        %v2845 = vxor.u32 %v2839, 2147483648
        %v2846 = vsel %vm2844, %v2838, %v2845
        %vm2847 = vcmp.eq.s32.totalorder %v2842, 2
        %v2848 = vxor.u32 %v2838, 2147483648
        %v2849 = vsel %vm2847, %v2848, %v2839
        %v2850 = vsel %vm2843, %v2846, %v2849
        %v2851 = vsel %vm2840, nan, %v2850
        %v2852 = vand.u32 2147483647, %v1037
        %vm2853 = vcmp.le.f32.partialorder %v2852, 0.7853982
        %vm2854 = vcmp.lt.s32.totalorder %v1037, 0
        %v2855 = vand.u32 %v1037, 2139095040
        %v2856 = vshrl.u32 %v2855, 23
        %v2857 = vsub.s32 %v2856, 127
        %v2858 = vand.u32 2147483647, %v1037
        %v2859 = vand.u32 %v2858, 8388607
        %v2860 = vor.u32 %v2859, 8388608
        %v2861 = vsub.s32 0, %v2860
        %v2862 = vadd.s32 %v2857, 1
        %vm2863 = vcmp.gt.s32.totalorder %v2862, 0
        %v2864 = vsel %vm2863, %v2862, 0
        %v2865 = vshrl.u32 %v2864, 5
        %v2866 = vand.u32 %v2864, 31
        %v2867 = vsub.s32 32, %v2866
        %v2868 = vshrl.u32 683565275, %v2867
        %v2869 = vshll.u32 683565275, %v2866
        %v2870 = vshrl.u32 2475754826, %v2867
        %v2871 = vor.u32 %v2869, %v2870
        %v2872 = vshll.u32 2475754826, %v2866
        %v2873 = vshrl.u32 2131351028, %v2867
        %v2874 = vor.u32 %v2872, %v2873
        %v2875 = vshll.u32 2131351028, %v2866
        %v2876 = vshrl.u32 2102212464, %v2867
        %v2877 = vor.u32 %v2875, %v2876
        %v2878 = vshll.u32 2102212464, %v2866
        %v2879 = vshrl.u32 920167782, %v2867
        %v2880 = vor.u32 %v2878, %v2879
        %v2881 = vshll.u32 920167782, %v2866
        %v2882 = vshrl.u32 1326507024, %v2867
        %v2883 = vor.u32 %v2881, %v2882
        %vm2884 = vcmp.lt.s32.totalorder %v2865, 1
        %vm2885 = vcmp.lt.s32.totalorder %v2865, 2
        %vm2886 = vcmp.lt.s32.totalorder %v2865, 3
        %vm2887 = vcmp.lt.s32.totalorder %v2865, 4
        %v2888 = vsel %vm2884, %v2868, %v2871
        %v2889 = vsel %vm2887, %v2877, 2102212464
        %v2890 = vsel %vm2886, %v2874, %v2889
        %v2891 = vsel %vm2885, %v2888, %v2890
        %v2892 = vsel %vm2884, %v2871, %v2874
        %v2893 = vsel %vm2887, %v2880, 920167782
        %v2894 = vsel %vm2886, %v2877, %v2893
        %v2895 = vsel %vm2885, %v2892, %v2894
        %v2896 = vsel %vm2884, %v2874, %v2877
        %v2897 = vsel %vm2887, %v2883, 1326507024
        %v2898 = vsel %vm2886, %v2880, %v2897
        %v2899 = vsel %vm2885, %v2896, %v2898
        %v2900 = vshll.u32 %v2860, 8
        %v2901 = vmul.u32.u64.compose %v2900, %v2899
        %v2902 = vextract.low.u32 %v2901
        %v2903 = vextract.high.u32 %v2901
        %v2904 = vmul.u32.u64.compose %v2900, %v2895
        %v2905 = vextract.low.u32 %v2904
        %v2906 = vextract.high.u32 %v2904
        %v2907 = vmul.u32 %v2900, %v2891
        %v2908 = vadd.s32 %v2903, %v2905
        %vm2909 = vc.u32 %v2903, %v2905
        %v2910 = vadd.s32 %v2906, 1
        %v2911 = vsel %vm2909, %v2910, %v2906
        %v2912 = vadd.s32 %v2907, %v2911
        %v2913 = vadd.s32 %v2912, 536870912
        %v2914 = vshrl.u32 %v2913, 30
        %v2915 = vshll.u32 %v2914, 30
        %v2916 = vsub.s32 %v2912, %v2915
        %vm2917 = vcmp.lt.s32.totalorder %v2916, 0
        %v2918 = vsub.s32 0, %v2916
        %v2919 = vsel %vm2917, %v2918, %v2916
        %v2920 = vclz %v2919
        %v2921 = vsub.s32 %v2920, 2
        %vm2922 = vcmp.gt.s32.totalorder 0, %v2921
        %v2923 = vsel %vm2922, 0, %v2921
        %v2924 = vsub.s32 32, %v2923
        %v2925 = vshll.u32 %v2916, %v2923
        %v2926 = vshrl.u32 %v2908, %v2924
        %v2927 = vor.u32 %v2925, %v2926
        %v2928 = vsub.s32 4294967266, %v2923
        %v2929 = vadd.s32 %v2928, 127
        %v2930 = vshll.u32 %v2929, 23
        %v2931 = vor.u32 4788187, %v2930
        %v2932 = vand.u32 2147483647, %v2931
        %v2934 = vcvt.s32.f32 %v2927
        %v2935 = vmul.f32 %v2934, %v2932
        %v2936 = vxor.u32 %v2935, 2147483648
        %v2937 = vsel %vm2854, %v2936, %v2935
        %v2938 = vsub.s32 4, %v2914
        %v2939 = vsel %vm2854, %v2938, %v2914
        %v2940 = vsel %vm2853, %v1037, %v2937
        %v2941 = vsel %vm2853, 0, %v2939
        %v2942 = vcosq.f32.pop %v2940
        %v2943 = vsinq.f32.pop %v2940
        %vm2944 = vweird.f32 %v1037
        %v2945 = vadd.s32 %v2941, 3
        %v2946 = vand.u32 %v2945, 3
        %vm2947 = vcmp.lt.s32.totalorder %v2946, 2
        %vm2948 = vcmp.eq.s32.totalorder %v2946, 0
        %v2949 = vxor.u32 %v2943, 2147483648
        %v2950 = vsel %vm2948, %v2942, %v2949
        %vm2951 = vcmp.eq.s32.totalorder %v2946, 2
        %v2952 = vxor.u32 %v2942, 2147483648
        %v2953 = vsel %vm2951, %v2952, %v2943
        %v2954 = vsel %vm2947, %v2950, %v2953
        %v2955 = vsel %vm2944, nan, %v2954
        %v2956 = vand.u32 2147483647, %v1038
        %vm2957 = vcmp.le.f32.partialorder %v2956, 0.7853982
        %vm2958 = vcmp.lt.s32.totalorder %v1038, 0
        %v2959 = vand.u32 %v1038, 2139095040
        %v2960 = vshrl.u32 %v2959, 23
        %v2961 = vsub.s32 %v2960, 127
        %v2962 = vand.u32 2147483647, %v1038
        %v2963 = vand.u32 %v2962, 8388607
        %v2964 = vor.u32 %v2963, 8388608
        %v2965 = vsub.s32 0, %v2964
        %v2966 = vadd.s32 %v2961, 1
        %vm2967 = vcmp.gt.s32.totalorder %v2966, 0
        %v2968 = vsel %vm2967, %v2966, 0
        %v2969 = vshrl.u32 %v2968, 5
        %v2970 = vand.u32 %v2968, 31
        %v2971 = vsub.s32 32, %v2970
        %v2972 = vshrl.u32 683565275, %v2971
        %v2973 = vshll.u32 683565275, %v2970
        %v2974 = vshrl.u32 2475754826, %v2971
        %v2975 = vor.u32 %v2973, %v2974
        %v2976 = vshll.u32 2475754826, %v2970
        %v2977 = vshrl.u32 2131351028, %v2971
        %v2978 = vor.u32 %v2976, %v2977
        %v2979 = vshll.u32 2131351028, %v2970
        %v2980 = vshrl.u32 2102212464, %v2971
        %v2981 = vor.u32 %v2979, %v2980
        %v2982 = vshll.u32 2102212464, %v2970
        %v2983 = vshrl.u32 920167782, %v2971
        %v2984 = vor.u32 %v2982, %v2983
        %v2985 = vshll.u32 920167782, %v2970
        %v2986 = vshrl.u32 1326507024, %v2971
        %v2987 = vor.u32 %v2985, %v2986
        %vm2988 = vcmp.lt.s32.totalorder %v2969, 1
        %vm2989 = vcmp.lt.s32.totalorder %v2969, 2
        %vm2990 = vcmp.lt.s32.totalorder %v2969, 3
        %vm2991 = vcmp.lt.s32.totalorder %v2969, 4
        %v2992 = vsel %vm2988, %v2972, %v2975
        %v2993 = vsel %vm2991, %v2981, 2102212464
        %v2994 = vsel %vm2990, %v2978, %v2993
        %v2995 = vsel %vm2989, %v2992, %v2994
        %v2996 = vsel %vm2988, %v2975, %v2978
        %v2997 = vsel %vm2991, %v2984, 920167782
        %v2998 = vsel %vm2990, %v2981, %v2997
        %v2999 = vsel %vm2989, %v2996, %v2998
        %v3000 = vsel %vm2988, %v2978, %v2981
        %v3001 = vsel %vm2991, %v2987, 1326507024
        %v3002 = vsel %vm2990, %v2984, %v3001
        %v3003 = vsel %vm2989, %v3000, %v3002
        %v3004 = vshll.u32 %v2964, 8
        %v3005 = vmul.u32.u64.compose %v3004, %v3003
        %v3006 = vextract.low.u32 %v3005
        %v3007 = vextract.high.u32 %v3005
        %v3008 = vmul.u32.u64.compose %v3004, %v2999
        %v3009 = vextract.low.u32 %v3008
        %v3010 = vextract.high.u32 %v3008
        %v3011 = vmul.u32 %v3004, %v2995
        %v3012 = vadd.s32 %v3007, %v3009
        %vm3013 = vc.u32 %v3007, %v3009
        %v3014 = vadd.s32 %v3010, 1
        %v3015 = vsel %vm3013, %v3014, %v3010
        %v3016 = vadd.s32 %v3011, %v3015
        %v3017 = vadd.s32 %v3016, 536870912
        %v3018 = vshrl.u32 %v3017, 30
        %v3019 = vshll.u32 %v3018, 30
        %v3020 = vsub.s32 %v3016, %v3019
        %vm3021 = vcmp.lt.s32.totalorder %v3020, 0
        %v3022 = vsub.s32 0, %v3020
        %v3023 = vsel %vm3021, %v3022, %v3020
        %v3024 = vclz %v3023
        %v3025 = vsub.s32 %v3024, 2
        %vm3026 = vcmp.gt.s32.totalorder 0, %v3025
        %v3027 = vsel %vm3026, 0, %v3025
        %v3028 = vsub.s32 32, %v3027
        %v3029 = vshll.u32 %v3020, %v3027
        %v3030 = vshrl.u32 %v3012, %v3028
        %v3031 = vor.u32 %v3029, %v3030
        %v3032 = vsub.s32 4294967266, %v3027
        %v3033 = vadd.s32 %v3032, 127
        %v3034 = vshll.u32 %v3033, 23
        %v3035 = vor.u32 4788187, %v3034
        %v3036 = vand.u32 2147483647, %v3035
        %v3038 = vcvt.s32.f32 %v3031
        %v3039 = vmul.f32 %v3038, %v3036
        %v3040 = vxor.u32 %v3039, 2147483648
        %v3041 = vsel %vm2958, %v3040, %v3039
        %v3042 = vsub.s32 4, %v3018
        %v3043 = vsel %vm2958, %v3042, %v3018
        %v3044 = vsel %vm2957, %v1038, %v3041
        %v3045 = vsel %vm2957, 0, %v3043
        %v3046 = vcosq.f32.pop %v3044
        %v3047 = vsinq.f32.pop %v3044
        %vm3048 = vweird.f32 %v1038
        %v3049 = vadd.s32 %v3045, 3
        %v3050 = vand.u32 %v3049, 3
        %vm3051 = vcmp.lt.s32.totalorder %v3050, 2
        %vm3052 = vcmp.eq.s32.totalorder %v3050, 0
        %v3053 = vxor.u32 %v3047, 2147483648
        %v3054 = vsel %vm3052, %v3046, %v3053
        %vm3055 = vcmp.eq.s32.totalorder %v3050, 2
        %v3056 = vxor.u32 %v3046, 2147483648
        %v3057 = vsel %vm3055, %v3056, %v3047
        %v3058 = vsel %vm3051, %v3054, %v3057
        %v3059 = vsel %vm3048, nan, %v3058
        %v3060 = vand.u32 2147483647, %v1039
        %vm3061 = vcmp.le.f32.partialorder %v3060, 0.7853982
        %vm3062 = vcmp.lt.s32.totalorder %v1039, 0
        %v3063 = vand.u32 %v1039, 2139095040
        %v3064 = vshrl.u32 %v3063, 23
        %v3065 = vsub.s32 %v3064, 127
        %v3066 = vand.u32 2147483647, %v1039
        %v3067 = vand.u32 %v3066, 8388607
        %v3068 = vor.u32 %v3067, 8388608
        %v3069 = vsub.s32 0, %v3068
        %v3070 = vadd.s32 %v3065, 1
        %vm3071 = vcmp.gt.s32.totalorder %v3070, 0
        %v3072 = vsel %vm3071, %v3070, 0
        %v3073 = vshrl.u32 %v3072, 5
        %v3074 = vand.u32 %v3072, 31
        %v3075 = vsub.s32 32, %v3074
        %v3076 = vshrl.u32 683565275, %v3075
        %v3077 = vshll.u32 683565275, %v3074
        %v3078 = vshrl.u32 2475754826, %v3075
        %v3079 = vor.u32 %v3077, %v3078
        %v3080 = vshll.u32 2475754826, %v3074
        %v3081 = vshrl.u32 2131351028, %v3075
        %v3082 = vor.u32 %v3080, %v3081
        %v3083 = vshll.u32 2131351028, %v3074
        %v3084 = vshrl.u32 2102212464, %v3075
        %v3085 = vor.u32 %v3083, %v3084
        %v3086 = vshll.u32 2102212464, %v3074
        %v3087 = vshrl.u32 920167782, %v3075
        %v3088 = vor.u32 %v3086, %v3087
        %v3089 = vshll.u32 920167782, %v3074
        %v3090 = vshrl.u32 1326507024, %v3075
        %v3091 = vor.u32 %v3089, %v3090
        %vm3092 = vcmp.lt.s32.totalorder %v3073, 1
        %vm3093 = vcmp.lt.s32.totalorder %v3073, 2
        %vm3094 = vcmp.lt.s32.totalorder %v3073, 3
        %vm3095 = vcmp.lt.s32.totalorder %v3073, 4
        %v3096 = vsel %vm3092, %v3076, %v3079
        %v3097 = vsel %vm3095, %v3085, 2102212464
        %v3098 = vsel %vm3094, %v3082, %v3097
        %v3099 = vsel %vm3093, %v3096, %v3098
        %v3100 = vsel %vm3092, %v3079, %v3082
        %v3101 = vsel %vm3095, %v3088, 920167782
        %v3102 = vsel %vm3094, %v3085, %v3101
        %v3103 = vsel %vm3093, %v3100, %v3102
        %v3104 = vsel %vm3092, %v3082, %v3085
        %v3105 = vsel %vm3095, %v3091, 1326507024
        %v3106 = vsel %vm3094, %v3088, %v3105
        %v3107 = vsel %vm3093, %v3104, %v3106
        %v3108 = vshll.u32 %v3068, 8
        %v3109 = vmul.u32.u64.compose %v3108, %v3107
        %v3110 = vextract.low.u32 %v3109
        %v3111 = vextract.high.u32 %v3109
        %v3112 = vmul.u32.u64.compose %v3108, %v3103
        %v3113 = vextract.low.u32 %v3112
        %v3114 = vextract.high.u32 %v3112
        %v3115 = vmul.u32 %v3108, %v3099
        %v3116 = vadd.s32 %v3111, %v3113
        %vm3117 = vc.u32 %v3111, %v3113
        %v3118 = vadd.s32 %v3114, 1
        %v3119 = vsel %vm3117, %v3118, %v3114
        %v3120 = vadd.s32 %v3115, %v3119
        %v3121 = vadd.s32 %v3120, 536870912
        %v3122 = vshrl.u32 %v3121, 30
        %v3123 = vshll.u32 %v3122, 30
        %v3124 = vsub.s32 %v3120, %v3123
        %vm3125 = vcmp.lt.s32.totalorder %v3124, 0
        %v3126 = vsub.s32 0, %v3124
        %v3127 = vsel %vm3125, %v3126, %v3124
        %v3128 = vclz %v3127
        %v3129 = vsub.s32 %v3128, 2
        %vm3130 = vcmp.gt.s32.totalorder 0, %v3129
        %v3131 = vsel %vm3130, 0, %v3129
        %v3132 = vsub.s32 32, %v3131
        %v3133 = vshll.u32 %v3124, %v3131
        %v3134 = vshrl.u32 %v3116, %v3132
        %v3135 = vor.u32 %v3133, %v3134
        %v3136 = vsub.s32 4294967266, %v3131
        %v3137 = vadd.s32 %v3136, 127
        %v3138 = vshll.u32 %v3137, 23
        %v3139 = vor.u32 4788187, %v3138
        %v3140 = vand.u32 2147483647, %v3139
        %v3142 = vcvt.s32.f32 %v3135
        %v3143 = vmul.f32 %v3142, %v3140
        %v3144 = vxor.u32 %v3143, 2147483648
        %v3145 = vsel %vm3062, %v3144, %v3143
        %v3146 = vsub.s32 4, %v3122
        %v3147 = vsel %vm3062, %v3146, %v3122
        %v3148 = vsel %vm3061, %v1039, %v3145
        %v3149 = vsel %vm3061, 0, %v3147
        %v3150 = vcosq.f32.pop %v3148
        %v3151 = vsinq.f32.pop %v3148
        %vm3152 = vweird.f32 %v1039
        %v3153 = vadd.s32 %v3149, 3
        %v3154 = vand.u32 %v3153, 3
        %vm3155 = vcmp.lt.s32.totalorder %v3154, 2
        %vm3156 = vcmp.eq.s32.totalorder %v3154, 0
        %v3157 = vxor.u32 %v3151, 2147483648
        %v3158 = vsel %vm3156, %v3150, %v3157
        %vm3159 = vcmp.eq.s32.totalorder %v3154, 2
        %v3160 = vxor.u32 %v3150, 2147483648
        %v3161 = vsel %vm3159, %v3160, %v3151
        %v3162 = vsel %vm3155, %v3158, %v3161
        %v3163 = vsel %vm3152, nan, %v3162
        %v3164 = vand.u32 2147483647, %v1040
        %vm3165 = vcmp.le.f32.partialorder %v3164, 0.7853982
        %vm3166 = vcmp.lt.s32.totalorder %v1040, 0
        %v3167 = vand.u32 %v1040, 2139095040
        %v3168 = vshrl.u32 %v3167, 23
        %v3169 = vsub.s32 %v3168, 127
        %v3170 = vand.u32 2147483647, %v1040
        %v3171 = vand.u32 %v3170, 8388607
        %v3172 = vor.u32 %v3171, 8388608
        %v3173 = vsub.s32 0, %v3172
        %v3174 = vadd.s32 %v3169, 1
        %vm3175 = vcmp.gt.s32.totalorder %v3174, 0
        %v3176 = vsel %vm3175, %v3174, 0
        %v3177 = vshrl.u32 %v3176, 5
        %v3178 = vand.u32 %v3176, 31
        %v3179 = vsub.s32 32, %v3178
        %v3180 = vshrl.u32 683565275, %v3179
        %v3181 = vshll.u32 683565275, %v3178
        %v3182 = vshrl.u32 2475754826, %v3179
        %v3183 = vor.u32 %v3181, %v3182
        %v3184 = vshll.u32 2475754826, %v3178
        %v3185 = vshrl.u32 2131351028, %v3179
        %v3186 = vor.u32 %v3184, %v3185
        %v3187 = vshll.u32 2131351028, %v3178
        %v3188 = vshrl.u32 2102212464, %v3179
        %v3189 = vor.u32 %v3187, %v3188
        %v3190 = vshll.u32 2102212464, %v3178
        %v3191 = vshrl.u32 920167782, %v3179
        %v3192 = vor.u32 %v3190, %v3191
        %v3193 = vshll.u32 920167782, %v3178
        %v3194 = vshrl.u32 1326507024, %v3179
        %v3195 = vor.u32 %v3193, %v3194
        %vm3196 = vcmp.lt.s32.totalorder %v3177, 1
        %vm3197 = vcmp.lt.s32.totalorder %v3177, 2
        %vm3198 = vcmp.lt.s32.totalorder %v3177, 3
        %vm3199 = vcmp.lt.s32.totalorder %v3177, 4
        %v3200 = vsel %vm3196, %v3180, %v3183
        %v3201 = vsel %vm3199, %v3189, 2102212464
        %v3202 = vsel %vm3198, %v3186, %v3201
        %v3203 = vsel %vm3197, %v3200, %v3202
        %v3204 = vsel %vm3196, %v3183, %v3186
        %v3205 = vsel %vm3199, %v3192, 920167782
        %v3206 = vsel %vm3198, %v3189, %v3205
        %v3207 = vsel %vm3197, %v3204, %v3206
        %v3208 = vsel %vm3196, %v3186, %v3189
        %v3209 = vsel %vm3199, %v3195, 1326507024
        %v3210 = vsel %vm3198, %v3192, %v3209
        %v3211 = vsel %vm3197, %v3208, %v3210
        %v3212 = vshll.u32 %v3172, 8
        %v3213 = vmul.u32.u64.compose %v3212, %v3211
        %v3214 = vextract.low.u32 %v3213
        %v3215 = vextract.high.u32 %v3213
        %v3216 = vmul.u32.u64.compose %v3212, %v3207
        %v3217 = vextract.low.u32 %v3216
        %v3218 = vextract.high.u32 %v3216
        %v3219 = vmul.u32 %v3212, %v3203
        %v3220 = vadd.s32 %v3215, %v3217
        %vm3221 = vc.u32 %v3215, %v3217
        %v3222 = vadd.s32 %v3218, 1
        %v3223 = vsel %vm3221, %v3222, %v3218
        %v3224 = vadd.s32 %v3219, %v3223
        %v3225 = vadd.s32 %v3224, 536870912
        %v3226 = vshrl.u32 %v3225, 30
        %v3227 = vshll.u32 %v3226, 30
        %v3228 = vsub.s32 %v3224, %v3227
        %vm3229 = vcmp.lt.s32.totalorder %v3228, 0
        %v3230 = vsub.s32 0, %v3228
        %v3231 = vsel %vm3229, %v3230, %v3228
        %v3232 = vclz %v3231
        %v3233 = vsub.s32 %v3232, 2
        %vm3234 = vcmp.gt.s32.totalorder 0, %v3233
        %v3235 = vsel %vm3234, 0, %v3233
        %v3236 = vsub.s32 32, %v3235
        %v3237 = vshll.u32 %v3228, %v3235
        %v3238 = vshrl.u32 %v3220, %v3236
        %v3239 = vor.u32 %v3237, %v3238
        %v3240 = vsub.s32 4294967266, %v3235
        %v3241 = vadd.s32 %v3240, 127
        %v3242 = vshll.u32 %v3241, 23
        %v3243 = vor.u32 4788187, %v3242
        %v3244 = vand.u32 2147483647, %v3243
        %v3246 = vcvt.s32.f32 %v3239
        %v3247 = vmul.f32 %v3246, %v3244
        %v3248 = vxor.u32 %v3247, 2147483648
        %v3249 = vsel %vm3166, %v3248, %v3247
        %v3250 = vsub.s32 4, %v3226
        %v3251 = vsel %vm3166, %v3250, %v3226
        %v3252 = vsel %vm3165, %v1040, %v3249
        %v3253 = vsel %vm3165, 0, %v3251
        %v3254 = vcosq.f32.pop %v3252
        %v3255 = vsinq.f32.pop %v3252
        %vm3256 = vweird.f32 %v1040
        %v3257 = vadd.s32 %v3253, 3
        %v3258 = vand.u32 %v3257, 3
        %vm3259 = vcmp.lt.s32.totalorder %v3258, 2
        %vm3260 = vcmp.eq.s32.totalorder %v3258, 0
        %v3261 = vxor.u32 %v3255, 2147483648
        %v3262 = vsel %vm3260, %v3254, %v3261
        %vm3263 = vcmp.eq.s32.totalorder %v3258, 2
        %v3264 = vxor.u32 %v3254, 2147483648
        %v3265 = vsel %vm3263, %v3264, %v3255
        %v3266 = vsel %vm3259, %v3262, %v3265
        %v3267 = vsel %vm3256, nan, %v3266
        %v3268 = vand.u32 2147483647, %v1041
        %vm3269 = vcmp.le.f32.partialorder %v3268, 0.7853982
        %vm3270 = vcmp.lt.s32.totalorder %v1041, 0
        %v3271 = vand.u32 %v1041, 2139095040
        %v3272 = vshrl.u32 %v3271, 23
        %v3273 = vsub.s32 %v3272, 127
        %v3274 = vand.u32 2147483647, %v1041
        %v3275 = vand.u32 %v3274, 8388607
        %v3276 = vor.u32 %v3275, 8388608
        %v3277 = vsub.s32 0, %v3276
        %v3278 = vadd.s32 %v3273, 1
        %vm3279 = vcmp.gt.s32.totalorder %v3278, 0
        %v3280 = vsel %vm3279, %v3278, 0
        %v3281 = vshrl.u32 %v3280, 5
        %v3282 = vand.u32 %v3280, 31
        %v3283 = vsub.s32 32, %v3282
        %v3284 = vshrl.u32 683565275, %v3283
        %v3285 = vshll.u32 683565275, %v3282
        %v3286 = vshrl.u32 2475754826, %v3283
        %v3287 = vor.u32 %v3285, %v3286
        %v3288 = vshll.u32 2475754826, %v3282
        %v3289 = vshrl.u32 2131351028, %v3283
        %v3290 = vor.u32 %v3288, %v3289
        %v3291 = vshll.u32 2131351028, %v3282
        %v3292 = vshrl.u32 2102212464, %v3283
        %v3293 = vor.u32 %v3291, %v3292
        %v3294 = vshll.u32 2102212464, %v3282
        %v3295 = vshrl.u32 920167782, %v3283
        %v3296 = vor.u32 %v3294, %v3295
        %v3297 = vshll.u32 920167782, %v3282
        %v3298 = vshrl.u32 1326507024, %v3283
        %v3299 = vor.u32 %v3297, %v3298
        %vm3300 = vcmp.lt.s32.totalorder %v3281, 1
        %vm3301 = vcmp.lt.s32.totalorder %v3281, 2
        %vm3302 = vcmp.lt.s32.totalorder %v3281, 3
        %vm3303 = vcmp.lt.s32.totalorder %v3281, 4
        %v3304 = vsel %vm3300, %v3284, %v3287
        %v3305 = vsel %vm3303, %v3293, 2102212464
        %v3306 = vsel %vm3302, %v3290, %v3305
        %v3307 = vsel %vm3301, %v3304, %v3306
        %v3308 = vsel %vm3300, %v3287, %v3290
        %v3309 = vsel %vm3303, %v3296, 920167782
        %v3310 = vsel %vm3302, %v3293, %v3309
        %v3311 = vsel %vm3301, %v3308, %v3310
        %v3312 = vsel %vm3300, %v3290, %v3293
        %v3313 = vsel %vm3303, %v3299, 1326507024
        %v3314 = vsel %vm3302, %v3296, %v3313
        %v3315 = vsel %vm3301, %v3312, %v3314
        %v3316 = vshll.u32 %v3276, 8
        %v3317 = vmul.u32.u64.compose %v3316, %v3315
        %v3318 = vextract.low.u32 %v3317
        %v3319 = vextract.high.u32 %v3317
        %v3320 = vmul.u32.u64.compose %v3316, %v3311
        %v3321 = vextract.low.u32 %v3320
        %v3322 = vextract.high.u32 %v3320
        %v3323 = vmul.u32 %v3316, %v3307
        %v3324 = vadd.s32 %v3319, %v3321
        %vm3325 = vc.u32 %v3319, %v3321
        %v3326 = vadd.s32 %v3322, 1
        %v3327 = vsel %vm3325, %v3326, %v3322
        %v3328 = vadd.s32 %v3323, %v3327
        %v3329 = vadd.s32 %v3328, 536870912
        %v3330 = vshrl.u32 %v3329, 30
        %v3331 = vshll.u32 %v3330, 30
        %v3332 = vsub.s32 %v3328, %v3331
        %vm3333 = vcmp.lt.s32.totalorder %v3332, 0
        %v3334 = vsub.s32 0, %v3332
        %v3335 = vsel %vm3333, %v3334, %v3332
        %v3336 = vclz %v3335
        %v3337 = vsub.s32 %v3336, 2
        %vm3338 = vcmp.gt.s32.totalorder 0, %v3337
        %v3339 = vsel %vm3338, 0, %v3337
        %v3340 = vsub.s32 32, %v3339
        %v3341 = vshll.u32 %v3332, %v3339
        %v3342 = vshrl.u32 %v3324, %v3340
        %v3343 = vor.u32 %v3341, %v3342
        %v3344 = vsub.s32 4294967266, %v3339
        %v3345 = vadd.s32 %v3344, 127
        %v3346 = vshll.u32 %v3345, 23
        %v3347 = vor.u32 4788187, %v3346
        %v3348 = vand.u32 2147483647, %v3347
        %v3350 = vcvt.s32.f32 %v3343
        %v3351 = vmul.f32 %v3350, %v3348
        %v3352 = vxor.u32 %v3351, 2147483648
        %v3353 = vsel %vm3270, %v3352, %v3351
        %v3354 = vsub.s32 4, %v3330
        %v3355 = vsel %vm3270, %v3354, %v3330
        %v3356 = vsel %vm3269, %v1041, %v3353
        %v3357 = vsel %vm3269, 0, %v3355
        %v3358 = vcosq.f32.pop %v3356
        %v3359 = vsinq.f32.pop %v3356
        %vm3360 = vweird.f32 %v1041
        %v3361 = vadd.s32 %v3357, 3
        %v3362 = vand.u32 %v3361, 3
        %vm3363 = vcmp.lt.s32.totalorder %v3362, 2
        %vm3364 = vcmp.eq.s32.totalorder %v3362, 0
        %v3365 = vxor.u32 %v3359, 2147483648
        %v3366 = vsel %vm3364, %v3358, %v3365
        %vm3367 = vcmp.eq.s32.totalorder %v3362, 2
        %v3368 = vxor.u32 %v3358, 2147483648
        %v3369 = vsel %vm3367, %v3368, %v3359
        %v3370 = vsel %vm3363, %v3366, %v3369
        %v3371 = vsel %vm3360, nan, %v3370
        %v3372 = vand.u32 2147483647, %v1042
        %vm3373 = vcmp.le.f32.partialorder %v3372, 0.7853982
        %vm3374 = vcmp.lt.s32.totalorder %v1042, 0
        %v3375 = vand.u32 %v1042, 2139095040
        %v3376 = vshrl.u32 %v3375, 23
        %v3377 = vsub.s32 %v3376, 127
        %v3378 = vand.u32 2147483647, %v1042
        %v3379 = vand.u32 %v3378, 8388607
        %v3380 = vor.u32 %v3379, 8388608
        %v3381 = vsub.s32 0, %v3380
        %v3382 = vadd.s32 %v3377, 1
        %vm3383 = vcmp.gt.s32.totalorder %v3382, 0
        %v3384 = vsel %vm3383, %v3382, 0
        %v3385 = vshrl.u32 %v3384, 5
        %v3386 = vand.u32 %v3384, 31
        %v3387 = vsub.s32 32, %v3386
        %v3388 = vshrl.u32 683565275, %v3387
        %v3389 = vshll.u32 683565275, %v3386
        %v3390 = vshrl.u32 2475754826, %v3387
        %v3391 = vor.u32 %v3389, %v3390
        %v3392 = vshll.u32 2475754826, %v3386
        %v3393 = vshrl.u32 2131351028, %v3387
        %v3394 = vor.u32 %v3392, %v3393
        %v3395 = vshll.u32 2131351028, %v3386
        %v3396 = vshrl.u32 2102212464, %v3387
        %v3397 = vor.u32 %v3395, %v3396
        %v3398 = vshll.u32 2102212464, %v3386
        %v3399 = vshrl.u32 920167782, %v3387
        %v3400 = vor.u32 %v3398, %v3399
        %v3401 = vshll.u32 920167782, %v3386
        %v3402 = vshrl.u32 1326507024, %v3387
        %v3403 = vor.u32 %v3401, %v3402
        %vm3404 = vcmp.lt.s32.totalorder %v3385, 1
        %vm3405 = vcmp.lt.s32.totalorder %v3385, 2
        %vm3406 = vcmp.lt.s32.totalorder %v3385, 3
        %vm3407 = vcmp.lt.s32.totalorder %v3385, 4
        %v3408 = vsel %vm3404, %v3388, %v3391
        %v3409 = vsel %vm3407, %v3397, 2102212464
        %v3410 = vsel %vm3406, %v3394, %v3409
        %v3411 = vsel %vm3405, %v3408, %v3410
        %v3412 = vsel %vm3404, %v3391, %v3394
        %v3413 = vsel %vm3407, %v3400, 920167782
        %v3414 = vsel %vm3406, %v3397, %v3413
        %v3415 = vsel %vm3405, %v3412, %v3414
        %v3416 = vsel %vm3404, %v3394, %v3397
        %v3417 = vsel %vm3407, %v3403, 1326507024
        %v3418 = vsel %vm3406, %v3400, %v3417
        %v3419 = vsel %vm3405, %v3416, %v3418
        %v3420 = vshll.u32 %v3380, 8
        %v3421 = vmul.u32.u64.compose %v3420, %v3419
        %v3422 = vextract.low.u32 %v3421
        %v3423 = vextract.high.u32 %v3421
        %v3424 = vmul.u32.u64.compose %v3420, %v3415
        %v3425 = vextract.low.u32 %v3424
        %v3426 = vextract.high.u32 %v3424
        %v3427 = vmul.u32 %v3420, %v3411
        %v3428 = vadd.s32 %v3423, %v3425
        %vm3429 = vc.u32 %v3423, %v3425
        %v3430 = vadd.s32 %v3426, 1
        %v3431 = vsel %vm3429, %v3430, %v3426
        %v3432 = vadd.s32 %v3427, %v3431
        %v3433 = vadd.s32 %v3432, 536870912
        %v3434 = vshrl.u32 %v3433, 30
        %v3435 = vshll.u32 %v3434, 30
        %v3436 = vsub.s32 %v3432, %v3435
        %vm3437 = vcmp.lt.s32.totalorder %v3436, 0
        %v3438 = vsub.s32 0, %v3436
        %v3439 = vsel %vm3437, %v3438, %v3436
        %v3440 = vclz %v3439
        %v3441 = vsub.s32 %v3440, 2
        %vm3442 = vcmp.gt.s32.totalorder 0, %v3441
        %v3443 = vsel %vm3442, 0, %v3441
        %v3444 = vsub.s32 32, %v3443
        %v3445 = vshll.u32 %v3436, %v3443
        %v3446 = vshrl.u32 %v3428, %v3444
        %v3447 = vor.u32 %v3445, %v3446
        %v3448 = vsub.s32 4294967266, %v3443
        %v3449 = vadd.s32 %v3448, 127
        %v3450 = vshll.u32 %v3449, 23
        %v3451 = vor.u32 4788187, %v3450
        %v3452 = vand.u32 2147483647, %v3451
        %v3454 = vcvt.s32.f32 %v3447
        %v3455 = vmul.f32 %v3454, %v3452
        %v3456 = vxor.u32 %v3455, 2147483648
        %v3457 = vsel %vm3374, %v3456, %v3455
        %v3458 = vsub.s32 4, %v3434
        %v3459 = vsel %vm3374, %v3458, %v3434
        %v3460 = vsel %vm3373, %v1042, %v3457
        %v3461 = vsel %vm3373, 0, %v3459
        %v3462 = vcosq.f32.pop %v3460
        %v3463 = vsinq.f32.pop %v3460
        %vm3464 = vweird.f32 %v1042
        %v3465 = vadd.s32 %v3461, 3
        %v3466 = vand.u32 %v3465, 3
        %vm3467 = vcmp.lt.s32.totalorder %v3466, 2
        %vm3468 = vcmp.eq.s32.totalorder %v3466, 0
        %v3469 = vxor.u32 %v3463, 2147483648
        %v3470 = vsel %vm3468, %v3462, %v3469
        %vm3471 = vcmp.eq.s32.totalorder %v3466, 2
        %v3472 = vxor.u32 %v3462, 2147483648
        %v3473 = vsel %vm3471, %v3472, %v3463
        %v3474 = vsel %vm3467, %v3470, %v3473
        %v3475 = vsel %vm3464, nan, %v3474
        %v3476 = vand.u32 2147483647, %v1043
        %vm3477 = vcmp.le.f32.partialorder %v3476, 0.7853982
        %vm3478 = vcmp.lt.s32.totalorder %v1043, 0
        %v3479 = vand.u32 %v1043, 2139095040
        %v3480 = vshrl.u32 %v3479, 23
        %v3481 = vsub.s32 %v3480, 127
        %v3482 = vand.u32 2147483647, %v1043
        %v3483 = vand.u32 %v3482, 8388607
        %v3484 = vor.u32 %v3483, 8388608
        %v3485 = vsub.s32 0, %v3484
        %v3486 = vadd.s32 %v3481, 1
        %vm3487 = vcmp.gt.s32.totalorder %v3486, 0
        %v3488 = vsel %vm3487, %v3486, 0
        %v3489 = vshrl.u32 %v3488, 5
        %v3490 = vand.u32 %v3488, 31
        %v3491 = vsub.s32 32, %v3490
        %v3492 = vshrl.u32 683565275, %v3491
        %v3493 = vshll.u32 683565275, %v3490
        %v3494 = vshrl.u32 2475754826, %v3491
        %v3495 = vor.u32 %v3493, %v3494
        %v3496 = vshll.u32 2475754826, %v3490
        %v3497 = vshrl.u32 2131351028, %v3491
        %v3498 = vor.u32 %v3496, %v3497
        %v3499 = vshll.u32 2131351028, %v3490
        %v3500 = vshrl.u32 2102212464, %v3491
        %v3501 = vor.u32 %v3499, %v3500
        %v3502 = vshll.u32 2102212464, %v3490
        %v3503 = vshrl.u32 920167782, %v3491
        %v3504 = vor.u32 %v3502, %v3503
        %v3505 = vshll.u32 920167782, %v3490
        %v3506 = vshrl.u32 1326507024, %v3491
        %v3507 = vor.u32 %v3505, %v3506
        %vm3508 = vcmp.lt.s32.totalorder %v3489, 1
        %vm3509 = vcmp.lt.s32.totalorder %v3489, 2
        %vm3510 = vcmp.lt.s32.totalorder %v3489, 3
        %vm3511 = vcmp.lt.s32.totalorder %v3489, 4
        %v3512 = vsel %vm3508, %v3492, %v3495
        %v3513 = vsel %vm3511, %v3501, 2102212464
        %v3514 = vsel %vm3510, %v3498, %v3513
        %v3515 = vsel %vm3509, %v3512, %v3514
        %v3516 = vsel %vm3508, %v3495, %v3498
        %v3517 = vsel %vm3511, %v3504, 920167782
        %v3518 = vsel %vm3510, %v3501, %v3517
        %v3519 = vsel %vm3509, %v3516, %v3518
        %v3520 = vsel %vm3508, %v3498, %v3501
        %v3521 = vsel %vm3511, %v3507, 1326507024
        %v3522 = vsel %vm3510, %v3504, %v3521
        %v3523 = vsel %vm3509, %v3520, %v3522
        %v3524 = vshll.u32 %v3484, 8
        %v3525 = vmul.u32.u64.compose %v3524, %v3523
        %v3526 = vextract.low.u32 %v3525
        %v3527 = vextract.high.u32 %v3525
        %v3528 = vmul.u32.u64.compose %v3524, %v3519
        %v3529 = vextract.low.u32 %v3528
        %v3530 = vextract.high.u32 %v3528
        %v3531 = vmul.u32 %v3524, %v3515
        %v3532 = vadd.s32 %v3527, %v3529
        %vm3533 = vc.u32 %v3527, %v3529
        %v3534 = vadd.s32 %v3530, 1
        %v3535 = vsel %vm3533, %v3534, %v3530
        %v3536 = vadd.s32 %v3531, %v3535
        %v3537 = vadd.s32 %v3536, 536870912
        %v3538 = vshrl.u32 %v3537, 30
        %v3539 = vshll.u32 %v3538, 30
        %v3540 = vsub.s32 %v3536, %v3539
        %vm3541 = vcmp.lt.s32.totalorder %v3540, 0
        %v3542 = vsub.s32 0, %v3540
        %v3543 = vsel %vm3541, %v3542, %v3540
        %v3544 = vclz %v3543
        %v3545 = vsub.s32 %v3544, 2
        %vm3546 = vcmp.gt.s32.totalorder 0, %v3545
        %v3547 = vsel %vm3546, 0, %v3545
        %v3548 = vsub.s32 32, %v3547
        %v3549 = vshll.u32 %v3540, %v3547
        %v3550 = vshrl.u32 %v3532, %v3548
        %v3551 = vor.u32 %v3549, %v3550
        %v3552 = vsub.s32 4294967266, %v3547
        %v3553 = vadd.s32 %v3552, 127
        %v3554 = vshll.u32 %v3553, 23
        %v3555 = vor.u32 4788187, %v3554
        %v3556 = vand.u32 2147483647, %v3555
        %v3558 = vcvt.s32.f32 %v3551
        %v3559 = vmul.f32 %v3558, %v3556
        %v3560 = vxor.u32 %v3559, 2147483648
        %v3561 = vsel %vm3478, %v3560, %v3559
        %v3562 = vsub.s32 4, %v3538
        %v3563 = vsel %vm3478, %v3562, %v3538
        %v3564 = vsel %vm3477, %v1043, %v3561
        %v3565 = vsel %vm3477, 0, %v3563
        %v3566 = vcosq.f32.pop %v3564
        %v3567 = vsinq.f32.pop %v3564
        %vm3568 = vweird.f32 %v1043
        %v3569 = vadd.s32 %v3565, 3
        %v3570 = vand.u32 %v3569, 3
        %vm3571 = vcmp.lt.s32.totalorder %v3570, 2
        %vm3572 = vcmp.eq.s32.totalorder %v3570, 0
        %v3573 = vxor.u32 %v3567, 2147483648
        %v3574 = vsel %vm3572, %v3566, %v3573
        %vm3575 = vcmp.eq.s32.totalorder %v3570, 2
        %v3576 = vxor.u32 %v3566, 2147483648
        %v3577 = vsel %vm3575, %v3576, %v3567
        %v3578 = vsel %vm3571, %v3574, %v3577
        %v3579 = vsel %vm3568, nan, %v3578
        %v3580 = vand.u32 2147483647, %v1044
        %vm3581 = vcmp.le.f32.partialorder %v3580, 0.7853982
        %vm3582 = vcmp.lt.s32.totalorder %v1044, 0
        %v3583 = vand.u32 %v1044, 2139095040
        %v3584 = vshrl.u32 %v3583, 23
        %v3585 = vsub.s32 %v3584, 127
        %v3586 = vand.u32 2147483647, %v1044
        %v3587 = vand.u32 %v3586, 8388607
        %v3588 = vor.u32 %v3587, 8388608
        %v3589 = vsub.s32 0, %v3588
        %v3590 = vadd.s32 %v3585, 1
        %vm3591 = vcmp.gt.s32.totalorder %v3590, 0
        %v3592 = vsel %vm3591, %v3590, 0
        %v3593 = vshrl.u32 %v3592, 5
        %v3594 = vand.u32 %v3592, 31
        %v3595 = vsub.s32 32, %v3594
        %v3596 = vshrl.u32 683565275, %v3595
        %v3597 = vshll.u32 683565275, %v3594
        %v3598 = vshrl.u32 2475754826, %v3595
        %v3599 = vor.u32 %v3597, %v3598
        %v3600 = vshll.u32 2475754826, %v3594
        %v3601 = vshrl.u32 2131351028, %v3595
        %v3602 = vor.u32 %v3600, %v3601
        %v3603 = vshll.u32 2131351028, %v3594
        %v3604 = vshrl.u32 2102212464, %v3595
        %v3605 = vor.u32 %v3603, %v3604
        %v3606 = vshll.u32 2102212464, %v3594
        %v3607 = vshrl.u32 920167782, %v3595
        %v3608 = vor.u32 %v3606, %v3607
        %v3609 = vshll.u32 920167782, %v3594
        %v3610 = vshrl.u32 1326507024, %v3595
        %v3611 = vor.u32 %v3609, %v3610
        %vm3612 = vcmp.lt.s32.totalorder %v3593, 1
        %vm3613 = vcmp.lt.s32.totalorder %v3593, 2
        %vm3614 = vcmp.lt.s32.totalorder %v3593, 3
        %vm3615 = vcmp.lt.s32.totalorder %v3593, 4
        %v3616 = vsel %vm3612, %v3596, %v3599
        %v3617 = vsel %vm3615, %v3605, 2102212464
        %v3618 = vsel %vm3614, %v3602, %v3617
        %v3619 = vsel %vm3613, %v3616, %v3618
        %v3620 = vsel %vm3612, %v3599, %v3602
        %v3621 = vsel %vm3615, %v3608, 920167782
        %v3622 = vsel %vm3614, %v3605, %v3621
        %v3623 = vsel %vm3613, %v3620, %v3622
        %v3624 = vsel %vm3612, %v3602, %v3605
        %v3625 = vsel %vm3615, %v3611, 1326507024
        %v3626 = vsel %vm3614, %v3608, %v3625
        %v3627 = vsel %vm3613, %v3624, %v3626
        %v3628 = vshll.u32 %v3588, 8
        %v3629 = vmul.u32.u64.compose %v3628, %v3627
        %v3630 = vextract.low.u32 %v3629
        %v3631 = vextract.high.u32 %v3629
        %v3632 = vmul.u32.u64.compose %v3628, %v3623
        %v3633 = vextract.low.u32 %v3632
        %v3634 = vextract.high.u32 %v3632
        %v3635 = vmul.u32 %v3628, %v3619
        %v3636 = vadd.s32 %v3631, %v3633
        %vm3637 = vc.u32 %v3631, %v3633
        %v3638 = vadd.s32 %v3634, 1
        %v3639 = vsel %vm3637, %v3638, %v3634
        %v3640 = vadd.s32 %v3635, %v3639
        %v3641 = vadd.s32 %v3640, 536870912
        %v3642 = vshrl.u32 %v3641, 30
        %v3643 = vshll.u32 %v3642, 30
        %v3644 = vsub.s32 %v3640, %v3643
        %vm3645 = vcmp.lt.s32.totalorder %v3644, 0
        %v3646 = vsub.s32 0, %v3644
        %v3647 = vsel %vm3645, %v3646, %v3644
        %v3648 = vclz %v3647
        %v3649 = vsub.s32 %v3648, 2
        %vm3650 = vcmp.gt.s32.totalorder 0, %v3649
        %v3651 = vsel %vm3650, 0, %v3649
        %v3652 = vsub.s32 32, %v3651
        %v3653 = vshll.u32 %v3644, %v3651
        %v3654 = vshrl.u32 %v3636, %v3652
        %v3655 = vor.u32 %v3653, %v3654
        %v3656 = vsub.s32 4294967266, %v3651
        %v3657 = vadd.s32 %v3656, 127
        %v3658 = vshll.u32 %v3657, 23
        %v3659 = vor.u32 4788187, %v3658
        %v3660 = vand.u32 2147483647, %v3659
        %v3662 = vcvt.s32.f32 %v3655
        %v3663 = vmul.f32 %v3662, %v3660
        %v3664 = vxor.u32 %v3663, 2147483648
        %v3665 = vsel %vm3582, %v3664, %v3663
        %v3666 = vsub.s32 4, %v3642
        %v3667 = vsel %vm3582, %v3666, %v3642
        %v3668 = vsel %vm3581, %v1044, %v3665
        %v3669 = vsel %vm3581, 0, %v3667
        %v3670 = vcosq.f32.pop %v3668
        %v3671 = vsinq.f32.pop %v3668
        %vm3672 = vweird.f32 %v1044
        %v3673 = vadd.s32 %v3669, 3
        %v3674 = vand.u32 %v3673, 3
        %vm3675 = vcmp.lt.s32.totalorder %v3674, 2
        %vm3676 = vcmp.eq.s32.totalorder %v3674, 0
        %v3677 = vxor.u32 %v3671, 2147483648
        %v3678 = vsel %vm3676, %v3670, %v3677
        %vm3679 = vcmp.eq.s32.totalorder %v3674, 2
        %v3680 = vxor.u32 %v3670, 2147483648
        %v3681 = vsel %vm3679, %v3680, %v3671
        %v3682 = vsel %vm3675, %v3678, %v3681
        %v3683 = vsel %vm3672, nan, %v3682
        %v3684 = vand.u32 2147483647, %v1045
        %vm3685 = vcmp.le.f32.partialorder %v3684, 0.7853982
        %vm3686 = vcmp.lt.s32.totalorder %v1045, 0
        %v3687 = vand.u32 %v1045, 2139095040
        %v3688 = vshrl.u32 %v3687, 23
        %v3689 = vsub.s32 %v3688, 127
        %v3690 = vand.u32 2147483647, %v1045
        %v3691 = vand.u32 %v3690, 8388607
        %v3692 = vor.u32 %v3691, 8388608
        %v3693 = vsub.s32 0, %v3692
        %v3694 = vadd.s32 %v3689, 1
        %vm3695 = vcmp.gt.s32.totalorder %v3694, 0
        %v3696 = vsel %vm3695, %v3694, 0
        %v3697 = vshrl.u32 %v3696, 5
        %v3698 = vand.u32 %v3696, 31
        %v3699 = vsub.s32 32, %v3698
        %v3700 = vshrl.u32 683565275, %v3699
        %v3701 = vshll.u32 683565275, %v3698
        %v3702 = vshrl.u32 2475754826, %v3699
        %v3703 = vor.u32 %v3701, %v3702
        %v3704 = vshll.u32 2475754826, %v3698
        %v3705 = vshrl.u32 2131351028, %v3699
        %v3706 = vor.u32 %v3704, %v3705
        %v3707 = vshll.u32 2131351028, %v3698
        %v3708 = vshrl.u32 2102212464, %v3699
        %v3709 = vor.u32 %v3707, %v3708
        %v3710 = vshll.u32 2102212464, %v3698
        %v3711 = vshrl.u32 920167782, %v3699
        %v3712 = vor.u32 %v3710, %v3711
        %v3713 = vshll.u32 920167782, %v3698
        %v3714 = vshrl.u32 1326507024, %v3699
        %v3715 = vor.u32 %v3713, %v3714
        %vm3716 = vcmp.lt.s32.totalorder %v3697, 1
        %vm3717 = vcmp.lt.s32.totalorder %v3697, 2
        %vm3718 = vcmp.lt.s32.totalorder %v3697, 3
        %vm3719 = vcmp.lt.s32.totalorder %v3697, 4
        %v3720 = vsel %vm3716, %v3700, %v3703
        %v3721 = vsel %vm3719, %v3709, 2102212464
        %v3722 = vsel %vm3718, %v3706, %v3721
        %v3723 = vsel %vm3717, %v3720, %v3722
        %v3724 = vsel %vm3716, %v3703, %v3706
        %v3725 = vsel %vm3719, %v3712, 920167782
        %v3726 = vsel %vm3718, %v3709, %v3725
        %v3727 = vsel %vm3717, %v3724, %v3726
        %v3728 = vsel %vm3716, %v3706, %v3709
        %v3729 = vsel %vm3719, %v3715, 1326507024
        %v3730 = vsel %vm3718, %v3712, %v3729
        %v3731 = vsel %vm3717, %v3728, %v3730
        %v3732 = vshll.u32 %v3692, 8
        %v3733 = vmul.u32.u64.compose %v3732, %v3731
        %v3734 = vextract.low.u32 %v3733
        %v3735 = vextract.high.u32 %v3733
        %v3736 = vmul.u32.u64.compose %v3732, %v3727
        %v3737 = vextract.low.u32 %v3736
        %v3738 = vextract.high.u32 %v3736
        %v3739 = vmul.u32 %v3732, %v3723
        %v3740 = vadd.s32 %v3735, %v3737
        %vm3741 = vc.u32 %v3735, %v3737
        %v3742 = vadd.s32 %v3738, 1
        %v3743 = vsel %vm3741, %v3742, %v3738
        %v3744 = vadd.s32 %v3739, %v3743
        %v3745 = vadd.s32 %v3744, 536870912
        %v3746 = vshrl.u32 %v3745, 30
        %v3747 = vshll.u32 %v3746, 30
        %v3748 = vsub.s32 %v3744, %v3747
        %vm3749 = vcmp.lt.s32.totalorder %v3748, 0
        %v3750 = vsub.s32 0, %v3748
        %v3751 = vsel %vm3749, %v3750, %v3748
        %v3752 = vclz %v3751
        %v3753 = vsub.s32 %v3752, 2
        %vm3754 = vcmp.gt.s32.totalorder 0, %v3753
        %v3755 = vsel %vm3754, 0, %v3753
        %v3756 = vsub.s32 32, %v3755
        %v3757 = vshll.u32 %v3748, %v3755
        %v3758 = vshrl.u32 %v3740, %v3756
        %v3759 = vor.u32 %v3757, %v3758
        %v3760 = vsub.s32 4294967266, %v3755
        %v3761 = vadd.s32 %v3760, 127
        %v3762 = vshll.u32 %v3761, 23
        %v3763 = vor.u32 4788187, %v3762
        %v3764 = vand.u32 2147483647, %v3763
        %v3766 = vcvt.s32.f32 %v3759
        %v3767 = vmul.f32 %v3766, %v3764
        %v3768 = vxor.u32 %v3767, 2147483648
        %v3769 = vsel %vm3686, %v3768, %v3767
        %v3770 = vsub.s32 4, %v3746
        %v3771 = vsel %vm3686, %v3770, %v3746
        %v3772 = vsel %vm3685, %v1045, %v3769
        %v3773 = vsel %vm3685, 0, %v3771
        %v3774 = vcosq.f32.pop %v3772
        %v3775 = vsinq.f32.pop %v3772
        %vm3776 = vweird.f32 %v1045
        %v3777 = vadd.s32 %v3773, 3
        %v3778 = vand.u32 %v3777, 3
        %vm3779 = vcmp.lt.s32.totalorder %v3778, 2
        %vm3780 = vcmp.eq.s32.totalorder %v3778, 0
        %v3781 = vxor.u32 %v3775, 2147483648
        %v3782 = vsel %vm3780, %v3774, %v3781
        %vm3783 = vcmp.eq.s32.totalorder %v3778, 2
        %v3784 = vxor.u32 %v3774, 2147483648
        %v3785 = vsel %vm3783, %v3784, %v3775
        %v3786 = vsel %vm3779, %v3782, %v3785
        %v3787 = vsel %vm3776, nan, %v3786
        %v3788 = vand.u32 2147483647, %v1046
        %vm3789 = vcmp.le.f32.partialorder %v3788, 0.7853982
        %vm3790 = vcmp.lt.s32.totalorder %v1046, 0
        %v3791 = vand.u32 %v1046, 2139095040
        %v3792 = vshrl.u32 %v3791, 23
        %v3793 = vsub.s32 %v3792, 127
        %v3794 = vand.u32 2147483647, %v1046
        %v3795 = vand.u32 %v3794, 8388607
        %v3796 = vor.u32 %v3795, 8388608
        %v3797 = vsub.s32 0, %v3796
        %v3798 = vadd.s32 %v3793, 1
        %vm3799 = vcmp.gt.s32.totalorder %v3798, 0
        %v3800 = vsel %vm3799, %v3798, 0
        %v3801 = vshrl.u32 %v3800, 5
        %v3802 = vand.u32 %v3800, 31
        %v3803 = vsub.s32 32, %v3802
        %v3804 = vshrl.u32 683565275, %v3803
        %v3805 = vshll.u32 683565275, %v3802
        %v3806 = vshrl.u32 2475754826, %v3803
        %v3807 = vor.u32 %v3805, %v3806
        %v3808 = vshll.u32 2475754826, %v3802
        %v3809 = vshrl.u32 2131351028, %v3803
        %v3810 = vor.u32 %v3808, %v3809
        %v3811 = vshll.u32 2131351028, %v3802
        %v3812 = vshrl.u32 2102212464, %v3803
        %v3813 = vor.u32 %v3811, %v3812
        %v3814 = vshll.u32 2102212464, %v3802
        %v3815 = vshrl.u32 920167782, %v3803
        %v3816 = vor.u32 %v3814, %v3815
        %v3817 = vshll.u32 920167782, %v3802
        %v3818 = vshrl.u32 1326507024, %v3803
        %v3819 = vor.u32 %v3817, %v3818
        %vm3820 = vcmp.lt.s32.totalorder %v3801, 1
        %vm3821 = vcmp.lt.s32.totalorder %v3801, 2
        %vm3822 = vcmp.lt.s32.totalorder %v3801, 3
        %vm3823 = vcmp.lt.s32.totalorder %v3801, 4
        %v3824 = vsel %vm3820, %v3804, %v3807
        %v3825 = vsel %vm3823, %v3813, 2102212464
        %v3826 = vsel %vm3822, %v3810, %v3825
        %v3827 = vsel %vm3821, %v3824, %v3826
        %v3828 = vsel %vm3820, %v3807, %v3810
        %v3829 = vsel %vm3823, %v3816, 920167782
        %v3830 = vsel %vm3822, %v3813, %v3829
        %v3831 = vsel %vm3821, %v3828, %v3830
        %v3832 = vsel %vm3820, %v3810, %v3813
        %v3833 = vsel %vm3823, %v3819, 1326507024
        %v3834 = vsel %vm3822, %v3816, %v3833
        %v3835 = vsel %vm3821, %v3832, %v3834
        %v3836 = vshll.u32 %v3796, 8
        %v3837 = vmul.u32.u64.compose %v3836, %v3835
        %v3838 = vextract.low.u32 %v3837
        %v3839 = vextract.high.u32 %v3837
        %v3840 = vmul.u32.u64.compose %v3836, %v3831
        %v3841 = vextract.low.u32 %v3840
        %v3842 = vextract.high.u32 %v3840
        %v3843 = vmul.u32 %v3836, %v3827
        %v3844 = vadd.s32 %v3839, %v3841
        %vm3845 = vc.u32 %v3839, %v3841
        %v3846 = vadd.s32 %v3842, 1
        %v3847 = vsel %vm3845, %v3846, %v3842
        %v3848 = vadd.s32 %v3843, %v3847
        %v3849 = vadd.s32 %v3848, 536870912
        %v3850 = vshrl.u32 %v3849, 30
        %v3851 = vshll.u32 %v3850, 30
        %v3852 = vsub.s32 %v3848, %v3851
        %vm3853 = vcmp.lt.s32.totalorder %v3852, 0
        %v3854 = vsub.s32 0, %v3852
        %v3855 = vsel %vm3853, %v3854, %v3852
        %v3856 = vclz %v3855
        %v3857 = vsub.s32 %v3856, 2
        %vm3858 = vcmp.gt.s32.totalorder 0, %v3857
        %v3859 = vsel %vm3858, 0, %v3857
        %v3860 = vsub.s32 32, %v3859
        %v3861 = vshll.u32 %v3852, %v3859
        %v3862 = vshrl.u32 %v3844, %v3860
        %v3863 = vor.u32 %v3861, %v3862
        %v3864 = vsub.s32 4294967266, %v3859
        %v3865 = vadd.s32 %v3864, 127
        %v3866 = vshll.u32 %v3865, 23
        %v3867 = vor.u32 4788187, %v3866
        %v3868 = vand.u32 2147483647, %v3867
        %v3870 = vcvt.s32.f32 %v3863
        %v3871 = vmul.f32 %v3870, %v3868
        %v3872 = vxor.u32 %v3871, 2147483648
        %v3873 = vsel %vm3790, %v3872, %v3871
        %v3874 = vsub.s32 4, %v3850
        %v3875 = vsel %vm3790, %v3874, %v3850
        %v3876 = vsel %vm3789, %v1046, %v3873
        %v3877 = vsel %vm3789, 0, %v3875
        %v3878 = vcosq.f32.pop %v3876
        %v3879 = vsinq.f32.pop %v3876
        %vm3880 = vweird.f32 %v1046
        %v3881 = vadd.s32 %v3877, 3
        %v3882 = vand.u32 %v3881, 3
        %vm3883 = vcmp.lt.s32.totalorder %v3882, 2
        %vm3884 = vcmp.eq.s32.totalorder %v3882, 0
        %v3885 = vxor.u32 %v3879, 2147483648
        %v3886 = vsel %vm3884, %v3878, %v3885
        %vm3887 = vcmp.eq.s32.totalorder %v3882, 2
        %v3888 = vxor.u32 %v3878, 2147483648
        %v3889 = vsel %vm3887, %v3888, %v3879
        %v3890 = vsel %vm3883, %v3886, %v3889
        %v3891 = vsel %vm3880, nan, %v3890
        %v3892 = vand.u32 2147483647, %v1047
        %vm3893 = vcmp.le.f32.partialorder %v3892, 0.7853982
        %vm3894 = vcmp.lt.s32.totalorder %v1047, 0
        %v3895 = vand.u32 %v1047, 2139095040
        %v3896 = vshrl.u32 %v3895, 23
        %v3897 = vsub.s32 %v3896, 127
        %v3898 = vand.u32 2147483647, %v1047
        %v3899 = vand.u32 %v3898, 8388607
        %v3900 = vor.u32 %v3899, 8388608
        %v3901 = vsub.s32 0, %v3900
        %v3902 = vadd.s32 %v3897, 1
        %vm3903 = vcmp.gt.s32.totalorder %v3902, 0
        %v3904 = vsel %vm3903, %v3902, 0
        %v3905 = vshrl.u32 %v3904, 5
        %v3906 = vand.u32 %v3904, 31
        %v3907 = vsub.s32 32, %v3906
        %v3908 = vshrl.u32 683565275, %v3907
        %v3909 = vshll.u32 683565275, %v3906
        %v3910 = vshrl.u32 2475754826, %v3907
        %v3911 = vor.u32 %v3909, %v3910
        %v3912 = vshll.u32 2475754826, %v3906
        %v3913 = vshrl.u32 2131351028, %v3907
        %v3914 = vor.u32 %v3912, %v3913
        %v3915 = vshll.u32 2131351028, %v3906
        %v3916 = vshrl.u32 2102212464, %v3907
        %v3917 = vor.u32 %v3915, %v3916
        %v3918 = vshll.u32 2102212464, %v3906
        %v3919 = vshrl.u32 920167782, %v3907
        %v3920 = vor.u32 %v3918, %v3919
        %v3921 = vshll.u32 920167782, %v3906
        %v3922 = vshrl.u32 1326507024, %v3907
        %v3923 = vor.u32 %v3921, %v3922
        %vm3924 = vcmp.lt.s32.totalorder %v3905, 1
        %vm3925 = vcmp.lt.s32.totalorder %v3905, 2
        %vm3926 = vcmp.lt.s32.totalorder %v3905, 3
        %vm3927 = vcmp.lt.s32.totalorder %v3905, 4
        %v3928 = vsel %vm3924, %v3908, %v3911
        %v3929 = vsel %vm3927, %v3917, 2102212464
        %v3930 = vsel %vm3926, %v3914, %v3929
        %v3931 = vsel %vm3925, %v3928, %v3930
        %v3932 = vsel %vm3924, %v3911, %v3914
        %v3933 = vsel %vm3927, %v3920, 920167782
        %v3934 = vsel %vm3926, %v3917, %v3933
        %v3935 = vsel %vm3925, %v3932, %v3934
        %v3936 = vsel %vm3924, %v3914, %v3917
        %v3937 = vsel %vm3927, %v3923, 1326507024
        %v3938 = vsel %vm3926, %v3920, %v3937
        %v3939 = vsel %vm3925, %v3936, %v3938
        %v3940 = vshll.u32 %v3900, 8
        %v3941 = vmul.u32.u64.compose %v3940, %v3939
        %v3942 = vextract.low.u32 %v3941
        %v3943 = vextract.high.u32 %v3941
        %v3944 = vmul.u32.u64.compose %v3940, %v3935
        %v3945 = vextract.low.u32 %v3944
        %v3946 = vextract.high.u32 %v3944
        %v3947 = vmul.u32 %v3940, %v3931
        %v3948 = vadd.s32 %v3943, %v3945
        %vm3949 = vc.u32 %v3943, %v3945
        %v3950 = vadd.s32 %v3946, 1
        %v3951 = vsel %vm3949, %v3950, %v3946
        %v3952 = vadd.s32 %v3947, %v3951
        %v3953 = vadd.s32 %v3952, 536870912
        %v3954 = vshrl.u32 %v3953, 30
        %v3955 = vshll.u32 %v3954, 30
        %v3956 = vsub.s32 %v3952, %v3955
        %vm3957 = vcmp.lt.s32.totalorder %v3956, 0
        %v3958 = vsub.s32 0, %v3956
        %v3959 = vsel %vm3957, %v3958, %v3956
        %v3960 = vclz %v3959
        %v3961 = vsub.s32 %v3960, 2
        %vm3962 = vcmp.gt.s32.totalorder 0, %v3961
        %v3963 = vsel %vm3962, 0, %v3961
        %v3964 = vsub.s32 32, %v3963
        %v3965 = vshll.u32 %v3956, %v3963
        %v3966 = vshrl.u32 %v3948, %v3964
        %v3967 = vor.u32 %v3965, %v3966
        %v3968 = vsub.s32 4294967266, %v3963
        %v3969 = vadd.s32 %v3968, 127
        %v3970 = vshll.u32 %v3969, 23
        %v3971 = vor.u32 4788187, %v3970
        %v3972 = vand.u32 2147483647, %v3971
        %v3974 = vcvt.s32.f32 %v3967
        %v3975 = vmul.f32 %v3974, %v3972
        %v3976 = vxor.u32 %v3975, 2147483648
        %v3977 = vsel %vm3894, %v3976, %v3975
        %v3978 = vsub.s32 4, %v3954
        %v3979 = vsel %vm3894, %v3978, %v3954
        %v3980 = vsel %vm3893, %v1047, %v3977
        %v3981 = vsel %vm3893, 0, %v3979
        %v3982 = vcosq.f32.pop %v3980
        %v3983 = vsinq.f32.pop %v3980
        %vm3984 = vweird.f32 %v1047
        %v3985 = vadd.s32 %v3981, 3
        %v3986 = vand.u32 %v3985, 3
        %vm3987 = vcmp.lt.s32.totalorder %v3986, 2
        %vm3988 = vcmp.eq.s32.totalorder %v3986, 0
        %v3989 = vxor.u32 %v3983, 2147483648
        %v3990 = vsel %vm3988, %v3982, %v3989
        %vm3991 = vcmp.eq.s32.totalorder %v3986, 2
        %v3992 = vxor.u32 %v3982, 2147483648
        %v3993 = vsel %vm3991, %v3992, %v3983
        %v3994 = vsel %vm3987, %v3990, %v3993
        %v3995 = vsel %vm3984, nan, %v3994
        %v3996 = vand.u32 2147483647, %v1048
        %vm3997 = vcmp.le.f32.partialorder %v3996, 0.7853982
        %vm3998 = vcmp.lt.s32.totalorder %v1048, 0
        %v3999 = vand.u32 %v1048, 2139095040
        %v4000 = vshrl.u32 %v3999, 23
        %v4001 = vsub.s32 %v4000, 127
        %v4002 = vand.u32 2147483647, %v1048
        %v4003 = vand.u32 %v4002, 8388607
        %v4004 = vor.u32 %v4003, 8388608
        %v4005 = vsub.s32 0, %v4004
        %v4006 = vadd.s32 %v4001, 1
        %vm4007 = vcmp.gt.s32.totalorder %v4006, 0
        %v4008 = vsel %vm4007, %v4006, 0
        %v4009 = vshrl.u32 %v4008, 5
        %v4010 = vand.u32 %v4008, 31
        %v4011 = vsub.s32 32, %v4010
        %v4012 = vshrl.u32 683565275, %v4011
        %v4013 = vshll.u32 683565275, %v4010
        %v4014 = vshrl.u32 2475754826, %v4011
        %v4015 = vor.u32 %v4013, %v4014
        %v4016 = vshll.u32 2475754826, %v4010
        %v4017 = vshrl.u32 2131351028, %v4011
        %v4018 = vor.u32 %v4016, %v4017
        %v4019 = vshll.u32 2131351028, %v4010
        %v4020 = vshrl.u32 2102212464, %v4011
        %v4021 = vor.u32 %v4019, %v4020
        %v4022 = vshll.u32 2102212464, %v4010
        %v4023 = vshrl.u32 920167782, %v4011
        %v4024 = vor.u32 %v4022, %v4023
        %v4025 = vshll.u32 920167782, %v4010
        %v4026 = vshrl.u32 1326507024, %v4011
        %v4027 = vor.u32 %v4025, %v4026
        %vm4028 = vcmp.lt.s32.totalorder %v4009, 1
        %vm4029 = vcmp.lt.s32.totalorder %v4009, 2
        %vm4030 = vcmp.lt.s32.totalorder %v4009, 3
        %vm4031 = vcmp.lt.s32.totalorder %v4009, 4
        %v4032 = vsel %vm4028, %v4012, %v4015
        %v4033 = vsel %vm4031, %v4021, 2102212464
        %v4034 = vsel %vm4030, %v4018, %v4033
        %v4035 = vsel %vm4029, %v4032, %v4034
        %v4036 = vsel %vm4028, %v4015, %v4018
        %v4037 = vsel %vm4031, %v4024, 920167782
        %v4038 = vsel %vm4030, %v4021, %v4037
        %v4039 = vsel %vm4029, %v4036, %v4038
        %v4040 = vsel %vm4028, %v4018, %v4021
        %v4041 = vsel %vm4031, %v4027, 1326507024
        %v4042 = vsel %vm4030, %v4024, %v4041
        %v4043 = vsel %vm4029, %v4040, %v4042
        %v4044 = vshll.u32 %v4004, 8
        %v4045 = vmul.u32.u64.compose %v4044, %v4043
        %v4046 = vextract.low.u32 %v4045
        %v4047 = vextract.high.u32 %v4045
        %v4048 = vmul.u32.u64.compose %v4044, %v4039
        %v4049 = vextract.low.u32 %v4048
        %v4050 = vextract.high.u32 %v4048
        %v4051 = vmul.u32 %v4044, %v4035
        %v4052 = vadd.s32 %v4047, %v4049
        %vm4053 = vc.u32 %v4047, %v4049
        %v4054 = vadd.s32 %v4050, 1
        %v4055 = vsel %vm4053, %v4054, %v4050
        %v4056 = vadd.s32 %v4051, %v4055
        %v4057 = vadd.s32 %v4056, 536870912
        %v4058 = vshrl.u32 %v4057, 30
        %v4059 = vshll.u32 %v4058, 30
        %v4060 = vsub.s32 %v4056, %v4059
        %vm4061 = vcmp.lt.s32.totalorder %v4060, 0
        %v4062 = vsub.s32 0, %v4060
        %v4063 = vsel %vm4061, %v4062, %v4060
        %v4064 = vclz %v4063
        %v4065 = vsub.s32 %v4064, 2
        %vm4066 = vcmp.gt.s32.totalorder 0, %v4065
        %v4067 = vsel %vm4066, 0, %v4065
        %v4068 = vsub.s32 32, %v4067
        %v4069 = vshll.u32 %v4060, %v4067
        %v4070 = vshrl.u32 %v4052, %v4068
        %v4071 = vor.u32 %v4069, %v4070
        %v4072 = vsub.s32 4294967266, %v4067
        %v4073 = vadd.s32 %v4072, 127
        %v4074 = vshll.u32 %v4073, 23
        %v4075 = vor.u32 4788187, %v4074
        %v4076 = vand.u32 2147483647, %v4075
        %v4078 = vcvt.s32.f32 %v4071
        %v4079 = vmul.f32 %v4078, %v4076
        %v4080 = vxor.u32 %v4079, 2147483648
        %v4081 = vsel %vm3998, %v4080, %v4079
        %v4082 = vsub.s32 4, %v4058
        %v4083 = vsel %vm3998, %v4082, %v4058
        %v4084 = vsel %vm3997, %v1048, %v4081
        %v4085 = vsel %vm3997, 0, %v4083
        %v4086 = vcosq.f32.pop %v4084
        %v4087 = vsinq.f32.pop %v4084
        %vm4088 = vweird.f32 %v1048
        %v4089 = vadd.s32 %v4085, 3
        %v4090 = vand.u32 %v4089, 3
        %vm4091 = vcmp.lt.s32.totalorder %v4090, 2
        %vm4092 = vcmp.eq.s32.totalorder %v4090, 0
        %v4093 = vxor.u32 %v4087, 2147483648
        %v4094 = vsel %vm4092, %v4086, %v4093
        %vm4095 = vcmp.eq.s32.totalorder %v4090, 2
        %v4096 = vxor.u32 %v4086, 2147483648
        %v4097 = vsel %vm4095, %v4096, %v4087
        %v4098 = vsel %vm4091, %v4094, %v4097
        %v4099 = vsel %vm4088, nan, %v4098
        %v4100 = vand.u32 2147483647, %v1049
        %vm4101 = vcmp.le.f32.partialorder %v4100, 0.7853982
        %vm4102 = vcmp.lt.s32.totalorder %v1049, 0
        %v4103 = vand.u32 %v1049, 2139095040
        %v4104 = vshrl.u32 %v4103, 23
        %v4105 = vsub.s32 %v4104, 127
        %v4106 = vand.u32 2147483647, %v1049
        %v4107 = vand.u32 %v4106, 8388607
        %v4108 = vor.u32 %v4107, 8388608
        %v4109 = vsub.s32 0, %v4108
        %v4110 = vadd.s32 %v4105, 1
        %vm4111 = vcmp.gt.s32.totalorder %v4110, 0
        %v4112 = vsel %vm4111, %v4110, 0
        %v4113 = vshrl.u32 %v4112, 5
        %v4114 = vand.u32 %v4112, 31
        %v4115 = vsub.s32 32, %v4114
        %v4116 = vshrl.u32 683565275, %v4115
        %v4117 = vshll.u32 683565275, %v4114
        %v4118 = vshrl.u32 2475754826, %v4115
        %v4119 = vor.u32 %v4117, %v4118
        %v4120 = vshll.u32 2475754826, %v4114
        %v4121 = vshrl.u32 2131351028, %v4115
        %v4122 = vor.u32 %v4120, %v4121
        %v4123 = vshll.u32 2131351028, %v4114
        %v4124 = vshrl.u32 2102212464, %v4115
        %v4125 = vor.u32 %v4123, %v4124
        %v4126 = vshll.u32 2102212464, %v4114
        %v4127 = vshrl.u32 920167782, %v4115
        %v4128 = vor.u32 %v4126, %v4127
        %v4129 = vshll.u32 920167782, %v4114
        %v4130 = vshrl.u32 1326507024, %v4115
        %v4131 = vor.u32 %v4129, %v4130
        %vm4132 = vcmp.lt.s32.totalorder %v4113, 1
        %vm4133 = vcmp.lt.s32.totalorder %v4113, 2
        %vm4134 = vcmp.lt.s32.totalorder %v4113, 3
        %vm4135 = vcmp.lt.s32.totalorder %v4113, 4
        %v4136 = vsel %vm4132, %v4116, %v4119
        %v4137 = vsel %vm4135, %v4125, 2102212464
        %v4138 = vsel %vm4134, %v4122, %v4137
        %v4139 = vsel %vm4133, %v4136, %v4138
        %v4140 = vsel %vm4132, %v4119, %v4122
        %v4141 = vsel %vm4135, %v4128, 920167782
        %v4142 = vsel %vm4134, %v4125, %v4141
        %v4143 = vsel %vm4133, %v4140, %v4142
        %v4144 = vsel %vm4132, %v4122, %v4125
        %v4145 = vsel %vm4135, %v4131, 1326507024
        %v4146 = vsel %vm4134, %v4128, %v4145
        %v4147 = vsel %vm4133, %v4144, %v4146
        %v4148 = vshll.u32 %v4108, 8
        %v4149 = vmul.u32.u64.compose %v4148, %v4147
        %v4150 = vextract.low.u32 %v4149
        %v4151 = vextract.high.u32 %v4149
        %v4152 = vmul.u32.u64.compose %v4148, %v4143
        %v4153 = vextract.low.u32 %v4152
        %v4154 = vextract.high.u32 %v4152
        %v4155 = vmul.u32 %v4148, %v4139
        %v4156 = vadd.s32 %v4151, %v4153
        %vm4157 = vc.u32 %v4151, %v4153
        %v4158 = vadd.s32 %v4154, 1
        %v4159 = vsel %vm4157, %v4158, %v4154
        %v4160 = vadd.s32 %v4155, %v4159
        %v4161 = vadd.s32 %v4160, 536870912
        %v4162 = vshrl.u32 %v4161, 30
        %v4163 = vshll.u32 %v4162, 30
        %v4164 = vsub.s32 %v4160, %v4163
        %vm4165 = vcmp.lt.s32.totalorder %v4164, 0
        %v4166 = vsub.s32 0, %v4164
        %v4167 = vsel %vm4165, %v4166, %v4164
        %v4168 = vclz %v4167
        %v4169 = vsub.s32 %v4168, 2
        %vm4170 = vcmp.gt.s32.totalorder 0, %v4169
        %v4171 = vsel %vm4170, 0, %v4169
        %v4172 = vsub.s32 32, %v4171
        %v4173 = vshll.u32 %v4164, %v4171
        %v4174 = vshrl.u32 %v4156, %v4172
        %v4175 = vor.u32 %v4173, %v4174
        %v4176 = vsub.s32 4294967266, %v4171
        %v4177 = vadd.s32 %v4176, 127
        %v4178 = vshll.u32 %v4177, 23
        %v4179 = vor.u32 4788187, %v4178
        %v4180 = vand.u32 2147483647, %v4179
        %v4182 = vcvt.s32.f32 %v4175
        %v4183 = vmul.f32 %v4182, %v4180
        %v4184 = vxor.u32 %v4183, 2147483648
        %v4185 = vsel %vm4102, %v4184, %v4183
        %v4186 = vsub.s32 4, %v4162
        %v4187 = vsel %vm4102, %v4186, %v4162
        %v4188 = vsel %vm4101, %v1049, %v4185
        %v4189 = vsel %vm4101, 0, %v4187
        %v4190 = vcosq.f32.pop %v4188
        %v4191 = vsinq.f32.pop %v4188
        %vm4192 = vweird.f32 %v1049
        %v4193 = vadd.s32 %v4189, 3
        %v4194 = vand.u32 %v4193, 3
        %vm4195 = vcmp.lt.s32.totalorder %v4194, 2
        %vm4196 = vcmp.eq.s32.totalorder %v4194, 0
        %v4197 = vxor.u32 %v4191, 2147483648
        %v4198 = vsel %vm4196, %v4190, %v4197
        %vm4199 = vcmp.eq.s32.totalorder %v4194, 2
        %v4200 = vxor.u32 %v4190, 2147483648
        %v4201 = vsel %vm4199, %v4200, %v4191
        %v4202 = vsel %vm4195, %v4198, %v4201
        %v4203 = vsel %vm4192, nan, %v4202
        %v4204 = vand.u32 2147483647, %v1050
        %vm4205 = vcmp.le.f32.partialorder %v4204, 0.7853982
        %vm4206 = vcmp.lt.s32.totalorder %v1050, 0
        %v4207 = vand.u32 %v1050, 2139095040
        %v4208 = vshrl.u32 %v4207, 23
        %v4209 = vsub.s32 %v4208, 127
        %v4210 = vand.u32 2147483647, %v1050
        %v4211 = vand.u32 %v4210, 8388607
        %v4212 = vor.u32 %v4211, 8388608
        %v4213 = vsub.s32 0, %v4212
        %v4214 = vadd.s32 %v4209, 1
        %vm4215 = vcmp.gt.s32.totalorder %v4214, 0
        %v4216 = vsel %vm4215, %v4214, 0
        %v4217 = vshrl.u32 %v4216, 5
        %v4218 = vand.u32 %v4216, 31
        %v4219 = vsub.s32 32, %v4218
        %v4220 = vshrl.u32 683565275, %v4219
        %v4221 = vshll.u32 683565275, %v4218
        %v4222 = vshrl.u32 2475754826, %v4219
        %v4223 = vor.u32 %v4221, %v4222
        %v4224 = vshll.u32 2475754826, %v4218
        %v4225 = vshrl.u32 2131351028, %v4219
        %v4226 = vor.u32 %v4224, %v4225
        %v4227 = vshll.u32 2131351028, %v4218
        %v4228 = vshrl.u32 2102212464, %v4219
        %v4229 = vor.u32 %v4227, %v4228
        %v4230 = vshll.u32 2102212464, %v4218
        %v4231 = vshrl.u32 920167782, %v4219
        %v4232 = vor.u32 %v4230, %v4231
        %v4233 = vshll.u32 920167782, %v4218
        %v4234 = vshrl.u32 1326507024, %v4219
        %v4235 = vor.u32 %v4233, %v4234
        %vm4236 = vcmp.lt.s32.totalorder %v4217, 1
        %vm4237 = vcmp.lt.s32.totalorder %v4217, 2
        %vm4238 = vcmp.lt.s32.totalorder %v4217, 3
        %vm4239 = vcmp.lt.s32.totalorder %v4217, 4
        %v4240 = vsel %vm4236, %v4220, %v4223
        %v4241 = vsel %vm4239, %v4229, 2102212464
        %v4242 = vsel %vm4238, %v4226, %v4241
        %v4243 = vsel %vm4237, %v4240, %v4242
        %v4244 = vsel %vm4236, %v4223, %v4226
        %v4245 = vsel %vm4239, %v4232, 920167782
        %v4246 = vsel %vm4238, %v4229, %v4245
        %v4247 = vsel %vm4237, %v4244, %v4246
        %v4248 = vsel %vm4236, %v4226, %v4229
        %v4249 = vsel %vm4239, %v4235, 1326507024
        %v4250 = vsel %vm4238, %v4232, %v4249
        %v4251 = vsel %vm4237, %v4248, %v4250
        %v4252 = vshll.u32 %v4212, 8
        %v4253 = vmul.u32.u64.compose %v4252, %v4251
        %v4254 = vextract.low.u32 %v4253
        %v4255 = vextract.high.u32 %v4253
        %v4256 = vmul.u32.u64.compose %v4252, %v4247
        %v4257 = vextract.low.u32 %v4256
        %v4258 = vextract.high.u32 %v4256
        %v4259 = vmul.u32 %v4252, %v4243
        %v4260 = vadd.s32 %v4255, %v4257
        %vm4261 = vc.u32 %v4255, %v4257
        %v4262 = vadd.s32 %v4258, 1
        %v4263 = vsel %vm4261, %v4262, %v4258
        %v4264 = vadd.s32 %v4259, %v4263
        %v4265 = vadd.s32 %v4264, 536870912
        %v4266 = vshrl.u32 %v4265, 30
        %v4267 = vshll.u32 %v4266, 30
        %v4268 = vsub.s32 %v4264, %v4267
        %vm4269 = vcmp.lt.s32.totalorder %v4268, 0
        %v4270 = vsub.s32 0, %v4268
        %v4271 = vsel %vm4269, %v4270, %v4268
        %v4272 = vclz %v4271
        %v4273 = vsub.s32 %v4272, 2
        %vm4274 = vcmp.gt.s32.totalorder 0, %v4273
        %v4275 = vsel %vm4274, 0, %v4273
        %v4276 = vsub.s32 32, %v4275
        %v4277 = vshll.u32 %v4268, %v4275
        %v4278 = vshrl.u32 %v4260, %v4276
        %v4279 = vor.u32 %v4277, %v4278
        %v4280 = vsub.s32 4294967266, %v4275
        %v4281 = vadd.s32 %v4280, 127
        %v4282 = vshll.u32 %v4281, 23
        %v4283 = vor.u32 4788187, %v4282
        %v4284 = vand.u32 2147483647, %v4283
        %v4286 = vcvt.s32.f32 %v4279
        %v4287 = vmul.f32 %v4286, %v4284
        %v4288 = vxor.u32 %v4287, 2147483648
        %v4289 = vsel %vm4206, %v4288, %v4287
        %v4290 = vsub.s32 4, %v4266
        %v4291 = vsel %vm4206, %v4290, %v4266
        %v4292 = vsel %vm4205, %v1050, %v4289
        %v4293 = vsel %vm4205, 0, %v4291
        %v4294 = vcosq.f32.pop %v4292
        %v4295 = vsinq.f32.pop %v4292
        %vm4296 = vweird.f32 %v1050
        %v4297 = vadd.s32 %v4293, 3
        %v4298 = vand.u32 %v4297, 3
        %vm4299 = vcmp.lt.s32.totalorder %v4298, 2
        %vm4300 = vcmp.eq.s32.totalorder %v4298, 0
        %v4301 = vxor.u32 %v4295, 2147483648
        %v4302 = vsel %vm4300, %v4294, %v4301
        %vm4303 = vcmp.eq.s32.totalorder %v4298, 2
        %v4304 = vxor.u32 %v4294, 2147483648
        %v4305 = vsel %vm4303, %v4304, %v4295
        %v4306 = vsel %vm4299, %v4302, %v4305
        %v4307 = vsel %vm4296, nan, %v4306
        %v4308 = vand.u32 2147483647, %v1051
        %vm4309 = vcmp.le.f32.partialorder %v4308, 0.7853982
        %vm4310 = vcmp.lt.s32.totalorder %v1051, 0
        %v4311 = vand.u32 %v1051, 2139095040
        %v4312 = vshrl.u32 %v4311, 23
        %v4313 = vsub.s32 %v4312, 127
        %v4314 = vand.u32 2147483647, %v1051
        %v4315 = vand.u32 %v4314, 8388607
        %v4316 = vor.u32 %v4315, 8388608
        %v4317 = vsub.s32 0, %v4316
        %v4318 = vadd.s32 %v4313, 1
        %vm4319 = vcmp.gt.s32.totalorder %v4318, 0
        %v4320 = vsel %vm4319, %v4318, 0
        %v4321 = vshrl.u32 %v4320, 5
        %v4322 = vand.u32 %v4320, 31
        %v4323 = vsub.s32 32, %v4322
        %v4324 = vshrl.u32 683565275, %v4323
        %v4325 = vshll.u32 683565275, %v4322
        %v4326 = vshrl.u32 2475754826, %v4323
        %v4327 = vor.u32 %v4325, %v4326
        %v4328 = vshll.u32 2475754826, %v4322
        %v4329 = vshrl.u32 2131351028, %v4323
        %v4330 = vor.u32 %v4328, %v4329
        %v4331 = vshll.u32 2131351028, %v4322
        %v4332 = vshrl.u32 2102212464, %v4323
        %v4333 = vor.u32 %v4331, %v4332
        %v4334 = vshll.u32 2102212464, %v4322
        %v4335 = vshrl.u32 920167782, %v4323
        %v4336 = vor.u32 %v4334, %v4335
        %v4337 = vshll.u32 920167782, %v4322
        %v4338 = vshrl.u32 1326507024, %v4323
        %v4339 = vor.u32 %v4337, %v4338
        %vm4340 = vcmp.lt.s32.totalorder %v4321, 1
        %vm4341 = vcmp.lt.s32.totalorder %v4321, 2
        %vm4342 = vcmp.lt.s32.totalorder %v4321, 3
        %vm4343 = vcmp.lt.s32.totalorder %v4321, 4
        %v4344 = vsel %vm4340, %v4324, %v4327
        %v4345 = vsel %vm4343, %v4333, 2102212464
        %v4346 = vsel %vm4342, %v4330, %v4345
        %v4347 = vsel %vm4341, %v4344, %v4346
        %v4348 = vsel %vm4340, %v4327, %v4330
        %v4349 = vsel %vm4343, %v4336, 920167782
        %v4350 = vsel %vm4342, %v4333, %v4349
        %v4351 = vsel %vm4341, %v4348, %v4350
        %v4352 = vsel %vm4340, %v4330, %v4333
        %v4353 = vsel %vm4343, %v4339, 1326507024
        %v4354 = vsel %vm4342, %v4336, %v4353
        %v4355 = vsel %vm4341, %v4352, %v4354
        %v4356 = vshll.u32 %v4316, 8
        %v4357 = vmul.u32.u64.compose %v4356, %v4355
        %v4358 = vextract.low.u32 %v4357
        %v4359 = vextract.high.u32 %v4357
        %v4360 = vmul.u32.u64.compose %v4356, %v4351
        %v4361 = vextract.low.u32 %v4360
        %v4362 = vextract.high.u32 %v4360
        %v4363 = vmul.u32 %v4356, %v4347
        %v4364 = vadd.s32 %v4359, %v4361
        %vm4365 = vc.u32 %v4359, %v4361
        %v4366 = vadd.s32 %v4362, 1
        %v4367 = vsel %vm4365, %v4366, %v4362
        %v4368 = vadd.s32 %v4363, %v4367
        %v4369 = vadd.s32 %v4368, 536870912
        %v4370 = vshrl.u32 %v4369, 30
        %v4371 = vshll.u32 %v4370, 30
        %v4372 = vsub.s32 %v4368, %v4371
        %vm4373 = vcmp.lt.s32.totalorder %v4372, 0
        %v4374 = vsub.s32 0, %v4372
        %v4375 = vsel %vm4373, %v4374, %v4372
        %v4376 = vclz %v4375
        %v4377 = vsub.s32 %v4376, 2
        %vm4378 = vcmp.gt.s32.totalorder 0, %v4377
        %v4379 = vsel %vm4378, 0, %v4377
        %v4380 = vsub.s32 32, %v4379
        %v4381 = vshll.u32 %v4372, %v4379
        %v4382 = vshrl.u32 %v4364, %v4380
        %v4383 = vor.u32 %v4381, %v4382
        %v4384 = vsub.s32 4294967266, %v4379
        %v4385 = vadd.s32 %v4384, 127
        %v4386 = vshll.u32 %v4385, 23
        %v4387 = vor.u32 4788187, %v4386
        %v4388 = vand.u32 2147483647, %v4387
        %v4390 = vcvt.s32.f32 %v4383
        %v4391 = vmul.f32 %v4390, %v4388
        %v4392 = vxor.u32 %v4391, 2147483648
        %v4393 = vsel %vm4310, %v4392, %v4391
        %v4394 = vsub.s32 4, %v4370
        %v4395 = vsel %vm4310, %v4394, %v4370
        %v4396 = vsel %vm4309, %v1051, %v4393
        %v4397 = vsel %vm4309, 0, %v4395
        %v4398 = vcosq.f32.pop %v4396
        %v4399 = vsinq.f32.pop %v4396
        %vm4400 = vweird.f32 %v1051
        %v4401 = vadd.s32 %v4397, 3
        %v4402 = vand.u32 %v4401, 3
        %vm4403 = vcmp.lt.s32.totalorder %v4402, 2
        %vm4404 = vcmp.eq.s32.totalorder %v4402, 0
        %v4405 = vxor.u32 %v4399, 2147483648
        %v4406 = vsel %vm4404, %v4398, %v4405
        %vm4407 = vcmp.eq.s32.totalorder %v4402, 2
        %v4408 = vxor.u32 %v4398, 2147483648
        %v4409 = vsel %vm4407, %v4408, %v4399
        %v4410 = vsel %vm4403, %v4406, %v4409
        %v4411 = vsel %vm4400, nan, %v4410
        %v4412 = vand.u32 2147483647, %v1052
        %vm4413 = vcmp.le.f32.partialorder %v4412, 0.7853982
        %vm4414 = vcmp.lt.s32.totalorder %v1052, 0
        %v4415 = vand.u32 %v1052, 2139095040
        %v4416 = vshrl.u32 %v4415, 23
        %v4417 = vsub.s32 %v4416, 127
        %v4418 = vand.u32 2147483647, %v1052
        %v4419 = vand.u32 %v4418, 8388607
        %v4420 = vor.u32 %v4419, 8388608
        %v4421 = vsub.s32 0, %v4420
        %v4422 = vadd.s32 %v4417, 1
        %vm4423 = vcmp.gt.s32.totalorder %v4422, 0
        %v4424 = vsel %vm4423, %v4422, 0
        %v4425 = vshrl.u32 %v4424, 5
        %v4426 = vand.u32 %v4424, 31
        %v4427 = vsub.s32 32, %v4426
        %v4428 = vshrl.u32 683565275, %v4427
        %v4429 = vshll.u32 683565275, %v4426
        %v4430 = vshrl.u32 2475754826, %v4427
        %v4431 = vor.u32 %v4429, %v4430
        %v4432 = vshll.u32 2475754826, %v4426
        %v4433 = vshrl.u32 2131351028, %v4427
        %v4434 = vor.u32 %v4432, %v4433
        %v4435 = vshll.u32 2131351028, %v4426
        %v4436 = vshrl.u32 2102212464, %v4427
        %v4437 = vor.u32 %v4435, %v4436
        %v4438 = vshll.u32 2102212464, %v4426
        %v4439 = vshrl.u32 920167782, %v4427
        %v4440 = vor.u32 %v4438, %v4439
        %v4441 = vshll.u32 920167782, %v4426
        %v4442 = vshrl.u32 1326507024, %v4427
        %v4443 = vor.u32 %v4441, %v4442
        %vm4444 = vcmp.lt.s32.totalorder %v4425, 1
        %vm4445 = vcmp.lt.s32.totalorder %v4425, 2
        %vm4446 = vcmp.lt.s32.totalorder %v4425, 3
        %vm4447 = vcmp.lt.s32.totalorder %v4425, 4
        %v4448 = vsel %vm4444, %v4428, %v4431
        %v4449 = vsel %vm4447, %v4437, 2102212464
        %v4450 = vsel %vm4446, %v4434, %v4449
        %v4451 = vsel %vm4445, %v4448, %v4450
        %v4452 = vsel %vm4444, %v4431, %v4434
        %v4453 = vsel %vm4447, %v4440, 920167782
        %v4454 = vsel %vm4446, %v4437, %v4453
        %v4455 = vsel %vm4445, %v4452, %v4454
        %v4456 = vsel %vm4444, %v4434, %v4437
        %v4457 = vsel %vm4447, %v4443, 1326507024
        %v4458 = vsel %vm4446, %v4440, %v4457
        %v4459 = vsel %vm4445, %v4456, %v4458
        %v4460 = vshll.u32 %v4420, 8
        %v4461 = vmul.u32.u64.compose %v4460, %v4459
        %v4462 = vextract.low.u32 %v4461
        %v4463 = vextract.high.u32 %v4461
        %v4464 = vmul.u32.u64.compose %v4460, %v4455
        %v4465 = vextract.low.u32 %v4464
        %v4466 = vextract.high.u32 %v4464
        %v4467 = vmul.u32 %v4460, %v4451
        %v4468 = vadd.s32 %v4463, %v4465
        %vm4469 = vc.u32 %v4463, %v4465
        %v4470 = vadd.s32 %v4466, 1
        %v4471 = vsel %vm4469, %v4470, %v4466
        %v4472 = vadd.s32 %v4467, %v4471
        %v4473 = vadd.s32 %v4472, 536870912
        %v4474 = vshrl.u32 %v4473, 30
        %v4475 = vshll.u32 %v4474, 30
        %v4476 = vsub.s32 %v4472, %v4475
        %vm4477 = vcmp.lt.s32.totalorder %v4476, 0
        %v4478 = vsub.s32 0, %v4476
        %v4479 = vsel %vm4477, %v4478, %v4476
        %v4480 = vclz %v4479
        %v4481 = vsub.s32 %v4480, 2
        %vm4482 = vcmp.gt.s32.totalorder 0, %v4481
        %v4483 = vsel %vm4482, 0, %v4481
        %v4484 = vsub.s32 32, %v4483
        %v4485 = vshll.u32 %v4476, %v4483
        %v4486 = vshrl.u32 %v4468, %v4484
        %v4487 = vor.u32 %v4485, %v4486
        %v4488 = vsub.s32 4294967266, %v4483
        %v4489 = vadd.s32 %v4488, 127
        %v4490 = vshll.u32 %v4489, 23
        %v4491 = vor.u32 4788187, %v4490
        %v4492 = vand.u32 2147483647, %v4491
        %v4494 = vcvt.s32.f32 %v4487
        %v4495 = vmul.f32 %v4494, %v4492
        %v4496 = vxor.u32 %v4495, 2147483648
        %v4497 = vsel %vm4414, %v4496, %v4495
        %v4498 = vsub.s32 4, %v4474
        %v4499 = vsel %vm4414, %v4498, %v4474
        %v4500 = vsel %vm4413, %v1052, %v4497
        %v4501 = vsel %vm4413, 0, %v4499
        %v4502 = vcosq.f32.pop %v4500
        %v4503 = vsinq.f32.pop %v4500
        %vm4504 = vweird.f32 %v1052
        %v4505 = vadd.s32 %v4501, 3
        %v4506 = vand.u32 %v4505, 3
        %vm4507 = vcmp.lt.s32.totalorder %v4506, 2
        %vm4508 = vcmp.eq.s32.totalorder %v4506, 0
        %v4509 = vxor.u32 %v4503, 2147483648
        %v4510 = vsel %vm4508, %v4502, %v4509
        %vm4511 = vcmp.eq.s32.totalorder %v4506, 2
        %v4512 = vxor.u32 %v4502, 2147483648
        %v4513 = vsel %vm4511, %v4512, %v4503
        %v4514 = vsel %vm4507, %v4510, %v4513
        %v4515 = vsel %vm4504, nan, %v4514
        %v4516 = vand.u32 2147483647, %v1053
        %vm4517 = vcmp.le.f32.partialorder %v4516, 0.7853982
        %vm4518 = vcmp.lt.s32.totalorder %v1053, 0
        %v4519 = vand.u32 %v1053, 2139095040
        %v4520 = vshrl.u32 %v4519, 23
        %v4521 = vsub.s32 %v4520, 127
        %v4522 = vand.u32 2147483647, %v1053
        %v4523 = vand.u32 %v4522, 8388607
        %v4524 = vor.u32 %v4523, 8388608
        %v4525 = vsub.s32 0, %v4524
        %v4526 = vadd.s32 %v4521, 1
        %vm4527 = vcmp.gt.s32.totalorder %v4526, 0
        %v4528 = vsel %vm4527, %v4526, 0
        %v4529 = vshrl.u32 %v4528, 5
        %v4530 = vand.u32 %v4528, 31
        %v4531 = vsub.s32 32, %v4530
        %v4532 = vshrl.u32 683565275, %v4531
        %v4533 = vshll.u32 683565275, %v4530
        %v4534 = vshrl.u32 2475754826, %v4531
        %v4535 = vor.u32 %v4533, %v4534
        %v4536 = vshll.u32 2475754826, %v4530
        %v4537 = vshrl.u32 2131351028, %v4531
        %v4538 = vor.u32 %v4536, %v4537
        %v4539 = vshll.u32 2131351028, %v4530
        %v4540 = vshrl.u32 2102212464, %v4531
        %v4541 = vor.u32 %v4539, %v4540
        %v4542 = vshll.u32 2102212464, %v4530
        %v4543 = vshrl.u32 920167782, %v4531
        %v4544 = vor.u32 %v4542, %v4543
        %v4545 = vshll.u32 920167782, %v4530
        %v4546 = vshrl.u32 1326507024, %v4531
        %v4547 = vor.u32 %v4545, %v4546
        %vm4548 = vcmp.lt.s32.totalorder %v4529, 1
        %vm4549 = vcmp.lt.s32.totalorder %v4529, 2
        %vm4550 = vcmp.lt.s32.totalorder %v4529, 3
        %vm4551 = vcmp.lt.s32.totalorder %v4529, 4
        %v4552 = vsel %vm4548, %v4532, %v4535
        %v4553 = vsel %vm4551, %v4541, 2102212464
        %v4554 = vsel %vm4550, %v4538, %v4553
        %v4555 = vsel %vm4549, %v4552, %v4554
        %v4556 = vsel %vm4548, %v4535, %v4538
        %v4557 = vsel %vm4551, %v4544, 920167782
        %v4558 = vsel %vm4550, %v4541, %v4557
        %v4559 = vsel %vm4549, %v4556, %v4558
        %v4560 = vsel %vm4548, %v4538, %v4541
        %v4561 = vsel %vm4551, %v4547, 1326507024
        %v4562 = vsel %vm4550, %v4544, %v4561
        %v4563 = vsel %vm4549, %v4560, %v4562
        %v4564 = vshll.u32 %v4524, 8
        %v4565 = vmul.u32.u64.compose %v4564, %v4563
        %v4566 = vextract.low.u32 %v4565
        %v4567 = vextract.high.u32 %v4565
        %v4568 = vmul.u32.u64.compose %v4564, %v4559
        %v4569 = vextract.low.u32 %v4568
        %v4570 = vextract.high.u32 %v4568
        %v4571 = vmul.u32 %v4564, %v4555
        %v4572 = vadd.s32 %v4567, %v4569
        %vm4573 = vc.u32 %v4567, %v4569
        %v4574 = vadd.s32 %v4570, 1
        %v4575 = vsel %vm4573, %v4574, %v4570
        %v4576 = vadd.s32 %v4571, %v4575
        %v4577 = vadd.s32 %v4576, 536870912
        %v4578 = vshrl.u32 %v4577, 30
        %v4579 = vshll.u32 %v4578, 30
        %v4580 = vsub.s32 %v4576, %v4579
        %vm4581 = vcmp.lt.s32.totalorder %v4580, 0
        %v4582 = vsub.s32 0, %v4580
        %v4583 = vsel %vm4581, %v4582, %v4580
        %v4584 = vclz %v4583
        %v4585 = vsub.s32 %v4584, 2
        %vm4586 = vcmp.gt.s32.totalorder 0, %v4585
        %v4587 = vsel %vm4586, 0, %v4585
        %v4588 = vsub.s32 32, %v4587
        %v4589 = vshll.u32 %v4580, %v4587
        %v4590 = vshrl.u32 %v4572, %v4588
        %v4591 = vor.u32 %v4589, %v4590
        %v4592 = vsub.s32 4294967266, %v4587
        %v4593 = vadd.s32 %v4592, 127
        %v4594 = vshll.u32 %v4593, 23
        %v4595 = vor.u32 4788187, %v4594
        %v4596 = vand.u32 2147483647, %v4595
        %v4598 = vcvt.s32.f32 %v4591
        %v4599 = vmul.f32 %v4598, %v4596
        %v4600 = vxor.u32 %v4599, 2147483648
        %v4601 = vsel %vm4518, %v4600, %v4599
        %v4602 = vsub.s32 4, %v4578
        %v4603 = vsel %vm4518, %v4602, %v4578
        %v4604 = vsel %vm4517, %v1053, %v4601
        %v4605 = vsel %vm4517, 0, %v4603
        %v4606 = vcosq.f32.pop %v4604
        %v4607 = vsinq.f32.pop %v4604
        %vm4608 = vweird.f32 %v1053
        %v4609 = vadd.s32 %v4605, 3
        %v4610 = vand.u32 %v4609, 3
        %vm4611 = vcmp.lt.s32.totalorder %v4610, 2
        %vm4612 = vcmp.eq.s32.totalorder %v4610, 0
        %v4613 = vxor.u32 %v4607, 2147483648
        %v4614 = vsel %vm4612, %v4606, %v4613
        %vm4615 = vcmp.eq.s32.totalorder %v4610, 2
        %v4616 = vxor.u32 %v4606, 2147483648
        %v4617 = vsel %vm4615, %v4616, %v4607
        %v4618 = vsel %vm4611, %v4614, %v4617
        %v4619 = vsel %vm4608, nan, %v4618
        %v4620 = vand.u32 2147483647, %v1054
        %vm4621 = vcmp.le.f32.partialorder %v4620, 0.7853982
        %vm4622 = vcmp.lt.s32.totalorder %v1054, 0
        %v4623 = vand.u32 %v1054, 2139095040
        %v4624 = vshrl.u32 %v4623, 23
        %v4625 = vsub.s32 %v4624, 127
        %v4626 = vand.u32 2147483647, %v1054
        %v4627 = vand.u32 %v4626, 8388607
        %v4628 = vor.u32 %v4627, 8388608
        %v4629 = vsub.s32 0, %v4628
        %v4630 = vadd.s32 %v4625, 1
        %vm4631 = vcmp.gt.s32.totalorder %v4630, 0
        %v4632 = vsel %vm4631, %v4630, 0
        %v4633 = vshrl.u32 %v4632, 5
        %v4634 = vand.u32 %v4632, 31
        %v4635 = vsub.s32 32, %v4634
        %v4636 = vshrl.u32 683565275, %v4635
        %v4637 = vshll.u32 683565275, %v4634
        %v4638 = vshrl.u32 2475754826, %v4635
        %v4639 = vor.u32 %v4637, %v4638
        %v4640 = vshll.u32 2475754826, %v4634
        %v4641 = vshrl.u32 2131351028, %v4635
        %v4642 = vor.u32 %v4640, %v4641
        %v4643 = vshll.u32 2131351028, %v4634
        %v4644 = vshrl.u32 2102212464, %v4635
        %v4645 = vor.u32 %v4643, %v4644
        %v4646 = vshll.u32 2102212464, %v4634
        %v4647 = vshrl.u32 920167782, %v4635
        %v4648 = vor.u32 %v4646, %v4647
        %v4649 = vshll.u32 920167782, %v4634
        %v4650 = vshrl.u32 1326507024, %v4635
        %v4651 = vor.u32 %v4649, %v4650
        %vm4652 = vcmp.lt.s32.totalorder %v4633, 1
        %vm4653 = vcmp.lt.s32.totalorder %v4633, 2
        %vm4654 = vcmp.lt.s32.totalorder %v4633, 3
        %vm4655 = vcmp.lt.s32.totalorder %v4633, 4
        %v4656 = vsel %vm4652, %v4636, %v4639
        %v4657 = vsel %vm4655, %v4645, 2102212464
        %v4658 = vsel %vm4654, %v4642, %v4657
        %v4659 = vsel %vm4653, %v4656, %v4658
        %v4660 = vsel %vm4652, %v4639, %v4642
        %v4661 = vsel %vm4655, %v4648, 920167782
        %v4662 = vsel %vm4654, %v4645, %v4661
        %v4663 = vsel %vm4653, %v4660, %v4662
        %v4664 = vsel %vm4652, %v4642, %v4645
        %v4665 = vsel %vm4655, %v4651, 1326507024
        %v4666 = vsel %vm4654, %v4648, %v4665
        %v4667 = vsel %vm4653, %v4664, %v4666
        %v4668 = vshll.u32 %v4628, 8
        %v4669 = vmul.u32.u64.compose %v4668, %v4667
        %v4670 = vextract.low.u32 %v4669
        %v4671 = vextract.high.u32 %v4669
        %v4672 = vmul.u32.u64.compose %v4668, %v4663
        %v4673 = vextract.low.u32 %v4672
        %v4674 = vextract.high.u32 %v4672
        %v4675 = vmul.u32 %v4668, %v4659
        %v4676 = vadd.s32 %v4671, %v4673
        %vm4677 = vc.u32 %v4671, %v4673
        %v4678 = vadd.s32 %v4674, 1
        %v4679 = vsel %vm4677, %v4678, %v4674
        %v4680 = vadd.s32 %v4675, %v4679
        %v4681 = vadd.s32 %v4680, 536870912
        %v4682 = vshrl.u32 %v4681, 30
        %v4683 = vshll.u32 %v4682, 30
        %v4684 = vsub.s32 %v4680, %v4683
        %vm4685 = vcmp.lt.s32.totalorder %v4684, 0
        %v4686 = vsub.s32 0, %v4684
        %v4687 = vsel %vm4685, %v4686, %v4684
        %v4688 = vclz %v4687
        %v4689 = vsub.s32 %v4688, 2
        %vm4690 = vcmp.gt.s32.totalorder 0, %v4689
        %v4691 = vsel %vm4690, 0, %v4689
        %v4692 = vsub.s32 32, %v4691
        %v4693 = vshll.u32 %v4684, %v4691
        %v4694 = vshrl.u32 %v4676, %v4692
        %v4695 = vor.u32 %v4693, %v4694
        %v4696 = vsub.s32 4294967266, %v4691
        %v4697 = vadd.s32 %v4696, 127
        %v4698 = vshll.u32 %v4697, 23
        %v4699 = vor.u32 4788187, %v4698
        %v4700 = vand.u32 2147483647, %v4699
        %v4702 = vcvt.s32.f32 %v4695
        %v4703 = vmul.f32 %v4702, %v4700
        %v4704 = vxor.u32 %v4703, 2147483648
        %v4705 = vsel %vm4622, %v4704, %v4703
        %v4706 = vsub.s32 4, %v4682
        %v4707 = vsel %vm4622, %v4706, %v4682
        %v4708 = vsel %vm4621, %v1054, %v4705
        %v4709 = vsel %vm4621, 0, %v4707
        %v4710 = vcosq.f32.pop %v4708
        %v4711 = vsinq.f32.pop %v4708
        %vm4712 = vweird.f32 %v1054
        %v4713 = vadd.s32 %v4709, 3
        %v4714 = vand.u32 %v4713, 3
        %vm4715 = vcmp.lt.s32.totalorder %v4714, 2
        %vm4716 = vcmp.eq.s32.totalorder %v4714, 0
        %v4717 = vxor.u32 %v4711, 2147483648
        %v4718 = vsel %vm4716, %v4710, %v4717
        %vm4719 = vcmp.eq.s32.totalorder %v4714, 2
        %v4720 = vxor.u32 %v4710, 2147483648
        %v4721 = vsel %vm4719, %v4720, %v4711
        %v4722 = vsel %vm4715, %v4718, %v4721
        %v4723 = vsel %vm4712, nan, %v4722
        %v4724 = vand.u32 2147483647, %v1055
        %vm4725 = vcmp.le.f32.partialorder %v4724, 0.7853982
        %vm4726 = vcmp.lt.s32.totalorder %v1055, 0
        %v4727 = vand.u32 %v1055, 2139095040
        %v4728 = vshrl.u32 %v4727, 23
        %v4729 = vsub.s32 %v4728, 127
        %v4730 = vand.u32 2147483647, %v1055
        %v4731 = vand.u32 %v4730, 8388607
        %v4732 = vor.u32 %v4731, 8388608
        %v4733 = vsub.s32 0, %v4732
        %v4734 = vadd.s32 %v4729, 1
        %vm4735 = vcmp.gt.s32.totalorder %v4734, 0
        %v4736 = vsel %vm4735, %v4734, 0
        %v4737 = vshrl.u32 %v4736, 5
        %v4738 = vand.u32 %v4736, 31
        %v4739 = vsub.s32 32, %v4738
        %v4740 = vshrl.u32 683565275, %v4739
        %v4741 = vshll.u32 683565275, %v4738
        %v4742 = vshrl.u32 2475754826, %v4739
        %v4743 = vor.u32 %v4741, %v4742
        %v4744 = vshll.u32 2475754826, %v4738
        %v4745 = vshrl.u32 2131351028, %v4739
        %v4746 = vor.u32 %v4744, %v4745
        %v4747 = vshll.u32 2131351028, %v4738
        %v4748 = vshrl.u32 2102212464, %v4739
        %v4749 = vor.u32 %v4747, %v4748
        %v4750 = vshll.u32 2102212464, %v4738
        %v4751 = vshrl.u32 920167782, %v4739
        %v4752 = vor.u32 %v4750, %v4751
        %v4753 = vshll.u32 920167782, %v4738
        %v4754 = vshrl.u32 1326507024, %v4739
        %v4755 = vor.u32 %v4753, %v4754
        %vm4756 = vcmp.lt.s32.totalorder %v4737, 1
        %vm4757 = vcmp.lt.s32.totalorder %v4737, 2
        %vm4758 = vcmp.lt.s32.totalorder %v4737, 3
        %vm4759 = vcmp.lt.s32.totalorder %v4737, 4
        %v4760 = vsel %vm4756, %v4740, %v4743
        %v4761 = vsel %vm4759, %v4749, 2102212464
        %v4762 = vsel %vm4758, %v4746, %v4761
        %v4763 = vsel %vm4757, %v4760, %v4762
        %v4764 = vsel %vm4756, %v4743, %v4746
        %v4765 = vsel %vm4759, %v4752, 920167782
        %v4766 = vsel %vm4758, %v4749, %v4765
        %v4767 = vsel %vm4757, %v4764, %v4766
        %v4768 = vsel %vm4756, %v4746, %v4749
        %v4769 = vsel %vm4759, %v4755, 1326507024
        %v4770 = vsel %vm4758, %v4752, %v4769
        %v4771 = vsel %vm4757, %v4768, %v4770
        %v4772 = vshll.u32 %v4732, 8
        %v4773 = vmul.u32.u64.compose %v4772, %v4771
        %v4774 = vextract.low.u32 %v4773
        %v4775 = vextract.high.u32 %v4773
        %v4776 = vmul.u32.u64.compose %v4772, %v4767
        %v4777 = vextract.low.u32 %v4776
        %v4778 = vextract.high.u32 %v4776
        %v4779 = vmul.u32 %v4772, %v4763
        %v4780 = vadd.s32 %v4775, %v4777
        %vm4781 = vc.u32 %v4775, %v4777
        %v4782 = vadd.s32 %v4778, 1
        %v4783 = vsel %vm4781, %v4782, %v4778
        %v4784 = vadd.s32 %v4779, %v4783
        %v4785 = vadd.s32 %v4784, 536870912
        %v4786 = vshrl.u32 %v4785, 30
        %v4787 = vshll.u32 %v4786, 30
        %v4788 = vsub.s32 %v4784, %v4787
        %vm4789 = vcmp.lt.s32.totalorder %v4788, 0
        %v4790 = vsub.s32 0, %v4788
        %v4791 = vsel %vm4789, %v4790, %v4788
        %v4792 = vclz %v4791
        %v4793 = vsub.s32 %v4792, 2
        %vm4794 = vcmp.gt.s32.totalorder 0, %v4793
        %v4795 = vsel %vm4794, 0, %v4793
        %v4796 = vsub.s32 32, %v4795
        %v4797 = vshll.u32 %v4788, %v4795
        %v4798 = vshrl.u32 %v4780, %v4796
        %v4799 = vor.u32 %v4797, %v4798
        %v4800 = vsub.s32 4294967266, %v4795
        %v4801 = vadd.s32 %v4800, 127
        %v4802 = vshll.u32 %v4801, 23
        %v4803 = vor.u32 4788187, %v4802
        %v4804 = vand.u32 2147483647, %v4803
        %v4806 = vcvt.s32.f32 %v4799
        %v4807 = vmul.f32 %v4806, %v4804
        %v4808 = vxor.u32 %v4807, 2147483648
        %v4809 = vsel %vm4726, %v4808, %v4807
        %v4810 = vsub.s32 4, %v4786
        %v4811 = vsel %vm4726, %v4810, %v4786
        %v4812 = vsel %vm4725, %v1055, %v4809
        %v4813 = vsel %vm4725, 0, %v4811
        %v4814 = vcosq.f32.pop %v4812
        %v4815 = vsinq.f32.pop %v4812
        %vm4816 = vweird.f32 %v1055
        %v4817 = vadd.s32 %v4813, 3
        %v4818 = vand.u32 %v4817, 3
        %vm4819 = vcmp.lt.s32.totalorder %v4818, 2
        %vm4820 = vcmp.eq.s32.totalorder %v4818, 0
        %v4821 = vxor.u32 %v4815, 2147483648
        %v4822 = vsel %vm4820, %v4814, %v4821
        %vm4823 = vcmp.eq.s32.totalorder %v4818, 2
        %v4824 = vxor.u32 %v4814, 2147483648
        %v4825 = vsel %vm4823, %v4824, %v4815
        %v4826 = vsel %vm4819, %v4822, %v4825
        %v4827 = vsel %vm4816, nan, %v4826
        %v4828 = vand.u32 2147483647, %v1056
        %vm4829 = vcmp.le.f32.partialorder %v4828, 0.7853982
        %vm4830 = vcmp.lt.s32.totalorder %v1056, 0
        %v4831 = vand.u32 %v1056, 2139095040
        %v4832 = vshrl.u32 %v4831, 23
        %v4833 = vsub.s32 %v4832, 127
        %v4834 = vand.u32 2147483647, %v1056
        %v4835 = vand.u32 %v4834, 8388607
        %v4836 = vor.u32 %v4835, 8388608
        %v4837 = vsub.s32 0, %v4836
        %v4838 = vadd.s32 %v4833, 1
        %vm4839 = vcmp.gt.s32.totalorder %v4838, 0
        %v4840 = vsel %vm4839, %v4838, 0
        %v4841 = vshrl.u32 %v4840, 5
        %v4842 = vand.u32 %v4840, 31
        %v4843 = vsub.s32 32, %v4842
        %v4844 = vshrl.u32 683565275, %v4843
        %v4845 = vshll.u32 683565275, %v4842
        %v4846 = vshrl.u32 2475754826, %v4843
        %v4847 = vor.u32 %v4845, %v4846
        %v4848 = vshll.u32 2475754826, %v4842
        %v4849 = vshrl.u32 2131351028, %v4843
        %v4850 = vor.u32 %v4848, %v4849
        %v4851 = vshll.u32 2131351028, %v4842
        %v4852 = vshrl.u32 2102212464, %v4843
        %v4853 = vor.u32 %v4851, %v4852
        %v4854 = vshll.u32 2102212464, %v4842
        %v4855 = vshrl.u32 920167782, %v4843
        %v4856 = vor.u32 %v4854, %v4855
        %v4857 = vshll.u32 920167782, %v4842
        %v4858 = vshrl.u32 1326507024, %v4843
        %v4859 = vor.u32 %v4857, %v4858
        %vm4860 = vcmp.lt.s32.totalorder %v4841, 1
        %vm4861 = vcmp.lt.s32.totalorder %v4841, 2
        %vm4862 = vcmp.lt.s32.totalorder %v4841, 3
        %vm4863 = vcmp.lt.s32.totalorder %v4841, 4
        %v4864 = vsel %vm4860, %v4844, %v4847
        %v4865 = vsel %vm4863, %v4853, 2102212464
        %v4866 = vsel %vm4862, %v4850, %v4865
        %v4867 = vsel %vm4861, %v4864, %v4866
        %v4868 = vsel %vm4860, %v4847, %v4850
        %v4869 = vsel %vm4863, %v4856, 920167782
        %v4870 = vsel %vm4862, %v4853, %v4869
        %v4871 = vsel %vm4861, %v4868, %v4870
        %v4872 = vsel %vm4860, %v4850, %v4853
        %v4873 = vsel %vm4863, %v4859, 1326507024
        %v4874 = vsel %vm4862, %v4856, %v4873
        %v4875 = vsel %vm4861, %v4872, %v4874
        %v4876 = vshll.u32 %v4836, 8
        %v4877 = vmul.u32.u64.compose %v4876, %v4875
        %v4878 = vextract.low.u32 %v4877
        %v4879 = vextract.high.u32 %v4877
        %v4880 = vmul.u32.u64.compose %v4876, %v4871
        %v4881 = vextract.low.u32 %v4880
        %v4882 = vextract.high.u32 %v4880
        %v4883 = vmul.u32 %v4876, %v4867
        %v4884 = vadd.s32 %v4879, %v4881
        %vm4885 = vc.u32 %v4879, %v4881
        %v4886 = vadd.s32 %v4882, 1
        %v4887 = vsel %vm4885, %v4886, %v4882
        %v4888 = vadd.s32 %v4883, %v4887
        %v4889 = vadd.s32 %v4888, 536870912
        %v4890 = vshrl.u32 %v4889, 30
        %v4891 = vshll.u32 %v4890, 30
        %v4892 = vsub.s32 %v4888, %v4891
        %vm4893 = vcmp.lt.s32.totalorder %v4892, 0
        %v4894 = vsub.s32 0, %v4892
        %v4895 = vsel %vm4893, %v4894, %v4892
        %v4896 = vclz %v4895
        %v4897 = vsub.s32 %v4896, 2
        %vm4898 = vcmp.gt.s32.totalorder 0, %v4897
        %v4899 = vsel %vm4898, 0, %v4897
        %v4900 = vsub.s32 32, %v4899
        %v4901 = vshll.u32 %v4892, %v4899
        %v4902 = vshrl.u32 %v4884, %v4900
        %v4903 = vor.u32 %v4901, %v4902
        %v4904 = vsub.s32 4294967266, %v4899
        %v4905 = vadd.s32 %v4904, 127
        %v4906 = vshll.u32 %v4905, 23
        %v4907 = vor.u32 4788187, %v4906
        %v4908 = vand.u32 2147483647, %v4907
        %v4910 = vcvt.s32.f32 %v4903
        %v4911 = vmul.f32 %v4910, %v4908
        %v4912 = vxor.u32 %v4911, 2147483648
        %v4913 = vsel %vm4830, %v4912, %v4911
        %v4914 = vsub.s32 4, %v4890
        %v4915 = vsel %vm4830, %v4914, %v4890
        %v4916 = vsel %vm4829, %v1056, %v4913
        %v4917 = vsel %vm4829, 0, %v4915
        %v4918 = vcosq.f32.pop %v4916
        %v4919 = vsinq.f32.pop %v4916
        %vm4920 = vweird.f32 %v1056
        %v4921 = vadd.s32 %v4917, 3
        %v4922 = vand.u32 %v4921, 3
        %vm4923 = vcmp.lt.s32.totalorder %v4922, 2
        %vm4924 = vcmp.eq.s32.totalorder %v4922, 0
        %v4925 = vxor.u32 %v4919, 2147483648
        %v4926 = vsel %vm4924, %v4918, %v4925
        %vm4927 = vcmp.eq.s32.totalorder %v4922, 2
        %v4928 = vxor.u32 %v4918, 2147483648
        %v4929 = vsel %vm4927, %v4928, %v4919
        %v4930 = vsel %vm4923, %v4926, %v4929
        %v4931 = vsel %vm4920, nan, %v4930
        %v4932 = vand.u32 2147483647, %v1057
        %vm4933 = vcmp.le.f32.partialorder %v4932, 0.7853982
        %vm4934 = vcmp.lt.s32.totalorder %v1057, 0
        %v4935 = vand.u32 %v1057, 2139095040
        %v4936 = vshrl.u32 %v4935, 23
        %v4937 = vsub.s32 %v4936, 127
        %v4938 = vand.u32 2147483647, %v1057
        %v4939 = vand.u32 %v4938, 8388607
        %v4940 = vor.u32 %v4939, 8388608
        %v4941 = vsub.s32 0, %v4940
        %v4942 = vadd.s32 %v4937, 1
        %vm4943 = vcmp.gt.s32.totalorder %v4942, 0
        %v4944 = vsel %vm4943, %v4942, 0
        %v4945 = vshrl.u32 %v4944, 5
        %v4946 = vand.u32 %v4944, 31
        %v4947 = vsub.s32 32, %v4946
        %v4948 = vshrl.u32 683565275, %v4947
        %v4949 = vshll.u32 683565275, %v4946
        %v4950 = vshrl.u32 2475754826, %v4947
        %v4951 = vor.u32 %v4949, %v4950
        %v4952 = vshll.u32 2475754826, %v4946
        %v4953 = vshrl.u32 2131351028, %v4947
        %v4954 = vor.u32 %v4952, %v4953
        %v4955 = vshll.u32 2131351028, %v4946
        %v4956 = vshrl.u32 2102212464, %v4947
        %v4957 = vor.u32 %v4955, %v4956
        %v4958 = vshll.u32 2102212464, %v4946
        %v4959 = vshrl.u32 920167782, %v4947
        %v4960 = vor.u32 %v4958, %v4959
        %v4961 = vshll.u32 920167782, %v4946
        %v4962 = vshrl.u32 1326507024, %v4947
        %v4963 = vor.u32 %v4961, %v4962
        %vm4964 = vcmp.lt.s32.totalorder %v4945, 1
        %vm4965 = vcmp.lt.s32.totalorder %v4945, 2
        %vm4966 = vcmp.lt.s32.totalorder %v4945, 3
        %vm4967 = vcmp.lt.s32.totalorder %v4945, 4
        %v4968 = vsel %vm4964, %v4948, %v4951
        %v4969 = vsel %vm4967, %v4957, 2102212464
        %v4970 = vsel %vm4966, %v4954, %v4969
        %v4971 = vsel %vm4965, %v4968, %v4970
        %v4972 = vsel %vm4964, %v4951, %v4954
        %v4973 = vsel %vm4967, %v4960, 920167782
        %v4974 = vsel %vm4966, %v4957, %v4973
        %v4975 = vsel %vm4965, %v4972, %v4974
        %v4976 = vsel %vm4964, %v4954, %v4957
        %v4977 = vsel %vm4967, %v4963, 1326507024
        %v4978 = vsel %vm4966, %v4960, %v4977
        %v4979 = vsel %vm4965, %v4976, %v4978
        %v4980 = vshll.u32 %v4940, 8
        %v4981 = vmul.u32.u64.compose %v4980, %v4979
        %v4982 = vextract.low.u32 %v4981
        %v4983 = vextract.high.u32 %v4981
        %v4984 = vmul.u32.u64.compose %v4980, %v4975
        %v4985 = vextract.low.u32 %v4984
        %v4986 = vextract.high.u32 %v4984
        %v4987 = vmul.u32 %v4980, %v4971
        %v4988 = vadd.s32 %v4983, %v4985
        %vm4989 = vc.u32 %v4983, %v4985
        %v4990 = vadd.s32 %v4986, 1
        %v4991 = vsel %vm4989, %v4990, %v4986
        %v4992 = vadd.s32 %v4987, %v4991
        %v4993 = vadd.s32 %v4992, 536870912
        %v4994 = vshrl.u32 %v4993, 30
        %v4995 = vshll.u32 %v4994, 30
        %v4996 = vsub.s32 %v4992, %v4995
        %vm4997 = vcmp.lt.s32.totalorder %v4996, 0
        %v4998 = vsub.s32 0, %v4996
        %v4999 = vsel %vm4997, %v4998, %v4996
        %v5000 = vclz %v4999
        %v5001 = vsub.s32 %v5000, 2
        %vm5002 = vcmp.gt.s32.totalorder 0, %v5001
        %v5003 = vsel %vm5002, 0, %v5001
        %v5004 = vsub.s32 32, %v5003
        %v5005 = vshll.u32 %v4996, %v5003
        %v5006 = vshrl.u32 %v4988, %v5004
        %v5007 = vor.u32 %v5005, %v5006
        %v5008 = vsub.s32 4294967266, %v5003
        %v5009 = vadd.s32 %v5008, 127
        %v5010 = vshll.u32 %v5009, 23
        %v5011 = vor.u32 4788187, %v5010
        %v5012 = vand.u32 2147483647, %v5011
        %v5014 = vcvt.s32.f32 %v5007
        %v5015 = vmul.f32 %v5014, %v5012
        %v5016 = vxor.u32 %v5015, 2147483648
        %v5017 = vsel %vm4934, %v5016, %v5015
        %v5018 = vsub.s32 4, %v4994
        %v5019 = vsel %vm4934, %v5018, %v4994
        %v5020 = vsel %vm4933, %v1057, %v5017
        %v5021 = vsel %vm4933, 0, %v5019
        %v5022 = vcosq.f32.pop %v5020
        %v5023 = vsinq.f32.pop %v5020
        %vm5024 = vweird.f32 %v1057
        %v5025 = vadd.s32 %v5021, 3
        %v5026 = vand.u32 %v5025, 3
        %vm5027 = vcmp.lt.s32.totalorder %v5026, 2
        %vm5028 = vcmp.eq.s32.totalorder %v5026, 0
        %v5029 = vxor.u32 %v5023, 2147483648
        %v5030 = vsel %vm5028, %v5022, %v5029
        %vm5031 = vcmp.eq.s32.totalorder %v5026, 2
        %v5032 = vxor.u32 %v5022, 2147483648
        %v5033 = vsel %vm5031, %v5032, %v5023
        %v5034 = vsel %vm5027, %v5030, %v5033
        %v5035 = vsel %vm5024, nan, %v5034
        %v5036 = vand.u32 2147483647, %v1058
        %vm5037 = vcmp.le.f32.partialorder %v5036, 0.7853982
        %vm5038 = vcmp.lt.s32.totalorder %v1058, 0
        %v5039 = vand.u32 %v1058, 2139095040
        %v5040 = vshrl.u32 %v5039, 23
        %v5041 = vsub.s32 %v5040, 127
        %v5042 = vand.u32 2147483647, %v1058
        %v5043 = vand.u32 %v5042, 8388607
        %v5044 = vor.u32 %v5043, 8388608
        %v5045 = vsub.s32 0, %v5044
        %v5046 = vadd.s32 %v5041, 1
        %vm5047 = vcmp.gt.s32.totalorder %v5046, 0
        %v5048 = vsel %vm5047, %v5046, 0
        %v5049 = vshrl.u32 %v5048, 5
        %v5050 = vand.u32 %v5048, 31
        %v5051 = vsub.s32 32, %v5050
        %v5052 = vshrl.u32 683565275, %v5051
        %v5053 = vshll.u32 683565275, %v5050
        %v5054 = vshrl.u32 2475754826, %v5051
        %v5055 = vor.u32 %v5053, %v5054
        %v5056 = vshll.u32 2475754826, %v5050
        %v5057 = vshrl.u32 2131351028, %v5051
        %v5058 = vor.u32 %v5056, %v5057
        %v5059 = vshll.u32 2131351028, %v5050
        %v5060 = vshrl.u32 2102212464, %v5051
        %v5061 = vor.u32 %v5059, %v5060
        %v5062 = vshll.u32 2102212464, %v5050
        %v5063 = vshrl.u32 920167782, %v5051
        %v5064 = vor.u32 %v5062, %v5063
        %v5065 = vshll.u32 920167782, %v5050
        %v5066 = vshrl.u32 1326507024, %v5051
        %v5067 = vor.u32 %v5065, %v5066
        %vm5068 = vcmp.lt.s32.totalorder %v5049, 1
        %vm5069 = vcmp.lt.s32.totalorder %v5049, 2
        %vm5070 = vcmp.lt.s32.totalorder %v5049, 3
        %vm5071 = vcmp.lt.s32.totalorder %v5049, 4
        %v5072 = vsel %vm5068, %v5052, %v5055
        %v5073 = vsel %vm5071, %v5061, 2102212464
        %v5074 = vsel %vm5070, %v5058, %v5073
        %v5075 = vsel %vm5069, %v5072, %v5074
        %v5076 = vsel %vm5068, %v5055, %v5058
        %v5077 = vsel %vm5071, %v5064, 920167782
        %v5078 = vsel %vm5070, %v5061, %v5077
        %v5079 = vsel %vm5069, %v5076, %v5078
        %v5080 = vsel %vm5068, %v5058, %v5061
        %v5081 = vsel %vm5071, %v5067, 1326507024
        %v5082 = vsel %vm5070, %v5064, %v5081
        %v5083 = vsel %vm5069, %v5080, %v5082
        %v5084 = vshll.u32 %v5044, 8
        %v5085 = vmul.u32.u64.compose %v5084, %v5083
        %v5086 = vextract.low.u32 %v5085
        %v5087 = vextract.high.u32 %v5085
        %v5088 = vmul.u32.u64.compose %v5084, %v5079
        %v5089 = vextract.low.u32 %v5088
        %v5090 = vextract.high.u32 %v5088
        %v5091 = vmul.u32 %v5084, %v5075
        %v5092 = vadd.s32 %v5087, %v5089
        %vm5093 = vc.u32 %v5087, %v5089
        %v5094 = vadd.s32 %v5090, 1
        %v5095 = vsel %vm5093, %v5094, %v5090
        %v5096 = vadd.s32 %v5091, %v5095
        %v5097 = vadd.s32 %v5096, 536870912
        %v5098 = vshrl.u32 %v5097, 30
        %v5099 = vshll.u32 %v5098, 30
        %v5100 = vsub.s32 %v5096, %v5099
        %vm5101 = vcmp.lt.s32.totalorder %v5100, 0
        %v5102 = vsub.s32 0, %v5100
        %v5103 = vsel %vm5101, %v5102, %v5100
        %v5104 = vclz %v5103
        %v5105 = vsub.s32 %v5104, 2
        %vm5106 = vcmp.gt.s32.totalorder 0, %v5105
        %v5107 = vsel %vm5106, 0, %v5105
        %v5108 = vsub.s32 32, %v5107
        %v5109 = vshll.u32 %v5100, %v5107
        %v5110 = vshrl.u32 %v5092, %v5108
        %v5111 = vor.u32 %v5109, %v5110
        %v5112 = vsub.s32 4294967266, %v5107
        %v5113 = vadd.s32 %v5112, 127
        %v5114 = vshll.u32 %v5113, 23
        %v5115 = vor.u32 4788187, %v5114
        %v5116 = vand.u32 2147483647, %v5115
        %v5118 = vcvt.s32.f32 %v5111
        %v5119 = vmul.f32 %v5118, %v5116
        %v5120 = vxor.u32 %v5119, 2147483648
        %v5121 = vsel %vm5038, %v5120, %v5119
        %v5122 = vsub.s32 4, %v5098
        %v5123 = vsel %vm5038, %v5122, %v5098
        %v5124 = vsel %vm5037, %v1058, %v5121
        %v5125 = vsel %vm5037, 0, %v5123
        %v5126 = vcosq.f32.pop %v5124
        %v5127 = vsinq.f32.pop %v5124
        %vm5128 = vweird.f32 %v1058
        %v5129 = vadd.s32 %v5125, 3
        %v5130 = vand.u32 %v5129, 3
        %vm5131 = vcmp.lt.s32.totalorder %v5130, 2
        %vm5132 = vcmp.eq.s32.totalorder %v5130, 0
        %v5133 = vxor.u32 %v5127, 2147483648
        %v5134 = vsel %vm5132, %v5126, %v5133
        %vm5135 = vcmp.eq.s32.totalorder %v5130, 2
        %v5136 = vxor.u32 %v5126, 2147483648
        %v5137 = vsel %vm5135, %v5136, %v5127
        %v5138 = vsel %vm5131, %v5134, %v5137
        %v5139 = vsel %vm5128, nan, %v5138
        %v5140 = vand.u32 2147483647, %v1059
        %vm5141 = vcmp.le.f32.partialorder %v5140, 0.7853982
        %vm5142 = vcmp.lt.s32.totalorder %v1059, 0
        %v5143 = vand.u32 %v1059, 2139095040
        %v5144 = vshrl.u32 %v5143, 23
        %v5145 = vsub.s32 %v5144, 127
        %v5146 = vand.u32 2147483647, %v1059
        %v5147 = vand.u32 %v5146, 8388607
        %v5148 = vor.u32 %v5147, 8388608
        %v5149 = vsub.s32 0, %v5148
        %v5150 = vadd.s32 %v5145, 1
        %vm5151 = vcmp.gt.s32.totalorder %v5150, 0
        %v5152 = vsel %vm5151, %v5150, 0
        %v5153 = vshrl.u32 %v5152, 5
        %v5154 = vand.u32 %v5152, 31
        %v5155 = vsub.s32 32, %v5154
        %v5156 = vshrl.u32 683565275, %v5155
        %v5157 = vshll.u32 683565275, %v5154
        %v5158 = vshrl.u32 2475754826, %v5155
        %v5159 = vor.u32 %v5157, %v5158
        %v5160 = vshll.u32 2475754826, %v5154
        %v5161 = vshrl.u32 2131351028, %v5155
        %v5162 = vor.u32 %v5160, %v5161
        %v5163 = vshll.u32 2131351028, %v5154
        %v5164 = vshrl.u32 2102212464, %v5155
        %v5165 = vor.u32 %v5163, %v5164
        %v5166 = vshll.u32 2102212464, %v5154
        %v5167 = vshrl.u32 920167782, %v5155
        %v5168 = vor.u32 %v5166, %v5167
        %v5169 = vshll.u32 920167782, %v5154
        %v5170 = vshrl.u32 1326507024, %v5155
        %v5171 = vor.u32 %v5169, %v5170
        %vm5172 = vcmp.lt.s32.totalorder %v5153, 1
        %vm5173 = vcmp.lt.s32.totalorder %v5153, 2
        %vm5174 = vcmp.lt.s32.totalorder %v5153, 3
        %vm5175 = vcmp.lt.s32.totalorder %v5153, 4
        %v5176 = vsel %vm5172, %v5156, %v5159
        %v5177 = vsel %vm5175, %v5165, 2102212464
        %v5178 = vsel %vm5174, %v5162, %v5177
        %v5179 = vsel %vm5173, %v5176, %v5178
        %v5180 = vsel %vm5172, %v5159, %v5162
        %v5181 = vsel %vm5175, %v5168, 920167782
        %v5182 = vsel %vm5174, %v5165, %v5181
        %v5183 = vsel %vm5173, %v5180, %v5182
        %v5184 = vsel %vm5172, %v5162, %v5165
        %v5185 = vsel %vm5175, %v5171, 1326507024
        %v5186 = vsel %vm5174, %v5168, %v5185
        %v5187 = vsel %vm5173, %v5184, %v5186
        %v5188 = vshll.u32 %v5148, 8
        %v5189 = vmul.u32.u64.compose %v5188, %v5187
        %v5190 = vextract.low.u32 %v5189
        %v5191 = vextract.high.u32 %v5189
        %v5192 = vmul.u32.u64.compose %v5188, %v5183
        %v5193 = vextract.low.u32 %v5192
        %v5194 = vextract.high.u32 %v5192
        %v5195 = vmul.u32 %v5188, %v5179
        %v5196 = vadd.s32 %v5191, %v5193
        %vm5197 = vc.u32 %v5191, %v5193
        %v5198 = vadd.s32 %v5194, 1
        %v5199 = vsel %vm5197, %v5198, %v5194
        %v5200 = vadd.s32 %v5195, %v5199
        %v5201 = vadd.s32 %v5200, 536870912
        %v5202 = vshrl.u32 %v5201, 30
        %v5203 = vshll.u32 %v5202, 30
        %v5204 = vsub.s32 %v5200, %v5203
        %vm5205 = vcmp.lt.s32.totalorder %v5204, 0
        %v5206 = vsub.s32 0, %v5204
        %v5207 = vsel %vm5205, %v5206, %v5204
        %v5208 = vclz %v5207
        %v5209 = vsub.s32 %v5208, 2
        %vm5210 = vcmp.gt.s32.totalorder 0, %v5209
        %v5211 = vsel %vm5210, 0, %v5209
        %v5212 = vsub.s32 32, %v5211
        %v5213 = vshll.u32 %v5204, %v5211
        %v5214 = vshrl.u32 %v5196, %v5212
        %v5215 = vor.u32 %v5213, %v5214
        %v5216 = vsub.s32 4294967266, %v5211
        %v5217 = vadd.s32 %v5216, 127
        %v5218 = vshll.u32 %v5217, 23
        %v5219 = vor.u32 4788187, %v5218
        %v5220 = vand.u32 2147483647, %v5219
        %v5222 = vcvt.s32.f32 %v5215
        %v5223 = vmul.f32 %v5222, %v5220
        %v5224 = vxor.u32 %v5223, 2147483648
        %v5225 = vsel %vm5142, %v5224, %v5223
        %v5226 = vsub.s32 4, %v5202
        %v5227 = vsel %vm5142, %v5226, %v5202
        %v5228 = vsel %vm5141, %v1059, %v5225
        %v5229 = vsel %vm5141, 0, %v5227
        %v5230 = vcosq.f32.pop %v5228
        %v5231 = vsinq.f32.pop %v5228
        %vm5232 = vweird.f32 %v1059
        %v5233 = vadd.s32 %v5229, 3
        %v5234 = vand.u32 %v5233, 3
        %vm5235 = vcmp.lt.s32.totalorder %v5234, 2
        %vm5236 = vcmp.eq.s32.totalorder %v5234, 0
        %v5237 = vxor.u32 %v5231, 2147483648
        %v5238 = vsel %vm5236, %v5230, %v5237
        %vm5239 = vcmp.eq.s32.totalorder %v5234, 2
        %v5240 = vxor.u32 %v5230, 2147483648
        %v5241 = vsel %vm5239, %v5240, %v5231
        %v5242 = vsel %vm5235, %v5238, %v5241
        %v5243 = vsel %vm5232, nan, %v5242
        %v5244 = vand.u32 2147483647, %v1060
        %vm5245 = vcmp.le.f32.partialorder %v5244, 0.7853982
        %vm5246 = vcmp.lt.s32.totalorder %v1060, 0
        %v5247 = vand.u32 %v1060, 2139095040
        %v5248 = vshrl.u32 %v5247, 23
        %v5249 = vsub.s32 %v5248, 127
        %v5250 = vand.u32 2147483647, %v1060
        %v5251 = vand.u32 %v5250, 8388607
        %v5252 = vor.u32 %v5251, 8388608
        %v5253 = vsub.s32 0, %v5252
        %v5254 = vadd.s32 %v5249, 1
        %vm5255 = vcmp.gt.s32.totalorder %v5254, 0
        %v5256 = vsel %vm5255, %v5254, 0
        %v5257 = vshrl.u32 %v5256, 5
        %v5258 = vand.u32 %v5256, 31
        %v5259 = vsub.s32 32, %v5258
        %v5260 = vshrl.u32 683565275, %v5259
        %v5261 = vshll.u32 683565275, %v5258
        %v5262 = vshrl.u32 2475754826, %v5259
        %v5263 = vor.u32 %v5261, %v5262
        %v5264 = vshll.u32 2475754826, %v5258
        %v5265 = vshrl.u32 2131351028, %v5259
        %v5266 = vor.u32 %v5264, %v5265
        %v5267 = vshll.u32 2131351028, %v5258
        %v5268 = vshrl.u32 2102212464, %v5259
        %v5269 = vor.u32 %v5267, %v5268
        %v5270 = vshll.u32 2102212464, %v5258
        %v5271 = vshrl.u32 920167782, %v5259
        %v5272 = vor.u32 %v5270, %v5271
        %v5273 = vshll.u32 920167782, %v5258
        %v5274 = vshrl.u32 1326507024, %v5259
        %v5275 = vor.u32 %v5273, %v5274
        %vm5276 = vcmp.lt.s32.totalorder %v5257, 1
        %vm5277 = vcmp.lt.s32.totalorder %v5257, 2
        %vm5278 = vcmp.lt.s32.totalorder %v5257, 3
        %vm5279 = vcmp.lt.s32.totalorder %v5257, 4
        %v5280 = vsel %vm5276, %v5260, %v5263
        %v5281 = vsel %vm5279, %v5269, 2102212464
        %v5282 = vsel %vm5278, %v5266, %v5281
        %v5283 = vsel %vm5277, %v5280, %v5282
        %v5284 = vsel %vm5276, %v5263, %v5266
        %v5285 = vsel %vm5279, %v5272, 920167782
        %v5286 = vsel %vm5278, %v5269, %v5285
        %v5287 = vsel %vm5277, %v5284, %v5286
        %v5288 = vsel %vm5276, %v5266, %v5269
        %v5289 = vsel %vm5279, %v5275, 1326507024
        %v5290 = vsel %vm5278, %v5272, %v5289
        %v5291 = vsel %vm5277, %v5288, %v5290
        %v5292 = vshll.u32 %v5252, 8
        %v5293 = vmul.u32.u64.compose %v5292, %v5291
        %v5294 = vextract.low.u32 %v5293
        %v5295 = vextract.high.u32 %v5293
        %v5296 = vmul.u32.u64.compose %v5292, %v5287
        %v5297 = vextract.low.u32 %v5296
        %v5298 = vextract.high.u32 %v5296
        %v5299 = vmul.u32 %v5292, %v5283
        %v5300 = vadd.s32 %v5295, %v5297
        %vm5301 = vc.u32 %v5295, %v5297
        %v5302 = vadd.s32 %v5298, 1
        %v5303 = vsel %vm5301, %v5302, %v5298
        %v5304 = vadd.s32 %v5299, %v5303
        %v5305 = vadd.s32 %v5304, 536870912
        %v5306 = vshrl.u32 %v5305, 30
        %v5307 = vshll.u32 %v5306, 30
        %v5308 = vsub.s32 %v5304, %v5307
        %vm5309 = vcmp.lt.s32.totalorder %v5308, 0
        %v5310 = vsub.s32 0, %v5308
        %v5311 = vsel %vm5309, %v5310, %v5308
        %v5312 = vclz %v5311
        %v5313 = vsub.s32 %v5312, 2
        %vm5314 = vcmp.gt.s32.totalorder 0, %v5313
        %v5315 = vsel %vm5314, 0, %v5313
        %v5316 = vsub.s32 32, %v5315
        %v5317 = vshll.u32 %v5308, %v5315
        %v5318 = vshrl.u32 %v5300, %v5316
        %v5319 = vor.u32 %v5317, %v5318
        %v5320 = vsub.s32 4294967266, %v5315
        %v5321 = vadd.s32 %v5320, 127
        %v5322 = vshll.u32 %v5321, 23
        %v5323 = vor.u32 4788187, %v5322
        %v5324 = vand.u32 2147483647, %v5323
        %v5326 = vcvt.s32.f32 %v5319
        %v5327 = vmul.f32 %v5326, %v5324
        %v5328 = vxor.u32 %v5327, 2147483648
        %v5329 = vsel %vm5246, %v5328, %v5327
        %v5330 = vsub.s32 4, %v5306
        %v5331 = vsel %vm5246, %v5330, %v5306
        %v5332 = vsel %vm5245, %v1060, %v5329
        %v5333 = vsel %vm5245, 0, %v5331
        %v5334 = vcosq.f32.pop %v5332
        %v5335 = vsinq.f32.pop %v5332
        %vm5336 = vweird.f32 %v1060
        %v5337 = vadd.s32 %v5333, 3
        %v5338 = vand.u32 %v5337, 3
        %vm5339 = vcmp.lt.s32.totalorder %v5338, 2
        %vm5340 = vcmp.eq.s32.totalorder %v5338, 0
        %v5341 = vxor.u32 %v5335, 2147483648
        %v5342 = vsel %vm5340, %v5334, %v5341
        %vm5343 = vcmp.eq.s32.totalorder %v5338, 2
        %v5344 = vxor.u32 %v5334, 2147483648
        %v5345 = vsel %vm5343, %v5344, %v5335
        %v5346 = vsel %vm5339, %v5342, %v5345
        %v5347 = vsel %vm5336, nan, %v5346
        %v5348 = vand.u32 2147483647, %v1061
        %vm5349 = vcmp.le.f32.partialorder %v5348, 0.7853982
        %vm5350 = vcmp.lt.s32.totalorder %v1061, 0
        %v5351 = vand.u32 %v1061, 2139095040
        %v5352 = vshrl.u32 %v5351, 23
        %v5353 = vsub.s32 %v5352, 127
        %v5354 = vand.u32 2147483647, %v1061
        %v5355 = vand.u32 %v5354, 8388607
        %v5356 = vor.u32 %v5355, 8388608
        %v5357 = vsub.s32 0, %v5356
        %v5358 = vadd.s32 %v5353, 1
        %vm5359 = vcmp.gt.s32.totalorder %v5358, 0
        %v5360 = vsel %vm5359, %v5358, 0
        %v5361 = vshrl.u32 %v5360, 5
        %v5362 = vand.u32 %v5360, 31
        %v5363 = vsub.s32 32, %v5362
        %v5364 = vshrl.u32 683565275, %v5363
        %v5365 = vshll.u32 683565275, %v5362
        %v5366 = vshrl.u32 2475754826, %v5363
        %v5367 = vor.u32 %v5365, %v5366
        %v5368 = vshll.u32 2475754826, %v5362
        %v5369 = vshrl.u32 2131351028, %v5363
        %v5370 = vor.u32 %v5368, %v5369
        %v5371 = vshll.u32 2131351028, %v5362
        %v5372 = vshrl.u32 2102212464, %v5363
        %v5373 = vor.u32 %v5371, %v5372
        %v5374 = vshll.u32 2102212464, %v5362
        %v5375 = vshrl.u32 920167782, %v5363
        %v5376 = vor.u32 %v5374, %v5375
        %v5377 = vshll.u32 920167782, %v5362
        %v5378 = vshrl.u32 1326507024, %v5363
        %v5379 = vor.u32 %v5377, %v5378
        %vm5380 = vcmp.lt.s32.totalorder %v5361, 1
        %vm5381 = vcmp.lt.s32.totalorder %v5361, 2
        %vm5382 = vcmp.lt.s32.totalorder %v5361, 3
        %vm5383 = vcmp.lt.s32.totalorder %v5361, 4
        %v5384 = vsel %vm5380, %v5364, %v5367
        %v5385 = vsel %vm5383, %v5373, 2102212464
        %v5386 = vsel %vm5382, %v5370, %v5385
        %v5387 = vsel %vm5381, %v5384, %v5386
        %v5388 = vsel %vm5380, %v5367, %v5370
        %v5389 = vsel %vm5383, %v5376, 920167782
        %v5390 = vsel %vm5382, %v5373, %v5389
        %v5391 = vsel %vm5381, %v5388, %v5390
        %v5392 = vsel %vm5380, %v5370, %v5373
        %v5393 = vsel %vm5383, %v5379, 1326507024
        %v5394 = vsel %vm5382, %v5376, %v5393
        %v5395 = vsel %vm5381, %v5392, %v5394
        %v5396 = vshll.u32 %v5356, 8
        %v5397 = vmul.u32.u64.compose %v5396, %v5395
        %v5398 = vextract.low.u32 %v5397
        %v5399 = vextract.high.u32 %v5397
        %v5400 = vmul.u32.u64.compose %v5396, %v5391
        %v5401 = vextract.low.u32 %v5400
        %v5402 = vextract.high.u32 %v5400
        %v5403 = vmul.u32 %v5396, %v5387
        %v5404 = vadd.s32 %v5399, %v5401
        %vm5405 = vc.u32 %v5399, %v5401
        %v5406 = vadd.s32 %v5402, 1
        %v5407 = vsel %vm5405, %v5406, %v5402
        %v5408 = vadd.s32 %v5403, %v5407
        %v5409 = vadd.s32 %v5408, 536870912
        %v5410 = vshrl.u32 %v5409, 30
        %v5411 = vshll.u32 %v5410, 30
        %v5412 = vsub.s32 %v5408, %v5411
        %vm5413 = vcmp.lt.s32.totalorder %v5412, 0
        %v5414 = vsub.s32 0, %v5412
        %v5415 = vsel %vm5413, %v5414, %v5412
        %v5416 = vclz %v5415
        %v5417 = vsub.s32 %v5416, 2
        %vm5418 = vcmp.gt.s32.totalorder 0, %v5417
        %v5419 = vsel %vm5418, 0, %v5417
        %v5420 = vsub.s32 32, %v5419
        %v5421 = vshll.u32 %v5412, %v5419
        %v5422 = vshrl.u32 %v5404, %v5420
        %v5423 = vor.u32 %v5421, %v5422
        %v5424 = vsub.s32 4294967266, %v5419
        %v5425 = vadd.s32 %v5424, 127
        %v5426 = vshll.u32 %v5425, 23
        %v5427 = vor.u32 4788187, %v5426
        %v5428 = vand.u32 2147483647, %v5427
        %v5430 = vcvt.s32.f32 %v5423
        %v5431 = vmul.f32 %v5430, %v5428
        %v5432 = vxor.u32 %v5431, 2147483648
        %v5433 = vsel %vm5350, %v5432, %v5431
        %v5434 = vsub.s32 4, %v5410
        %v5435 = vsel %vm5350, %v5434, %v5410
        %v5436 = vsel %vm5349, %v1061, %v5433
        %v5437 = vsel %vm5349, 0, %v5435
        %v5438 = vcosq.f32.pop %v5436
        %v5439 = vsinq.f32.pop %v5436
        %vm5440 = vweird.f32 %v1061
        %v5441 = vadd.s32 %v5437, 3
        %v5442 = vand.u32 %v5441, 3
        %vm5443 = vcmp.lt.s32.totalorder %v5442, 2
        %vm5444 = vcmp.eq.s32.totalorder %v5442, 0
        %v5445 = vxor.u32 %v5439, 2147483648
        %v5446 = vsel %vm5444, %v5438, %v5445
        %vm5447 = vcmp.eq.s32.totalorder %v5442, 2
        %v5448 = vxor.u32 %v5438, 2147483648
        %v5449 = vsel %vm5447, %v5448, %v5439
        %v5450 = vsel %vm5443, %v5446, %v5449
        %v5451 = vsel %vm5440, nan, %v5450
        %v5452 = vand.u32 2147483647, %v1062
        %vm5453 = vcmp.le.f32.partialorder %v5452, 0.7853982
        %vm5454 = vcmp.lt.s32.totalorder %v1062, 0
        %v5455 = vand.u32 %v1062, 2139095040
        %v5456 = vshrl.u32 %v5455, 23
        %v5457 = vsub.s32 %v5456, 127
        %v5458 = vand.u32 2147483647, %v1062
        %v5459 = vand.u32 %v5458, 8388607
        %v5460 = vor.u32 %v5459, 8388608
        %v5461 = vsub.s32 0, %v5460
        %v5462 = vadd.s32 %v5457, 1
        %vm5463 = vcmp.gt.s32.totalorder %v5462, 0
        %v5464 = vsel %vm5463, %v5462, 0
        %v5465 = vshrl.u32 %v5464, 5
        %v5466 = vand.u32 %v5464, 31
        %v5467 = vsub.s32 32, %v5466
        %v5468 = vshrl.u32 683565275, %v5467
        %v5469 = vshll.u32 683565275, %v5466
        %v5470 = vshrl.u32 2475754826, %v5467
        %v5471 = vor.u32 %v5469, %v5470
        %v5472 = vshll.u32 2475754826, %v5466
        %v5473 = vshrl.u32 2131351028, %v5467
        %v5474 = vor.u32 %v5472, %v5473
        %v5475 = vshll.u32 2131351028, %v5466
        %v5476 = vshrl.u32 2102212464, %v5467
        %v5477 = vor.u32 %v5475, %v5476
        %v5478 = vshll.u32 2102212464, %v5466
        %v5479 = vshrl.u32 920167782, %v5467
        %v5480 = vor.u32 %v5478, %v5479
        %v5481 = vshll.u32 920167782, %v5466
        %v5482 = vshrl.u32 1326507024, %v5467
        %v5483 = vor.u32 %v5481, %v5482
        %vm5484 = vcmp.lt.s32.totalorder %v5465, 1
        %vm5485 = vcmp.lt.s32.totalorder %v5465, 2
        %vm5486 = vcmp.lt.s32.totalorder %v5465, 3
        %vm5487 = vcmp.lt.s32.totalorder %v5465, 4
        %v5488 = vsel %vm5484, %v5468, %v5471
        %v5489 = vsel %vm5487, %v5477, 2102212464
        %v5490 = vsel %vm5486, %v5474, %v5489
        %v5491 = vsel %vm5485, %v5488, %v5490
        %v5492 = vsel %vm5484, %v5471, %v5474
        %v5493 = vsel %vm5487, %v5480, 920167782
        %v5494 = vsel %vm5486, %v5477, %v5493
        %v5495 = vsel %vm5485, %v5492, %v5494
        %v5496 = vsel %vm5484, %v5474, %v5477
        %v5497 = vsel %vm5487, %v5483, 1326507024
        %v5498 = vsel %vm5486, %v5480, %v5497
        %v5499 = vsel %vm5485, %v5496, %v5498
        %v5500 = vshll.u32 %v5460, 8
        %v5501 = vmul.u32.u64.compose %v5500, %v5499
        %v5502 = vextract.low.u32 %v5501
        %v5503 = vextract.high.u32 %v5501
        %v5504 = vmul.u32.u64.compose %v5500, %v5495
        %v5505 = vextract.low.u32 %v5504
        %v5506 = vextract.high.u32 %v5504
        %v5507 = vmul.u32 %v5500, %v5491
        %v5508 = vadd.s32 %v5503, %v5505
        %vm5509 = vc.u32 %v5503, %v5505
        %v5510 = vadd.s32 %v5506, 1
        %v5511 = vsel %vm5509, %v5510, %v5506
        %v5512 = vadd.s32 %v5507, %v5511
        %v5513 = vadd.s32 %v5512, 536870912
        %v5514 = vshrl.u32 %v5513, 30
        %v5515 = vshll.u32 %v5514, 30
        %v5516 = vsub.s32 %v5512, %v5515
        %vm5517 = vcmp.lt.s32.totalorder %v5516, 0
        %v5518 = vsub.s32 0, %v5516
        %v5519 = vsel %vm5517, %v5518, %v5516
        %v5520 = vclz %v5519
        %v5521 = vsub.s32 %v5520, 2
        %vm5522 = vcmp.gt.s32.totalorder 0, %v5521
        %v5523 = vsel %vm5522, 0, %v5521
        %v5524 = vsub.s32 32, %v5523
        %v5525 = vshll.u32 %v5516, %v5523
        %v5526 = vshrl.u32 %v5508, %v5524
        %v5527 = vor.u32 %v5525, %v5526
        %v5528 = vsub.s32 4294967266, %v5523
        %v5529 = vadd.s32 %v5528, 127
        %v5530 = vshll.u32 %v5529, 23
        %v5531 = vor.u32 4788187, %v5530
        %v5532 = vand.u32 2147483647, %v5531
        %v5534 = vcvt.s32.f32 %v5527
        %v5535 = vmul.f32 %v5534, %v5532
        %v5536 = vxor.u32 %v5535, 2147483648
        %v5537 = vsel %vm5454, %v5536, %v5535
        %v5538 = vsub.s32 4, %v5514
        %v5539 = vsel %vm5454, %v5538, %v5514
        %v5540 = vsel %vm5453, %v1062, %v5537
        %v5541 = vsel %vm5453, 0, %v5539
        %v5542 = vcosq.f32.pop %v5540
        %v5543 = vsinq.f32.pop %v5540
        %vm5544 = vweird.f32 %v1062
        %v5545 = vadd.s32 %v5541, 3
        %v5546 = vand.u32 %v5545, 3
        %vm5547 = vcmp.lt.s32.totalorder %v5546, 2
        %vm5548 = vcmp.eq.s32.totalorder %v5546, 0
        %v5549 = vxor.u32 %v5543, 2147483648
        %v5550 = vsel %vm5548, %v5542, %v5549
        %vm5551 = vcmp.eq.s32.totalorder %v5546, 2
        %v5552 = vxor.u32 %v5542, 2147483648
        %v5553 = vsel %vm5551, %v5552, %v5543
        %v5554 = vsel %vm5547, %v5550, %v5553
        %v5555 = vsel %vm5544, nan, %v5554
        %v5556 = vand.u32 2147483647, %v1063
        %vm5557 = vcmp.le.f32.partialorder %v5556, 0.7853982
        %vm5558 = vcmp.lt.s32.totalorder %v1063, 0
        %v5559 = vand.u32 %v1063, 2139095040
        %v5560 = vshrl.u32 %v5559, 23
        %v5561 = vsub.s32 %v5560, 127
        %v5562 = vand.u32 2147483647, %v1063
        %v5563 = vand.u32 %v5562, 8388607
        %v5564 = vor.u32 %v5563, 8388608
        %v5565 = vsub.s32 0, %v5564
        %v5566 = vadd.s32 %v5561, 1
        %vm5567 = vcmp.gt.s32.totalorder %v5566, 0
        %v5568 = vsel %vm5567, %v5566, 0
        %v5569 = vshrl.u32 %v5568, 5
        %v5570 = vand.u32 %v5568, 31
        %v5571 = vsub.s32 32, %v5570
        %v5572 = vshrl.u32 683565275, %v5571
        %v5573 = vshll.u32 683565275, %v5570
        %v5574 = vshrl.u32 2475754826, %v5571
        %v5575 = vor.u32 %v5573, %v5574
        %v5576 = vshll.u32 2475754826, %v5570
        %v5577 = vshrl.u32 2131351028, %v5571
        %v5578 = vor.u32 %v5576, %v5577
        %v5579 = vshll.u32 2131351028, %v5570
        %v5580 = vshrl.u32 2102212464, %v5571
        %v5581 = vor.u32 %v5579, %v5580
        %v5582 = vshll.u32 2102212464, %v5570
        %v5583 = vshrl.u32 920167782, %v5571
        %v5584 = vor.u32 %v5582, %v5583
        %v5585 = vshll.u32 920167782, %v5570
        %v5586 = vshrl.u32 1326507024, %v5571
        %v5587 = vor.u32 %v5585, %v5586
        %vm5588 = vcmp.lt.s32.totalorder %v5569, 1
        %vm5589 = vcmp.lt.s32.totalorder %v5569, 2
        %vm5590 = vcmp.lt.s32.totalorder %v5569, 3
        %vm5591 = vcmp.lt.s32.totalorder %v5569, 4
        %v5592 = vsel %vm5588, %v5572, %v5575
        %v5593 = vsel %vm5591, %v5581, 2102212464
        %v5594 = vsel %vm5590, %v5578, %v5593
        %v5595 = vsel %vm5589, %v5592, %v5594
        %v5596 = vsel %vm5588, %v5575, %v5578
        %v5597 = vsel %vm5591, %v5584, 920167782
        %v5598 = vsel %vm5590, %v5581, %v5597
        %v5599 = vsel %vm5589, %v5596, %v5598
        %v5600 = vsel %vm5588, %v5578, %v5581
        %v5601 = vsel %vm5591, %v5587, 1326507024
        %v5602 = vsel %vm5590, %v5584, %v5601
        %v5603 = vsel %vm5589, %v5600, %v5602
        %v5604 = vshll.u32 %v5564, 8
        %v5605 = vmul.u32.u64.compose %v5604, %v5603
        %v5606 = vextract.low.u32 %v5605
        %v5607 = vextract.high.u32 %v5605
        %v5608 = vmul.u32.u64.compose %v5604, %v5599
        %v5609 = vextract.low.u32 %v5608
        %v5610 = vextract.high.u32 %v5608
        %v5611 = vmul.u32 %v5604, %v5595
        %v5612 = vadd.s32 %v5607, %v5609
        %vm5613 = vc.u32 %v5607, %v5609
        %v5614 = vadd.s32 %v5610, 1
        %v5615 = vsel %vm5613, %v5614, %v5610
        %v5616 = vadd.s32 %v5611, %v5615
        %v5617 = vadd.s32 %v5616, 536870912
        %v5618 = vshrl.u32 %v5617, 30
        %v5619 = vshll.u32 %v5618, 30
        %v5620 = vsub.s32 %v5616, %v5619
        %vm5621 = vcmp.lt.s32.totalorder %v5620, 0
        %v5622 = vsub.s32 0, %v5620
        %v5623 = vsel %vm5621, %v5622, %v5620
        %v5624 = vclz %v5623
        %v5625 = vsub.s32 %v5624, 2
        %vm5626 = vcmp.gt.s32.totalorder 0, %v5625
        %v5627 = vsel %vm5626, 0, %v5625
        %v5628 = vsub.s32 32, %v5627
        %v5629 = vshll.u32 %v5620, %v5627
        %v5630 = vshrl.u32 %v5612, %v5628
        %v5631 = vor.u32 %v5629, %v5630
        %v5632 = vsub.s32 4294967266, %v5627
        %v5633 = vadd.s32 %v5632, 127
        %v5634 = vshll.u32 %v5633, 23
        %v5635 = vor.u32 4788187, %v5634
        %v5636 = vand.u32 2147483647, %v5635
        %v5638 = vcvt.s32.f32 %v5631
        %v5639 = vmul.f32 %v5638, %v5636
        %v5640 = vxor.u32 %v5639, 2147483648
        %v5641 = vsel %vm5558, %v5640, %v5639
        %v5642 = vsub.s32 4, %v5618
        %v5643 = vsel %vm5558, %v5642, %v5618
        %v5644 = vsel %vm5557, %v1063, %v5641
        %v5645 = vsel %vm5557, 0, %v5643
        %v5646 = vcosq.f32.pop %v5644
        %v5647 = vsinq.f32.pop %v5644
        %vm5648 = vweird.f32 %v1063
        %v5649 = vadd.s32 %v5645, 3
        %v5650 = vand.u32 %v5649, 3
        %vm5651 = vcmp.lt.s32.totalorder %v5650, 2
        %vm5652 = vcmp.eq.s32.totalorder %v5650, 0
        %v5653 = vxor.u32 %v5647, 2147483648
        %v5654 = vsel %vm5652, %v5646, %v5653
        %vm5655 = vcmp.eq.s32.totalorder %v5650, 2
        %v5656 = vxor.u32 %v5646, 2147483648
        %v5657 = vsel %vm5655, %v5656, %v5647
        %v5658 = vsel %vm5651, %v5654, %v5657
        %v5659 = vsel %vm5648, nan, %v5658
        %v5660 = vand.u32 2147483647, %v1064
        %vm5661 = vcmp.le.f32.partialorder %v5660, 0.7853982
        %vm5662 = vcmp.lt.s32.totalorder %v1064, 0
        %v5663 = vand.u32 %v1064, 2139095040
        %v5664 = vshrl.u32 %v5663, 23
        %v5665 = vsub.s32 %v5664, 127
        %v5666 = vand.u32 2147483647, %v1064
        %v5667 = vand.u32 %v5666, 8388607
        %v5668 = vor.u32 %v5667, 8388608
        %v5669 = vsub.s32 0, %v5668
        %v5670 = vadd.s32 %v5665, 1
        %vm5671 = vcmp.gt.s32.totalorder %v5670, 0
        %v5672 = vsel %vm5671, %v5670, 0
        %v5673 = vshrl.u32 %v5672, 5
        %v5674 = vand.u32 %v5672, 31
        %v5675 = vsub.s32 32, %v5674
        %v5676 = vshrl.u32 683565275, %v5675
        %v5677 = vshll.u32 683565275, %v5674
        %v5678 = vshrl.u32 2475754826, %v5675
        %v5679 = vor.u32 %v5677, %v5678
        %v5680 = vshll.u32 2475754826, %v5674
        %v5681 = vshrl.u32 2131351028, %v5675
        %v5682 = vor.u32 %v5680, %v5681
        %v5683 = vshll.u32 2131351028, %v5674
        %v5684 = vshrl.u32 2102212464, %v5675
        %v5685 = vor.u32 %v5683, %v5684
        %v5686 = vshll.u32 2102212464, %v5674
        %v5687 = vshrl.u32 920167782, %v5675
        %v5688 = vor.u32 %v5686, %v5687
        %v5689 = vshll.u32 920167782, %v5674
        %v5690 = vshrl.u32 1326507024, %v5675
        %v5691 = vor.u32 %v5689, %v5690
        %vm5692 = vcmp.lt.s32.totalorder %v5673, 1
        %vm5693 = vcmp.lt.s32.totalorder %v5673, 2
        %vm5694 = vcmp.lt.s32.totalorder %v5673, 3
        %vm5695 = vcmp.lt.s32.totalorder %v5673, 4
        %v5696 = vsel %vm5692, %v5676, %v5679
        %v5697 = vsel %vm5695, %v5685, 2102212464
        %v5698 = vsel %vm5694, %v5682, %v5697
        %v5699 = vsel %vm5693, %v5696, %v5698
        %v5700 = vsel %vm5692, %v5679, %v5682
        %v5701 = vsel %vm5695, %v5688, 920167782
        %v5702 = vsel %vm5694, %v5685, %v5701
        %v5703 = vsel %vm5693, %v5700, %v5702
        %v5704 = vsel %vm5692, %v5682, %v5685
        %v5705 = vsel %vm5695, %v5691, 1326507024
        %v5706 = vsel %vm5694, %v5688, %v5705
        %v5707 = vsel %vm5693, %v5704, %v5706
        %v5708 = vshll.u32 %v5668, 8
        %v5709 = vmul.u32.u64.compose %v5708, %v5707
        %v5710 = vextract.low.u32 %v5709
        %v5711 = vextract.high.u32 %v5709
        %v5712 = vmul.u32.u64.compose %v5708, %v5703
        %v5713 = vextract.low.u32 %v5712
        %v5714 = vextract.high.u32 %v5712
        %v5715 = vmul.u32 %v5708, %v5699
        %v5716 = vadd.s32 %v5711, %v5713
        %vm5717 = vc.u32 %v5711, %v5713
        %v5718 = vadd.s32 %v5714, 1
        %v5719 = vsel %vm5717, %v5718, %v5714
        %v5720 = vadd.s32 %v5715, %v5719
        %v5721 = vadd.s32 %v5720, 536870912
        %v5722 = vshrl.u32 %v5721, 30
        %v5723 = vshll.u32 %v5722, 30
        %v5724 = vsub.s32 %v5720, %v5723
        %vm5725 = vcmp.lt.s32.totalorder %v5724, 0
        %v5726 = vsub.s32 0, %v5724
        %v5727 = vsel %vm5725, %v5726, %v5724
        %v5728 = vclz %v5727
        %v5729 = vsub.s32 %v5728, 2
        %vm5730 = vcmp.gt.s32.totalorder 0, %v5729
        %v5731 = vsel %vm5730, 0, %v5729
        %v5732 = vsub.s32 32, %v5731
        %v5733 = vshll.u32 %v5724, %v5731
        %v5734 = vshrl.u32 %v5716, %v5732
        %v5735 = vor.u32 %v5733, %v5734
        %v5736 = vsub.s32 4294967266, %v5731
        %v5737 = vadd.s32 %v5736, 127
        %v5738 = vshll.u32 %v5737, 23
        %v5739 = vor.u32 4788187, %v5738
        %v5740 = vand.u32 2147483647, %v5739
        %v5742 = vcvt.s32.f32 %v5735
        %v5743 = vmul.f32 %v5742, %v5740
        %v5744 = vxor.u32 %v5743, 2147483648
        %v5745 = vsel %vm5662, %v5744, %v5743
        %v5746 = vsub.s32 4, %v5722
        %v5747 = vsel %vm5662, %v5746, %v5722
        %v5748 = vsel %vm5661, %v1064, %v5745
        %v5749 = vsel %vm5661, 0, %v5747
        %v5750 = vcosq.f32.pop %v5748
        %v5751 = vsinq.f32.pop %v5748
        %vm5752 = vweird.f32 %v1064
        %v5753 = vadd.s32 %v5749, 3
        %v5754 = vand.u32 %v5753, 3
        %vm5755 = vcmp.lt.s32.totalorder %v5754, 2
        %vm5756 = vcmp.eq.s32.totalorder %v5754, 0
        %v5757 = vxor.u32 %v5751, 2147483648
        %v5758 = vsel %vm5756, %v5750, %v5757
        %vm5759 = vcmp.eq.s32.totalorder %v5754, 2
        %v5760 = vxor.u32 %v5750, 2147483648
        %v5761 = vsel %vm5759, %v5760, %v5751
        %v5762 = vsel %vm5755, %v5758, %v5761
        %v5763 = vsel %vm5752, nan, %v5762
        %v5764 = vand.u32 2147483647, %v1065
        %vm5765 = vcmp.le.f32.partialorder %v5764, 0.7853982
        %vm5766 = vcmp.lt.s32.totalorder %v1065, 0
        %v5767 = vand.u32 %v1065, 2139095040
        %v5768 = vshrl.u32 %v5767, 23
        %v5769 = vsub.s32 %v5768, 127
        %v5770 = vand.u32 2147483647, %v1065
        %v5771 = vand.u32 %v5770, 8388607
        %v5772 = vor.u32 %v5771, 8388608
        %v5773 = vsub.s32 0, %v5772
        %v5774 = vadd.s32 %v5769, 1
        %vm5775 = vcmp.gt.s32.totalorder %v5774, 0
        %v5776 = vsel %vm5775, %v5774, 0
        %v5777 = vshrl.u32 %v5776, 5
        %v5778 = vand.u32 %v5776, 31
        %v5779 = vsub.s32 32, %v5778
        %v5780 = vshrl.u32 683565275, %v5779
        %v5781 = vshll.u32 683565275, %v5778
        %v5782 = vshrl.u32 2475754826, %v5779
        %v5783 = vor.u32 %v5781, %v5782
        %v5784 = vshll.u32 2475754826, %v5778
        %v5785 = vshrl.u32 2131351028, %v5779
        %v5786 = vor.u32 %v5784, %v5785
        %v5787 = vshll.u32 2131351028, %v5778
        %v5788 = vshrl.u32 2102212464, %v5779
        %v5789 = vor.u32 %v5787, %v5788
        %v5790 = vshll.u32 2102212464, %v5778
        %v5791 = vshrl.u32 920167782, %v5779
        %v5792 = vor.u32 %v5790, %v5791
        %v5793 = vshll.u32 920167782, %v5778
        %v5794 = vshrl.u32 1326507024, %v5779
        %v5795 = vor.u32 %v5793, %v5794
        %vm5796 = vcmp.lt.s32.totalorder %v5777, 1
        %vm5797 = vcmp.lt.s32.totalorder %v5777, 2
        %vm5798 = vcmp.lt.s32.totalorder %v5777, 3
        %vm5799 = vcmp.lt.s32.totalorder %v5777, 4
        %v5800 = vsel %vm5796, %v5780, %v5783
        %v5801 = vsel %vm5799, %v5789, 2102212464
        %v5802 = vsel %vm5798, %v5786, %v5801
        %v5803 = vsel %vm5797, %v5800, %v5802
        %v5804 = vsel %vm5796, %v5783, %v5786
        %v5805 = vsel %vm5799, %v5792, 920167782
        %v5806 = vsel %vm5798, %v5789, %v5805
        %v5807 = vsel %vm5797, %v5804, %v5806
        %v5808 = vsel %vm5796, %v5786, %v5789
        %v5809 = vsel %vm5799, %v5795, 1326507024
        %v5810 = vsel %vm5798, %v5792, %v5809
        %v5811 = vsel %vm5797, %v5808, %v5810
        %v5812 = vshll.u32 %v5772, 8
        %v5813 = vmul.u32.u64.compose %v5812, %v5811
        %v5814 = vextract.low.u32 %v5813
        %v5815 = vextract.high.u32 %v5813
        %v5816 = vmul.u32.u64.compose %v5812, %v5807
        %v5817 = vextract.low.u32 %v5816
        %v5818 = vextract.high.u32 %v5816
        %v5819 = vmul.u32 %v5812, %v5803
        %v5820 = vadd.s32 %v5815, %v5817
        %vm5821 = vc.u32 %v5815, %v5817
        %v5822 = vadd.s32 %v5818, 1
        %v5823 = vsel %vm5821, %v5822, %v5818
        %v5824 = vadd.s32 %v5819, %v5823
        %v5825 = vadd.s32 %v5824, 536870912
        %v5826 = vshrl.u32 %v5825, 30
        %v5827 = vshll.u32 %v5826, 30
        %v5828 = vsub.s32 %v5824, %v5827
        %vm5829 = vcmp.lt.s32.totalorder %v5828, 0
        %v5830 = vsub.s32 0, %v5828
        %v5831 = vsel %vm5829, %v5830, %v5828
        %v5832 = vclz %v5831
        %v5833 = vsub.s32 %v5832, 2
        %vm5834 = vcmp.gt.s32.totalorder 0, %v5833
        %v5835 = vsel %vm5834, 0, %v5833
        %v5836 = vsub.s32 32, %v5835
        %v5837 = vshll.u32 %v5828, %v5835
        %v5838 = vshrl.u32 %v5820, %v5836
        %v5839 = vor.u32 %v5837, %v5838
        %v5840 = vsub.s32 4294967266, %v5835
        %v5841 = vadd.s32 %v5840, 127
        %v5842 = vshll.u32 %v5841, 23
        %v5843 = vor.u32 4788187, %v5842
        %v5844 = vand.u32 2147483647, %v5843
        %v5846 = vcvt.s32.f32 %v5839
        %v5847 = vmul.f32 %v5846, %v5844
        %v5848 = vxor.u32 %v5847, 2147483648
        %v5849 = vsel %vm5766, %v5848, %v5847
        %v5850 = vsub.s32 4, %v5826
        %v5851 = vsel %vm5766, %v5850, %v5826
        %v5852 = vsel %vm5765, %v1065, %v5849
        %v5853 = vsel %vm5765, 0, %v5851
        %v5854 = vcosq.f32.pop %v5852
        %v5855 = vsinq.f32.pop %v5852
        %vm5856 = vweird.f32 %v1065
        %v5857 = vadd.s32 %v5853, 3
        %v5858 = vand.u32 %v5857, 3
        %vm5859 = vcmp.lt.s32.totalorder %v5858, 2
        %vm5860 = vcmp.eq.s32.totalorder %v5858, 0
        %v5861 = vxor.u32 %v5855, 2147483648
        %v5862 = vsel %vm5860, %v5854, %v5861
        %vm5863 = vcmp.eq.s32.totalorder %v5858, 2
        %v5864 = vxor.u32 %v5854, 2147483648
        %v5865 = vsel %vm5863, %v5864, %v5855
        %v5866 = vsel %vm5859, %v5862, %v5865
        %v5867 = vsel %vm5856, nan, %v5866
        %v5868 = vand.u32 2147483647, %v1066
        %vm5869 = vcmp.le.f32.partialorder %v5868, 0.7853982
        %vm5870 = vcmp.lt.s32.totalorder %v1066, 0
        %v5871 = vand.u32 %v1066, 2139095040
        %v5872 = vshrl.u32 %v5871, 23
        %v5873 = vsub.s32 %v5872, 127
        %v5874 = vand.u32 2147483647, %v1066
        %v5875 = vand.u32 %v5874, 8388607
        %v5876 = vor.u32 %v5875, 8388608
        %v5877 = vsub.s32 0, %v5876
        %v5878 = vadd.s32 %v5873, 1
        %vm5879 = vcmp.gt.s32.totalorder %v5878, 0
        %v5880 = vsel %vm5879, %v5878, 0
        %v5881 = vshrl.u32 %v5880, 5
        %v5882 = vand.u32 %v5880, 31
        %v5883 = vsub.s32 32, %v5882
        %v5884 = vshrl.u32 683565275, %v5883
        %v5885 = vshll.u32 683565275, %v5882
        %v5886 = vshrl.u32 2475754826, %v5883
        %v5887 = vor.u32 %v5885, %v5886
        %v5888 = vshll.u32 2475754826, %v5882
        %v5889 = vshrl.u32 2131351028, %v5883
        %v5890 = vor.u32 %v5888, %v5889
        %v5891 = vshll.u32 2131351028, %v5882
        %v5892 = vshrl.u32 2102212464, %v5883
        %v5893 = vor.u32 %v5891, %v5892
        %v5894 = vshll.u32 2102212464, %v5882
        %v5895 = vshrl.u32 920167782, %v5883
        %v5896 = vor.u32 %v5894, %v5895
        %v5897 = vshll.u32 920167782, %v5882
        %v5898 = vshrl.u32 1326507024, %v5883
        %v5899 = vor.u32 %v5897, %v5898
        %vm5900 = vcmp.lt.s32.totalorder %v5881, 1
        %vm5901 = vcmp.lt.s32.totalorder %v5881, 2
        %vm5902 = vcmp.lt.s32.totalorder %v5881, 3
        %vm5903 = vcmp.lt.s32.totalorder %v5881, 4
        %v5904 = vsel %vm5900, %v5884, %v5887
        %v5905 = vsel %vm5903, %v5893, 2102212464
        %v5906 = vsel %vm5902, %v5890, %v5905
        %v5907 = vsel %vm5901, %v5904, %v5906
        %v5908 = vsel %vm5900, %v5887, %v5890
        %v5909 = vsel %vm5903, %v5896, 920167782
        %v5910 = vsel %vm5902, %v5893, %v5909
        %v5911 = vsel %vm5901, %v5908, %v5910
        %v5912 = vsel %vm5900, %v5890, %v5893
        %v5913 = vsel %vm5903, %v5899, 1326507024
        %v5914 = vsel %vm5902, %v5896, %v5913
        %v5915 = vsel %vm5901, %v5912, %v5914
        %v5916 = vshll.u32 %v5876, 8
        %v5917 = vmul.u32.u64.compose %v5916, %v5915
        %v5918 = vextract.low.u32 %v5917
        %v5919 = vextract.high.u32 %v5917
        %v5920 = vmul.u32.u64.compose %v5916, %v5911
        %v5921 = vextract.low.u32 %v5920
        %v5922 = vextract.high.u32 %v5920
        %v5923 = vmul.u32 %v5916, %v5907
        %v5924 = vadd.s32 %v5919, %v5921
        %vm5925 = vc.u32 %v5919, %v5921
        %v5926 = vadd.s32 %v5922, 1
        %v5927 = vsel %vm5925, %v5926, %v5922
        %v5928 = vadd.s32 %v5923, %v5927
        %v5929 = vadd.s32 %v5928, 536870912
        %v5930 = vshrl.u32 %v5929, 30
        %v5931 = vshll.u32 %v5930, 30
        %v5932 = vsub.s32 %v5928, %v5931
        %vm5933 = vcmp.lt.s32.totalorder %v5932, 0
        %v5934 = vsub.s32 0, %v5932
        %v5935 = vsel %vm5933, %v5934, %v5932
        %v5936 = vclz %v5935
        %v5937 = vsub.s32 %v5936, 2
        %vm5938 = vcmp.gt.s32.totalorder 0, %v5937
        %v5939 = vsel %vm5938, 0, %v5937
        %v5940 = vsub.s32 32, %v5939
        %v5941 = vshll.u32 %v5932, %v5939
        %v5942 = vshrl.u32 %v5924, %v5940
        %v5943 = vor.u32 %v5941, %v5942
        %v5944 = vsub.s32 4294967266, %v5939
        %v5945 = vadd.s32 %v5944, 127
        %v5946 = vshll.u32 %v5945, 23
        %v5947 = vor.u32 4788187, %v5946
        %v5948 = vand.u32 2147483647, %v5947
        %v5950 = vcvt.s32.f32 %v5943
        %v5951 = vmul.f32 %v5950, %v5948
        %v5952 = vxor.u32 %v5951, 2147483648
        %v5953 = vsel %vm5870, %v5952, %v5951
        %v5954 = vsub.s32 4, %v5930
        %v5955 = vsel %vm5870, %v5954, %v5930
        %v5956 = vsel %vm5869, %v1066, %v5953
        %v5957 = vsel %vm5869, 0, %v5955
        %v5958 = vcosq.f32.pop %v5956
        %v5959 = vsinq.f32.pop %v5956
        %vm5960 = vweird.f32 %v1066
        %v5961 = vadd.s32 %v5957, 3
        %v5962 = vand.u32 %v5961, 3
        %vm5963 = vcmp.lt.s32.totalorder %v5962, 2
        %vm5964 = vcmp.eq.s32.totalorder %v5962, 0
        %v5965 = vxor.u32 %v5959, 2147483648
        %v5966 = vsel %vm5964, %v5958, %v5965
        %vm5967 = vcmp.eq.s32.totalorder %v5962, 2
        %v5968 = vxor.u32 %v5958, 2147483648
        %v5969 = vsel %vm5967, %v5968, %v5959
        %v5970 = vsel %vm5963, %v5966, %v5969
        %v5971 = vsel %vm5960, nan, %v5970
        %v5972 = vand.u32 2147483647, %v1067
        %vm5973 = vcmp.le.f32.partialorder %v5972, 0.7853982
        %vm5974 = vcmp.lt.s32.totalorder %v1067, 0
        %v5975 = vand.u32 %v1067, 2139095040
        %v5976 = vshrl.u32 %v5975, 23
        %v5977 = vsub.s32 %v5976, 127
        %v5978 = vand.u32 2147483647, %v1067
        %v5979 = vand.u32 %v5978, 8388607
        %v5980 = vor.u32 %v5979, 8388608
        %v5981 = vsub.s32 0, %v5980
        %v5982 = vadd.s32 %v5977, 1
        %vm5983 = vcmp.gt.s32.totalorder %v5982, 0
        %v5984 = vsel %vm5983, %v5982, 0
        %v5985 = vshrl.u32 %v5984, 5
        %v5986 = vand.u32 %v5984, 31
        %v5987 = vsub.s32 32, %v5986
        %v5988 = vshrl.u32 683565275, %v5987
        %v5989 = vshll.u32 683565275, %v5986
        %v5990 = vshrl.u32 2475754826, %v5987
        %v5991 = vor.u32 %v5989, %v5990
        %v5992 = vshll.u32 2475754826, %v5986
        %v5993 = vshrl.u32 2131351028, %v5987
        %v5994 = vor.u32 %v5992, %v5993
        %v5995 = vshll.u32 2131351028, %v5986
        %v5996 = vshrl.u32 2102212464, %v5987
        %v5997 = vor.u32 %v5995, %v5996
        %v5998 = vshll.u32 2102212464, %v5986
        %v5999 = vshrl.u32 920167782, %v5987
        %v6000 = vor.u32 %v5998, %v5999
        %v6001 = vshll.u32 920167782, %v5986
        %v6002 = vshrl.u32 1326507024, %v5987
        %v6003 = vor.u32 %v6001, %v6002
        %vm6004 = vcmp.lt.s32.totalorder %v5985, 1
        %vm6005 = vcmp.lt.s32.totalorder %v5985, 2
        %vm6006 = vcmp.lt.s32.totalorder %v5985, 3
        %vm6007 = vcmp.lt.s32.totalorder %v5985, 4
        %v6008 = vsel %vm6004, %v5988, %v5991
        %v6009 = vsel %vm6007, %v5997, 2102212464
        %v6010 = vsel %vm6006, %v5994, %v6009
        %v6011 = vsel %vm6005, %v6008, %v6010
        %v6012 = vsel %vm6004, %v5991, %v5994
        %v6013 = vsel %vm6007, %v6000, 920167782
        %v6014 = vsel %vm6006, %v5997, %v6013
        %v6015 = vsel %vm6005, %v6012, %v6014
        %v6016 = vsel %vm6004, %v5994, %v5997
        %v6017 = vsel %vm6007, %v6003, 1326507024
        %v6018 = vsel %vm6006, %v6000, %v6017
        %v6019 = vsel %vm6005, %v6016, %v6018
        %v6020 = vshll.u32 %v5980, 8
        %v6021 = vmul.u32.u64.compose %v6020, %v6019
        %v6022 = vextract.low.u32 %v6021
        %v6023 = vextract.high.u32 %v6021
        %v6024 = vmul.u32.u64.compose %v6020, %v6015
        %v6025 = vextract.low.u32 %v6024
        %v6026 = vextract.high.u32 %v6024
        %v6027 = vmul.u32 %v6020, %v6011
        %v6028 = vadd.s32 %v6023, %v6025
        %vm6029 = vc.u32 %v6023, %v6025
        %v6030 = vadd.s32 %v6026, 1
        %v6031 = vsel %vm6029, %v6030, %v6026
        %v6032 = vadd.s32 %v6027, %v6031
        %v6033 = vadd.s32 %v6032, 536870912
        %v6034 = vshrl.u32 %v6033, 30
        %v6035 = vshll.u32 %v6034, 30
        %v6036 = vsub.s32 %v6032, %v6035
        %vm6037 = vcmp.lt.s32.totalorder %v6036, 0
        %v6038 = vsub.s32 0, %v6036
        %v6039 = vsel %vm6037, %v6038, %v6036
        %v6040 = vclz %v6039
        %v6041 = vsub.s32 %v6040, 2
        %vm6042 = vcmp.gt.s32.totalorder 0, %v6041
        %v6043 = vsel %vm6042, 0, %v6041
        %v6044 = vsub.s32 32, %v6043
        %v6045 = vshll.u32 %v6036, %v6043
        %v6046 = vshrl.u32 %v6028, %v6044
        %v6047 = vor.u32 %v6045, %v6046
        %v6048 = vsub.s32 4294967266, %v6043
        %v6049 = vadd.s32 %v6048, 127
        %v6050 = vshll.u32 %v6049, 23
        %v6051 = vor.u32 4788187, %v6050
        %v6052 = vand.u32 2147483647, %v6051
        %v6054 = vcvt.s32.f32 %v6047
        %v6055 = vmul.f32 %v6054, %v6052
        %v6056 = vxor.u32 %v6055, 2147483648
        %v6057 = vsel %vm5974, %v6056, %v6055
        %v6058 = vsub.s32 4, %v6034
        %v6059 = vsel %vm5974, %v6058, %v6034
        %v6060 = vsel %vm5973, %v1067, %v6057
        %v6061 = vsel %vm5973, 0, %v6059
        %v6062 = vcosq.f32.pop %v6060
        %v6063 = vsinq.f32.pop %v6060
        %vm6064 = vweird.f32 %v1067
        %v6065 = vadd.s32 %v6061, 3
        %v6066 = vand.u32 %v6065, 3
        %vm6067 = vcmp.lt.s32.totalorder %v6066, 2
        %vm6068 = vcmp.eq.s32.totalorder %v6066, 0
        %v6069 = vxor.u32 %v6063, 2147483648
        %v6070 = vsel %vm6068, %v6062, %v6069
        %vm6071 = vcmp.eq.s32.totalorder %v6066, 2
        %v6072 = vxor.u32 %v6062, 2147483648
        %v6073 = vsel %vm6071, %v6072, %v6063
        %v6074 = vsel %vm6067, %v6070, %v6073
        %v6075 = vsel %vm6064, nan, %v6074
        %v6076 = vand.u32 2147483647, %v1068
        %vm6077 = vcmp.le.f32.partialorder %v6076, 0.7853982
        %vm6078 = vcmp.lt.s32.totalorder %v1068, 0
        %v6079 = vand.u32 %v1068, 2139095040
        %v6080 = vshrl.u32 %v6079, 23
        %v6081 = vsub.s32 %v6080, 127
        %v6082 = vand.u32 2147483647, %v1068
        %v6083 = vand.u32 %v6082, 8388607
        %v6084 = vor.u32 %v6083, 8388608
        %v6085 = vsub.s32 0, %v6084
        %v6086 = vadd.s32 %v6081, 1
        %vm6087 = vcmp.gt.s32.totalorder %v6086, 0
        %v6088 = vsel %vm6087, %v6086, 0
        %v6089 = vshrl.u32 %v6088, 5
        %v6090 = vand.u32 %v6088, 31
        %v6091 = vsub.s32 32, %v6090
        %v6092 = vshrl.u32 683565275, %v6091
        %v6093 = vshll.u32 683565275, %v6090
        %v6094 = vshrl.u32 2475754826, %v6091
        %v6095 = vor.u32 %v6093, %v6094
        %v6096 = vshll.u32 2475754826, %v6090
        %v6097 = vshrl.u32 2131351028, %v6091
        %v6098 = vor.u32 %v6096, %v6097
        %v6099 = vshll.u32 2131351028, %v6090
        %v6100 = vshrl.u32 2102212464, %v6091
        %v6101 = vor.u32 %v6099, %v6100
        %v6102 = vshll.u32 2102212464, %v6090
        %v6103 = vshrl.u32 920167782, %v6091
        %v6104 = vor.u32 %v6102, %v6103
        %v6105 = vshll.u32 920167782, %v6090
        %v6106 = vshrl.u32 1326507024, %v6091
        %v6107 = vor.u32 %v6105, %v6106
        %vm6108 = vcmp.lt.s32.totalorder %v6089, 1
        %vm6109 = vcmp.lt.s32.totalorder %v6089, 2
        %vm6110 = vcmp.lt.s32.totalorder %v6089, 3
        %vm6111 = vcmp.lt.s32.totalorder %v6089, 4
        %v6112 = vsel %vm6108, %v6092, %v6095
        %v6113 = vsel %vm6111, %v6101, 2102212464
        %v6114 = vsel %vm6110, %v6098, %v6113
        %v6115 = vsel %vm6109, %v6112, %v6114
        %v6116 = vsel %vm6108, %v6095, %v6098
        %v6117 = vsel %vm6111, %v6104, 920167782
        %v6118 = vsel %vm6110, %v6101, %v6117
        %v6119 = vsel %vm6109, %v6116, %v6118
        %v6120 = vsel %vm6108, %v6098, %v6101
        %v6121 = vsel %vm6111, %v6107, 1326507024
        %v6122 = vsel %vm6110, %v6104, %v6121
        %v6123 = vsel %vm6109, %v6120, %v6122
        %v6124 = vshll.u32 %v6084, 8
        %v6125 = vmul.u32.u64.compose %v6124, %v6123
        %v6126 = vextract.low.u32 %v6125
        %v6127 = vextract.high.u32 %v6125
        %v6128 = vmul.u32.u64.compose %v6124, %v6119
        %v6129 = vextract.low.u32 %v6128
        %v6130 = vextract.high.u32 %v6128
        %v6131 = vmul.u32 %v6124, %v6115
        %v6132 = vadd.s32 %v6127, %v6129
        %vm6133 = vc.u32 %v6127, %v6129
        %v6134 = vadd.s32 %v6130, 1
        %v6135 = vsel %vm6133, %v6134, %v6130
        %v6136 = vadd.s32 %v6131, %v6135
        %v6137 = vadd.s32 %v6136, 536870912
        %v6138 = vshrl.u32 %v6137, 30
        %v6139 = vshll.u32 %v6138, 30
        %v6140 = vsub.s32 %v6136, %v6139
        %vm6141 = vcmp.lt.s32.totalorder %v6140, 0
        %v6142 = vsub.s32 0, %v6140
        %v6143 = vsel %vm6141, %v6142, %v6140
        %v6144 = vclz %v6143
        %v6145 = vsub.s32 %v6144, 2
        %vm6146 = vcmp.gt.s32.totalorder 0, %v6145
        %v6147 = vsel %vm6146, 0, %v6145
        %v6148 = vsub.s32 32, %v6147
        %v6149 = vshll.u32 %v6140, %v6147
        %v6150 = vshrl.u32 %v6132, %v6148
        %v6151 = vor.u32 %v6149, %v6150
        %v6152 = vsub.s32 4294967266, %v6147
        %v6153 = vadd.s32 %v6152, 127
        %v6154 = vshll.u32 %v6153, 23
        %v6155 = vor.u32 4788187, %v6154
        %v6156 = vand.u32 2147483647, %v6155
        %v6158 = vcvt.s32.f32 %v6151
        %v6159 = vmul.f32 %v6158, %v6156
        %v6160 = vxor.u32 %v6159, 2147483648
        %v6161 = vsel %vm6078, %v6160, %v6159
        %v6162 = vsub.s32 4, %v6138
        %v6163 = vsel %vm6078, %v6162, %v6138
        %v6164 = vsel %vm6077, %v1068, %v6161
        %v6165 = vsel %vm6077, 0, %v6163
        %v6166 = vcosq.f32.pop %v6164
        %v6167 = vsinq.f32.pop %v6164
        %vm6168 = vweird.f32 %v1068
        %v6169 = vadd.s32 %v6165, 3
        %v6170 = vand.u32 %v6169, 3
        %vm6171 = vcmp.lt.s32.totalorder %v6170, 2
        %vm6172 = vcmp.eq.s32.totalorder %v6170, 0
        %v6173 = vxor.u32 %v6167, 2147483648
        %v6174 = vsel %vm6172, %v6166, %v6173
        %vm6175 = vcmp.eq.s32.totalorder %v6170, 2
        %v6176 = vxor.u32 %v6166, 2147483648
        %v6177 = vsel %vm6175, %v6176, %v6167
        %v6178 = vsel %vm6171, %v6174, %v6177
        %v6179 = vsel %vm6168, nan, %v6178
        %v6180 = vand.u32 2147483647, %v1069
        %vm6181 = vcmp.le.f32.partialorder %v6180, 0.7853982
        %vm6182 = vcmp.lt.s32.totalorder %v1069, 0
        %v6183 = vand.u32 %v1069, 2139095040
        %v6184 = vshrl.u32 %v6183, 23
        %v6185 = vsub.s32 %v6184, 127
        %v6186 = vand.u32 2147483647, %v1069
        %v6187 = vand.u32 %v6186, 8388607
        %v6188 = vor.u32 %v6187, 8388608
        %v6189 = vsub.s32 0, %v6188
        %v6190 = vadd.s32 %v6185, 1
        %vm6191 = vcmp.gt.s32.totalorder %v6190, 0
        %v6192 = vsel %vm6191, %v6190, 0
        %v6193 = vshrl.u32 %v6192, 5
        %v6194 = vand.u32 %v6192, 31
        %v6195 = vsub.s32 32, %v6194
        %v6196 = vshrl.u32 683565275, %v6195
        %v6197 = vshll.u32 683565275, %v6194
        %v6198 = vshrl.u32 2475754826, %v6195
        %v6199 = vor.u32 %v6197, %v6198
        %v6200 = vshll.u32 2475754826, %v6194
        %v6201 = vshrl.u32 2131351028, %v6195
        %v6202 = vor.u32 %v6200, %v6201
        %v6203 = vshll.u32 2131351028, %v6194
        %v6204 = vshrl.u32 2102212464, %v6195
        %v6205 = vor.u32 %v6203, %v6204
        %v6206 = vshll.u32 2102212464, %v6194
        %v6207 = vshrl.u32 920167782, %v6195
        %v6208 = vor.u32 %v6206, %v6207
        %v6209 = vshll.u32 920167782, %v6194
        %v6210 = vshrl.u32 1326507024, %v6195
        %v6211 = vor.u32 %v6209, %v6210
        %vm6212 = vcmp.lt.s32.totalorder %v6193, 1
        %vm6213 = vcmp.lt.s32.totalorder %v6193, 2
        %vm6214 = vcmp.lt.s32.totalorder %v6193, 3
        %vm6215 = vcmp.lt.s32.totalorder %v6193, 4
        %v6216 = vsel %vm6212, %v6196, %v6199
        %v6217 = vsel %vm6215, %v6205, 2102212464
        %v6218 = vsel %vm6214, %v6202, %v6217
        %v6219 = vsel %vm6213, %v6216, %v6218
        %v6220 = vsel %vm6212, %v6199, %v6202
        %v6221 = vsel %vm6215, %v6208, 920167782
        %v6222 = vsel %vm6214, %v6205, %v6221
        %v6223 = vsel %vm6213, %v6220, %v6222
        %v6224 = vsel %vm6212, %v6202, %v6205
        %v6225 = vsel %vm6215, %v6211, 1326507024
        %v6226 = vsel %vm6214, %v6208, %v6225
        %v6227 = vsel %vm6213, %v6224, %v6226
        %v6228 = vshll.u32 %v6188, 8
        %v6229 = vmul.u32.u64.compose %v6228, %v6227
        %v6230 = vextract.low.u32 %v6229
        %v6231 = vextract.high.u32 %v6229
        %v6232 = vmul.u32.u64.compose %v6228, %v6223
        %v6233 = vextract.low.u32 %v6232
        %v6234 = vextract.high.u32 %v6232
        %v6235 = vmul.u32 %v6228, %v6219
        %v6236 = vadd.s32 %v6231, %v6233
        %vm6237 = vc.u32 %v6231, %v6233
        %v6238 = vadd.s32 %v6234, 1
        %v6239 = vsel %vm6237, %v6238, %v6234
        %v6240 = vadd.s32 %v6235, %v6239
        %v6241 = vadd.s32 %v6240, 536870912
        %v6242 = vshrl.u32 %v6241, 30
        %v6243 = vshll.u32 %v6242, 30
        %v6244 = vsub.s32 %v6240, %v6243
        %vm6245 = vcmp.lt.s32.totalorder %v6244, 0
        %v6246 = vsub.s32 0, %v6244
        %v6247 = vsel %vm6245, %v6246, %v6244
        %v6248 = vclz %v6247
        %v6249 = vsub.s32 %v6248, 2
        %vm6250 = vcmp.gt.s32.totalorder 0, %v6249
        %v6251 = vsel %vm6250, 0, %v6249
        %v6252 = vsub.s32 32, %v6251
        %v6253 = vshll.u32 %v6244, %v6251
        %v6254 = vshrl.u32 %v6236, %v6252
        %v6255 = vor.u32 %v6253, %v6254
        %v6256 = vsub.s32 4294967266, %v6251
        %v6257 = vadd.s32 %v6256, 127
        %v6258 = vshll.u32 %v6257, 23
        %v6259 = vor.u32 4788187, %v6258
        %v6260 = vand.u32 2147483647, %v6259
        %v6262 = vcvt.s32.f32 %v6255
        %v6263 = vmul.f32 %v6262, %v6260
        %v6264 = vxor.u32 %v6263, 2147483648
        %v6265 = vsel %vm6182, %v6264, %v6263
        %v6266 = vsub.s32 4, %v6242
        %v6267 = vsel %vm6182, %v6266, %v6242
        %v6268 = vsel %vm6181, %v1069, %v6265
        %v6269 = vsel %vm6181, 0, %v6267
        %v6270 = vcosq.f32.pop %v6268
        %v6271 = vsinq.f32.pop %v6268
        %vm6272 = vweird.f32 %v1069
        %v6273 = vadd.s32 %v6269, 3
        %v6274 = vand.u32 %v6273, 3
        %vm6275 = vcmp.lt.s32.totalorder %v6274, 2
        %vm6276 = vcmp.eq.s32.totalorder %v6274, 0
        %v6277 = vxor.u32 %v6271, 2147483648
        %v6278 = vsel %vm6276, %v6270, %v6277
        %vm6279 = vcmp.eq.s32.totalorder %v6274, 2
        %v6280 = vxor.u32 %v6270, 2147483648
        %v6281 = vsel %vm6279, %v6280, %v6271
        %v6282 = vsel %vm6275, %v6278, %v6281
        %v6283 = vsel %vm6272, nan, %v6282
        %v6284 = vand.u32 2147483647, %v1070
        %vm6285 = vcmp.le.f32.partialorder %v6284, 0.7853982
        %vm6286 = vcmp.lt.s32.totalorder %v1070, 0
        %v6287 = vand.u32 %v1070, 2139095040
        %v6288 = vshrl.u32 %v6287, 23
        %v6289 = vsub.s32 %v6288, 127
        %v6290 = vand.u32 2147483647, %v1070
        %v6291 = vand.u32 %v6290, 8388607
        %v6292 = vor.u32 %v6291, 8388608
        %v6293 = vsub.s32 0, %v6292
        %v6294 = vadd.s32 %v6289, 1
        %vm6295 = vcmp.gt.s32.totalorder %v6294, 0
        %v6296 = vsel %vm6295, %v6294, 0
        %v6297 = vshrl.u32 %v6296, 5
        %v6298 = vand.u32 %v6296, 31
        %v6299 = vsub.s32 32, %v6298
        %v6300 = vshrl.u32 683565275, %v6299
        %v6301 = vshll.u32 683565275, %v6298
        %v6302 = vshrl.u32 2475754826, %v6299
        %v6303 = vor.u32 %v6301, %v6302
        %v6304 = vshll.u32 2475754826, %v6298
        %v6305 = vshrl.u32 2131351028, %v6299
        %v6306 = vor.u32 %v6304, %v6305
        %v6307 = vshll.u32 2131351028, %v6298
        %v6308 = vshrl.u32 2102212464, %v6299
        %v6309 = vor.u32 %v6307, %v6308
        %v6310 = vshll.u32 2102212464, %v6298
        %v6311 = vshrl.u32 920167782, %v6299
        %v6312 = vor.u32 %v6310, %v6311
        %v6313 = vshll.u32 920167782, %v6298
        %v6314 = vshrl.u32 1326507024, %v6299
        %v6315 = vor.u32 %v6313, %v6314
        %vm6316 = vcmp.lt.s32.totalorder %v6297, 1
        %vm6317 = vcmp.lt.s32.totalorder %v6297, 2
        %vm6318 = vcmp.lt.s32.totalorder %v6297, 3
        %vm6319 = vcmp.lt.s32.totalorder %v6297, 4
        %v6320 = vsel %vm6316, %v6300, %v6303
        %v6321 = vsel %vm6319, %v6309, 2102212464
        %v6322 = vsel %vm6318, %v6306, %v6321
        %v6323 = vsel %vm6317, %v6320, %v6322
        %v6324 = vsel %vm6316, %v6303, %v6306
        %v6325 = vsel %vm6319, %v6312, 920167782
        %v6326 = vsel %vm6318, %v6309, %v6325
        %v6327 = vsel %vm6317, %v6324, %v6326
        %v6328 = vsel %vm6316, %v6306, %v6309
        %v6329 = vsel %vm6319, %v6315, 1326507024
        %v6330 = vsel %vm6318, %v6312, %v6329
        %v6331 = vsel %vm6317, %v6328, %v6330
        %v6332 = vshll.u32 %v6292, 8
        %v6333 = vmul.u32.u64.compose %v6332, %v6331
        %v6334 = vextract.low.u32 %v6333
        %v6335 = vextract.high.u32 %v6333
        %v6336 = vmul.u32.u64.compose %v6332, %v6327
        %v6337 = vextract.low.u32 %v6336
        %v6338 = vextract.high.u32 %v6336
        %v6339 = vmul.u32 %v6332, %v6323
        %v6340 = vadd.s32 %v6335, %v6337
        %vm6341 = vc.u32 %v6335, %v6337
        %v6342 = vadd.s32 %v6338, 1
        %v6343 = vsel %vm6341, %v6342, %v6338
        %v6344 = vadd.s32 %v6339, %v6343
        %v6345 = vadd.s32 %v6344, 536870912
        %v6346 = vshrl.u32 %v6345, 30
        %v6347 = vshll.u32 %v6346, 30
        %v6348 = vsub.s32 %v6344, %v6347
        %vm6349 = vcmp.lt.s32.totalorder %v6348, 0
        %v6350 = vsub.s32 0, %v6348
        %v6351 = vsel %vm6349, %v6350, %v6348
        %v6352 = vclz %v6351
        %v6353 = vsub.s32 %v6352, 2
        %vm6354 = vcmp.gt.s32.totalorder 0, %v6353
        %v6355 = vsel %vm6354, 0, %v6353
        %v6356 = vsub.s32 32, %v6355
        %v6357 = vshll.u32 %v6348, %v6355
        %v6358 = vshrl.u32 %v6340, %v6356
        %v6359 = vor.u32 %v6357, %v6358
        %v6360 = vsub.s32 4294967266, %v6355
        %v6361 = vadd.s32 %v6360, 127
        %v6362 = vshll.u32 %v6361, 23
        %v6363 = vor.u32 4788187, %v6362
        %v6364 = vand.u32 2147483647, %v6363
        %v6366 = vcvt.s32.f32 %v6359
        %v6367 = vmul.f32 %v6366, %v6364
        %v6368 = vxor.u32 %v6367, 2147483648
        %v6369 = vsel %vm6286, %v6368, %v6367
        %v6370 = vsub.s32 4, %v6346
        %v6371 = vsel %vm6286, %v6370, %v6346
        %v6372 = vsel %vm6285, %v1070, %v6369
        %v6373 = vsel %vm6285, 0, %v6371
        %v6374 = vcosq.f32.pop %v6372
        %v6375 = vsinq.f32.pop %v6372
        %vm6376 = vweird.f32 %v1070
        %v6377 = vadd.s32 %v6373, 3
        %v6378 = vand.u32 %v6377, 3
        %vm6379 = vcmp.lt.s32.totalorder %v6378, 2
        %vm6380 = vcmp.eq.s32.totalorder %v6378, 0
        %v6381 = vxor.u32 %v6375, 2147483648
        %v6382 = vsel %vm6380, %v6374, %v6381
        %vm6383 = vcmp.eq.s32.totalorder %v6378, 2
        %v6384 = vxor.u32 %v6374, 2147483648
        %v6385 = vsel %vm6383, %v6384, %v6375
        %v6386 = vsel %vm6379, %v6382, %v6385
        %v6387 = vsel %vm6376, nan, %v6386
        %v6388 = vand.u32 2147483647, %v1071
        %vm6389 = vcmp.le.f32.partialorder %v6388, 0.7853982
        %vm6390 = vcmp.lt.s32.totalorder %v1071, 0
        %v6391 = vand.u32 %v1071, 2139095040
        %v6392 = vshrl.u32 %v6391, 23
        %v6393 = vsub.s32 %v6392, 127
        %v6394 = vand.u32 2147483647, %v1071
        %v6395 = vand.u32 %v6394, 8388607
        %v6396 = vor.u32 %v6395, 8388608
        %v6397 = vsub.s32 0, %v6396
        %v6398 = vadd.s32 %v6393, 1
        %vm6399 = vcmp.gt.s32.totalorder %v6398, 0
        %v6400 = vsel %vm6399, %v6398, 0
        %v6401 = vshrl.u32 %v6400, 5
        %v6402 = vand.u32 %v6400, 31
        %v6403 = vsub.s32 32, %v6402
        %v6404 = vshrl.u32 683565275, %v6403
        %v6405 = vshll.u32 683565275, %v6402
        %v6406 = vshrl.u32 2475754826, %v6403
        %v6407 = vor.u32 %v6405, %v6406
        %v6408 = vshll.u32 2475754826, %v6402
        %v6409 = vshrl.u32 2131351028, %v6403
        %v6410 = vor.u32 %v6408, %v6409
        %v6411 = vshll.u32 2131351028, %v6402
        %v6412 = vshrl.u32 2102212464, %v6403
        %v6413 = vor.u32 %v6411, %v6412
        %v6414 = vshll.u32 2102212464, %v6402
        %v6415 = vshrl.u32 920167782, %v6403
        %v6416 = vor.u32 %v6414, %v6415
        %v6417 = vshll.u32 920167782, %v6402
        %v6418 = vshrl.u32 1326507024, %v6403
        %v6419 = vor.u32 %v6417, %v6418
        %vm6420 = vcmp.lt.s32.totalorder %v6401, 1
        %vm6421 = vcmp.lt.s32.totalorder %v6401, 2
        %vm6422 = vcmp.lt.s32.totalorder %v6401, 3
        %vm6423 = vcmp.lt.s32.totalorder %v6401, 4
        %v6424 = vsel %vm6420, %v6404, %v6407
        %v6425 = vsel %vm6423, %v6413, 2102212464
        %v6426 = vsel %vm6422, %v6410, %v6425
        %v6427 = vsel %vm6421, %v6424, %v6426
        %v6428 = vsel %vm6420, %v6407, %v6410
        %v6429 = vsel %vm6423, %v6416, 920167782
        %v6430 = vsel %vm6422, %v6413, %v6429
        %v6431 = vsel %vm6421, %v6428, %v6430
        %v6432 = vsel %vm6420, %v6410, %v6413
        %v6433 = vsel %vm6423, %v6419, 1326507024
        %v6434 = vsel %vm6422, %v6416, %v6433
        %v6435 = vsel %vm6421, %v6432, %v6434
        %v6436 = vshll.u32 %v6396, 8
        %v6437 = vmul.u32.u64.compose %v6436, %v6435
        %v6438 = vextract.low.u32 %v6437
        %v6439 = vextract.high.u32 %v6437
        %v6440 = vmul.u32.u64.compose %v6436, %v6431
        %v6441 = vextract.low.u32 %v6440
        %v6442 = vextract.high.u32 %v6440
        %v6443 = vmul.u32 %v6436, %v6427
        %v6444 = vadd.s32 %v6439, %v6441
        %vm6445 = vc.u32 %v6439, %v6441
        %v6446 = vadd.s32 %v6442, 1
        %v6447 = vsel %vm6445, %v6446, %v6442
        %v6448 = vadd.s32 %v6443, %v6447
        %v6449 = vadd.s32 %v6448, 536870912
        %v6450 = vshrl.u32 %v6449, 30
        %v6451 = vshll.u32 %v6450, 30
        %v6452 = vsub.s32 %v6448, %v6451
        %vm6453 = vcmp.lt.s32.totalorder %v6452, 0
        %v6454 = vsub.s32 0, %v6452
        %v6455 = vsel %vm6453, %v6454, %v6452
        %v6456 = vclz %v6455
        %v6457 = vsub.s32 %v6456, 2
        %vm6458 = vcmp.gt.s32.totalorder 0, %v6457
        %v6459 = vsel %vm6458, 0, %v6457
        %v6460 = vsub.s32 32, %v6459
        %v6461 = vshll.u32 %v6452, %v6459
        %v6462 = vshrl.u32 %v6444, %v6460
        %v6463 = vor.u32 %v6461, %v6462
        %v6464 = vsub.s32 4294967266, %v6459
        %v6465 = vadd.s32 %v6464, 127
        %v6466 = vshll.u32 %v6465, 23
        %v6467 = vor.u32 4788187, %v6466
        %v6468 = vand.u32 2147483647, %v6467
        %v6470 = vcvt.s32.f32 %v6463
        %v6471 = vmul.f32 %v6470, %v6468
        %v6472 = vxor.u32 %v6471, 2147483648
        %v6473 = vsel %vm6390, %v6472, %v6471
        %v6474 = vsub.s32 4, %v6450
        %v6475 = vsel %vm6390, %v6474, %v6450
        %v6476 = vsel %vm6389, %v1071, %v6473
        %v6477 = vsel %vm6389, 0, %v6475
        %v6478 = vcosq.f32.pop %v6476
        %v6479 = vsinq.f32.pop %v6476
        %vm6480 = vweird.f32 %v1071
        %v6481 = vadd.s32 %v6477, 3
        %v6482 = vand.u32 %v6481, 3
        %vm6483 = vcmp.lt.s32.totalorder %v6482, 2
        %vm6484 = vcmp.eq.s32.totalorder %v6482, 0
        %v6485 = vxor.u32 %v6479, 2147483648
        %v6486 = vsel %vm6484, %v6478, %v6485
        %vm6487 = vcmp.eq.s32.totalorder %v6482, 2
        %v6488 = vxor.u32 %v6478, 2147483648
        %v6489 = vsel %vm6487, %v6488, %v6479
        %v6490 = vsel %vm6483, %v6486, %v6489
        %v6491 = vsel %vm6480, nan, %v6490
        %v6492 = vand.u32 2147483647, %v1072
        %vm6493 = vcmp.le.f32.partialorder %v6492, 0.7853982
        %vm6494 = vcmp.lt.s32.totalorder %v1072, 0
        %v6495 = vand.u32 %v1072, 2139095040
        %v6496 = vshrl.u32 %v6495, 23
        %v6497 = vsub.s32 %v6496, 127
        %v6498 = vand.u32 2147483647, %v1072
        %v6499 = vand.u32 %v6498, 8388607
        %v6500 = vor.u32 %v6499, 8388608
        %v6501 = vsub.s32 0, %v6500
        %v6502 = vadd.s32 %v6497, 1
        %vm6503 = vcmp.gt.s32.totalorder %v6502, 0
        %v6504 = vsel %vm6503, %v6502, 0
        %v6505 = vshrl.u32 %v6504, 5
        %v6506 = vand.u32 %v6504, 31
        %v6507 = vsub.s32 32, %v6506
        %v6508 = vshrl.u32 683565275, %v6507
        %v6509 = vshll.u32 683565275, %v6506
        %v6510 = vshrl.u32 2475754826, %v6507
        %v6511 = vor.u32 %v6509, %v6510
        %v6512 = vshll.u32 2475754826, %v6506
        %v6513 = vshrl.u32 2131351028, %v6507
        %v6514 = vor.u32 %v6512, %v6513
        %v6515 = vshll.u32 2131351028, %v6506
        %v6516 = vshrl.u32 2102212464, %v6507
        %v6517 = vor.u32 %v6515, %v6516
        %v6518 = vshll.u32 2102212464, %v6506
        %v6519 = vshrl.u32 920167782, %v6507
        %v6520 = vor.u32 %v6518, %v6519
        %v6521 = vshll.u32 920167782, %v6506
        %v6522 = vshrl.u32 1326507024, %v6507
        %v6523 = vor.u32 %v6521, %v6522
        %vm6524 = vcmp.lt.s32.totalorder %v6505, 1
        %vm6525 = vcmp.lt.s32.totalorder %v6505, 2
        %vm6526 = vcmp.lt.s32.totalorder %v6505, 3
        %vm6527 = vcmp.lt.s32.totalorder %v6505, 4
        %v6528 = vsel %vm6524, %v6508, %v6511
        %v6529 = vsel %vm6527, %v6517, 2102212464
        %v6530 = vsel %vm6526, %v6514, %v6529
        %v6531 = vsel %vm6525, %v6528, %v6530
        %v6532 = vsel %vm6524, %v6511, %v6514
        %v6533 = vsel %vm6527, %v6520, 920167782
        %v6534 = vsel %vm6526, %v6517, %v6533
        %v6535 = vsel %vm6525, %v6532, %v6534
        %v6536 = vsel %vm6524, %v6514, %v6517
        %v6537 = vsel %vm6527, %v6523, 1326507024
        %v6538 = vsel %vm6526, %v6520, %v6537
        %v6539 = vsel %vm6525, %v6536, %v6538
        %v6540 = vshll.u32 %v6500, 8
        %v6541 = vmul.u32.u64.compose %v6540, %v6539
        %v6542 = vextract.low.u32 %v6541
        %v6543 = vextract.high.u32 %v6541
        %v6544 = vmul.u32.u64.compose %v6540, %v6535
        %v6545 = vextract.low.u32 %v6544
        %v6546 = vextract.high.u32 %v6544
        %v6547 = vmul.u32 %v6540, %v6531
        %v6548 = vadd.s32 %v6543, %v6545
        %vm6549 = vc.u32 %v6543, %v6545
        %v6550 = vadd.s32 %v6546, 1
        %v6551 = vsel %vm6549, %v6550, %v6546
        %v6552 = vadd.s32 %v6547, %v6551
        %v6553 = vadd.s32 %v6552, 536870912
        %v6554 = vshrl.u32 %v6553, 30
        %v6555 = vshll.u32 %v6554, 30
        %v6556 = vsub.s32 %v6552, %v6555
        %vm6557 = vcmp.lt.s32.totalorder %v6556, 0
        %v6558 = vsub.s32 0, %v6556
        %v6559 = vsel %vm6557, %v6558, %v6556
        %v6560 = vclz %v6559
        %v6561 = vsub.s32 %v6560, 2
        %vm6562 = vcmp.gt.s32.totalorder 0, %v6561
        %v6563 = vsel %vm6562, 0, %v6561
        %v6564 = vsub.s32 32, %v6563
        %v6565 = vshll.u32 %v6556, %v6563
        %v6566 = vshrl.u32 %v6548, %v6564
        %v6567 = vor.u32 %v6565, %v6566
        %v6568 = vsub.s32 4294967266, %v6563
        %v6569 = vadd.s32 %v6568, 127
        %v6570 = vshll.u32 %v6569, 23
        %v6571 = vor.u32 4788187, %v6570
        %v6572 = vand.u32 2147483647, %v6571
        %v6574 = vcvt.s32.f32 %v6567
        %v6575 = vmul.f32 %v6574, %v6572
        %v6576 = vxor.u32 %v6575, 2147483648
        %v6577 = vsel %vm6494, %v6576, %v6575
        %v6578 = vsub.s32 4, %v6554
        %v6579 = vsel %vm6494, %v6578, %v6554
        %v6580 = vsel %vm6493, %v1072, %v6577
        %v6581 = vsel %vm6493, 0, %v6579
        %v6582 = vcosq.f32.pop %v6580
        %v6583 = vsinq.f32.pop %v6580
        %vm6584 = vweird.f32 %v1072
        %v6585 = vadd.s32 %v6581, 3
        %v6586 = vand.u32 %v6585, 3
        %vm6587 = vcmp.lt.s32.totalorder %v6586, 2
        %vm6588 = vcmp.eq.s32.totalorder %v6586, 0
        %v6589 = vxor.u32 %v6583, 2147483648
        %v6590 = vsel %vm6588, %v6582, %v6589
        %vm6591 = vcmp.eq.s32.totalorder %v6586, 2
        %v6592 = vxor.u32 %v6582, 2147483648
        %v6593 = vsel %vm6591, %v6592, %v6583
        %v6594 = vsel %vm6587, %v6590, %v6593
        %v6595 = vsel %vm6584, nan, %v6594
        %v6596 = vand.u32 2147483647, %v1073
        %vm6597 = vcmp.le.f32.partialorder %v6596, 0.7853982
        %vm6598 = vcmp.lt.s32.totalorder %v1073, 0
        %v6599 = vand.u32 %v1073, 2139095040
        %v6600 = vshrl.u32 %v6599, 23
        %v6601 = vsub.s32 %v6600, 127
        %v6602 = vand.u32 2147483647, %v1073
        %v6603 = vand.u32 %v6602, 8388607
        %v6604 = vor.u32 %v6603, 8388608
        %v6605 = vsub.s32 0, %v6604
        %v6606 = vadd.s32 %v6601, 1
        %vm6607 = vcmp.gt.s32.totalorder %v6606, 0
        %v6608 = vsel %vm6607, %v6606, 0
        %v6609 = vshrl.u32 %v6608, 5
        %v6610 = vand.u32 %v6608, 31
        %v6611 = vsub.s32 32, %v6610
        %v6612 = vshrl.u32 683565275, %v6611
        %v6613 = vshll.u32 683565275, %v6610
        %v6614 = vshrl.u32 2475754826, %v6611
        %v6615 = vor.u32 %v6613, %v6614
        %v6616 = vshll.u32 2475754826, %v6610
        %v6617 = vshrl.u32 2131351028, %v6611
        %v6618 = vor.u32 %v6616, %v6617
        %v6619 = vshll.u32 2131351028, %v6610
        %v6620 = vshrl.u32 2102212464, %v6611
        %v6621 = vor.u32 %v6619, %v6620
        %v6622 = vshll.u32 2102212464, %v6610
        %v6623 = vshrl.u32 920167782, %v6611
        %v6624 = vor.u32 %v6622, %v6623
        %v6625 = vshll.u32 920167782, %v6610
        %v6626 = vshrl.u32 1326507024, %v6611
        %v6627 = vor.u32 %v6625, %v6626
        %vm6628 = vcmp.lt.s32.totalorder %v6609, 1
        %vm6629 = vcmp.lt.s32.totalorder %v6609, 2
        %vm6630 = vcmp.lt.s32.totalorder %v6609, 3
        %vm6631 = vcmp.lt.s32.totalorder %v6609, 4
        %v6632 = vsel %vm6628, %v6612, %v6615
        %v6633 = vsel %vm6631, %v6621, 2102212464
        %v6634 = vsel %vm6630, %v6618, %v6633
        %v6635 = vsel %vm6629, %v6632, %v6634
        %v6636 = vsel %vm6628, %v6615, %v6618
        %v6637 = vsel %vm6631, %v6624, 920167782
        %v6638 = vsel %vm6630, %v6621, %v6637
        %v6639 = vsel %vm6629, %v6636, %v6638
        %v6640 = vsel %vm6628, %v6618, %v6621
        %v6641 = vsel %vm6631, %v6627, 1326507024
        %v6642 = vsel %vm6630, %v6624, %v6641
        %v6643 = vsel %vm6629, %v6640, %v6642
        %v6644 = vshll.u32 %v6604, 8
        %v6645 = vmul.u32.u64.compose %v6644, %v6643
        %v6646 = vextract.low.u32 %v6645
        %v6647 = vextract.high.u32 %v6645
        %v6648 = vmul.u32.u64.compose %v6644, %v6639
        %v6649 = vextract.low.u32 %v6648
        %v6650 = vextract.high.u32 %v6648
        %v6651 = vmul.u32 %v6644, %v6635
        %v6652 = vadd.s32 %v6647, %v6649
        %vm6653 = vc.u32 %v6647, %v6649
        %v6654 = vadd.s32 %v6650, 1
        %v6655 = vsel %vm6653, %v6654, %v6650
        %v6656 = vadd.s32 %v6651, %v6655
        %v6657 = vadd.s32 %v6656, 536870912
        %v6658 = vshrl.u32 %v6657, 30
        %v6659 = vshll.u32 %v6658, 30
        %v6660 = vsub.s32 %v6656, %v6659
        %vm6661 = vcmp.lt.s32.totalorder %v6660, 0
        %v6662 = vsub.s32 0, %v6660
        %v6663 = vsel %vm6661, %v6662, %v6660
        %v6664 = vclz %v6663
        %v6665 = vsub.s32 %v6664, 2
        %vm6666 = vcmp.gt.s32.totalorder 0, %v6665
        %v6667 = vsel %vm6666, 0, %v6665
        %v6668 = vsub.s32 32, %v6667
        %v6669 = vshll.u32 %v6660, %v6667
        %v6670 = vshrl.u32 %v6652, %v6668
        %v6671 = vor.u32 %v6669, %v6670
        %v6672 = vsub.s32 4294967266, %v6667
        %v6673 = vadd.s32 %v6672, 127
        %v6674 = vshll.u32 %v6673, 23
        %v6675 = vor.u32 4788187, %v6674
        %v6676 = vand.u32 2147483647, %v6675
        %v6678 = vcvt.s32.f32 %v6671
        %v6679 = vmul.f32 %v6678, %v6676
        %v6680 = vxor.u32 %v6679, 2147483648
        %v6681 = vsel %vm6598, %v6680, %v6679
        %v6682 = vsub.s32 4, %v6658
        %v6683 = vsel %vm6598, %v6682, %v6658
        %v6684 = vsel %vm6597, %v1073, %v6681
        %v6685 = vsel %vm6597, 0, %v6683
        %v6686 = vcosq.f32.pop %v6684
        %v6687 = vsinq.f32.pop %v6684
        %vm6688 = vweird.f32 %v1073
        %v6689 = vadd.s32 %v6685, 3
        %v6690 = vand.u32 %v6689, 3
        %vm6691 = vcmp.lt.s32.totalorder %v6690, 2
        %vm6692 = vcmp.eq.s32.totalorder %v6690, 0
        %v6693 = vxor.u32 %v6687, 2147483648
        %v6694 = vsel %vm6692, %v6686, %v6693
        %vm6695 = vcmp.eq.s32.totalorder %v6690, 2
        %v6696 = vxor.u32 %v6686, 2147483648
        %v6697 = vsel %vm6695, %v6696, %v6687
        %v6698 = vsel %vm6691, %v6694, %v6697
        %v6699 = vsel %vm6688, nan, %v6698
        %v6700 = vand.u32 2147483647, %v1074
        %vm6701 = vcmp.le.f32.partialorder %v6700, 0.7853982
        %vm6702 = vcmp.lt.s32.totalorder %v1074, 0
        %v6703 = vand.u32 %v1074, 2139095040
        %v6704 = vshrl.u32 %v6703, 23
        %v6705 = vsub.s32 %v6704, 127
        %v6706 = vand.u32 2147483647, %v1074
        %v6707 = vand.u32 %v6706, 8388607
        %v6708 = vor.u32 %v6707, 8388608
        %v6709 = vsub.s32 0, %v6708
        %v6710 = vadd.s32 %v6705, 1
        %vm6711 = vcmp.gt.s32.totalorder %v6710, 0
        %v6712 = vsel %vm6711, %v6710, 0
        %v6713 = vshrl.u32 %v6712, 5
        %v6714 = vand.u32 %v6712, 31
        %v6715 = vsub.s32 32, %v6714
        %v6716 = vshrl.u32 683565275, %v6715
        %v6717 = vshll.u32 683565275, %v6714
        %v6718 = vshrl.u32 2475754826, %v6715
        %v6719 = vor.u32 %v6717, %v6718
        %v6720 = vshll.u32 2475754826, %v6714
        %v6721 = vshrl.u32 2131351028, %v6715
        %v6722 = vor.u32 %v6720, %v6721
        %v6723 = vshll.u32 2131351028, %v6714
        %v6724 = vshrl.u32 2102212464, %v6715
        %v6725 = vor.u32 %v6723, %v6724
        %v6726 = vshll.u32 2102212464, %v6714
        %v6727 = vshrl.u32 920167782, %v6715
        %v6728 = vor.u32 %v6726, %v6727
        %v6729 = vshll.u32 920167782, %v6714
        %v6730 = vshrl.u32 1326507024, %v6715
        %v6731 = vor.u32 %v6729, %v6730
        %vm6732 = vcmp.lt.s32.totalorder %v6713, 1
        %vm6733 = vcmp.lt.s32.totalorder %v6713, 2
        %vm6734 = vcmp.lt.s32.totalorder %v6713, 3
        %vm6735 = vcmp.lt.s32.totalorder %v6713, 4
        %v6736 = vsel %vm6732, %v6716, %v6719
        %v6737 = vsel %vm6735, %v6725, 2102212464
        %v6738 = vsel %vm6734, %v6722, %v6737
        %v6739 = vsel %vm6733, %v6736, %v6738
        %v6740 = vsel %vm6732, %v6719, %v6722
        %v6741 = vsel %vm6735, %v6728, 920167782
        %v6742 = vsel %vm6734, %v6725, %v6741
        %v6743 = vsel %vm6733, %v6740, %v6742
        %v6744 = vsel %vm6732, %v6722, %v6725
        %v6745 = vsel %vm6735, %v6731, 1326507024
        %v6746 = vsel %vm6734, %v6728, %v6745
        %v6747 = vsel %vm6733, %v6744, %v6746
        %v6748 = vshll.u32 %v6708, 8
        %v6749 = vmul.u32.u64.compose %v6748, %v6747
        %v6750 = vextract.low.u32 %v6749
        %v6751 = vextract.high.u32 %v6749
        %v6752 = vmul.u32.u64.compose %v6748, %v6743
        %v6753 = vextract.low.u32 %v6752
        %v6754 = vextract.high.u32 %v6752
        %v6755 = vmul.u32 %v6748, %v6739
        %v6756 = vadd.s32 %v6751, %v6753
        %vm6757 = vc.u32 %v6751, %v6753
        %v6758 = vadd.s32 %v6754, 1
        %v6759 = vsel %vm6757, %v6758, %v6754
        %v6760 = vadd.s32 %v6755, %v6759
        %v6761 = vadd.s32 %v6760, 536870912
        %v6762 = vshrl.u32 %v6761, 30
        %v6763 = vshll.u32 %v6762, 30
        %v6764 = vsub.s32 %v6760, %v6763
        %vm6765 = vcmp.lt.s32.totalorder %v6764, 0
        %v6766 = vsub.s32 0, %v6764
        %v6767 = vsel %vm6765, %v6766, %v6764
        %v6768 = vclz %v6767
        %v6769 = vsub.s32 %v6768, 2
        %vm6770 = vcmp.gt.s32.totalorder 0, %v6769
        %v6771 = vsel %vm6770, 0, %v6769
        %v6772 = vsub.s32 32, %v6771
        %v6773 = vshll.u32 %v6764, %v6771
        %v6774 = vshrl.u32 %v6756, %v6772
        %v6775 = vor.u32 %v6773, %v6774
        %v6776 = vsub.s32 4294967266, %v6771
        %v6777 = vadd.s32 %v6776, 127
        %v6778 = vshll.u32 %v6777, 23
        %v6779 = vor.u32 4788187, %v6778
        %v6780 = vand.u32 2147483647, %v6779
        %v6782 = vcvt.s32.f32 %v6775
        %v6783 = vmul.f32 %v6782, %v6780
        %v6784 = vxor.u32 %v6783, 2147483648
        %v6785 = vsel %vm6702, %v6784, %v6783
        %v6786 = vsub.s32 4, %v6762
        %v6787 = vsel %vm6702, %v6786, %v6762
        %v6788 = vsel %vm6701, %v1074, %v6785
        %v6789 = vsel %vm6701, 0, %v6787
        %v6790 = vcosq.f32.pop %v6788
        %v6791 = vsinq.f32.pop %v6788
        %vm6792 = vweird.f32 %v1074
        %v6793 = vadd.s32 %v6789, 3
        %v6794 = vand.u32 %v6793, 3
        %vm6795 = vcmp.lt.s32.totalorder %v6794, 2
        %vm6796 = vcmp.eq.s32.totalorder %v6794, 0
        %v6797 = vxor.u32 %v6791, 2147483648
        %v6798 = vsel %vm6796, %v6790, %v6797
        %vm6799 = vcmp.eq.s32.totalorder %v6794, 2
        %v6800 = vxor.u32 %v6790, 2147483648
        %v6801 = vsel %vm6799, %v6800, %v6791
        %v6802 = vsel %vm6795, %v6798, %v6801
        %v6803 = vsel %vm6792, nan, %v6802
        %v6804 = vand.u32 2147483647, %v1075
        %vm6805 = vcmp.le.f32.partialorder %v6804, 0.7853982
        %vm6806 = vcmp.lt.s32.totalorder %v1075, 0
        %v6807 = vand.u32 %v1075, 2139095040
        %v6808 = vshrl.u32 %v6807, 23
        %v6809 = vsub.s32 %v6808, 127
        %v6810 = vand.u32 2147483647, %v1075
        %v6811 = vand.u32 %v6810, 8388607
        %v6812 = vor.u32 %v6811, 8388608
        %v6813 = vsub.s32 0, %v6812
        %v6814 = vadd.s32 %v6809, 1
        %vm6815 = vcmp.gt.s32.totalorder %v6814, 0
        %v6816 = vsel %vm6815, %v6814, 0
        %v6817 = vshrl.u32 %v6816, 5
        %v6818 = vand.u32 %v6816, 31
        %v6819 = vsub.s32 32, %v6818
        %v6820 = vshrl.u32 683565275, %v6819
        %v6821 = vshll.u32 683565275, %v6818
        %v6822 = vshrl.u32 2475754826, %v6819
        %v6823 = vor.u32 %v6821, %v6822
        %v6824 = vshll.u32 2475754826, %v6818
        %v6825 = vshrl.u32 2131351028, %v6819
        %v6826 = vor.u32 %v6824, %v6825
        %v6827 = vshll.u32 2131351028, %v6818
        %v6828 = vshrl.u32 2102212464, %v6819
        %v6829 = vor.u32 %v6827, %v6828
        %v6830 = vshll.u32 2102212464, %v6818
        %v6831 = vshrl.u32 920167782, %v6819
        %v6832 = vor.u32 %v6830, %v6831
        %v6833 = vshll.u32 920167782, %v6818
        %v6834 = vshrl.u32 1326507024, %v6819
        %v6835 = vor.u32 %v6833, %v6834
        %vm6836 = vcmp.lt.s32.totalorder %v6817, 1
        %vm6837 = vcmp.lt.s32.totalorder %v6817, 2
        %vm6838 = vcmp.lt.s32.totalorder %v6817, 3
        %vm6839 = vcmp.lt.s32.totalorder %v6817, 4
        %v6840 = vsel %vm6836, %v6820, %v6823
        %v6841 = vsel %vm6839, %v6829, 2102212464
        %v6842 = vsel %vm6838, %v6826, %v6841
        %v6843 = vsel %vm6837, %v6840, %v6842
        %v6844 = vsel %vm6836, %v6823, %v6826
        %v6845 = vsel %vm6839, %v6832, 920167782
        %v6846 = vsel %vm6838, %v6829, %v6845
        %v6847 = vsel %vm6837, %v6844, %v6846
        %v6848 = vsel %vm6836, %v6826, %v6829
        %v6849 = vsel %vm6839, %v6835, 1326507024
        %v6850 = vsel %vm6838, %v6832, %v6849
        %v6851 = vsel %vm6837, %v6848, %v6850
        %v6852 = vshll.u32 %v6812, 8
        %v6853 = vmul.u32.u64.compose %v6852, %v6851
        %v6854 = vextract.low.u32 %v6853
        %v6855 = vextract.high.u32 %v6853
        %v6856 = vmul.u32.u64.compose %v6852, %v6847
        %v6857 = vextract.low.u32 %v6856
        %v6858 = vextract.high.u32 %v6856
        %v6859 = vmul.u32 %v6852, %v6843
        %v6860 = vadd.s32 %v6855, %v6857
        %vm6861 = vc.u32 %v6855, %v6857
        %v6862 = vadd.s32 %v6858, 1
        %v6863 = vsel %vm6861, %v6862, %v6858
        %v6864 = vadd.s32 %v6859, %v6863
        %v6865 = vadd.s32 %v6864, 536870912
        %v6866 = vshrl.u32 %v6865, 30
        %v6867 = vshll.u32 %v6866, 30
        %v6868 = vsub.s32 %v6864, %v6867
        %vm6869 = vcmp.lt.s32.totalorder %v6868, 0
        %v6870 = vsub.s32 0, %v6868
        %v6871 = vsel %vm6869, %v6870, %v6868
        %v6872 = vclz %v6871
        %v6873 = vsub.s32 %v6872, 2
        %vm6874 = vcmp.gt.s32.totalorder 0, %v6873
        %v6875 = vsel %vm6874, 0, %v6873
        %v6876 = vsub.s32 32, %v6875
        %v6877 = vshll.u32 %v6868, %v6875
        %v6878 = vshrl.u32 %v6860, %v6876
        %v6879 = vor.u32 %v6877, %v6878
        %v6880 = vsub.s32 4294967266, %v6875
        %v6881 = vadd.s32 %v6880, 127
        %v6882 = vshll.u32 %v6881, 23
        %v6883 = vor.u32 4788187, %v6882
        %v6884 = vand.u32 2147483647, %v6883
        %v6886 = vcvt.s32.f32 %v6879
        %v6887 = vmul.f32 %v6886, %v6884
        %v6888 = vxor.u32 %v6887, 2147483648
        %v6889 = vsel %vm6806, %v6888, %v6887
        %v6890 = vsub.s32 4, %v6866
        %v6891 = vsel %vm6806, %v6890, %v6866
        %v6892 = vsel %vm6805, %v1075, %v6889
        %v6893 = vsel %vm6805, 0, %v6891
        %v6894 = vcosq.f32.pop %v6892
        %v6895 = vsinq.f32.pop %v6892
        %vm6896 = vweird.f32 %v1075
        %v6897 = vadd.s32 %v6893, 3
        %v6898 = vand.u32 %v6897, 3
        %vm6899 = vcmp.lt.s32.totalorder %v6898, 2
        %vm6900 = vcmp.eq.s32.totalorder %v6898, 0
        %v6901 = vxor.u32 %v6895, 2147483648
        %v6902 = vsel %vm6900, %v6894, %v6901
        %vm6903 = vcmp.eq.s32.totalorder %v6898, 2
        %v6904 = vxor.u32 %v6894, 2147483648
        %v6905 = vsel %vm6903, %v6904, %v6895
        %v6906 = vsel %vm6899, %v6902, %v6905
        %v6907 = vsel %vm6896, nan, %v6906
        %v6908 = vand.u32 2147483647, %v1076
        %vm6909 = vcmp.le.f32.partialorder %v6908, 0.7853982
        %vm6910 = vcmp.lt.s32.totalorder %v1076, 0
        %v6911 = vand.u32 %v1076, 2139095040
        %v6912 = vshrl.u32 %v6911, 23
        %v6913 = vsub.s32 %v6912, 127
        %v6914 = vand.u32 2147483647, %v1076
        %v6915 = vand.u32 %v6914, 8388607
        %v6916 = vor.u32 %v6915, 8388608
        %v6917 = vsub.s32 0, %v6916
        %v6918 = vadd.s32 %v6913, 1
        %vm6919 = vcmp.gt.s32.totalorder %v6918, 0
        %v6920 = vsel %vm6919, %v6918, 0
        %v6921 = vshrl.u32 %v6920, 5
        %v6922 = vand.u32 %v6920, 31
        %v6923 = vsub.s32 32, %v6922
        %v6924 = vshrl.u32 683565275, %v6923
        %v6925 = vshll.u32 683565275, %v6922
        %v6926 = vshrl.u32 2475754826, %v6923
        %v6927 = vor.u32 %v6925, %v6926
        %v6928 = vshll.u32 2475754826, %v6922
        %v6929 = vshrl.u32 2131351028, %v6923
        %v6930 = vor.u32 %v6928, %v6929
        %v6931 = vshll.u32 2131351028, %v6922
        %v6932 = vshrl.u32 2102212464, %v6923
        %v6933 = vor.u32 %v6931, %v6932
        %v6934 = vshll.u32 2102212464, %v6922
        %v6935 = vshrl.u32 920167782, %v6923
        %v6936 = vor.u32 %v6934, %v6935
        %v6937 = vshll.u32 920167782, %v6922
        %v6938 = vshrl.u32 1326507024, %v6923
        %v6939 = vor.u32 %v6937, %v6938
        %vm6940 = vcmp.lt.s32.totalorder %v6921, 1
        %vm6941 = vcmp.lt.s32.totalorder %v6921, 2
        %vm6942 = vcmp.lt.s32.totalorder %v6921, 3
        %vm6943 = vcmp.lt.s32.totalorder %v6921, 4
        %v6944 = vsel %vm6940, %v6924, %v6927
        %v6945 = vsel %vm6943, %v6933, 2102212464
        %v6946 = vsel %vm6942, %v6930, %v6945
        %v6947 = vsel %vm6941, %v6944, %v6946
        %v6948 = vsel %vm6940, %v6927, %v6930
        %v6949 = vsel %vm6943, %v6936, 920167782
        %v6950 = vsel %vm6942, %v6933, %v6949
        %v6951 = vsel %vm6941, %v6948, %v6950
        %v6952 = vsel %vm6940, %v6930, %v6933
        %v6953 = vsel %vm6943, %v6939, 1326507024
        %v6954 = vsel %vm6942, %v6936, %v6953
        %v6955 = vsel %vm6941, %v6952, %v6954
        %v6956 = vshll.u32 %v6916, 8
        %v6957 = vmul.u32.u64.compose %v6956, %v6955
        %v6958 = vextract.low.u32 %v6957
        %v6959 = vextract.high.u32 %v6957
        %v6960 = vmul.u32.u64.compose %v6956, %v6951
        %v6961 = vextract.low.u32 %v6960
        %v6962 = vextract.high.u32 %v6960
        %v6963 = vmul.u32 %v6956, %v6947
        %v6964 = vadd.s32 %v6959, %v6961
        %vm6965 = vc.u32 %v6959, %v6961
        %v6966 = vadd.s32 %v6962, 1
        %v6967 = vsel %vm6965, %v6966, %v6962
        %v6968 = vadd.s32 %v6963, %v6967
        %v6969 = vadd.s32 %v6968, 536870912
        %v6970 = vshrl.u32 %v6969, 30
        %v6971 = vshll.u32 %v6970, 30
        %v6972 = vsub.s32 %v6968, %v6971
        %vm6973 = vcmp.lt.s32.totalorder %v6972, 0
        %v6974 = vsub.s32 0, %v6972
        %v6975 = vsel %vm6973, %v6974, %v6972
        %v6976 = vclz %v6975
        %v6977 = vsub.s32 %v6976, 2
        %vm6978 = vcmp.gt.s32.totalorder 0, %v6977
        %v6979 = vsel %vm6978, 0, %v6977
        %v6980 = vsub.s32 32, %v6979
        %v6981 = vshll.u32 %v6972, %v6979
        %v6982 = vshrl.u32 %v6964, %v6980
        %v6983 = vor.u32 %v6981, %v6982
        %v6984 = vsub.s32 4294967266, %v6979
        %v6985 = vadd.s32 %v6984, 127
        %v6986 = vshll.u32 %v6985, 23
        %v6987 = vor.u32 4788187, %v6986
        %v6988 = vand.u32 2147483647, %v6987
        %v6990 = vcvt.s32.f32 %v6983
        %v6991 = vmul.f32 %v6990, %v6988
        %v6992 = vxor.u32 %v6991, 2147483648
        %v6993 = vsel %vm6910, %v6992, %v6991
        %v6994 = vsub.s32 4, %v6970
        %v6995 = vsel %vm6910, %v6994, %v6970
        %v6996 = vsel %vm6909, %v1076, %v6993
        %v6997 = vsel %vm6909, 0, %v6995
        %v6998 = vcosq.f32.pop %v6996
        %v6999 = vsinq.f32.pop %v6996
        %vm7000 = vweird.f32 %v1076
        %v7001 = vadd.s32 %v6997, 3
        %v7002 = vand.u32 %v7001, 3
        %vm7003 = vcmp.lt.s32.totalorder %v7002, 2
        %vm7004 = vcmp.eq.s32.totalorder %v7002, 0
        %v7005 = vxor.u32 %v6999, 2147483648
        %v7006 = vsel %vm7004, %v6998, %v7005
        %vm7007 = vcmp.eq.s32.totalorder %v7002, 2
        %v7008 = vxor.u32 %v6998, 2147483648
        %v7009 = vsel %vm7007, %v7008, %v6999
        %v7010 = vsel %vm7003, %v7006, %v7009
        %v7011 = vsel %vm7000, nan, %v7010
        %v7012 = vand.u32 2147483647, %v1077
        %vm7013 = vcmp.le.f32.partialorder %v7012, 0.7853982
        %vm7014 = vcmp.lt.s32.totalorder %v1077, 0
        %v7015 = vand.u32 %v1077, 2139095040
        %v7016 = vshrl.u32 %v7015, 23
        %v7017 = vsub.s32 %v7016, 127
        %v7018 = vand.u32 2147483647, %v1077
        %v7019 = vand.u32 %v7018, 8388607
        %v7020 = vor.u32 %v7019, 8388608
        %v7021 = vsub.s32 0, %v7020
        %v7022 = vadd.s32 %v7017, 1
        %vm7023 = vcmp.gt.s32.totalorder %v7022, 0
        %v7024 = vsel %vm7023, %v7022, 0
        %v7025 = vshrl.u32 %v7024, 5
        %v7026 = vand.u32 %v7024, 31
        %v7027 = vsub.s32 32, %v7026
        %v7028 = vshrl.u32 683565275, %v7027
        %v7029 = vshll.u32 683565275, %v7026
        %v7030 = vshrl.u32 2475754826, %v7027
        %v7031 = vor.u32 %v7029, %v7030
        %v7032 = vshll.u32 2475754826, %v7026
        %v7033 = vshrl.u32 2131351028, %v7027
        %v7034 = vor.u32 %v7032, %v7033
        %v7035 = vshll.u32 2131351028, %v7026
        %v7036 = vshrl.u32 2102212464, %v7027
        %v7037 = vor.u32 %v7035, %v7036
        %v7038 = vshll.u32 2102212464, %v7026
        %v7039 = vshrl.u32 920167782, %v7027
        %v7040 = vor.u32 %v7038, %v7039
        %v7041 = vshll.u32 920167782, %v7026
        %v7042 = vshrl.u32 1326507024, %v7027
        %v7043 = vor.u32 %v7041, %v7042
        %vm7044 = vcmp.lt.s32.totalorder %v7025, 1
        %vm7045 = vcmp.lt.s32.totalorder %v7025, 2
        %vm7046 = vcmp.lt.s32.totalorder %v7025, 3
        %vm7047 = vcmp.lt.s32.totalorder %v7025, 4
        %v7048 = vsel %vm7044, %v7028, %v7031
        %v7049 = vsel %vm7047, %v7037, 2102212464
        %v7050 = vsel %vm7046, %v7034, %v7049
        %v7051 = vsel %vm7045, %v7048, %v7050
        %v7052 = vsel %vm7044, %v7031, %v7034
        %v7053 = vsel %vm7047, %v7040, 920167782
        %v7054 = vsel %vm7046, %v7037, %v7053
        %v7055 = vsel %vm7045, %v7052, %v7054
        %v7056 = vsel %vm7044, %v7034, %v7037
        %v7057 = vsel %vm7047, %v7043, 1326507024
        %v7058 = vsel %vm7046, %v7040, %v7057
        %v7059 = vsel %vm7045, %v7056, %v7058
        %v7060 = vshll.u32 %v7020, 8
        %v7061 = vmul.u32.u64.compose %v7060, %v7059
        %v7062 = vextract.low.u32 %v7061
        %v7063 = vextract.high.u32 %v7061
        %v7064 = vmul.u32.u64.compose %v7060, %v7055
        %v7065 = vextract.low.u32 %v7064
        %v7066 = vextract.high.u32 %v7064
        %v7067 = vmul.u32 %v7060, %v7051
        %v7068 = vadd.s32 %v7063, %v7065
        %vm7069 = vc.u32 %v7063, %v7065
        %v7070 = vadd.s32 %v7066, 1
        %v7071 = vsel %vm7069, %v7070, %v7066
        %v7072 = vadd.s32 %v7067, %v7071
        %v7073 = vadd.s32 %v7072, 536870912
        %v7074 = vshrl.u32 %v7073, 30
        %v7075 = vshll.u32 %v7074, 30
        %v7076 = vsub.s32 %v7072, %v7075
        %vm7077 = vcmp.lt.s32.totalorder %v7076, 0
        %v7078 = vsub.s32 0, %v7076
        %v7079 = vsel %vm7077, %v7078, %v7076
        %v7080 = vclz %v7079
        %v7081 = vsub.s32 %v7080, 2
        %vm7082 = vcmp.gt.s32.totalorder 0, %v7081
        %v7083 = vsel %vm7082, 0, %v7081
        %v7084 = vsub.s32 32, %v7083
        %v7085 = vshll.u32 %v7076, %v7083
        %v7086 = vshrl.u32 %v7068, %v7084
        %v7087 = vor.u32 %v7085, %v7086
        %v7088 = vsub.s32 4294967266, %v7083
        %v7089 = vadd.s32 %v7088, 127
        %v7090 = vshll.u32 %v7089, 23
        %v7091 = vor.u32 4788187, %v7090
        %v7092 = vand.u32 2147483647, %v7091
        %v7094 = vcvt.s32.f32 %v7087
        %v7095 = vmul.f32 %v7094, %v7092
        %v7096 = vxor.u32 %v7095, 2147483648
        %v7097 = vsel %vm7014, %v7096, %v7095
        %v7098 = vsub.s32 4, %v7074
        %v7099 = vsel %vm7014, %v7098, %v7074
        %v7100 = vsel %vm7013, %v1077, %v7097
        %v7101 = vsel %vm7013, 0, %v7099
        %v7102 = vcosq.f32.pop %v7100
        %v7103 = vsinq.f32.pop %v7100
        %vm7104 = vweird.f32 %v1077
        %v7105 = vadd.s32 %v7101, 3
        %v7106 = vand.u32 %v7105, 3
        %vm7107 = vcmp.lt.s32.totalorder %v7106, 2
        %vm7108 = vcmp.eq.s32.totalorder %v7106, 0
        %v7109 = vxor.u32 %v7103, 2147483648
        %v7110 = vsel %vm7108, %v7102, %v7109
        %vm7111 = vcmp.eq.s32.totalorder %v7106, 2
        %v7112 = vxor.u32 %v7102, 2147483648
        %v7113 = vsel %vm7111, %v7112, %v7103
        %v7114 = vsel %vm7107, %v7110, %v7113
        %v7115 = vsel %vm7104, nan, %v7114
        %v7116 = vand.u32 2147483647, %v1078
        %vm7117 = vcmp.le.f32.partialorder %v7116, 0.7853982
        %vm7118 = vcmp.lt.s32.totalorder %v1078, 0
        %v7119 = vand.u32 %v1078, 2139095040
        %v7120 = vshrl.u32 %v7119, 23
        %v7121 = vsub.s32 %v7120, 127
        %v7122 = vand.u32 2147483647, %v1078
        %v7123 = vand.u32 %v7122, 8388607
        %v7124 = vor.u32 %v7123, 8388608
        %v7125 = vsub.s32 0, %v7124
        %v7126 = vadd.s32 %v7121, 1
        %vm7127 = vcmp.gt.s32.totalorder %v7126, 0
        %v7128 = vsel %vm7127, %v7126, 0
        %v7129 = vshrl.u32 %v7128, 5
        %v7130 = vand.u32 %v7128, 31
        %v7131 = vsub.s32 32, %v7130
        %v7132 = vshrl.u32 683565275, %v7131
        %v7133 = vshll.u32 683565275, %v7130
        %v7134 = vshrl.u32 2475754826, %v7131
        %v7135 = vor.u32 %v7133, %v7134
        %v7136 = vshll.u32 2475754826, %v7130
        %v7137 = vshrl.u32 2131351028, %v7131
        %v7138 = vor.u32 %v7136, %v7137
        %v7139 = vshll.u32 2131351028, %v7130
        %v7140 = vshrl.u32 2102212464, %v7131
        %v7141 = vor.u32 %v7139, %v7140
        %v7142 = vshll.u32 2102212464, %v7130
        %v7143 = vshrl.u32 920167782, %v7131
        %v7144 = vor.u32 %v7142, %v7143
        %v7145 = vshll.u32 920167782, %v7130
        %v7146 = vshrl.u32 1326507024, %v7131
        %v7147 = vor.u32 %v7145, %v7146
        %vm7148 = vcmp.lt.s32.totalorder %v7129, 1
        %vm7149 = vcmp.lt.s32.totalorder %v7129, 2
        %vm7150 = vcmp.lt.s32.totalorder %v7129, 3
        %vm7151 = vcmp.lt.s32.totalorder %v7129, 4
        %v7152 = vsel %vm7148, %v7132, %v7135
        %v7153 = vsel %vm7151, %v7141, 2102212464
        %v7154 = vsel %vm7150, %v7138, %v7153
        %v7155 = vsel %vm7149, %v7152, %v7154
        %v7156 = vsel %vm7148, %v7135, %v7138
        %v7157 = vsel %vm7151, %v7144, 920167782
        %v7158 = vsel %vm7150, %v7141, %v7157
        %v7159 = vsel %vm7149, %v7156, %v7158
        %v7160 = vsel %vm7148, %v7138, %v7141
        %v7161 = vsel %vm7151, %v7147, 1326507024
        %v7162 = vsel %vm7150, %v7144, %v7161
        %v7163 = vsel %vm7149, %v7160, %v7162
        %v7164 = vshll.u32 %v7124, 8
        %v7165 = vmul.u32.u64.compose %v7164, %v7163
        %v7166 = vextract.low.u32 %v7165
        %v7167 = vextract.high.u32 %v7165
        %v7168 = vmul.u32.u64.compose %v7164, %v7159
        %v7169 = vextract.low.u32 %v7168
        %v7170 = vextract.high.u32 %v7168
        %v7171 = vmul.u32 %v7164, %v7155
        %v7172 = vadd.s32 %v7167, %v7169
        %vm7173 = vc.u32 %v7167, %v7169
        %v7174 = vadd.s32 %v7170, 1
        %v7175 = vsel %vm7173, %v7174, %v7170
        %v7176 = vadd.s32 %v7171, %v7175
        %v7177 = vadd.s32 %v7176, 536870912
        %v7178 = vshrl.u32 %v7177, 30
        %v7179 = vshll.u32 %v7178, 30
        %v7180 = vsub.s32 %v7176, %v7179
        %vm7181 = vcmp.lt.s32.totalorder %v7180, 0
        %v7182 = vsub.s32 0, %v7180
        %v7183 = vsel %vm7181, %v7182, %v7180
        %v7184 = vclz %v7183
        %v7185 = vsub.s32 %v7184, 2
        %vm7186 = vcmp.gt.s32.totalorder 0, %v7185
        %v7187 = vsel %vm7186, 0, %v7185
        %v7188 = vsub.s32 32, %v7187
        %v7189 = vshll.u32 %v7180, %v7187
        %v7190 = vshrl.u32 %v7172, %v7188
        %v7191 = vor.u32 %v7189, %v7190
        %v7192 = vsub.s32 4294967266, %v7187
        %v7193 = vadd.s32 %v7192, 127
        %v7194 = vshll.u32 %v7193, 23
        %v7195 = vor.u32 4788187, %v7194
        %v7196 = vand.u32 2147483647, %v7195
        %v7198 = vcvt.s32.f32 %v7191
        %v7199 = vmul.f32 %v7198, %v7196
        %v7200 = vxor.u32 %v7199, 2147483648
        %v7201 = vsel %vm7118, %v7200, %v7199
        %v7202 = vsub.s32 4, %v7178
        %v7203 = vsel %vm7118, %v7202, %v7178
        %v7204 = vsel %vm7117, %v1078, %v7201
        %v7205 = vsel %vm7117, 0, %v7203
        %v7206 = vcosq.f32.pop %v7204
        %v7207 = vsinq.f32.pop %v7204
        %vm7208 = vweird.f32 %v1078
        %v7209 = vadd.s32 %v7205, 3
        %v7210 = vand.u32 %v7209, 3
        %vm7211 = vcmp.lt.s32.totalorder %v7210, 2
        %vm7212 = vcmp.eq.s32.totalorder %v7210, 0
        %v7213 = vxor.u32 %v7207, 2147483648
        %v7214 = vsel %vm7212, %v7206, %v7213
        %vm7215 = vcmp.eq.s32.totalorder %v7210, 2
        %v7216 = vxor.u32 %v7206, 2147483648
        %v7217 = vsel %vm7215, %v7216, %v7207
        %v7218 = vsel %vm7211, %v7214, %v7217
        %v7219 = vsel %vm7208, nan, %v7218
        %v7220 = vand.u32 2147483647, %v1079
        %vm7221 = vcmp.le.f32.partialorder %v7220, 0.7853982
        %vm7222 = vcmp.lt.s32.totalorder %v1079, 0
        %v7223 = vand.u32 %v1079, 2139095040
        %v7224 = vshrl.u32 %v7223, 23
        %v7225 = vsub.s32 %v7224, 127
        %v7226 = vand.u32 2147483647, %v1079
        %v7227 = vand.u32 %v7226, 8388607
        %v7228 = vor.u32 %v7227, 8388608
        %v7229 = vsub.s32 0, %v7228
        %v7230 = vadd.s32 %v7225, 1
        %vm7231 = vcmp.gt.s32.totalorder %v7230, 0
        %v7232 = vsel %vm7231, %v7230, 0
        %v7233 = vshrl.u32 %v7232, 5
        %v7234 = vand.u32 %v7232, 31
        %v7235 = vsub.s32 32, %v7234
        %v7236 = vshrl.u32 683565275, %v7235
        %v7237 = vshll.u32 683565275, %v7234
        %v7238 = vshrl.u32 2475754826, %v7235
        %v7239 = vor.u32 %v7237, %v7238
        %v7240 = vshll.u32 2475754826, %v7234
        %v7241 = vshrl.u32 2131351028, %v7235
        %v7242 = vor.u32 %v7240, %v7241
        %v7243 = vshll.u32 2131351028, %v7234
        %v7244 = vshrl.u32 2102212464, %v7235
        %v7245 = vor.u32 %v7243, %v7244
        %v7246 = vshll.u32 2102212464, %v7234
        %v7247 = vshrl.u32 920167782, %v7235
        %v7248 = vor.u32 %v7246, %v7247
        %v7249 = vshll.u32 920167782, %v7234
        %v7250 = vshrl.u32 1326507024, %v7235
        %v7251 = vor.u32 %v7249, %v7250
        %vm7252 = vcmp.lt.s32.totalorder %v7233, 1
        %vm7253 = vcmp.lt.s32.totalorder %v7233, 2
        %vm7254 = vcmp.lt.s32.totalorder %v7233, 3
        %vm7255 = vcmp.lt.s32.totalorder %v7233, 4
        %v7256 = vsel %vm7252, %v7236, %v7239
        %v7257 = vsel %vm7255, %v7245, 2102212464
        %v7258 = vsel %vm7254, %v7242, %v7257
        %v7259 = vsel %vm7253, %v7256, %v7258
        %v7260 = vsel %vm7252, %v7239, %v7242
        %v7261 = vsel %vm7255, %v7248, 920167782
        %v7262 = vsel %vm7254, %v7245, %v7261
        %v7263 = vsel %vm7253, %v7260, %v7262
        %v7264 = vsel %vm7252, %v7242, %v7245
        %v7265 = vsel %vm7255, %v7251, 1326507024
        %v7266 = vsel %vm7254, %v7248, %v7265
        %v7267 = vsel %vm7253, %v7264, %v7266
        %v7268 = vshll.u32 %v7228, 8
        %v7269 = vmul.u32.u64.compose %v7268, %v7267
        %v7270 = vextract.low.u32 %v7269
        %v7271 = vextract.high.u32 %v7269
        %v7272 = vmul.u32.u64.compose %v7268, %v7263
        %v7273 = vextract.low.u32 %v7272
        %v7274 = vextract.high.u32 %v7272
        %v7275 = vmul.u32 %v7268, %v7259
        %v7276 = vadd.s32 %v7271, %v7273
        %vm7277 = vc.u32 %v7271, %v7273
        %v7278 = vadd.s32 %v7274, 1
        %v7279 = vsel %vm7277, %v7278, %v7274
        %v7280 = vadd.s32 %v7275, %v7279
        %v7281 = vadd.s32 %v7280, 536870912
        %v7282 = vshrl.u32 %v7281, 30
        %v7283 = vshll.u32 %v7282, 30
        %v7284 = vsub.s32 %v7280, %v7283
        %vm7285 = vcmp.lt.s32.totalorder %v7284, 0
        %v7286 = vsub.s32 0, %v7284
        %v7287 = vsel %vm7285, %v7286, %v7284
        %v7288 = vclz %v7287
        %v7289 = vsub.s32 %v7288, 2
        %vm7290 = vcmp.gt.s32.totalorder 0, %v7289
        %v7291 = vsel %vm7290, 0, %v7289
        %v7292 = vsub.s32 32, %v7291
        %v7293 = vshll.u32 %v7284, %v7291
        %v7294 = vshrl.u32 %v7276, %v7292
        %v7295 = vor.u32 %v7293, %v7294
        %v7296 = vsub.s32 4294967266, %v7291
        %v7297 = vadd.s32 %v7296, 127
        %v7298 = vshll.u32 %v7297, 23
        %v7299 = vor.u32 4788187, %v7298
        %v7300 = vand.u32 2147483647, %v7299
        %v7302 = vcvt.s32.f32 %v7295
        %v7303 = vmul.f32 %v7302, %v7300
        %v7304 = vxor.u32 %v7303, 2147483648
        %v7305 = vsel %vm7222, %v7304, %v7303
        %v7306 = vsub.s32 4, %v7282
        %v7307 = vsel %vm7222, %v7306, %v7282
        %v7308 = vsel %vm7221, %v1079, %v7305
        %v7309 = vsel %vm7221, 0, %v7307
        %v7310 = vcosq.f32.pop %v7308
        %v7311 = vsinq.f32.pop %v7308
        %vm7312 = vweird.f32 %v1079
        %v7313 = vadd.s32 %v7309, 3
        %v7314 = vand.u32 %v7313, 3
        %vm7315 = vcmp.lt.s32.totalorder %v7314, 2
        %vm7316 = vcmp.eq.s32.totalorder %v7314, 0
        %v7317 = vxor.u32 %v7311, 2147483648
        %v7318 = vsel %vm7316, %v7310, %v7317
        %vm7319 = vcmp.eq.s32.totalorder %v7314, 2
        %v7320 = vxor.u32 %v7310, 2147483648
        %v7321 = vsel %vm7319, %v7320, %v7311
        %v7322 = vsel %vm7315, %v7318, %v7321
        %v7323 = vsel %vm7312, nan, %v7322
        %v7324 = vand.u32 2147483647, %v1080
        %vm7325 = vcmp.le.f32.partialorder %v7324, 0.7853982
        %vm7326 = vcmp.lt.s32.totalorder %v1080, 0
        %v7327 = vand.u32 %v1080, 2139095040
        %v7328 = vshrl.u32 %v7327, 23
        %v7329 = vsub.s32 %v7328, 127
        %v7330 = vand.u32 2147483647, %v1080
        %v7331 = vand.u32 %v7330, 8388607
        %v7332 = vor.u32 %v7331, 8388608
        %v7333 = vsub.s32 0, %v7332
        %v7334 = vadd.s32 %v7329, 1
        %vm7335 = vcmp.gt.s32.totalorder %v7334, 0
        %v7336 = vsel %vm7335, %v7334, 0
        %v7337 = vshrl.u32 %v7336, 5
        %v7338 = vand.u32 %v7336, 31
        %v7339 = vsub.s32 32, %v7338
        %v7340 = vshrl.u32 683565275, %v7339
        %v7341 = vshll.u32 683565275, %v7338
        %v7342 = vshrl.u32 2475754826, %v7339
        %v7343 = vor.u32 %v7341, %v7342
        %v7344 = vshll.u32 2475754826, %v7338
        %v7345 = vshrl.u32 2131351028, %v7339
        %v7346 = vor.u32 %v7344, %v7345
        %v7347 = vshll.u32 2131351028, %v7338
        %v7348 = vshrl.u32 2102212464, %v7339
        %v7349 = vor.u32 %v7347, %v7348
        %v7350 = vshll.u32 2102212464, %v7338
        %v7351 = vshrl.u32 920167782, %v7339
        %v7352 = vor.u32 %v7350, %v7351
        %v7353 = vshll.u32 920167782, %v7338
        %v7354 = vshrl.u32 1326507024, %v7339
        %v7355 = vor.u32 %v7353, %v7354
        %vm7356 = vcmp.lt.s32.totalorder %v7337, 1
        %vm7357 = vcmp.lt.s32.totalorder %v7337, 2
        %vm7358 = vcmp.lt.s32.totalorder %v7337, 3
        %vm7359 = vcmp.lt.s32.totalorder %v7337, 4
        %v7360 = vsel %vm7356, %v7340, %v7343
        %v7361 = vsel %vm7359, %v7349, 2102212464
        %v7362 = vsel %vm7358, %v7346, %v7361
        %v7363 = vsel %vm7357, %v7360, %v7362
        %v7364 = vsel %vm7356, %v7343, %v7346
        %v7365 = vsel %vm7359, %v7352, 920167782
        %v7366 = vsel %vm7358, %v7349, %v7365
        %v7367 = vsel %vm7357, %v7364, %v7366
        %v7368 = vsel %vm7356, %v7346, %v7349
        %v7369 = vsel %vm7359, %v7355, 1326507024
        %v7370 = vsel %vm7358, %v7352, %v7369
        %v7371 = vsel %vm7357, %v7368, %v7370
        %v7372 = vshll.u32 %v7332, 8
        %v7373 = vmul.u32.u64.compose %v7372, %v7371
        %v7374 = vextract.low.u32 %v7373
        %v7375 = vextract.high.u32 %v7373
        %v7376 = vmul.u32.u64.compose %v7372, %v7367
        %v7377 = vextract.low.u32 %v7376
        %v7378 = vextract.high.u32 %v7376
        %v7379 = vmul.u32 %v7372, %v7363
        %v7380 = vadd.s32 %v7375, %v7377
        %vm7381 = vc.u32 %v7375, %v7377
        %v7382 = vadd.s32 %v7378, 1
        %v7383 = vsel %vm7381, %v7382, %v7378
        %v7384 = vadd.s32 %v7379, %v7383
        %v7385 = vadd.s32 %v7384, 536870912
        %v7386 = vshrl.u32 %v7385, 30
        %v7387 = vshll.u32 %v7386, 30
        %v7388 = vsub.s32 %v7384, %v7387
        %vm7389 = vcmp.lt.s32.totalorder %v7388, 0
        %v7390 = vsub.s32 0, %v7388
        %v7391 = vsel %vm7389, %v7390, %v7388
        %v7392 = vclz %v7391
        %v7393 = vsub.s32 %v7392, 2
        %vm7394 = vcmp.gt.s32.totalorder 0, %v7393
        %v7395 = vsel %vm7394, 0, %v7393
        %v7396 = vsub.s32 32, %v7395
        %v7397 = vshll.u32 %v7388, %v7395
        %v7398 = vshrl.u32 %v7380, %v7396
        %v7399 = vor.u32 %v7397, %v7398
        %v7400 = vsub.s32 4294967266, %v7395
        %v7401 = vadd.s32 %v7400, 127
        %v7402 = vshll.u32 %v7401, 23
        %v7403 = vor.u32 4788187, %v7402
        %v7404 = vand.u32 2147483647, %v7403
        %v7406 = vcvt.s32.f32 %v7399
        %v7407 = vmul.f32 %v7406, %v7404
        %v7408 = vxor.u32 %v7407, 2147483648
        %v7409 = vsel %vm7326, %v7408, %v7407
        %v7410 = vsub.s32 4, %v7386
        %v7411 = vsel %vm7326, %v7410, %v7386
        %v7412 = vsel %vm7325, %v1080, %v7409
        %v7413 = vsel %vm7325, 0, %v7411
        %v7414 = vcosq.f32.pop %v7412
        %v7415 = vsinq.f32.pop %v7412
        %vm7416 = vweird.f32 %v1080
        %v7417 = vadd.s32 %v7413, 3
        %v7418 = vand.u32 %v7417, 3
        %vm7419 = vcmp.lt.s32.totalorder %v7418, 2
        %vm7420 = vcmp.eq.s32.totalorder %v7418, 0
        %v7421 = vxor.u32 %v7415, 2147483648
        %v7422 = vsel %vm7420, %v7414, %v7421
        %vm7423 = vcmp.eq.s32.totalorder %v7418, 2
        %v7424 = vxor.u32 %v7414, 2147483648
        %v7425 = vsel %vm7423, %v7424, %v7415
        %v7426 = vsel %vm7419, %v7422, %v7425
        %v7427 = vsel %vm7416, nan, %v7426
        %v7428 = vand.u32 2147483647, %v1081
        %vm7429 = vcmp.le.f32.partialorder %v7428, 0.7853982
        %vm7430 = vcmp.lt.s32.totalorder %v1081, 0
        %v7431 = vand.u32 %v1081, 2139095040
        %v7432 = vshrl.u32 %v7431, 23
        %v7433 = vsub.s32 %v7432, 127
        %v7434 = vand.u32 2147483647, %v1081
        %v7435 = vand.u32 %v7434, 8388607
        %v7436 = vor.u32 %v7435, 8388608
        %v7437 = vsub.s32 0, %v7436
        %v7438 = vadd.s32 %v7433, 1
        %vm7439 = vcmp.gt.s32.totalorder %v7438, 0
        %v7440 = vsel %vm7439, %v7438, 0
        %v7441 = vshrl.u32 %v7440, 5
        %v7442 = vand.u32 %v7440, 31
        %v7443 = vsub.s32 32, %v7442
        %v7444 = vshrl.u32 683565275, %v7443
        %v7445 = vshll.u32 683565275, %v7442
        %v7446 = vshrl.u32 2475754826, %v7443
        %v7447 = vor.u32 %v7445, %v7446
        %v7448 = vshll.u32 2475754826, %v7442
        %v7449 = vshrl.u32 2131351028, %v7443
        %v7450 = vor.u32 %v7448, %v7449
        %v7451 = vshll.u32 2131351028, %v7442
        %v7452 = vshrl.u32 2102212464, %v7443
        %v7453 = vor.u32 %v7451, %v7452
        %v7454 = vshll.u32 2102212464, %v7442
        %v7455 = vshrl.u32 920167782, %v7443
        %v7456 = vor.u32 %v7454, %v7455
        %v7457 = vshll.u32 920167782, %v7442
        %v7458 = vshrl.u32 1326507024, %v7443
        %v7459 = vor.u32 %v7457, %v7458
        %vm7460 = vcmp.lt.s32.totalorder %v7441, 1
        %vm7461 = vcmp.lt.s32.totalorder %v7441, 2
        %vm7462 = vcmp.lt.s32.totalorder %v7441, 3
        %vm7463 = vcmp.lt.s32.totalorder %v7441, 4
        %v7464 = vsel %vm7460, %v7444, %v7447
        %v7465 = vsel %vm7463, %v7453, 2102212464
        %v7466 = vsel %vm7462, %v7450, %v7465
        %v7467 = vsel %vm7461, %v7464, %v7466
        %v7468 = vsel %vm7460, %v7447, %v7450
        %v7469 = vsel %vm7463, %v7456, 920167782
        %v7470 = vsel %vm7462, %v7453, %v7469
        %v7471 = vsel %vm7461, %v7468, %v7470
        %v7472 = vsel %vm7460, %v7450, %v7453
        %v7473 = vsel %vm7463, %v7459, 1326507024
        %v7474 = vsel %vm7462, %v7456, %v7473
        %v7475 = vsel %vm7461, %v7472, %v7474
        %v7476 = vshll.u32 %v7436, 8
        %v7477 = vmul.u32.u64.compose %v7476, %v7475
        %v7478 = vextract.low.u32 %v7477
        %v7479 = vextract.high.u32 %v7477
        %v7480 = vmul.u32.u64.compose %v7476, %v7471
        %v7481 = vextract.low.u32 %v7480
        %v7482 = vextract.high.u32 %v7480
        %v7483 = vmul.u32 %v7476, %v7467
        %v7484 = vadd.s32 %v7479, %v7481
        %vm7485 = vc.u32 %v7479, %v7481
        %v7486 = vadd.s32 %v7482, 1
        %v7487 = vsel %vm7485, %v7486, %v7482
        %v7488 = vadd.s32 %v7483, %v7487
        %v7489 = vadd.s32 %v7488, 536870912
        %v7490 = vshrl.u32 %v7489, 30
        %v7491 = vshll.u32 %v7490, 30
        %v7492 = vsub.s32 %v7488, %v7491
        %vm7493 = vcmp.lt.s32.totalorder %v7492, 0
        %v7494 = vsub.s32 0, %v7492
        %v7495 = vsel %vm7493, %v7494, %v7492
        %v7496 = vclz %v7495
        %v7497 = vsub.s32 %v7496, 2
        %vm7498 = vcmp.gt.s32.totalorder 0, %v7497
        %v7499 = vsel %vm7498, 0, %v7497
        %v7500 = vsub.s32 32, %v7499
        %v7501 = vshll.u32 %v7492, %v7499
        %v7502 = vshrl.u32 %v7484, %v7500
        %v7503 = vor.u32 %v7501, %v7502
        %v7504 = vsub.s32 4294967266, %v7499
        %v7505 = vadd.s32 %v7504, 127
        %v7506 = vshll.u32 %v7505, 23
        %v7507 = vor.u32 4788187, %v7506
        %v7508 = vand.u32 2147483647, %v7507
        %v7510 = vcvt.s32.f32 %v7503
        %v7511 = vmul.f32 %v7510, %v7508
        %v7512 = vxor.u32 %v7511, 2147483648
        %v7513 = vsel %vm7430, %v7512, %v7511
        %v7514 = vsub.s32 4, %v7490
        %v7515 = vsel %vm7430, %v7514, %v7490
        %v7516 = vsel %vm7429, %v1081, %v7513
        %v7517 = vsel %vm7429, 0, %v7515
        %v7518 = vcosq.f32.pop %v7516
        %v7519 = vsinq.f32.pop %v7516
        %vm7520 = vweird.f32 %v1081
        %v7521 = vadd.s32 %v7517, 3
        %v7522 = vand.u32 %v7521, 3
        %vm7523 = vcmp.lt.s32.totalorder %v7522, 2
        %vm7524 = vcmp.eq.s32.totalorder %v7522, 0
        %v7525 = vxor.u32 %v7519, 2147483648
        %v7526 = vsel %vm7524, %v7518, %v7525
        %vm7527 = vcmp.eq.s32.totalorder %v7522, 2
        %v7528 = vxor.u32 %v7518, 2147483648
        %v7529 = vsel %vm7527, %v7528, %v7519
        %v7530 = vsel %vm7523, %v7526, %v7529
        %v7531 = vsel %vm7520, nan, %v7530
        %v7532 = vand.u32 2147483647, %v1082
        %vm7533 = vcmp.le.f32.partialorder %v7532, 0.7853982
        %vm7534 = vcmp.lt.s32.totalorder %v1082, 0
        %v7535 = vand.u32 %v1082, 2139095040
        %v7536 = vshrl.u32 %v7535, 23
        %v7537 = vsub.s32 %v7536, 127
        %v7538 = vand.u32 2147483647, %v1082
        %v7539 = vand.u32 %v7538, 8388607
        %v7540 = vor.u32 %v7539, 8388608
        %v7541 = vsub.s32 0, %v7540
        %v7542 = vadd.s32 %v7537, 1
        %vm7543 = vcmp.gt.s32.totalorder %v7542, 0
        %v7544 = vsel %vm7543, %v7542, 0
        %v7545 = vshrl.u32 %v7544, 5
        %v7546 = vand.u32 %v7544, 31
        %v7547 = vsub.s32 32, %v7546
        %v7548 = vshrl.u32 683565275, %v7547
        %v7549 = vshll.u32 683565275, %v7546
        %v7550 = vshrl.u32 2475754826, %v7547
        %v7551 = vor.u32 %v7549, %v7550
        %v7552 = vshll.u32 2475754826, %v7546
        %v7553 = vshrl.u32 2131351028, %v7547
        %v7554 = vor.u32 %v7552, %v7553
        %v7555 = vshll.u32 2131351028, %v7546
        %v7556 = vshrl.u32 2102212464, %v7547
        %v7557 = vor.u32 %v7555, %v7556
        %v7558 = vshll.u32 2102212464, %v7546
        %v7559 = vshrl.u32 920167782, %v7547
        %v7560 = vor.u32 %v7558, %v7559
        %v7561 = vshll.u32 920167782, %v7546
        %v7562 = vshrl.u32 1326507024, %v7547
        %v7563 = vor.u32 %v7561, %v7562
        %vm7564 = vcmp.lt.s32.totalorder %v7545, 1
        %vm7565 = vcmp.lt.s32.totalorder %v7545, 2
        %vm7566 = vcmp.lt.s32.totalorder %v7545, 3
        %vm7567 = vcmp.lt.s32.totalorder %v7545, 4
        %v7568 = vsel %vm7564, %v7548, %v7551
        %v7569 = vsel %vm7567, %v7557, 2102212464
        %v7570 = vsel %vm7566, %v7554, %v7569
        %v7571 = vsel %vm7565, %v7568, %v7570
        %v7572 = vsel %vm7564, %v7551, %v7554
        %v7573 = vsel %vm7567, %v7560, 920167782
        %v7574 = vsel %vm7566, %v7557, %v7573
        %v7575 = vsel %vm7565, %v7572, %v7574
        %v7576 = vsel %vm7564, %v7554, %v7557
        %v7577 = vsel %vm7567, %v7563, 1326507024
        %v7578 = vsel %vm7566, %v7560, %v7577
        %v7579 = vsel %vm7565, %v7576, %v7578
        %v7580 = vshll.u32 %v7540, 8
        %v7581 = vmul.u32.u64.compose %v7580, %v7579
        %v7582 = vextract.low.u32 %v7581
        %v7583 = vextract.high.u32 %v7581
        %v7584 = vmul.u32.u64.compose %v7580, %v7575
        %v7585 = vextract.low.u32 %v7584
        %v7586 = vextract.high.u32 %v7584
        %v7587 = vmul.u32 %v7580, %v7571
        %v7588 = vadd.s32 %v7583, %v7585
        %vm7589 = vc.u32 %v7583, %v7585
        %v7590 = vadd.s32 %v7586, 1
        %v7591 = vsel %vm7589, %v7590, %v7586
        %v7592 = vadd.s32 %v7587, %v7591
        %v7593 = vadd.s32 %v7592, 536870912
        %v7594 = vshrl.u32 %v7593, 30
        %v7595 = vshll.u32 %v7594, 30
        %v7596 = vsub.s32 %v7592, %v7595
        %vm7597 = vcmp.lt.s32.totalorder %v7596, 0
        %v7598 = vsub.s32 0, %v7596
        %v7599 = vsel %vm7597, %v7598, %v7596
        %v7600 = vclz %v7599
        %v7601 = vsub.s32 %v7600, 2
        %vm7602 = vcmp.gt.s32.totalorder 0, %v7601
        %v7603 = vsel %vm7602, 0, %v7601
        %v7604 = vsub.s32 32, %v7603
        %v7605 = vshll.u32 %v7596, %v7603
        %v7606 = vshrl.u32 %v7588, %v7604
        %v7607 = vor.u32 %v7605, %v7606
        %v7608 = vsub.s32 4294967266, %v7603
        %v7609 = vadd.s32 %v7608, 127
        %v7610 = vshll.u32 %v7609, 23
        %v7611 = vor.u32 4788187, %v7610
        %v7612 = vand.u32 2147483647, %v7611
        %v7614 = vcvt.s32.f32 %v7607
        %v7615 = vmul.f32 %v7614, %v7612
        %v7616 = vxor.u32 %v7615, 2147483648
        %v7617 = vsel %vm7534, %v7616, %v7615
        %v7618 = vsub.s32 4, %v7594
        %v7619 = vsel %vm7534, %v7618, %v7594
        %v7620 = vsel %vm7533, %v1082, %v7617
        %v7621 = vsel %vm7533, 0, %v7619
        %v7622 = vcosq.f32.pop %v7620
        %v7623 = vsinq.f32.pop %v7620
        %vm7624 = vweird.f32 %v1082
        %v7625 = vadd.s32 %v7621, 3
        %v7626 = vand.u32 %v7625, 3
        %vm7627 = vcmp.lt.s32.totalorder %v7626, 2
        %vm7628 = vcmp.eq.s32.totalorder %v7626, 0
        %v7629 = vxor.u32 %v7623, 2147483648
        %v7630 = vsel %vm7628, %v7622, %v7629
        %vm7631 = vcmp.eq.s32.totalorder %v7626, 2
        %v7632 = vxor.u32 %v7622, 2147483648
        %v7633 = vsel %vm7631, %v7632, %v7623
        %v7634 = vsel %vm7627, %v7630, %v7633
        %v7635 = vsel %vm7624, nan, %v7634
        %v7636 = vand.u32 2147483647, %v1083
        %vm7637 = vcmp.le.f32.partialorder %v7636, 0.7853982
        %vm7638 = vcmp.lt.s32.totalorder %v1083, 0
        %v7639 = vand.u32 %v1083, 2139095040
        %v7640 = vshrl.u32 %v7639, 23
        %v7641 = vsub.s32 %v7640, 127
        %v7642 = vand.u32 2147483647, %v1083
        %v7643 = vand.u32 %v7642, 8388607
        %v7644 = vor.u32 %v7643, 8388608
        %v7645 = vsub.s32 0, %v7644
        %v7646 = vadd.s32 %v7641, 1
        %vm7647 = vcmp.gt.s32.totalorder %v7646, 0
        %v7648 = vsel %vm7647, %v7646, 0
        %v7649 = vshrl.u32 %v7648, 5
        %v7650 = vand.u32 %v7648, 31
        %v7651 = vsub.s32 32, %v7650
        %v7652 = vshrl.u32 683565275, %v7651
        %v7653 = vshll.u32 683565275, %v7650
        %v7654 = vshrl.u32 2475754826, %v7651
        %v7655 = vor.u32 %v7653, %v7654
        %v7656 = vshll.u32 2475754826, %v7650
        %v7657 = vshrl.u32 2131351028, %v7651
        %v7658 = vor.u32 %v7656, %v7657
        %v7659 = vshll.u32 2131351028, %v7650
        %v7660 = vshrl.u32 2102212464, %v7651
        %v7661 = vor.u32 %v7659, %v7660
        %v7662 = vshll.u32 2102212464, %v7650
        %v7663 = vshrl.u32 920167782, %v7651
        %v7664 = vor.u32 %v7662, %v7663
        %v7665 = vshll.u32 920167782, %v7650
        %v7666 = vshrl.u32 1326507024, %v7651
        %v7667 = vor.u32 %v7665, %v7666
        %vm7668 = vcmp.lt.s32.totalorder %v7649, 1
        %vm7669 = vcmp.lt.s32.totalorder %v7649, 2
        %vm7670 = vcmp.lt.s32.totalorder %v7649, 3
        %vm7671 = vcmp.lt.s32.totalorder %v7649, 4
        %v7672 = vsel %vm7668, %v7652, %v7655
        %v7673 = vsel %vm7671, %v7661, 2102212464
        %v7674 = vsel %vm7670, %v7658, %v7673
        %v7675 = vsel %vm7669, %v7672, %v7674
        %v7676 = vsel %vm7668, %v7655, %v7658
        %v7677 = vsel %vm7671, %v7664, 920167782
        %v7678 = vsel %vm7670, %v7661, %v7677
        %v7679 = vsel %vm7669, %v7676, %v7678
        %v7680 = vsel %vm7668, %v7658, %v7661
        %v7681 = vsel %vm7671, %v7667, 1326507024
        %v7682 = vsel %vm7670, %v7664, %v7681
        %v7683 = vsel %vm7669, %v7680, %v7682
        %v7684 = vshll.u32 %v7644, 8
        %v7685 = vmul.u32.u64.compose %v7684, %v7683
        %v7686 = vextract.low.u32 %v7685
        %v7687 = vextract.high.u32 %v7685
        %v7688 = vmul.u32.u64.compose %v7684, %v7679
        %v7689 = vextract.low.u32 %v7688
        %v7690 = vextract.high.u32 %v7688
        %v7691 = vmul.u32 %v7684, %v7675
        %v7692 = vadd.s32 %v7687, %v7689
        %vm7693 = vc.u32 %v7687, %v7689
        %v7694 = vadd.s32 %v7690, 1
        %v7695 = vsel %vm7693, %v7694, %v7690
        %v7696 = vadd.s32 %v7691, %v7695
        %v7697 = vadd.s32 %v7696, 536870912
        %v7698 = vshrl.u32 %v7697, 30
        %v7699 = vshll.u32 %v7698, 30
        %v7700 = vsub.s32 %v7696, %v7699
        %vm7701 = vcmp.lt.s32.totalorder %v7700, 0
        %v7702 = vsub.s32 0, %v7700
        %v7703 = vsel %vm7701, %v7702, %v7700
        %v7704 = vclz %v7703
        %v7705 = vsub.s32 %v7704, 2
        %vm7706 = vcmp.gt.s32.totalorder 0, %v7705
        %v7707 = vsel %vm7706, 0, %v7705
        %v7708 = vsub.s32 32, %v7707
        %v7709 = vshll.u32 %v7700, %v7707
        %v7710 = vshrl.u32 %v7692, %v7708
        %v7711 = vor.u32 %v7709, %v7710
        %v7712 = vsub.s32 4294967266, %v7707
        %v7713 = vadd.s32 %v7712, 127
        %v7714 = vshll.u32 %v7713, 23
        %v7715 = vor.u32 4788187, %v7714
        %v7716 = vand.u32 2147483647, %v7715
        %v7718 = vcvt.s32.f32 %v7711
        %v7719 = vmul.f32 %v7718, %v7716
        %v7720 = vxor.u32 %v7719, 2147483648
        %v7721 = vsel %vm7638, %v7720, %v7719
        %v7722 = vsub.s32 4, %v7698
        %v7723 = vsel %vm7638, %v7722, %v7698
        %v7724 = vsel %vm7637, %v1083, %v7721
        %v7725 = vsel %vm7637, 0, %v7723
        %v7726 = vcosq.f32.pop %v7724
        %v7727 = vsinq.f32.pop %v7724
        %vm7728 = vweird.f32 %v1083
        %v7729 = vadd.s32 %v7725, 3
        %v7730 = vand.u32 %v7729, 3
        %vm7731 = vcmp.lt.s32.totalorder %v7730, 2
        %vm7732 = vcmp.eq.s32.totalorder %v7730, 0
        %v7733 = vxor.u32 %v7727, 2147483648
        %v7734 = vsel %vm7732, %v7726, %v7733
        %vm7735 = vcmp.eq.s32.totalorder %v7730, 2
        %v7736 = vxor.u32 %v7726, 2147483648
        %v7737 = vsel %vm7735, %v7736, %v7727
        %v7738 = vsel %vm7731, %v7734, %v7737
        %v7739 = vsel %vm7728, nan, %v7738
        %7740 = vst [vmem:[%s215] sm:$0xff] %v1187
        %7741 = vst [vmem:[%s215 + $0x8] sm:$0xff] %v1291
        %7742 = vst [vmem:[%s215 + $0x10] sm:$0xff] %v1395
        %7743 = vst [vmem:[%s215 + $0x18] sm:$0xff] %v1499
        %7744 = vst [vmem:[%s215 + $0x20] sm:$0xff] %v1603
        %7745 = vst [vmem:[%s215 + $0x28] sm:$0xff] %v1707
        %7746 = vst [vmem:[%s215 + $0x30] sm:$0xff] %v1811
        %7747 = vst [vmem:[%s215 + $0x38] sm:$0xff] %v1915
        %7748 = vst [vmem:[%s215 + $0x40] sm:$0xff] %v2019
        %7749 = vst [vmem:[%s215 + $0x48] sm:$0xff] %v2123
        %7750 = vst [vmem:[%s215 + $0x50] sm:$0xff] %v2227
        %7751 = vst [vmem:[%s215 + $0x58] sm:$0xff] %v2331
        %7752 = vst [vmem:[%s215 + $0x60] sm:$0xff] %v2435
        %7753 = vst [vmem:[%s215 + $0x68] sm:$0xff] %v2539
        %7754 = vst [vmem:[%s215 + $0x70] sm:$0xff] %v2643
        %7755 = vst [vmem:[%s215 + $0x78] sm:$0xff] %v2747
        %7756 = vst [vmem:[%s215 + $0x80] sm:$0xff] %v2851
        %7757 = vst [vmem:[%s215 + $0x88] sm:$0xff] %v2955
        %7758 = vst [vmem:[%s215 + $0x90] sm:$0xff] %v3059
        %7759 = vst [vmem:[%s215 + $0x98] sm:$0xff] %v3163
        %7760 = vst [vmem:[%s215 + $0xa0] sm:$0xff] %v3267
        %7761 = vst [vmem:[%s215 + $0xa8] sm:$0xff] %v3371
        %7762 = vst [vmem:[%s215 + $0xb0] sm:$0xff] %v3475
        %7763 = vst [vmem:[%s215 + $0xb8] sm:$0xff] %v3579
        %7764 = vst [vmem:[%s215 + $0xc0] sm:$0xff] %v3683
        %7765 = vst [vmem:[%s215 + $0xc8] sm:$0xff] %v3787
        %7766 = vst [vmem:[%s215 + $0xd0] sm:$0xff] %v3891
        %7767 = vst [vmem:[%s215 + $0xd8] sm:$0xff] %v3995
        %7768 = vst [vmem:[%s215 + $0xe0] sm:$0xff] %v4099
        %7769 = vst [vmem:[%s215 + $0xe8] sm:$0xff] %v4203
        %7770 = vst [vmem:[%s215 + $0xf0] sm:$0xff] %v4307
        %7771 = vst [vmem:[%s215 + $0xf8] sm:$0xff] %v4411
        %7772 = vst [vmem:[%s215 + $0x100] sm:$0xff] %v4515
        %7773 = vst [vmem:[%s215 + $0x108] sm:$0xff] %v4619
        %7774 = vst [vmem:[%s215 + $0x110] sm:$0xff] %v4723
        %7775 = vst [vmem:[%s215 + $0x118] sm:$0xff] %v4827
        %7776 = vst [vmem:[%s215 + $0x120] sm:$0xff] %v4931
        %7777 = vst [vmem:[%s215 + $0x128] sm:$0xff] %v5035
        %7778 = vst [vmem:[%s215 + $0x130] sm:$0xff] %v5139
        %7779 = vst [vmem:[%s215 + $0x138] sm:$0xff] %v5243
        %7780 = vst [vmem:[%s215 + $0x140] sm:$0xff] %v5347
        %7781 = vst [vmem:[%s215 + $0x148] sm:$0xff] %v5451
        %7782 = vst [vmem:[%s215 + $0x150] sm:$0xff] %v5555
        %7783 = vst [vmem:[%s215 + $0x158] sm:$0xff] %v5659
        %7784 = vst [vmem:[%s215 + $0x160] sm:$0xff] %v5763
        %7785 = vst [vmem:[%s215 + $0x168] sm:$0xff] %v5867
        %7786 = vst [vmem:[%s215 + $0x170] sm:$0xff] %v5971
        %7787 = vst [vmem:[%s215 + $0x178] sm:$0xff] %v6075
        %7788 = vst [vmem:[%s215 + $0x180] sm:$0xff] %v6179
        %7789 = vst [vmem:[%s215 + $0x188] sm:$0xff] %v6283
        %7790 = vst [vmem:[%s215 + $0x190] sm:$0xff] %v6387
        %7791 = vst [vmem:[%s215 + $0x198] sm:$0xff] %v6491
        %7792 = vst [vmem:[%s215 + $0x1a0] sm:$0xff] %v6595
        %7793 = vst [vmem:[%s215 + $0x1a8] sm:$0xff] %v6699
        %7794 = vst [vmem:[%s215 + $0x1b0] sm:$0xff] %v6803
        %7795 = vst [vmem:[%s215 + $0x1b8] sm:$0xff] %v6907
        %7796 = vst [vmem:[%s215 + $0x1c0] sm:$0xff] %v7011
        %7797 = vst [vmem:[%s215 + $0x1c8] sm:$0xff] %v7115
        %7798 = vst [vmem:[%s215 + $0x1d0] sm:$0xff] %v7219
        %7799 = vst [vmem:[%s215 + $0x1d8] sm:$0xff] %v7323
        %7800 = vst [vmem:[%s215 + $0x1e0] sm:$0xff] %v7427
        %7801 = vst [vmem:[%s215 + $0x1e8] sm:$0xff] %v7531
        %7802 = vst [vmem:[%s215 + $0x1f0] sm:$0xff] %v7635
        %7803 = vst [vmem:[%s215 + $0x1f8] sm:$0xff] %v7739
        %s7804 = sand.u32 %s131, 1
        %s7805 = scalar_lea.sflag [#allocation3], %s7804
        %s7806 = sand.u32 %s131, 1
        %s7807 = smul.addr %s7806, 512
        %s7808 = scalar_lea.vmem [#allocation2], %s7807
        // Predicated region
        $region37: #{tpu_custom_call.1} parent=35 // pred_check
          %p7809 = pneg %p141
        $region38: #{tpu_custom_call.1} parent=35 // pred_check_branch
          %7811 = sbr.rel (%p7809) target = $region40
        $region39: #{tpu_custom_call.1} parent=35 // pred_region
          %s7812 = smul.u32 2, %s23
          %s7814 = ssub.s32 8192, 8192
          %7815 = vsyncadd %s7805, %s7814
          %s7816 = smul.addr %s22, 64
          %s7817 = sadd.s32 %s7812, %s7816
          %s7818 = smul.addr %s7817, 128
          %s7819 = scalar_lea.hbm %s4, %s7818
          %s7820 = sshll.u32 %s7808, 4
          %s7821 = int_to_ptr.vmem [resolvable:$true] %s7820
          %7826 = dma.vmem_to_hbm [thread:$0]  %s7821, 8192, %s7819, %s7805, 256, 256, 16
        $region40: #{tpu_custom_call.1} parent=35 // pred_fallthru
          _
      $region36: #{tpu_custom_call.1} parent=5 // pred_fallthru
        _
      %p7827 = scmp.le.s32.totalorder 2, %s13
      // Predicated region
      $region41: #{tpu_custom_call.1} parent=5 // pred_check
        %p7828 = pneg %p7827
      $region42: #{tpu_custom_call.1} parent=5 // pred_check_branch
        %7830 = sbr.rel (%p7828) target = $region44
      $region43: #{tpu_custom_call.1} parent=5 // pred_region
        %s7831 = ssub.s32 %s13, 2
        // Predicated region
        $region45: #{tpu_custom_call.1} parent=43 // pred_check
          %p7832 = pneg %p147
        $region46: #{tpu_custom_call.1} parent=43 // pred_check_branch
          %7834 = sbr.rel (%p7832) target = $region48
        $region47: #{tpu_custom_call.1} parent=43 // pred_region
          %s7835 = sand.u32 %s132, 1
          %s7836 = scalar_lea.sflag [#allocation3], %s7835
          %s7837 = sand.u32 %s132, 1
          %s7838 = smul.addr %s7837, 512
          %s7839 = scalar_lea.vmem [#allocation2], %s7838
          %7840 = dma.done %s7836, 8192
        $region48: #{tpu_custom_call.1} parent=43 // pred_fallthru
          _
      $region44: #{tpu_custom_call.1} parent=5 // pred_fallthru
        _
    $region6: #{tpu_custom_call.1} parent=1 // loop_footer
      %s17 = sadd.s32 1, %s13
    $region7: #{tpu_custom_call.1} parent=1 // loop_footer_branch
      %12 = sbr.rel target = $region3
    $region8: #{tpu_custom_call.1} parent=1 // loop_exit
      _
    %7841 = vsyncpa [#allocation3], 1
    %s7842 = scalar_lea.sflag [#allocation3], 1
    %7843 = vsyncpa %s7842, 1

</llo_original>
